<compile_context>
chip_gen: v7x
topology: tpu7x:2x2x1
jax: 0.10.0
libtpu: 0.0.40
codegen_flags: <defaults>
</compile_context>

<pallas_src>
import functools
import math

import numpy as np

import jax
import jax.numpy as jnp
from jax import lax
from jax.experimental import pallas as pl
from jax.experimental.pallas import tpu as pltpu


LN_EPS = 1e-5
CLS_PAD_LANES = 128    # class-head output padded to a full 128-lane tile


# ----------------------------- in-kernel helpers ---------------------------- #

def _layer_norm(x, eps=LN_EPS):
    # TODO(synk): learned LayerNorm affine params omitted (synthetic weights).
    # Single-pass stats: mean and mean-of-squares are independent lane
    # reductions (they overlap in the XLU), var = E[x^2] - E[x]^2.
    mu = jnp.mean(x, axis=-1, keepdims=True)
    ms = jnp.mean(x * x, axis=-1, keepdims=True)
    var = jnp.maximum(ms - mu * mu, 0.0)
    return (x - mu) * lax.rsqrt(var + eps)


def _dot_t(a, b):
    """(M, D) x (N, D) -> (M, N), contracting last dims (q.k^T pattern)."""
    return lax.dot_general(a, b, (((1,), (1,)), ((), ())),
                           preferred_element_type=jnp.float32)


def _linear(x, w, b, relu=False):
    y = jnp.dot(x, w, preferred_element_type=jnp.float32) + b
    if relu:
        y = jnp.maximum(y, 0.0)
    return y


def _batched(*dims):
    n = len(dims)
    return pl.BlockSpec((1,) + dims, lambda b, _n=n: (b,) + (0,) * _n)


def _const(*dims):
    n = len(dims)
    return pl.BlockSpec(dims, lambda b, _n=n: (0,) * _n)


# --------------------- fully-fused segmentor kernel ------------------------- #

def _fused_segmentor_kernel(
        x0_ref, cond_ref, p1_ref, p2_ref,
        fw_ref, fb_ref, wm_ref, bm_ref, qe_ref,
        wq_ref, bq_ref, wk_ref, bk_ref, wv_ref, bv_ref, wo_ref, bo_ref,
        w1_ref, b1_ref, w2_ref, b2_ref,
        mm1w_ref, mm1b_ref, mm2w_ref, mm2b_ref,
        clsw_ref, clsb_ref,
        mlog_ref, cls_ref,
        *, num_layers):
    # ---------------- FPN + pixel-decoder preamble (VMEM resident) -----------
    x0 = x0_ref[0]                                        # (S0, Cb)
    cond = cond_ref[0]                                    # (1, D)

    # 2x2 average pooling as matmuls against constant pooling matrices; the
    # pooled pyramids never touch HBM and no strided reshapes are needed.
    x1 = jnp.dot(p1_ref[...], x0, preferred_element_type=jnp.float32)   # (S1, Cb)
    x2 = jnp.dot(p2_ref[...], x1, preferred_element_type=jnp.float32)   # (S2, Cb)

    # TODO(synk): exact FeaturePyramid architecture not provided; pooled
    #             pyramid with per-scale pointwise projection stands in.
    s0 = _linear(x0, fw_ref[0], fb_ref[0], relu=True)     # (S0, D)
    s1 = _linear(x1, fw_ref[1], fb_ref[1], relu=True)     # (S1, D)
    s2 = _linear(x2, fw_ref[2], fb_ref[2], relu=True)     # (S2, D)

    mask_feat = _linear(s0, wm_ref[...], bm_ref[...])     # (S0, D), loop-invariant

    # TODO(synk): real conditional-query mixing inside PixelDecoder is
    #             unspecified; broadcast-add to the memories is a stand-in.
    mems = (s0 + cond, s1 + cond, s2 + cond)

    # ---------------- Mask2Former transformer decoder ------------------------
    # TODO(synk): single-head, unmasked cross-attention; the reference decoder
    #             is multi-head and masks attention with the previous layer's
    #             thresholded mask prediction.
    x = qe_ref[...]                                       # (Q, D)
    for li in range(num_layers):                          # static unroll (L small)
        mem = mems[li % len(mems)]

        qp = _linear(x, wq_ref[li], bq_ref[li])           # scale pre-folded in wq
        kp = _linear(mem, wk_ref[li], bk_ref[li])
        vp = _linear(mem, wv_ref[li], bv_ref[li])

        s = _dot_t(qp, kp)                                # (Q, S)
        s = s - jnp.max(s, axis=-1, keepdims=True)
        p = jnp.exp(s)
        p = p * pl.reciprocal(jnp.sum(p, axis=-1, keepdims=True), approx=False)
        attn = jnp.dot(p, vp, preferred_element_type=jnp.float32)     # (Q, D)
        attn = _linear(attn, wo_ref[li], bo_ref[li])

        x = _layer_norm(x + attn)

        ff = _linear(x, w1_ref[li], b1_ref[li], relu=True)            # (Q, 4D)
        ff = _linear(ff, w2_ref[li], b2_ref[li])                      # (Q, D)
        x = _layer_norm(x + ff)

        # per-layer mask prediction: MLP(query) . mask_features^T -> (Q, HW)
        me = _linear(x, mm1w_ref[...], mm1b_ref[...], relu=True)
        me = _linear(me, mm2w_ref[...], mm2b_ref[...])                # (Q, D)
        mlog_ref[0, li] = _dot_t(me, mask_feat).astype(mlog_ref.dtype)

        # class head padded to 128 lanes => unmasked lane-dense store
        cls_ref[0, li] = _linear(x, clsw_ref[...],
                                 clsb_ref[...]).astype(cls_ref.dtype)


def fused_segmentor(x0, cond, p1, p2, params):
    """One pallas_call for the whole segmentor forward.

    x0: (B, H*W, Cb) channels-last tokens, cond: (B, 1, D).
    Returns mask logits (B, L, Q, HW) and padded class logits (B, L, Q, 128).
    """
    B, S0, Cb = x0.shape
    S1, S2 = p1.shape[0], p2.shape[0]
    D = params["query_embed"].shape[1]
    Q = params["query_embed"].shape[0]
    L = params["wq"].shape[0]
    cls_pad = params["cls_w"].shape[1]

    return pl.pallas_call(
        functools.partial(_fused_segmentor_kernel, num_layers=L),
        out_shape=(
            jax.ShapeDtypeStruct((B, L, Q, S0), jnp.float32),
            jax.ShapeDtypeStruct((B, L, Q, cls_pad), jnp.float32),
        ),
        grid=(B,),
        in_specs=[
            _batched(S0, Cb),            # x0
            _batched(1, D),              # conditional query
            _const(S1, S0),              # pooling matrix level 0 -> 1
            _const(S2, S1),              # pooling matrix level 1 -> 2
            _const(3, Cb, D),            # fpn_w (stacked)
            _const(3, 1, D),             # fpn_b
            _const(D, D),                # maskfeat_w
            _const(1, D),                # maskfeat_b
            _const(Q, D),                # query_embed
            _const(L, D, D), _const(L, 1, D),          # wq, bq (pre-scaled)
            _const(L, D, D), _const(L, 1, D),          # wk, bk
            _const(L, D, D), _const(L, 1, D),          # wv, bv
            _const(L, D, D), _const(L, 1, D),          # wo, bo
            _const(L, D, 4 * D), _const(L, 1, 4 * D),  # w1, b1
            _const(L, 4 * D, D), _const(L, 1, D),      # w2, b2
            _const(D, D), _const(1, D),                # maskmlp1
            _const(D, D), _const(1, D),                # maskmlp2
            _const(D, cls_pad), _const(1, cls_pad),    # class head (padded)
        ],
        out_specs=(
            _batched(L, Q, S0),
            _batched(L, Q, cls_pad),
        ),
        compiler_params=pltpu.CompilerParams(
            dimension_semantics=("parallel",)),   # dual-TC batch split on v7x
    )(x0, cond, p1, p2,
      params["fpn_w"], params["fpn_b"],
      params["maskfeat_w"], params["maskfeat_b"], params["query_embed"],
      params["wq"], params["bq"], params["wk"], params["bk"],
      params["wv"], params["bv"], params["wo"], params["bo"],
      params["w1"], params["b1"], params["w2"], params["b2"],
      params["maskmlp_w1"], params["maskmlp_b1"],
      params["maskmlp_w2"], params["maskmlp_b2"],
      params["cls_w"], params["cls_b"])


# --------------------------- constant pooling matrices ----------------------- #

@functools.lru_cache(maxsize=None)
def _pool_matrix(H, W):
    """(H//2 * W//2, H*W) matrix implementing 2x2 average pooling of a
    row-major flattened (H, W) grid."""
    Ho, Wo = H // 2, W // 2
    P = np.zeros((Ho * Wo, H * W), np.float32)
    for h in range(Ho):
        for w in range(Wo):
            o = h * Wo + w
            for dh in (0, 1):
                for dw in (0, 1):
                    P[o, (2 * h + dh) * W + (2 * w + dw)] = 0.25
    return jnp.asarray(P)


# --------------------------- parameter creation ------------------------------ #

CFG = dict(
    batch=2,
    backbone_width=32,     # config.backbone_config.width
    spatial=16,            # H = W
    feature_size=32,       # mask2former_config.feature_size == hidden_dim
    num_queries=8,
    num_labels=3,          # class predictor outputs num_labels + 1
    decoder_layers=3,
    initializer_range=0.02,
    enable_conditional_queries=True,
)


def init_params(key, cfg):
    D = cfg["feature_size"]
    Cb = cfg["backbone_width"]
    Q = cfg["num_queries"]
    L = cfg["decoder_layers"]
    ncls = cfg["num_labels"] + 1
    assert ncls <= CLS_PAD_LANES
    std = cfg["initializer_range"]
    scale = 1.0 / math.sqrt(D)     # attention scale, folded into wq at init

    keys = iter(jax.random.split(key, 64))

    def nrm(shape):
        return jax.random.normal(next(keys), shape, jnp.float32) * std

    # class head zero-padded to 128 lanes (lane-dense stores); wrapper slices
    cls_w = jnp.zeros((D, CLS_PAD_LANES), jnp.float32).at[:, :ncls].set(nrm((D, ncls)))
    cls_b = jnp.zeros((1, CLS_PAD_LANES), jnp.float32)

    params = {
        "num_classes": ncls,
        # nn.ParameterList([torch.randn(feature_size) * initializer_range] * 2)
        "label_emb": [nrm((D,)), nrm((D,))],
        # FeaturePyramid: per-scale 1x1 projection of backbone features (stacked)
        "fpn_w": jnp.stack([nrm((Cb, D)) for _ in range(3)]),
        "fpn_b": jnp.zeros((3, 1, D), jnp.float32),
        # PixelDecoder: mask-feature projection (finest scale)
        "maskfeat_w": nrm((D, D)),
        "maskfeat_b": jnp.zeros((1, D), jnp.float32),
        # Mask2Former decoder: learned queries
        "query_embed": nrm((Q, D)),
        # shared mask-embedding MLP
        "maskmlp_w1": nrm((D, D)), "maskmlp_b1": jnp.zeros((1, D), jnp.float32),
        "maskmlp_w2": nrm((D, D)), "maskmlp_b2": jnp.zeros((1, D), jnp.float32),
        # class_predictor = nn.Linear(hidden_dim, num_labels + 1), lane-padded
        "cls_w": cls_w, "cls_b": cls_b,
        # layer-stacked decoder weights; 1/sqrt(D) pre-folded into wq/bq at
        # init time (weight pre-scaling at init, not a per-call wrapper op).
        "wq": jnp.stack([nrm((D, D)) for _ in range(L)]) * scale,
        "bq": jnp.zeros((L, 1, D), jnp.float32),
        "wk": jnp.stack([nrm((D, D)) for _ in range(L)]),
        "bk": jnp.zeros((L, 1, D), jnp.float32),
        "wv": jnp.stack([nrm((D, D)) for _ in range(L)]),
        "bv": jnp.zeros((L, 1, D), jnp.float32),
        "wo": jnp.stack([nrm((D, D)) for _ in range(L)]),
        "bo": jnp.zeros((L, 1, D), jnp.float32),
        "w1": jnp.stack([nrm((D, 4 * D)) for _ in range(L)]),
        "b1": jnp.zeros((L, 1, 4 * D), jnp.float32),
        "w2": jnp.stack([nrm((4 * D, D)) for _ in range(L)]),
        "b2": jnp.zeros((L, 1, D), jnp.float32),
    }
    return params


# ------------------------------ forward pass --------------------------------- #

def loupe_segmentor_forward(params, features_nchw, pseudo_labels=None):
    """Mirrors LoupeSegmentor.forward (inference path, no labels => no loss)."""
    B, Cb, H, W = features_nchw.shape
    D = params["query_embed"].shape[1]
    Q = params["query_embed"].shape[0]
    L = params["wq"].shape[0]
    ncls = params["num_classes"]

    # NCHW -> channels-last token layout (channels map to TPU lanes)
    x0 = jnp.transpose(features_nchw, (0, 2, 3, 1)).reshape(B, H * W, Cb)

    # conditional queries from label embeddings
    if CFG["enable_conditional_queries"] and pseudo_labels is not None:
        plab = pseudo_labels[:, None].astype(jnp.float32)               # (B, 1)
        cond = (params["label_emb"][1][None, :] * plab
                + params["label_emb"][0][None, :] * (1.0 - plab))[:, None, :]
    else:
        cond = jnp.zeros((B, 1, D), jnp.float32)

    # constant pooling matrices (host-built, cached)
    p1 = _pool_matrix(H, W)
    p2 = _pool_matrix(H // 2, W // 2)

    # the whole forward: one fused pallas_call
    mlog, cls_pad = fused_segmentor(x0, cond, p1, p2, params)
    masks_all = mlog.reshape(B, L, Q, H, W)          # consistent with H-major flatten
    cls_all = cls_pad[..., :ncls]                    # drop lane padding

    auxiliary_logits = [
        {"masks_queries_logits": masks_all[:, i],
         "class_queries_logits": cls_all[:, i]}
        for i in range(L - 1)
    ]

    # TODO(synk): LoupeSegLoss (Hungarian matching + dice/mask/CE losses) is not
    #             implemented; inference path (mask_labels=None) returns loss=None.
    return {
        "loss": None,
        "loss_dict": None,
        "class_queries_logits": cls_all[:, -1],      # (B, Q, num_labels + 1)
        "masks_queries_logits": masks_all[:, -1],    # (B, Q, H, W)
        "auxiliary_logits": auxiliary_logits,
    }


# ---------------------------------- main ------------------------------------- #

if __name__ == "__main__":
    key = jax.random.PRNGKey(0)
    k_param, k_feat = jax.random.split(key)

    params = init_params(k_param, CFG)

    B = CFG["batch"]
    Cb = CFG["backbone_width"]
    HW = CFG["spatial"]
    features = jax.random.normal(k_feat, (B, Cb, HW, HW), jnp.float32)  # NCHW
    pseudo_labels = jnp.array([1.0, 0.0], jnp.float32)

    out = loupe_segmentor_forward(params, features, pseudo_labels)

    cls = jax.block_until_ready(out["class_queries_logits"])
    msk = jax.block_until_ready(out["masks_queries_logits"])
    for aux in out["auxiliary_logits"]:
        jax.block_until_ready(aux["masks_queries_logits"])
        jax.block_until_ready(aux["class_queries_logits"])

    assert cls.shape == (B, CFG["num_queries"], CFG["num_labels"] + 1)
    assert msk.shape == (B, CFG["num_queries"], HW, HW)
    assert len(out["auxiliary_logits"]) == CFG["decoder_layers"] - 1
    assert bool(jnp.all(jnp.isfinite(cls))) and bool(jnp.all(jnp.isfinite(msk)))

    print("KERNEL_OK")
</pallas_src>

<mosaic_0001>
module attributes {stable_mosaic.version = 11 : i64} {
  func.func @_fused_segmentor_kernel(%arg0: i32, %arg1: memref<1x256x32xf32, #tpu.memory_space<vmem>>, %arg2: memref<1x1x32xf32, #tpu.memory_space<vmem>>, %arg3: memref<64x256xf32, #tpu.memory_space<vmem>>, %arg4: memref<16x64xf32, #tpu.memory_space<vmem>>, %arg5: memref<3x32x32xf32, #tpu.memory_space<vmem>>, %arg6: memref<3x1x32xf32, #tpu.memory_space<vmem>>, %arg7: memref<32x32xf32, #tpu.memory_space<vmem>>, %arg8: memref<1x32xf32, #tpu.memory_space<vmem>>, %arg9: memref<8x32xf32, #tpu.memory_space<vmem>>, %arg10: memref<3x32x32xf32, #tpu.memory_space<vmem>>, %arg11: memref<3x1x32xf32, #tpu.memory_space<vmem>>, %arg12: memref<3x32x32xf32, #tpu.memory_space<vmem>>, %arg13: memref<3x1x32xf32, #tpu.memory_space<vmem>>, %arg14: memref<3x32x32xf32, #tpu.memory_space<vmem>>, %arg15: memref<3x1x32xf32, #tpu.memory_space<vmem>>, %arg16: memref<3x32x32xf32, #tpu.memory_space<vmem>>, %arg17: memref<3x1x32xf32, #tpu.memory_space<vmem>>, %arg18: memref<3x32x128xf32, #tpu.memory_space<vmem>>, %arg19: memref<3x1x128xf32, #tpu.memory_space<vmem>>, %arg20: memref<3x128x32xf32, #tpu.memory_space<vmem>>, %arg21: memref<3x1x32xf32, #tpu.memory_space<vmem>>, %arg22: memref<32x32xf32, #tpu.memory_space<vmem>>, %arg23: memref<1x32xf32, #tpu.memory_space<vmem>>, %arg24: memref<32x32xf32, #tpu.memory_space<vmem>>, %arg25: memref<1x32xf32, #tpu.memory_space<vmem>>, %arg26: memref<32x128xf32, #tpu.memory_space<vmem>>, %arg27: memref<1x128xf32, #tpu.memory_space<vmem>>, %arg28: memref<1x3x8x256xf32, #tpu.memory_space<vmem>>, %arg29: memref<1x3x8x128xf32, #tpu.memory_space<vmem>>) attributes {dimension_semantics = [#tpu.dimension_semantics<parallel>], iteration_bounds = array<i64: 2>, scalar_prefetch = 0 : i64, scratch_operands = 0 : i64, tpu.core_type = #tpu.core_type<tc>, window_params = [{transform_indices = @transform_0, window_bounds = array<i64: 1, 256, 32>}, {transform_indices = @transform_1, window_bounds = array<i64: 1, 1, 32>}, {pipeline_mode = #tpu.pipeline_mode<synchronous>, transform_indices = @transform_2, window_bounds = array<i64: 64, 256>}, {pipeline_mode = #tpu.pipeline_mode<synchronous>, transform_indices = @transform_3, window_bounds = array<i64: 16, 64>}, {pipeline_mode = #tpu.pipeline_mode<synchronous>, transform_indices = @transform_4, window_bounds = array<i64: 3, 32, 32>}, {pipeline_mode = #tpu.pipeline_mode<synchronous>, transform_indices = @transform_5, window_bounds = array<i64: 3, 1, 32>}, {pipeline_mode = #tpu.pipeline_mode<synchronous>, transform_indices = @transform_6, window_bounds = array<i64: 32, 32>}, {pipeline_mode = #tpu.pipeline_mode<synchronous>, transform_indices = @transform_7, window_bounds = array<i64: 1, 32>}, {pipeline_mode = #tpu.pipeline_mode<synchronous>, transform_indices = @transform_8, window_bounds = array<i64: 8, 32>}, {pipeline_mode = #tpu.pipeline_mode<synchronous>, transform_indices = @transform_9, window_bounds = array<i64: 3, 32, 32>}, {pipeline_mode = #tpu.pipeline_mode<synchronous>, transform_indices = @transform_10, window_bounds = array<i64: 3, 1, 32>}, {pipeline_mode = #tpu.pipeline_mode<synchronous>, transform_indices = @transform_11, window_bounds = array<i64: 3, 32, 32>}, {pipeline_mode = #tpu.pipeline_mode<synchronous>, transform_indices = @transform_12, window_bounds = array<i64: 3, 1, 32>}, {pipeline_mode = #tpu.pipeline_mode<synchronous>, transform_indices = @transform_13, window_bounds = array<i64: 3, 32, 32>}, {pipeline_mode = #tpu.pipeline_mode<synchronous>, transform_indices = @transform_14, window_bounds = array<i64: 3, 1, 32>}, {pipeline_mode = #tpu.pipeline_mode<synchronous>, transform_indices = @transform_15, window_bounds = array<i64: 3, 32, 32>}, {pipeline_mode = #tpu.pipeline_mode<synchronous>, transform_indices = @transform_16, window_bounds = array<i64: 3, 1, 32>}, {pipeline_mode = #tpu.pipeline_mode<synchronous>, transform_indices = @transform_17, window_bounds = array<i64: 3, 32, 128>}, {pipeline_mode = #tpu.pipeline_mode<synchronous>, transform_indices = @transform_18, window_bounds = array<i64: 3, 1, 128>}, {pipeline_mode = #tpu.pipeline_mode<synchronous>, transform_indices = @transform_19, window_bounds = array<i64: 3, 128, 32>}, {pipeline_mode = #tpu.pipeline_mode<synchronous>, transform_indices = @transform_20, window_bounds = array<i64: 3, 1, 32>}, {pipeline_mode = #tpu.pipeline_mode<synchronous>, transform_indices = @transform_21, window_bounds = array<i64: 32, 32>}, {pipeline_mode = #tpu.pipeline_mode<synchronous>, transform_indices = @transform_22, window_bounds = array<i64: 1, 32>}, {pipeline_mode = #tpu.pipeline_mode<synchronous>, transform_indices = @transform_23, window_bounds = array<i64: 32, 32>}, {pipeline_mode = #tpu.pipeline_mode<synchronous>, transform_indices = @transform_24, window_bounds = array<i64: 1, 32>}, {pipeline_mode = #tpu.pipeline_mode<synchronous>, transform_indices = @transform_25, window_bounds = array<i64: 32, 128>}, {pipeline_mode = #tpu.pipeline_mode<synchronous>, transform_indices = @transform_26, window_bounds = array<i64: 1, 128>}, {transform_indices = @transform_27, window_bounds = array<i64: 1, 3, 8, 256>}, {transform_indices = @transform_28, window_bounds = array<i64: 1, 3, 8, 128>}]} {
    %c0 = arith.constant 0 : index
    %c0_0 = arith.constant 0 : index
    %c0_1 = arith.constant 0 : index
    %0 = vector.load %arg1[%c0, %c0_0, %c0_1] : memref<1x256x32xf32, #tpu.memory_space<vmem>>, vector<1x256x32xf32>
    %1 = vector.shape_cast %0 : vector<1x256x32xf32> to vector<256x32xf32>
    %c0_2 = arith.constant 0 : index
    %c0_3 = arith.constant 0 : index
    %c0_4 = arith.constant 0 : index
    %2 = vector.load %arg2[%c0_2, %c0_3, %c0_4] : memref<1x1x32xf32, #tpu.memory_space<vmem>>, vector<1x1x32xf32>
    %3 = vector.shape_cast %2 : vector<1x1x32xf32> to vector<1x32xf32>
    %c0_5 = arith.constant 0 : index
    %c0_6 = arith.constant 0 : index
    %4 = vector.load %arg3[%c0_5, %c0_6] : memref<64x256xf32, #tpu.memory_space<vmem>>, vector<64x256xf32>
    %cst = arith.constant dense<0.000000e+00> : vector<64x32xf32>
    %5 = tpu.matmul %4, %1, %cst {dimension_numbers = #tpu.dot_dimension_numbers<[1], [0], [0], [1], [0, 0, 1, 1], [], []>} : vector<64x256xf32>, vector<256x32xf32>, vector<64x32xf32> -> vector<64x32xf32>
    %c0_7 = arith.constant 0 : index
    %c0_8 = arith.constant 0 : index
    %6 = vector.load %arg4[%c0_7, %c0_8] : memref<16x64xf32, #tpu.memory_space<vmem>>, vector<16x64xf32>
    %cst_9 = arith.constant dense<0.000000e+00> : vector<16x32xf32>
    %7 = tpu.matmul %6, %5, %cst_9 {dimension_numbers = #tpu.dot_dimension_numbers<[1], [0], [0], [1], [0, 0, 1, 1], [], []>} : vector<16x64xf32>, vector<64x32xf32>, vector<16x32xf32> -> vector<16x32xf32>
    %c0_10 = arith.constant 0 : index
    %c0_11 = arith.constant 0 : index
    %c0_12 = arith.constant 0 : index
    %8 = vector.load %arg5[%c0_10, %c0_11, %c0_12] : memref<3x32x32xf32, #tpu.memory_space<vmem>>, vector<1x32x32xf32>
    %9 = vector.shape_cast %8 : vector<1x32x32xf32> to vector<32x32xf32>
    %c0_13 = arith.constant 0 : index
    %c0_14 = arith.constant 0 : index
    %c0_15 = arith.constant 0 : index
    %10 = vector.load %arg6[%c0_13, %c0_14, %c0_15] : memref<3x1x32xf32, #tpu.memory_space<vmem>>, vector<1x1x32xf32>
    %11 = vector.shape_cast %10 : vector<1x1x32xf32> to vector<1x32xf32>
    %cst_16 = arith.constant dense<0.000000e+00> : vector<256x32xf32>
    %12 = tpu.matmul %1, %9, %cst_16 {dimension_numbers = #tpu.dot_dimension_numbers<[1], [0], [0], [1], [0, 0, 1, 1], [], []>} : vector<256x32xf32>, vector<32x32xf32>, vector<256x32xf32> -> vector<256x32xf32>
    %13 = vector.broadcast %11 : vector<1x32xf32> to vector<256x32xf32>
    %14 = arith.addf %12, %13 : vector<256x32xf32>
    %cst_17 = arith.constant 0.000000e+00 : f32
    %15 = vector.broadcast %cst_17 : f32 to vector<256x32xf32>
    %16 = arith.maximumf %14, %15 : vector<256x32xf32>
    %c1 = arith.constant 1 : index
    %c0_18 = arith.constant 0 : index
    %c0_19 = arith.constant 0 : index
    %17 = vector.load %arg5[%c1, %c0_18, %c0_19] : memref<3x32x32xf32, #tpu.memory_space<vmem>>, vector<1x32x32xf32>
    %18 = vector.shape_cast %17 : vector<1x32x32xf32> to vector<32x32xf32>
    %c1_20 = arith.constant 1 : index
    %c0_21 = arith.constant 0 : index
    %c0_22 = arith.constant 0 : index
    %19 = vector.load %arg6[%c1_20, %c0_21, %c0_22] : memref<3x1x32xf32, #tpu.memory_space<vmem>>, vector<1x1x32xf32>
    %20 = vector.shape_cast %19 : vector<1x1x32xf32> to vector<1x32xf32>
    %cst_23 = arith.constant dense<0.000000e+00> : vector<64x32xf32>
    %21 = tpu.matmul %5, %18, %cst_23 {dimension_numbers = #tpu.dot_dimension_numbers<[1], [0], [0], [1], [0, 0, 1, 1], [], []>} : vector<64x32xf32>, vector<32x32xf32>, vector<64x32xf32> -> vector<64x32xf32>
    %22 = vector.broadcast %20 : vector<1x32xf32> to vector<64x32xf32>
    %23 = arith.addf %21, %22 : vector<64x32xf32>
    %cst_24 = arith.constant 0.000000e+00 : f32
    %24 = vector.broadcast %cst_24 : f32 to vector<64x32xf32>
    %25 = arith.maximumf %23, %24 : vector<64x32xf32>
    %c2 = arith.constant 2 : index
    %c0_25 = arith.constant 0 : index
    %c0_26 = arith.constant 0 : index
    %26 = vector.load %arg5[%c2, %c0_25, %c0_26] : memref<3x32x32xf32, #tpu.memory_space<vmem>>, vector<1x32x32xf32>
    %27 = vector.shape_cast %26 : vector<1x32x32xf32> to vector<32x32xf32>
    %c2_27 = arith.constant 2 : index
    %c0_28 = arith.constant 0 : index
    %c0_29 = arith.constant 0 : index
    %28 = vector.load %arg6[%c2_27, %c0_28, %c0_29] : memref<3x1x32xf32, #tpu.memory_space<vmem>>, vector<1x1x32xf32>
    %29 = vector.shape_cast %28 : vector<1x1x32xf32> to vector<1x32xf32>
    %cst_30 = arith.constant dense<0.000000e+00> : vector<16x32xf32>
    %30 = tpu.matmul %7, %27, %cst_30 {dimension_numbers = #tpu.dot_dimension_numbers<[1], [0], [0], [1], [0, 0, 1, 1], [], []>} : vector<16x32xf32>, vector<32x32xf32>, vector<16x32xf32> -> vector<16x32xf32>
    %31 = vector.broadcast %29 : vector<1x32xf32> to vector<16x32xf32>
    %32 = arith.addf %30, %31 : vector<16x32xf32>
    %cst_31 = arith.constant 0.000000e+00 : f32
    %33 = vector.broadcast %cst_31 : f32 to vector<16x32xf32>
    %34 = arith.maximumf %32, %33 : vector<16x32xf32>
    %c0_32 = arith.constant 0 : index
    %c0_33 = arith.constant 0 : index
    %35 = vector.load %arg7[%c0_32, %c0_33] : memref<32x32xf32, #tpu.memory_space<vmem>>, vector<32x32xf32>
    %c0_34 = arith.constant 0 : index
    %c0_35 = arith.constant 0 : index
    %36 = vector.load %arg8[%c0_34, %c0_35] : memref<1x32xf32, #tpu.memory_space<vmem>>, vector<1x32xf32>
    %cst_36 = arith.constant dense<0.000000e+00> : vector<256x32xf32>
    %37 = tpu.matmul %16, %35, %cst_36 {dimension_numbers = #tpu.dot_dimension_numbers<[1], [0], [0], [1], [0, 0, 1, 1], [], []>} : vector<256x32xf32>, vector<32x32xf32>, vector<256x32xf32> -> vector<256x32xf32>
    %38 = vector.broadcast %36 : vector<1x32xf32> to vector<256x32xf32>
    %39 = arith.addf %37, %38 : vector<256x32xf32>
    %40 = vector.broadcast %3 : vector<1x32xf32> to vector<256x32xf32>
    %41 = arith.addf %16, %40 : vector<256x32xf32>
    %42 = vector.broadcast %3 : vector<1x32xf32> to vector<64x32xf32>
    %43 = arith.addf %25, %42 : vector<64x32xf32>
    %44 = vector.broadcast %3 : vector<1x32xf32> to vector<16x32xf32>
    %45 = arith.addf %34, %44 : vector<16x32xf32>
    %c0_37 = arith.constant 0 : index
    %c0_38 = arith.constant 0 : index
    %46 = vector.load %arg9[%c0_37, %c0_38] : memref<8x32xf32, #tpu.memory_space<vmem>>, vector<8x32xf32>
    %c0_39 = arith.constant 0 : index
    %c0_40 = arith.constant 0 : index
    %c0_41 = arith.constant 0 : index
    %47 = vector.load %arg10[%c0_39, %c0_40, %c0_41] : memref<3x32x32xf32, #tpu.memory_space<vmem>>, vector<1x32x32xf32>
    %48 = vector.shape_cast %47 : vector<1x32x32xf32> to vector<32x32xf32>
    %c0_42 = arith.constant 0 : index
    %c0_43 = arith.constant 0 : index
    %c0_44 = arith.constant 0 : index
    %49 = vector.load %arg11[%c0_42, %c0_43, %c0_44] : memref<3x1x32xf32, #tpu.memory_space<vmem>>, vector<1x1x32xf32>
    %50 = vector.shape_cast %49 : vector<1x1x32xf32> to vector<1x32xf32>
    %cst_45 = arith.constant dense<0.000000e+00> : vector<8x32xf32>
    %51 = tpu.matmul %46, %48, %cst_45 {dimension_numbers = #tpu.dot_dimension_numbers<[1], [0], [0], [1], [0, 0, 1, 1], [], []>} : vector<8x32xf32>, vector<32x32xf32>, vector<8x32xf32> -> vector<8x32xf32>
    %52 = vector.broadcast %50 : vector<1x32xf32> to vector<8x32xf32>
    %53 = arith.addf %51, %52 : vector<8x32xf32>
    %c0_46 = arith.constant 0 : index
    %c0_47 = arith.constant 0 : index
    %c0_48 = arith.constant 0 : index
    %54 = vector.load %arg12[%c0_46, %c0_47, %c0_48] : memref<3x32x32xf32, #tpu.memory_space<vmem>>, vector<1x32x32xf32>
    %55 = vector.shape_cast %54 : vector<1x32x32xf32> to vector<32x32xf32>
    %c0_49 = arith.constant 0 : index
    %c0_50 = arith.constant 0 : index
    %c0_51 = arith.constant 0 : index
    %56 = vector.load %arg13[%c0_49, %c0_50, %c0_51] : memref<3x1x32xf32, #tpu.memory_space<vmem>>, vector<1x1x32xf32>
    %57 = vector.shape_cast %56 : vector<1x1x32xf32> to vector<1x32xf32>
    %cst_52 = arith.constant dense<0.000000e+00> : vector<256x32xf32>
    %58 = tpu.matmul %41, %55, %cst_52 {dimension_numbers = #tpu.dot_dimension_numbers<[1], [0], [0], [1], [0, 0, 1, 1], [], []>} : vector<256x32xf32>, vector<32x32xf32>, vector<256x32xf32> -> vector<256x32xf32>
    %59 = vector.broadcast %57 : vector<1x32xf32> to vector<256x32xf32>
    %60 = arith.addf %58, %59 : vector<256x32xf32>
    %c0_53 = arith.constant 0 : index
    %c0_54 = arith.constant 0 : index
    %c0_55 = arith.constant 0 : index
    %61 = vector.load %arg14[%c0_53, %c0_54, %c0_55] : memref<3x32x32xf32, #tpu.memory_space<vmem>>, vector<1x32x32xf32>
    %62 = vector.shape_cast %61 : vector<1x32x32xf32> to vector<32x32xf32>
    %c0_56 = arith.constant 0 : index
    %c0_57 = arith.constant 0 : index
    %c0_58 = arith.constant 0 : index
    %63 = vector.load %arg15[%c0_56, %c0_57, %c0_58] : memref<3x1x32xf32, #tpu.memory_space<vmem>>, vector<1x1x32xf32>
    %64 = vector.shape_cast %63 : vector<1x1x32xf32> to vector<1x32xf32>
    %cst_59 = arith.constant dense<0.000000e+00> : vector<256x32xf32>
    %65 = tpu.matmul %41, %62, %cst_59 {dimension_numbers = #tpu.dot_dimension_numbers<[1], [0], [0], [1], [0, 0, 1, 1], [], []>} : vector<256x32xf32>, vector<32x32xf32>, vector<256x32xf32> -> vector<256x32xf32>
    %66 = vector.broadcast %64 : vector<1x32xf32> to vector<256x32xf32>
    %67 = arith.addf %65, %66 : vector<256x32xf32>
    %cst_60 = arith.constant dense<0.000000e+00> : vector<8x256xf32>
    %68 = tpu.matmul %53, %60, %cst_60 {dimension_numbers = #tpu.dot_dimension_numbers<[1], [1], [0], [0], [0, 0, 1, 0], [], []>} : vector<8x32xf32>, vector<256x32xf32>, vector<8x256xf32> -> vector<8x256xf32>
    %cst_61 = arith.constant dense<0xFF800000> : vector<8xf32>
    %69 = vector.multi_reduction <maximumf>, %68, %cst_61 [1] : vector<8x256xf32> to vector<8xf32>
    %70 = vector.shape_cast %69 : vector<8xf32> to vector<8x1xf32>
    %71 = vector.broadcast %70 : vector<8x1xf32> to vector<8x256xf32>
    %72 = arith.subf %68, %71 : vector<8x256xf32>
    %73 = math.exp %72 : vector<8x256xf32>
    %cst_62 = arith.constant dense<0.000000e+00> : vector<8xf32>
    %74 = vector.multi_reduction <add>, %73, %cst_62 [1] : vector<8x256xf32> to vector<8xf32>
    %75 = vector.shape_cast %74 : vector<8xf32> to vector<8x1xf32>
    %76 = tpu.reciprocal %75 : vector<8x1xf32> -> vector<8x1xf32>
    %77 = vector.broadcast %76 : vector<8x1xf32> to vector<8x256xf32>
    %78 = arith.mulf %73, %77 : vector<8x256xf32>
    %cst_63 = arith.constant dense<0.000000e+00> : vector<8x32xf32>
    %79 = tpu.matmul %78, %67, %cst_63 {dimension_numbers = #tpu.dot_dimension_numbers<[1], [0], [0], [1], [0, 0, 1, 1], [], []>} : vector<8x256xf32>, vector<256x32xf32>, vector<8x32xf32> -> vector<8x32xf32>
    %c0_64 = arith.constant 0 : index
    %c0_65 = arith.constant 0 : index
    %c0_66 = arith.constant 0 : index
    %80 = vector.load %arg16[%c0_64, %c0_65, %c0_66] : memref<3x32x32xf32, #tpu.memory_space<vmem>>, vector<1x32x32xf32>
    %81 = vector.shape_cast %80 : vector<1x32x32xf32> to vector<32x32xf32>
    %c0_67 = arith.constant 0 : index
    %c0_68 = arith.constant 0 : index
    %c0_69 = arith.constant 0 : index
    %82 = vector.load %arg17[%c0_67, %c0_68, %c0_69] : memref<3x1x32xf32, #tpu.memory_space<vmem>>, vector<1x1x32xf32>
    %83 = vector.shape_cast %82 : vector<1x1x32xf32> to vector<1x32xf32>
    %cst_70 = arith.constant dense<0.000000e+00> : vector<8x32xf32>
    %84 = tpu.matmul %79, %81, %cst_70 {dimension_numbers = #tpu.dot_dimension_numbers<[1], [0], [0], [1], [0, 0, 1, 1], [], []>} : vector<8x32xf32>, vector<32x32xf32>, vector<8x32xf32> -> vector<8x32xf32>
    %85 = vector.broadcast %83 : vector<1x32xf32> to vector<8x32xf32>
    %86 = arith.addf %84, %85 : vector<8x32xf32>
    %87 = arith.addf %46, %86 : vector<8x32xf32>
    %cst_71 = arith.constant dense<0.000000e+00> : vector<8xf32>
    %88 = vector.multi_reduction <add>, %87, %cst_71 [1] : vector<8x32xf32> to vector<8xf32>
    %89 = vector.shape_cast %88 : vector<8xf32> to vector<8x1xf32>
    %cst_72 = arith.constant 3.200000e+01 : f32
    %90 = vector.broadcast %cst_72 : f32 to vector<8x1xf32>
    %91 = arith.divf %89, %90 : vector<8x1xf32>
    %92 = arith.mulf %87, %87 : vector<8x32xf32>
    %cst_73 = arith.constant dense<0.000000e+00> : vector<8xf32>
    %93 = vector.multi_reduction <add>, %92, %cst_73 [1] : vector<8x32xf32> to vector<8xf32>
    %94 = vector.shape_cast %93 : vector<8xf32> to vector<8x1xf32>
    %cst_74 = arith.constant 3.200000e+01 : f32
    %95 = vector.broadcast %cst_74 : f32 to vector<8x1xf32>
    %96 = arith.divf %94, %95 : vector<8x1xf32>
    %97 = arith.mulf %91, %91 : vector<8x1xf32>
    %98 = arith.subf %96, %97 : vector<8x1xf32>
    %cst_75 = arith.constant 0.000000e+00 : f32
    %99 = vector.broadcast %cst_75 : f32 to vector<8x1xf32>
    %100 = arith.maximumf %98, %99 : vector<8x1xf32>
    %101 = vector.broadcast %91 : vector<8x1xf32> to vector<8x32xf32>
    %102 = arith.subf %87, %101 : vector<8x32xf32>
    %cst_76 = arith.constant 9.99999974E-6 : f32
    %103 = vector.broadcast %cst_76 : f32 to vector<8x1xf32>
    %104 = arith.addf %100, %103 : vector<8x1xf32>
    %105 = math.rsqrt %104 : vector<8x1xf32>
    %106 = vector.broadcast %105 : vector<8x1xf32> to vector<8x32xf32>
    %107 = arith.mulf %102, %106 : vector<8x32xf32>
    %c0_77 = arith.constant 0 : index
    %c0_78 = arith.constant 0 : index
    %c0_79 = arith.constant 0 : index
    %108 = vector.load %arg18[%c0_77, %c0_78, %c0_79] : memref<3x32x128xf32, #tpu.memory_space<vmem>>, vector<1x32x128xf32>
    %109 = vector.shape_cast %108 : vector<1x32x128xf32> to vector<32x128xf32>
    %c0_80 = arith.constant 0 : index
    %c0_81 = arith.constant 0 : index
    %c0_82 = arith.constant 0 : index
    %110 = vector.load %arg19[%c0_80, %c0_81, %c0_82] : memref<3x1x128xf32, #tpu.memory_space<vmem>>, vector<1x1x128xf32>
    %111 = vector.shape_cast %110 : vector<1x1x128xf32> to vector<1x128xf32>
    %cst_83 = arith.constant dense<0.000000e+00> : vector<8x128xf32>
    %112 = tpu.matmul %107, %109, %cst_83 {dimension_numbers = #tpu.dot_dimension_numbers<[1], [0], [0], [1], [0, 0, 1, 1], [], []>} : vector<8x32xf32>, vector<32x128xf32>, vector<8x128xf32> -> vector<8x128xf32>
    %113 = vector.broadcast %111 : vector<1x128xf32> to vector<8x128xf32>
    %114 = arith.addf %112, %113 : vector<8x128xf32>
    %cst_84 = arith.constant 0.000000e+00 : f32
    %115 = vector.broadcast %cst_84 : f32 to vector<8x128xf32>
    %116 = arith.maximumf %114, %115 : vector<8x128xf32>
    %c0_85 = arith.constant 0 : index
    %c0_86 = arith.constant 0 : index
    %c0_87 = arith.constant 0 : index
    %117 = vector.load %arg20[%c0_85, %c0_86, %c0_87] : memref<3x128x32xf32, #tpu.memory_space<vmem>>, vector<1x128x32xf32>
    %118 = vector.shape_cast %117 : vector<1x128x32xf32> to vector<128x32xf32>
    %c0_88 = arith.constant 0 : index
    %c0_89 = arith.constant 0 : index
    %c0_90 = arith.constant 0 : index
    %119 = vector.load %arg21[%c0_88, %c0_89, %c0_90] : memref<3x1x32xf32, #tpu.memory_space<vmem>>, vector<1x1x32xf32>
    %120 = vector.shape_cast %119 : vector<1x1x32xf32> to vector<1x32xf32>
    %cst_91 = arith.constant dense<0.000000e+00> : vector<8x32xf32>
    %121 = tpu.matmul %116, %118, %cst_91 {dimension_numbers = #tpu.dot_dimension_numbers<[1], [0], [0], [1], [0, 0, 1, 1], [], []>} : vector<8x128xf32>, vector<128x32xf32>, vector<8x32xf32> -> vector<8x32xf32>
    %122 = vector.broadcast %120 : vector<1x32xf32> to vector<8x32xf32>
    %123 = arith.addf %121, %122 : vector<8x32xf32>
    %124 = arith.addf %107, %123 : vector<8x32xf32>
    %cst_92 = arith.constant dense<0.000000e+00> : vector<8xf32>
    %125 = vector.multi_reduction <add>, %124, %cst_92 [1] : vector<8x32xf32> to vector<8xf32>
    %126 = vector.shape_cast %125 : vector<8xf32> to vector<8x1xf32>
    %cst_93 = arith.constant 3.200000e+01 : f32
    %127 = vector.broadcast %cst_93 : f32 to vector<8x1xf32>
    %128 = arith.divf %126, %127 : vector<8x1xf32>
    %129 = arith.mulf %124, %124 : vector<8x32xf32>
    %cst_94 = arith.constant dense<0.000000e+00> : vector<8xf32>
    %130 = vector.multi_reduction <add>, %129, %cst_94 [1] : vector<8x32xf32> to vector<8xf32>
    %131 = vector.shape_cast %130 : vector<8xf32> to vector<8x1xf32>
    %cst_95 = arith.constant 3.200000e+01 : f32
    %132 = vector.broadcast %cst_95 : f32 to vector<8x1xf32>
    %133 = arith.divf %131, %132 : vector<8x1xf32>
    %134 = arith.mulf %128, %128 : vector<8x1xf32>
    %135 = arith.subf %133, %134 : vector<8x1xf32>
    %cst_96 = arith.constant 0.000000e+00 : f32
    %136 = vector.broadcast %cst_96 : f32 to vector<8x1xf32>
    %137 = arith.maximumf %135, %136 : vector<8x1xf32>
    %138 = vector.broadcast %128 : vector<8x1xf32> to vector<8x32xf32>
    %139 = arith.subf %124, %138 : vector<8x32xf32>
    %cst_97 = arith.constant 9.99999974E-6 : f32
    %140 = vector.broadcast %cst_97 : f32 to vector<8x1xf32>
    %141 = arith.addf %137, %140 : vector<8x1xf32>
    %142 = math.rsqrt %141 : vector<8x1xf32>
    %143 = vector.broadcast %142 : vector<8x1xf32> to vector<8x32xf32>
    %144 = arith.mulf %139, %143 : vector<8x32xf32>
    %c0_98 = arith.constant 0 : index
    %c0_99 = arith.constant 0 : index
    %145 = vector.load %arg22[%c0_98, %c0_99] : memref<32x32xf32, #tpu.memory_space<vmem>>, vector<32x32xf32>
    %c0_100 = arith.constant 0 : index
    %c0_101 = arith.constant 0 : index
    %146 = vector.load %arg23[%c0_100, %c0_101] : memref<1x32xf32, #tpu.memory_space<vmem>>, vector<1x32xf32>
    %cst_102 = arith.constant dense<0.000000e+00> : vector<8x32xf32>
    %147 = tpu.matmul %144, %145, %cst_102 {dimension_numbers = #tpu.dot_dimension_numbers<[1], [0], [0], [1], [0, 0, 1, 1], [], []>} : vector<8x32xf32>, vector<32x32xf32>, vector<8x32xf32> -> vector<8x32xf32>
    %148 = vector.broadcast %146 : vector<1x32xf32> to vector<8x32xf32>
    %149 = arith.addf %147, %148 : vector<8x32xf32>
    %cst_103 = arith.constant 0.000000e+00 : f32
    %150 = vector.broadcast %cst_103 : f32 to vector<8x32xf32>
    %151 = arith.maximumf %149, %150 : vector<8x32xf32>
    %c0_104 = arith.constant 0 : index
    %c0_105 = arith.constant 0 : index
    %152 = vector.load %arg24[%c0_104, %c0_105] : memref<32x32xf32, #tpu.memory_space<vmem>>, vector<32x32xf32>
    %c0_106 = arith.constant 0 : index
    %c0_107 = arith.constant 0 : index
    %153 = vector.load %arg25[%c0_106, %c0_107] : memref<1x32xf32, #tpu.memory_space<vmem>>, vector<1x32xf32>
    %cst_108 = arith.constant dense<0.000000e+00> : vector<8x32xf32>
    %154 = tpu.matmul %151, %152, %cst_108 {dimension_numbers = #tpu.dot_dimension_numbers<[1], [0], [0], [1], [0, 0, 1, 1], [], []>} : vector<8x32xf32>, vector<32x32xf32>, vector<8x32xf32> -> vector<8x32xf32>
    %155 = vector.broadcast %153 : vector<1x32xf32> to vector<8x32xf32>
    %156 = arith.addf %154, %155 : vector<8x32xf32>
    %cst_109 = arith.constant dense<0.000000e+00> : vector<8x256xf32>
    %157 = tpu.matmul %156, %39, %cst_109 {dimension_numbers = #tpu.dot_dimension_numbers<[1], [1], [0], [0], [0, 0, 1, 0], [], []>} : vector<8x32xf32>, vector<256x32xf32>, vector<8x256xf32> -> vector<8x256xf32>
    %c0_110 = arith.constant 0 : index
    %c0_111 = arith.constant 0 : index
    %c0_112 = arith.constant 0 : index
    %c0_113 = arith.constant 0 : index
    %158 = vector.load %arg28[%c0_110, %c0_111, %c0_112, %c0_113] : memref<1x3x8x256xf32, #tpu.memory_space<vmem>>, vector<1x1x8x256xf32>
    %159 = vector.shape_cast %158 : vector<1x1x8x256xf32> to vector<8x256xf32>
    %160 = vector.shape_cast %157 : vector<8x256xf32> to vector<1x1x8x256xf32>
    tpu.vector_store %arg28[%c0_110, %c0_111, %c0_112, %c0_113], %160 {strides = array<i32>} : memref<1x3x8x256xf32, #tpu.memory_space<vmem>>, vector<1x1x8x256xf32>,
    %c0_114 = arith.constant 0 : index
    %c0_115 = arith.constant 0 : index
    %161 = vector.load %arg26[%c0_114, %c0_115] : memref<32x128xf32, #tpu.memory_space<vmem>>, vector<32x128xf32>
    %c0_116 = arith.constant 0 : index
    %c0_117 = arith.constant 0 : index
    %162 = vector.load %arg27[%c0_116, %c0_117] : memref<1x128xf32, #tpu.memory_space<vmem>>, vector<1x128xf32>
    %cst_118 = arith.constant dense<0.000000e+00> : vector<8x128xf32>
    %163 = tpu.matmul %144, %161, %cst_118 {dimension_numbers = #tpu.dot_dimension_numbers<[1], [0], [0], [1], [0, 0, 1, 1], [], []>} : vector<8x32xf32>, vector<32x128xf32>, vector<8x128xf32> -> vector<8x128xf32>
    %164 = vector.broadcast %162 : vector<1x128xf32> to vector<8x128xf32>
    %165 = arith.addf %163, %164 : vector<8x128xf32>
    %c0_119 = arith.constant 0 : index
    %c0_120 = arith.constant 0 : index
    %c0_121 = arith.constant 0 : index
    %c0_122 = arith.constant 0 : index
    %166 = vector.load %arg29[%c0_119, %c0_120, %c0_121, %c0_122] : memref<1x3x8x128xf32, #tpu.memory_space<vmem>>, vector<1x1x8x128xf32>
    %167 = vector.shape_cast %166 : vector<1x1x8x128xf32> to vector<8x128xf32>
    %168 = vector.shape_cast %165 : vector<8x128xf32> to vector<1x1x8x128xf32>
    tpu.vector_store %arg29[%c0_119, %c0_120, %c0_121, %c0_122], %168 {strides = array<i32>} : memref<1x3x8x128xf32, #tpu.memory_space<vmem>>, vector<1x1x8x128xf32>,
    %c1_123 = arith.constant 1 : index
    %c0_124 = arith.constant 0 : index
    %c0_125 = arith.constant 0 : index
    %169 = vector.load %arg10[%c1_123, %c0_124, %c0_125] : memref<3x32x32xf32, #tpu.memory_space<vmem>>, vector<1x32x32xf32>
    %170 = vector.shape_cast %169 : vector<1x32x32xf32> to vector<32x32xf32>
    %c1_126 = arith.constant 1 : index
    %c0_127 = arith.constant 0 : index
    %c0_128 = arith.constant 0 : index
    %171 = vector.load %arg11[%c1_126, %c0_127, %c0_128] : memref<3x1x32xf32, #tpu.memory_space<vmem>>, vector<1x1x32xf32>
    %172 = vector.shape_cast %171 : vector<1x1x32xf32> to vector<1x32xf32>
    %cst_129 = arith.constant dense<0.000000e+00> : vector<8x32xf32>
    %173 = tpu.matmul %144, %170, %cst_129 {dimension_numbers = #tpu.dot_dimension_numbers<[1], [0], [0], [1], [0, 0, 1, 1], [], []>} : vector<8x32xf32>, vector<32x32xf32>, vector<8x32xf32> -> vector<8x32xf32>
    %174 = vector.broadcast %172 : vector<1x32xf32> to vector<8x32xf32>
    %175 = arith.addf %173, %174 : vector<8x32xf32>
    %c1_130 = arith.constant 1 : index
    %c0_131 = arith.constant 0 : index
    %c0_132 = arith.constant 0 : index
    %176 = vector.load %arg12[%c1_130, %c0_131, %c0_132] : memref<3x32x32xf32, #tpu.memory_space<vmem>>, vector<1x32x32xf32>
    %177 = vector.shape_cast %176 : vector<1x32x32xf32> to vector<32x32xf32>
    %c1_133 = arith.constant 1 : index
    %c0_134 = arith.constant 0 : index
    %c0_135 = arith.constant 0 : index
    %178 = vector.load %arg13[%c1_133, %c0_134, %c0_135] : memref<3x1x32xf32, #tpu.memory_space<vmem>>, vector<1x1x32xf32>
    %179 = vector.shape_cast %178 : vector<1x1x32xf32> to vector<1x32xf32>
    %cst_136 = arith.constant dense<0.000000e+00> : vector<64x32xf32>
    %180 = tpu.matmul %43, %177, %cst_136 {dimension_numbers = #tpu.dot_dimension_numbers<[1], [0], [0], [1], [0, 0, 1, 1], [], []>} : vector<64x32xf32>, vector<32x32xf32>, vector<64x32xf32> -> vector<64x32xf32>
    %181 = vector.broadcast %179 : vector<1x32xf32> to vector<64x32xf32>
    %182 = arith.addf %180, %181 : vector<64x32xf32>
    %c1_137 = arith.constant 1 : index
    %c0_138 = arith.constant 0 : index
    %c0_139 = arith.constant 0 : index
    %183 = vector.load %arg14[%c1_137, %c0_138, %c0_139] : memref<3x32x32xf32, #tpu.memory_space<vmem>>, vector<1x32x32xf32>
    %184 = vector.shape_cast %183 : vector<1x32x32xf32> to vector<32x32xf32>
    %c1_140 = arith.constant 1 : index
    %c0_141 = arith.constant 0 : index
    %c0_142 = arith.constant 0 : index
    %185 = vector.load %arg15[%c1_140, %c0_141, %c0_142] : memref<3x1x32xf32, #tpu.memory_space<vmem>>, vector<1x1x32xf32>
    %186 = vector.shape_cast %185 : vector<1x1x32xf32> to vector<1x32xf32>
    %cst_143 = arith.constant dense<0.000000e+00> : vector<64x32xf32>
    %187 = tpu.matmul %43, %184, %cst_143 {dimension_numbers = #tpu.dot_dimension_numbers<[1], [0], [0], [1], [0, 0, 1, 1], [], []>} : vector<64x32xf32>, vector<32x32xf32>, vector<64x32xf32> -> vector<64x32xf32>
    %188 = vector.broadcast %186 : vector<1x32xf32> to vector<64x32xf32>
    %189 = arith.addf %187, %188 : vector<64x32xf32>
    %cst_144 = arith.constant dense<0.000000e+00> : vector<8x64xf32>
    %190 = tpu.matmul %175, %182, %cst_144 {dimension_numbers = #tpu.dot_dimension_numbers<[1], [1], [0], [0], [0, 0, 1, 0], [], []>} : vector<8x32xf32>, vector<64x32xf32>, vector<8x64xf32> -> vector<8x64xf32>
    %cst_145 = arith.constant dense<0xFF800000> : vector<8xf32>
    %191 = vector.multi_reduction <maximumf>, %190, %cst_145 [1] : vector<8x64xf32> to vector<8xf32>
    %192 = vector.shape_cast %191 : vector<8xf32> to vector<8x1xf32>
    %193 = vector.broadcast %192 : vector<8x1xf32> to vector<8x64xf32>
    %194 = arith.subf %190, %193 : vector<8x64xf32>
    %195 = math.exp %194 : vector<8x64xf32>
    %cst_146 = arith.constant dense<0.000000e+00> : vector<8xf32>
    %196 = vector.multi_reduction <add>, %195, %cst_146 [1] : vector<8x64xf32> to vector<8xf32>
    %197 = vector.shape_cast %196 : vector<8xf32> to vector<8x1xf32>
    %198 = tpu.reciprocal %197 : vector<8x1xf32> -> vector<8x1xf32>
    %199 = vector.broadcast %198 : vector<8x1xf32> to vector<8x64xf32>
    %200 = arith.mulf %195, %199 : vector<8x64xf32>
    %cst_147 = arith.constant dense<0.000000e+00> : vector<8x32xf32>
    %201 = tpu.matmul %200, %189, %cst_147 {dimension_numbers = #tpu.dot_dimension_numbers<[1], [0], [0], [1], [0, 0, 1, 1], [], []>} : vector<8x64xf32>, vector<64x32xf32>, vector<8x32xf32> -> vector<8x32xf32>
    %c1_148 = arith.constant 1 : index
    %c0_149 = arith.constant 0 : index
    %c0_150 = arith.constant 0 : index
    %202 = vector.load %arg16[%c1_148, %c0_149, %c0_150] : memref<3x32x32xf32, #tpu.memory_space<vmem>>, vector<1x32x32xf32>
    %203 = vector.shape_cast %202 : vector<1x32x32xf32> to vector<32x32xf32>
    %c1_151 = arith.constant 1 : index
    %c0_152 = arith.constant 0 : index
    %c0_153 = arith.constant 0 : index
    %204 = vector.load %arg17[%c1_151, %c0_152, %c0_153] : memref<3x1x32xf32, #tpu.memory_space<vmem>>, vector<1x1x32xf32>
    %205 = vector.shape_cast %204 : vector<1x1x32xf32> to vector<1x32xf32>
    %cst_154 = arith.constant dense<0.000000e+00> : vector<8x32xf32>
    %206 = tpu.matmul %201, %203, %cst_154 {dimension_numbers = #tpu.dot_dimension_numbers<[1], [0], [0], [1], [0, 0, 1, 1], [], []>} : vector<8x32xf32>, vector<32x32xf32>, vector<8x32xf32> -> vector<8x32xf32>
    %207 = vector.broadcast %205 : vector<1x32xf32> to vector<8x32xf32>
    %208 = arith.addf %206, %207 : vector<8x32xf32>
    %209 = arith.addf %144, %208 : vector<8x32xf32>
    %cst_155 = arith.constant dense<0.000000e+00> : vector<8xf32>
    %210 = vector.multi_reduction <add>, %209, %cst_155 [1] : vector<8x32xf32> to vector<8xf32>
    %211 = vector.shape_cast %210 : vector<8xf32> to vector<8x1xf32>
    %cst_156 = arith.constant 3.200000e+01 : f32
    %212 = vector.broadcast %cst_156 : f32 to vector<8x1xf32>
    %213 = arith.divf %211, %212 : vector<8x1xf32>
    %214 = arith.mulf %209, %209 : vector<8x32xf32>
    %cst_157 = arith.constant dense<0.000000e+00> : vector<8xf32>
    %215 = vector.multi_reduction <add>, %214, %cst_157 [1] : vector<8x32xf32> to vector<8xf32>
    %216 = vector.shape_cast %215 : vector<8xf32> to vector<8x1xf32>
    %cst_158 = arith.constant 3.200000e+01 : f32
    %217 = vector.broadcast %cst_158 : f32 to vector<8x1xf32>
    %218 = arith.divf %216, %217 : vector<8x1xf32>
    %219 = arith.mulf %213, %213 : vector<8x1xf32>
    %220 = arith.subf %218, %219 : vector<8x1xf32>
    %cst_159 = arith.constant 0.000000e+00 : f32
    %221 = vector.broadcast %cst_159 : f32 to vector<8x1xf32>
    %222 = arith.maximumf %220, %221 : vector<8x1xf32>
    %223 = vector.broadcast %213 : vector<8x1xf32> to vector<8x32xf32>
    %224 = arith.subf %209, %223 : vector<8x32xf32>
    %cst_160 = arith.constant 9.99999974E-6 : f32
    %225 = vector.broadcast %cst_160 : f32 to vector<8x1xf32>
    %226 = arith.addf %222, %225 : vector<8x1xf32>
    %227 = math.rsqrt %226 : vector<8x1xf32>
    %228 = vector.broadcast %227 : vector<8x1xf32> to vector<8x32xf32>
    %229 = arith.mulf %224, %228 : vector<8x32xf32>
    %c1_161 = arith.constant 1 : index
    %c0_162 = arith.constant 0 : index
    %c0_163 = arith.constant 0 : index
    %230 = vector.load %arg18[%c1_161, %c0_162, %c0_163] : memref<3x32x128xf32, #tpu.memory_space<vmem>>, vector<1x32x128xf32>
    %231 = vector.shape_cast %230 : vector<1x32x128xf32> to vector<32x128xf32>
    %c1_164 = arith.constant 1 : index
    %c0_165 = arith.constant 0 : index
    %c0_166 = arith.constant 0 : index
    %232 = vector.load %arg19[%c1_164, %c0_165, %c0_166] : memref<3x1x128xf32, #tpu.memory_space<vmem>>, vector<1x1x128xf32>
    %233 = vector.shape_cast %232 : vector<1x1x128xf32> to vector<1x128xf32>
    %cst_167 = arith.constant dense<0.000000e+00> : vector<8x128xf32>
    %234 = tpu.matmul %229, %231, %cst_167 {dimension_numbers = #tpu.dot_dimension_numbers<[1], [0], [0], [1], [0, 0, 1, 1], [], []>} : vector<8x32xf32>, vector<32x128xf32>, vector<8x128xf32> -> vector<8x128xf32>
    %235 = vector.broadcast %233 : vector<1x128xf32> to vector<8x128xf32>
    %236 = arith.addf %234, %235 : vector<8x128xf32>
    %cst_168 = arith.constant 0.000000e+00 : f32
    %237 = vector.broadcast %cst_168 : f32 to vector<8x128xf32>
    %238 = arith.maximumf %236, %237 : vector<8x128xf32>
    %c1_169 = arith.constant 1 : index
    %c0_170 = arith.constant 0 : index
    %c0_171 = arith.constant 0 : index
    %239 = vector.load %arg20[%c1_169, %c0_170, %c0_171] : memref<3x128x32xf32, #tpu.memory_space<vmem>>, vector<1x128x32xf32>
    %240 = vector.shape_cast %239 : vector<1x128x32xf32> to vector<128x32xf32>
    %c1_172 = arith.constant 1 : index
    %c0_173 = arith.constant 0 : index
    %c0_174 = arith.constant 0 : index
    %241 = vector.load %arg21[%c1_172, %c0_173, %c0_174] : memref<3x1x32xf32, #tpu.memory_space<vmem>>, vector<1x1x32xf32>
    %242 = vector.shape_cast %241 : vector<1x1x32xf32> to vector<1x32xf32>
    %cst_175 = arith.constant dense<0.000000e+00> : vector<8x32xf32>
    %243 = tpu.matmul %238, %240, %cst_175 {dimension_numbers = #tpu.dot_dimension_numbers<[1], [0], [0], [1], [0, 0, 1, 1], [], []>} : vector<8x128xf32>, vector<128x32xf32>, vector<8x32xf32> -> vector<8x32xf32>
    %244 = vector.broadcast %242 : vector<1x32xf32> to vector<8x32xf32>
    %245 = arith.addf %243, %244 : vector<8x32xf32>
    %246 = arith.addf %229, %245 : vector<8x32xf32>
    %cst_176 = arith.constant dense<0.000000e+00> : vector<8xf32>
    %247 = vector.multi_reduction <add>, %246, %cst_176 [1] : vector<8x32xf32> to vector<8xf32>
    %248 = vector.shape_cast %247 : vector<8xf32> to vector<8x1xf32>
    %cst_177 = arith.constant 3.200000e+01 : f32
    %249 = vector.broadcast %cst_177 : f32 to vector<8x1xf32>
    %250 = arith.divf %248, %249 : vector<8x1xf32>
    %251 = arith.mulf %246, %246 : vector<8x32xf32>
    %cst_178 = arith.constant dense<0.000000e+00> : vector<8xf32>
    %252 = vector.multi_reduction <add>, %251, %cst_178 [1] : vector<8x32xf32> to vector<8xf32>
    %253 = vector.shape_cast %252 : vector<8xf32> to vector<8x1xf32>
    %cst_179 = arith.constant 3.200000e+01 : f32
    %254 = vector.broadcast %cst_179 : f32 to vector<8x1xf32>
    %255 = arith.divf %253, %254 : vector<8x1xf32>
    %256 = arith.mulf %250, %250 : vector<8x1xf32>
    %257 = arith.subf %255, %256 : vector<8x1xf32>
    %cst_180 = arith.constant 0.000000e+00 : f32
    %258 = vector.broadcast %cst_180 : f32 to vector<8x1xf32>
    %259 = arith.maximumf %257, %258 : vector<8x1xf32>
    %260 = vector.broadcast %250 : vector<8x1xf32> to vector<8x32xf32>
    %261 = arith.subf %246, %260 : vector<8x32xf32>
    %cst_181 = arith.constant 9.99999974E-6 : f32
    %262 = vector.broadcast %cst_181 : f32 to vector<8x1xf32>
    %263 = arith.addf %259, %262 : vector<8x1xf32>
    %264 = math.rsqrt %263 : vector<8x1xf32>
    %265 = vector.broadcast %264 : vector<8x1xf32> to vector<8x32xf32>
    %266 = arith.mulf %261, %265 : vector<8x32xf32>
    %c0_182 = arith.constant 0 : index
    %c0_183 = arith.constant 0 : index
    %267 = vector.load %arg22[%c0_182, %c0_183] : memref<32x32xf32, #tpu.memory_space<vmem>>, vector<32x32xf32>
    %c0_184 = arith.constant 0 : index
    %c0_185 = arith.constant 0 : index
    %268 = vector.load %arg23[%c0_184, %c0_185] : memref<1x32xf32, #tpu.memory_space<vmem>>, vector<1x32xf32>
    %cst_186 = arith.constant dense<0.000000e+00> : vector<8x32xf32>
    %269 = tpu.matmul %266, %267, %cst_186 {dimension_numbers = #tpu.dot_dimension_numbers<[1], [0], [0], [1], [0, 0, 1, 1], [], []>} : vector<8x32xf32>, vector<32x32xf32>, vector<8x32xf32> -> vector<8x32xf32>
    %270 = vector.broadcast %268 : vector<1x32xf32> to vector<8x32xf32>
    %271 = arith.addf %269, %270 : vector<8x32xf32>
    %cst_187 = arith.constant 0.000000e+00 : f32
    %272 = vector.broadcast %cst_187 : f32 to vector<8x32xf32>
    %273 = arith.maximumf %271, %272 : vector<8x32xf32>
    %c0_188 = arith.constant 0 : index
    %c0_189 = arith.constant 0 : index
    %274 = vector.load %arg24[%c0_188, %c0_189] : memref<32x32xf32, #tpu.memory_space<vmem>>, vector<32x32xf32>
    %c0_190 = arith.constant 0 : index
    %c0_191 = arith.constant 0 : index
    %275 = vector.load %arg25[%c0_190, %c0_191] : memref<1x32xf32, #tpu.memory_space<vmem>>, vector<1x32xf32>
    %cst_192 = arith.constant dense<0.000000e+00> : vector<8x32xf32>
    %276 = tpu.matmul %273, %274, %cst_192 {dimension_numbers = #tpu.dot_dimension_numbers<[1], [0], [0], [1], [0, 0, 1, 1], [], []>} : vector<8x32xf32>, vector<32x32xf32>, vector<8x32xf32> -> vector<8x32xf32>
    %277 = vector.broadcast %275 : vector<1x32xf32> to vector<8x32xf32>
    %278 = arith.addf %276, %277 : vector<8x32xf32>
    %cst_193 = arith.constant dense<0.000000e+00> : vector<8x256xf32>
    %279 = tpu.matmul %278, %39, %cst_193 {dimension_numbers = #tpu.dot_dimension_numbers<[1], [1], [0], [0], [0, 0, 1, 0], [], []>} : vector<8x32xf32>, vector<256x32xf32>, vector<8x256xf32> -> vector<8x256xf32>
    %c0_194 = arith.constant 0 : index
    %c1_195 = arith.constant 1 : index
    %c0_196 = arith.constant 0 : index
    %c0_197 = arith.constant 0 : index
    %280 = vector.load %arg28[%c0_194, %c1_195, %c0_196, %c0_197] : memref<1x3x8x256xf32, #tpu.memory_space<vmem>>, vector<1x1x8x256xf32>
    %281 = vector.shape_cast %280 : vector<1x1x8x256xf32> to vector<8x256xf32>
    %282 = vector.shape_cast %279 : vector<8x256xf32> to vector<1x1x8x256xf32>
    tpu.vector_store %arg28[%c0_194, %c1_195, %c0_196, %c0_197], %282 {strides = array<i32>} : memref<1x3x8x256xf32, #tpu.memory_space<vmem>>, vector<1x1x8x256xf32>,
    %c0_198 = arith.constant 0 : index
    %c0_199 = arith.constant 0 : index
    %283 = vector.load %arg26[%c0_198, %c0_199] : memref<32x128xf32, #tpu.memory_space<vmem>>, vector<32x128xf32>
    %c0_200 = arith.constant 0 : index
    %c0_201 = arith.constant 0 : index
    %284 = vector.load %arg27[%c0_200, %c0_201] : memref<1x128xf32, #tpu.memory_space<vmem>>, vector<1x128xf32>
    %cst_202 = arith.constant dense<0.000000e+00> : vector<8x128xf32>
    %285 = tpu.matmul %266, %283, %cst_202 {dimension_numbers = #tpu.dot_dimension_numbers<[1], [0], [0], [1], [0, 0, 1, 1], [], []>} : vector<8x32xf32>, vector<32x128xf32>, vector<8x128xf32> -> vector<8x128xf32>
    %286 = vector.broadcast %284 : vector<1x128xf32> to vector<8x128xf32>
    %287 = arith.addf %285, %286 : vector<8x128xf32>
    %c0_203 = arith.constant 0 : index
    %c1_204 = arith.constant 1 : index
    %c0_205 = arith.constant 0 : index
    %c0_206 = arith.constant 0 : index
    %288 = vector.load %arg29[%c0_203, %c1_204, %c0_205, %c0_206] : memref<1x3x8x128xf32, #tpu.memory_space<vmem>>, vector<1x1x8x128xf32>
    %289 = vector.shape_cast %288 : vector<1x1x8x128xf32> to vector<8x128xf32>
    %290 = vector.shape_cast %287 : vector<8x128xf32> to vector<1x1x8x128xf32>
    tpu.vector_store %arg29[%c0_203, %c1_204, %c0_205, %c0_206], %290 {strides = array<i32>} : memref<1x3x8x128xf32, #tpu.memory_space<vmem>>, vector<1x1x8x128xf32>,
    %c2_207 = arith.constant 2 : index
    %c0_208 = arith.constant 0 : index
    %c0_209 = arith.constant 0 : index
    %291 = vector.load %arg10[%c2_207, %c0_208, %c0_209] : memref<3x32x32xf32, #tpu.memory_space<vmem>>, vector<1x32x32xf32>
    %292 = vector.shape_cast %291 : vector<1x32x32xf32> to vector<32x32xf32>
    %c2_210 = arith.constant 2 : index
    %c0_211 = arith.constant 0 : index
    %c0_212 = arith.constant 0 : index
    %293 = vector.load %arg11[%c2_210, %c0_211, %c0_212] : memref<3x1x32xf32, #tpu.memory_space<vmem>>, vector<1x1x32xf32>
    %294 = vector.shape_cast %293 : vector<1x1x32xf32> to vector<1x32xf32>
    %cst_213 = arith.constant dense<0.000000e+00> : vector<8x32xf32>
    %295 = tpu.matmul %266, %292, %cst_213 {dimension_numbers = #tpu.dot_dimension_numbers<[1], [0], [0], [1], [0, 0, 1, 1], [], []>} : vector<8x32xf32>, vector<32x32xf32>, vector<8x32xf32> -> vector<8x32xf32>
    %296 = vector.broadcast %294 : vector<1x32xf32> to vector<8x32xf32>
    %297 = arith.addf %295, %296 : vector<8x32xf32>
    %c2_214 = arith.constant 2 : index
    %c0_215 = arith.constant 0 : index
    %c0_216 = arith.constant 0 : index
    %298 = vector.load %arg12[%c2_214, %c0_215, %c0_216] : memref<3x32x32xf32, #tpu.memory_space<vmem>>, vector<1x32x32xf32>
    %299 = vector.shape_cast %298 : vector<1x32x32xf32> to vector<32x32xf32>
    %c2_217 = arith.constant 2 : index
    %c0_218 = arith.constant 0 : index
    %c0_219 = arith.constant 0 : index
    %300 = vector.load %arg13[%c2_217, %c0_218, %c0_219] : memref<3x1x32xf32, #tpu.memory_space<vmem>>, vector<1x1x32xf32>
    %301 = vector.shape_cast %300 : vector<1x1x32xf32> to vector<1x32xf32>
    %cst_220 = arith.constant dense<0.000000e+00> : vector<16x32xf32>
    %302 = tpu.matmul %45, %299, %cst_220 {dimension_numbers = #tpu.dot_dimension_numbers<[1], [0], [0], [1], [0, 0, 1, 1], [], []>} : vector<16x32xf32>, vector<32x32xf32>, vector<16x32xf32> -> vector<16x32xf32>
    %303 = vector.broadcast %301 : vector<1x32xf32> to vector<16x32xf32>
    %304 = arith.addf %302, %303 : vector<16x32xf32>
    %c2_221 = arith.constant 2 : index
    %c0_222 = arith.constant 0 : index
    %c0_223 = arith.constant 0 : index
    %305 = vector.load %arg14[%c2_221, %c0_222, %c0_223] : memref<3x32x32xf32, #tpu.memory_space<vmem>>, vector<1x32x32xf32>
    %306 = vector.shape_cast %305 : vector<1x32x32xf32> to vector<32x32xf32>
    %c2_224 = arith.constant 2 : index
    %c0_225 = arith.constant 0 : index
    %c0_226 = arith.constant 0 : index
    %307 = vector.load %arg15[%c2_224, %c0_225, %c0_226] : memref<3x1x32xf32, #tpu.memory_space<vmem>>, vector<1x1x32xf32>
    %308 = vector.shape_cast %307 : vector<1x1x32xf32> to vector<1x32xf32>
    %cst_227 = arith.constant dense<0.000000e+00> : vector<16x32xf32>
    %309 = tpu.matmul %45, %306, %cst_227 {dimension_numbers = #tpu.dot_dimension_numbers<[1], [0], [0], [1], [0, 0, 1, 1], [], []>} : vector<16x32xf32>, vector<32x32xf32>, vector<16x32xf32> -> vector<16x32xf32>
    %310 = vector.broadcast %308 : vector<1x32xf32> to vector<16x32xf32>
    %311 = arith.addf %309, %310 : vector<16x32xf32>
    %cst_228 = arith.constant dense<0.000000e+00> : vector<8x16xf32>
    %312 = tpu.matmul %297, %304, %cst_228 {dimension_numbers = #tpu.dot_dimension_numbers<[1], [1], [0], [0], [0, 0, 1, 0], [], []>} : vector<8x32xf32>, vector<16x32xf32>, vector<8x16xf32> -> vector<8x16xf32>
    %cst_229 = arith.constant dense<0xFF800000> : vector<8xf32>
    %313 = vector.multi_reduction <maximumf>, %312, %cst_229 [1] : vector<8x16xf32> to vector<8xf32>
    %314 = vector.shape_cast %313 : vector<8xf32> to vector<8x1xf32>
    %315 = vector.broadcast %314 : vector<8x1xf32> to vector<8x16xf32>
    %316 = arith.subf %312, %315 : vector<8x16xf32>
    %317 = math.exp %316 : vector<8x16xf32>
    %cst_230 = arith.constant dense<0.000000e+00> : vector<8xf32>
    %318 = vector.multi_reduction <add>, %317, %cst_230 [1] : vector<8x16xf32> to vector<8xf32>
    %319 = vector.shape_cast %318 : vector<8xf32> to vector<8x1xf32>
    %320 = tpu.reciprocal %319 : vector<8x1xf32> -> vector<8x1xf32>
    %321 = vector.broadcast %320 : vector<8x1xf32> to vector<8x16xf32>
    %322 = arith.mulf %317, %321 : vector<8x16xf32>
    %cst_231 = arith.constant dense<0.000000e+00> : vector<8x32xf32>
    %323 = tpu.matmul %322, %311, %cst_231 {dimension_numbers = #tpu.dot_dimension_numbers<[1], [0], [0], [1], [0, 0, 1, 1], [], []>} : vector<8x16xf32>, vector<16x32xf32>, vector<8x32xf32> -> vector<8x32xf32>
    %c2_232 = arith.constant 2 : index
    %c0_233 = arith.constant 0 : index
    %c0_234 = arith.constant 0 : index
    %324 = vector.load %arg16[%c2_232, %c0_233, %c0_234] : memref<3x32x32xf32, #tpu.memory_space<vmem>>, vector<1x32x32xf32>
    %325 = vector.shape_cast %324 : vector<1x32x32xf32> to vector<32x32xf32>
    %c2_235 = arith.constant 2 : index
    %c0_236 = arith.constant 0 : index
    %c0_237 = arith.constant 0 : index
    %326 = vector.load %arg17[%c2_235, %c0_236, %c0_237] : memref<3x1x32xf32, #tpu.memory_space<vmem>>, vector<1x1x32xf32>
    %327 = vector.shape_cast %326 : vector<1x1x32xf32> to vector<1x32xf32>
    %cst_238 = arith.constant dense<0.000000e+00> : vector<8x32xf32>
    %328 = tpu.matmul %323, %325, %cst_238 {dimension_numbers = #tpu.dot_dimension_numbers<[1], [0], [0], [1], [0, 0, 1, 1], [], []>} : vector<8x32xf32>, vector<32x32xf32>, vector<8x32xf32> -> vector<8x32xf32>
    %329 = vector.broadcast %327 : vector<1x32xf32> to vector<8x32xf32>
    %330 = arith.addf %328, %329 : vector<8x32xf32>
    %331 = arith.addf %266, %330 : vector<8x32xf32>
    %cst_239 = arith.constant dense<0.000000e+00> : vector<8xf32>
    %332 = vector.multi_reduction <add>, %331, %cst_239 [1] : vector<8x32xf32> to vector<8xf32>
    %333 = vector.shape_cast %332 : vector<8xf32> to vector<8x1xf32>
    %cst_240 = arith.constant 3.200000e+01 : f32
    %334 = vector.broadcast %cst_240 : f32 to vector<8x1xf32>
    %335 = arith.divf %333, %334 : vector<8x1xf32>
    %336 = arith.mulf %331, %331 : vector<8x32xf32>
    %cst_241 = arith.constant dense<0.000000e+00> : vector<8xf32>
    %337 = vector.multi_reduction <add>, %336, %cst_241 [1] : vector<8x32xf32> to vector<8xf32>
    %338 = vector.shape_cast %337 : vector<8xf32> to vector<8x1xf32>
    %cst_242 = arith.constant 3.200000e+01 : f32
    %339 = vector.broadcast %cst_242 : f32 to vector<8x1xf32>
    %340 = arith.divf %338, %339 : vector<8x1xf32>
    %341 = arith.mulf %335, %335 : vector<8x1xf32>
    %342 = arith.subf %340, %341 : vector<8x1xf32>
    %cst_243 = arith.constant 0.000000e+00 : f32
    %343 = vector.broadcast %cst_243 : f32 to vector<8x1xf32>
    %344 = arith.maximumf %342, %343 : vector<8x1xf32>
    %345 = vector.broadcast %335 : vector<8x1xf32> to vector<8x32xf32>
    %346 = arith.subf %331, %345 : vector<8x32xf32>
    %cst_244 = arith.constant 9.99999974E-6 : f32
    %347 = vector.broadcast %cst_244 : f32 to vector<8x1xf32>
    %348 = arith.addf %344, %347 : vector<8x1xf32>
    %349 = math.rsqrt %348 : vector<8x1xf32>
    %350 = vector.broadcast %349 : vector<8x1xf32> to vector<8x32xf32>
    %351 = arith.mulf %346, %350 : vector<8x32xf32>
    %c2_245 = arith.constant 2 : index
    %c0_246 = arith.constant 0 : index
    %c0_247 = arith.constant 0 : index
    %352 = vector.load %arg18[%c2_245, %c0_246, %c0_247] : memref<3x32x128xf32, #tpu.memory_space<vmem>>, vector<1x32x128xf32>
    %353 = vector.shape_cast %352 : vector<1x32x128xf32> to vector<32x128xf32>
    %c2_248 = arith.constant 2 : index
    %c0_249 = arith.constant 0 : index
    %c0_250 = arith.constant 0 : index
    %354 = vector.load %arg19[%c2_248, %c0_249, %c0_250] : memref<3x1x128xf32, #tpu.memory_space<vmem>>, vector<1x1x128xf32>
    %355 = vector.shape_cast %354 : vector<1x1x128xf32> to vector<1x128xf32>
    %cst_251 = arith.constant dense<0.000000e+00> : vector<8x128xf32>
    %356 = tpu.matmul %351, %353, %cst_251 {dimension_numbers = #tpu.dot_dimension_numbers<[1], [0], [0], [1], [0, 0, 1, 1], [], []>} : vector<8x32xf32>, vector<32x128xf32>, vector<8x128xf32> -> vector<8x128xf32>
    %357 = vector.broadcast %355 : vector<1x128xf32> to vector<8x128xf32>
    %358 = arith.addf %356, %357 : vector<8x128xf32>
    %cst_252 = arith.constant 0.000000e+00 : f32
    %359 = vector.broadcast %cst_252 : f32 to vector<8x128xf32>
    %360 = arith.maximumf %358, %359 : vector<8x128xf32>
    %c2_253 = arith.constant 2 : index
    %c0_254 = arith.constant 0 : index
    %c0_255 = arith.constant 0 : index
    %361 = vector.load %arg20[%c2_253, %c0_254, %c0_255] : memref<3x128x32xf32, #tpu.memory_space<vmem>>, vector<1x128x32xf32>
    %362 = vector.shape_cast %361 : vector<1x128x32xf32> to vector<128x32xf32>
    %c2_256 = arith.constant 2 : index
    %c0_257 = arith.constant 0 : index
    %c0_258 = arith.constant 0 : index
    %363 = vector.load %arg21[%c2_256, %c0_257, %c0_258] : memref<3x1x32xf32, #tpu.memory_space<vmem>>, vector<1x1x32xf32>
    %364 = vector.shape_cast %363 : vector<1x1x32xf32> to vector<1x32xf32>
    %cst_259 = arith.constant dense<0.000000e+00> : vector<8x32xf32>
    %365 = tpu.matmul %360, %362, %cst_259 {dimension_numbers = #tpu.dot_dimension_numbers<[1], [0], [0], [1], [0, 0, 1, 1], [], []>} : vector<8x128xf32>, vector<128x32xf32>, vector<8x32xf32> -> vector<8x32xf32>
    %366 = vector.broadcast %364 : vector<1x32xf32> to vector<8x32xf32>
    %367 = arith.addf %365, %366 : vector<8x32xf32>
    %368 = arith.addf %351, %367 : vector<8x32xf32>
    %cst_260 = arith.constant dense<0.000000e+00> : vector<8xf32>
    %369 = vector.multi_reduction <add>, %368, %cst_260 [1] : vector<8x32xf32> to vector<8xf32>
    %370 = vector.shape_cast %369 : vector<8xf32> to vector<8x1xf32>
    %cst_261 = arith.constant 3.200000e+01 : f32
    %371 = vector.broadcast %cst_261 : f32 to vector<8x1xf32>
    %372 = arith.divf %370, %371 : vector<8x1xf32>
    %373 = arith.mulf %368, %368 : vector<8x32xf32>
    %cst_262 = arith.constant dense<0.000000e+00> : vector<8xf32>
    %374 = vector.multi_reduction <add>, %373, %cst_262 [1] : vector<8x32xf32> to vector<8xf32>
    %375 = vector.shape_cast %374 : vector<8xf32> to vector<8x1xf32>
    %cst_263 = arith.constant 3.200000e+01 : f32
    %376 = vector.broadcast %cst_263 : f32 to vector<8x1xf32>
    %377 = arith.divf %375, %376 : vector<8x1xf32>
    %378 = arith.mulf %372, %372 : vector<8x1xf32>
    %379 = arith.subf %377, %378 : vector<8x1xf32>
    %cst_264 = arith.constant 0.000000e+00 : f32
    %380 = vector.broadcast %cst_264 : f32 to vector<8x1xf32>
    %381 = arith.maximumf %379, %380 : vector<8x1xf32>
    %382 = vector.broadcast %372 : vector<8x1xf32> to vector<8x32xf32>
    %383 = arith.subf %368, %382 : vector<8x32xf32>
    %cst_265 = arith.constant 9.99999974E-6 : f32
    %384 = vector.broadcast %cst_265 : f32 to vector<8x1xf32>
    %385 = arith.addf %381, %384 : vector<8x1xf32>
    %386 = math.rsqrt %385 : vector<8x1xf32>
    %387 = vector.broadcast %386 : vector<8x1xf32> to vector<8x32xf32>
    %388 = arith.mulf %383, %387 : vector<8x32xf32>
    %c0_266 = arith.constant 0 : index
    %c0_267 = arith.constant 0 : index
    %389 = vector.load %arg22[%c0_266, %c0_267] : memref<32x32xf32, #tpu.memory_space<vmem>>, vector<32x32xf32>
    %c0_268 = arith.constant 0 : index
    %c0_269 = arith.constant 0 : index
    %390 = vector.load %arg23[%c0_268, %c0_269] : memref<1x32xf32, #tpu.memory_space<vmem>>, vector<1x32xf32>
    %cst_270 = arith.constant dense<0.000000e+00> : vector<8x32xf32>
    %391 = tpu.matmul %388, %389, %cst_270 {dimension_numbers = #tpu.dot_dimension_numbers<[1], [0], [0], [1], [0, 0, 1, 1], [], []>} : vector<8x32xf32>, vector<32x32xf32>, vector<8x32xf32> -> vector<8x32xf32>
    %392 = vector.broadcast %390 : vector<1x32xf32> to vector<8x32xf32>
    %393 = arith.addf %391, %392 : vector<8x32xf32>
    %cst_271 = arith.constant 0.000000e+00 : f32
    %394 = vector.broadcast %cst_271 : f32 to vector<8x32xf32>
    %395 = arith.maximumf %393, %394 : vector<8x32xf32>
    %c0_272 = arith.constant 0 : index
    %c0_273 = arith.constant 0 : index
    %396 = vector.load %arg24[%c0_272, %c0_273] : memref<32x32xf32, #tpu.memory_space<vmem>>, vector<32x32xf32>
    %c0_274 = arith.constant 0 : index
    %c0_275 = arith.constant 0 : index
    %397 = vector.load %arg25[%c0_274, %c0_275] : memref<1x32xf32, #tpu.memory_space<vmem>>, vector<1x32xf32>
    %cst_276 = arith.constant dense<0.000000e+00> : vector<8x32xf32>
    %398 = tpu.matmul %395, %396, %cst_276 {dimension_numbers = #tpu.dot_dimension_numbers<[1], [0], [0], [1], [0, 0, 1, 1], [], []>} : vector<8x32xf32>, vector<32x32xf32>, vector<8x32xf32> -> vector<8x32xf32>
    %399 = vector.broadcast %397 : vector<1x32xf32> to vector<8x32xf32>
    %400 = arith.addf %398, %399 : vector<8x32xf32>
    %cst_277 = arith.constant dense<0.000000e+00> : vector<8x256xf32>
    %401 = tpu.matmul %400, %39, %cst_277 {dimension_numbers = #tpu.dot_dimension_numbers<[1], [1], [0], [0], [0, 0, 1, 0], [], []>} : vector<8x32xf32>, vector<256x32xf32>, vector<8x256xf32> -> vector<8x256xf32>
    %c0_278 = arith.constant 0 : index
    %c2_279 = arith.constant 2 : index
    %c0_280 = arith.constant 0 : index
    %c0_281 = arith.constant 0 : index
    %402 = vector.load %arg28[%c0_278, %c2_279, %c0_280, %c0_281] : memref<1x3x8x256xf32, #tpu.memory_space<vmem>>, vector<1x1x8x256xf32>
    %403 = vector.shape_cast %402 : vector<1x1x8x256xf32> to vector<8x256xf32>
    %404 = vector.shape_cast %401 : vector<8x256xf32> to vector<1x1x8x256xf32>
    tpu.vector_store %arg28[%c0_278, %c2_279, %c0_280, %c0_281], %404 {strides = array<i32>} : memref<1x3x8x256xf32, #tpu.memory_space<vmem>>, vector<1x1x8x256xf32>,
    %c0_282 = arith.constant 0 : index
    %c0_283 = arith.constant 0 : index
    %405 = vector.load %arg26[%c0_282, %c0_283] : memref<32x128xf32, #tpu.memory_space<vmem>>, vector<32x128xf32>
    %c0_284 = arith.constant 0 : index
    %c0_285 = arith.constant 0 : index
    %406 = vector.load %arg27[%c0_284, %c0_285] : memref<1x128xf32, #tpu.memory_space<vmem>>, vector<1x128xf32>
    %cst_286 = arith.constant dense<0.000000e+00> : vector<8x128xf32>
    %407 = tpu.matmul %388, %405, %cst_286 {dimension_numbers = #tpu.dot_dimension_numbers<[1], [0], [0], [1], [0, 0, 1, 1], [], []>} : vector<8x32xf32>, vector<32x128xf32>, vector<8x128xf32> -> vector<8x128xf32>
    %408 = vector.broadcast %406 : vector<1x128xf32> to vector<8x128xf32>
    %409 = arith.addf %407, %408 : vector<8x128xf32>
    %c0_287 = arith.constant 0 : index
    %c2_288 = arith.constant 2 : index
    %c0_289 = arith.constant 0 : index
    %c0_290 = arith.constant 0 : index
    %410 = vector.load %arg29[%c0_287, %c2_288, %c0_289, %c0_290] : memref<1x3x8x128xf32, #tpu.memory_space<vmem>>, vector<1x1x8x128xf32>
    %411 = vector.shape_cast %410 : vector<1x1x8x128xf32> to vector<8x128xf32>
    %412 = vector.shape_cast %409 : vector<8x128xf32> to vector<1x1x8x128xf32>
    tpu.vector_store %arg29[%c0_287, %c2_288, %c0_289, %c0_290], %412 {strides = array<i32>} : memref<1x3x8x128xf32, #tpu.memory_space<vmem>>, vector<1x1x8x128xf32>,
    return
  }
  func.func @transform_0(%arg0: i32) -> (i32, i32, i32) {
    %c0_i32 = arith.constant 0 : i32
    %c0_i32_0 = arith.constant 0 : i32
    %c0_i32_1 = arith.constant 0 : i32
    return %arg0, %c0_i32, %c0_i32_0 : i32, i32, i32
  }
  func.func @transform_1(%arg0: i32) -> (i32, i32, i32) {
    %c0_i32 = arith.constant 0 : i32
    %c0_i32_0 = arith.constant 0 : i32
    %c0_i32_1 = arith.constant 0 : i32
    return %arg0, %c0_i32, %c0_i32_0 : i32, i32, i32
  }
  func.func @transform_2(%arg0: i32) -> (i32, i32) {
    %c0_i32 = arith.constant 0 : i32
    %c0_i32_0 = arith.constant 0 : i32
    %c0_i32_1 = arith.constant 0 : i32
    return %c0_i32, %c0_i32_0 : i32, i32
  }
  func.func @transform_3(%arg0: i32) -> (i32, i32) {
    %c0_i32 = arith.constant 0 : i32
    %c0_i32_0 = arith.constant 0 : i32
    %c0_i32_1 = arith.constant 0 : i32
    return %c0_i32, %c0_i32_0 : i32, i32
  }
  func.func @transform_4(%arg0: i32) -> (i32, i32, i32) {
    %c0_i32 = arith.constant 0 : i32
    %c0_i32_0 = arith.constant 0 : i32
    %c0_i32_1 = arith.constant 0 : i32
    %c0_i32_2 = arith.constant 0 : i32
    return %c0_i32, %c0_i32_0, %c0_i32_1 : i32, i32, i32
  }
  func.func @transform_5(%arg0: i32) -> (i32, i32, i32) {
    %c0_i32 = arith.constant 0 : i32
    %c0_i32_0 = arith.constant 0 : i32
    %c0_i32_1 = arith.constant 0 : i32
    %c0_i32_2 = arith.constant 0 : i32
    return %c0_i32, %c0_i32_0, %c0_i32_1 : i32, i32, i32
  }
  func.func @transform_6(%arg0: i32) -> (i32, i32) {
    %c0_i32 = arith.constant 0 : i32
    %c0_i32_0 = arith.constant 0 : i32
    %c0_i32_1 = arith.constant 0 : i32
    return %c0_i32, %c0_i32_0 : i32, i32
  }
  func.func @transform_7(%arg0: i32) -> (i32, i32) {
    %c0_i32 = arith.constant 0 : i32
    %c0_i32_0 = arith.constant 0 : i32
    %c0_i32_1 = arith.constant 0 : i32
    return %c0_i32, %c0_i32_0 : i32, i32
  }
  func.func @transform_8(%arg0: i32) -> (i32, i32) {
    %c0_i32 = arith.constant 0 : i32
    %c0_i32_0 = arith.constant 0 : i32
    %c0_i32_1 = arith.constant 0 : i32
    return %c0_i32, %c0_i32_0 : i32, i32
  }
  func.func @transform_9(%arg0: i32) -> (i32, i32, i32) {
    %c0_i32 = arith.constant 0 : i32
    %c0_i32_0 = arith.constant 0 : i32
    %c0_i32_1 = arith.constant 0 : i32
    %c0_i32_2 = arith.constant 0 : i32
    return %c0_i32, %c0_i32_0, %c0_i32_1 : i32, i32, i32
  }
  func.func @transform_10(%arg0: i32) -> (i32, i32, i32) {
    %c0_i32 = arith.constant 0 : i32
    %c0_i32_0 = arith.constant 0 : i32
    %c0_i32_1 = arith.constant 0 : i32
    %c0_i32_2 = arith.constant 0 : i32
    return %c0_i32, %c0_i32_0, %c0_i32_1 : i32, i32, i32
  }
  func.func @transform_11(%arg0: i32) -> (i32, i32, i32) {
    %c0_i32 = arith.constant 0 : i32
    %c0_i32_0 = arith.constant 0 : i32
    %c0_i32_1 = arith.constant 0 : i32
    %c0_i32_2 = arith.constant 0 : i32
    return %c0_i32, %c0_i32_0, %c0_i32_1 : i32, i32, i32
  }
  func.func @transform_12(%arg0: i32) -> (i32, i32, i32) {
    %c0_i32 = arith.constant 0 : i32
    %c0_i32_0 = arith.constant 0 : i32
    %c0_i32_1 = arith.constant 0 : i32
    %c0_i32_2 = arith.constant 0 : i32
    return %c0_i32, %c0_i32_0, %c0_i32_1 : i32, i32, i32
  }
  func.func @transform_13(%arg0: i32) -> (i32, i32, i32) {
    %c0_i32 = arith.constant 0 : i32
    %c0_i32_0 = arith.constant 0 : i32
    %c0_i32_1 = arith.constant 0 : i32
    %c0_i32_2 = arith.constant 0 : i32
    return %c0_i32, %c0_i32_0, %c0_i32_1 : i32, i32, i32
  }
  func.func @transform_14(%arg0: i32) -> (i32, i32, i32) {
    %c0_i32 = arith.constant 0 : i32
    %c0_i32_0 = arith.constant 0 : i32
    %c0_i32_1 = arith.constant 0 : i32
    %c0_i32_2 = arith.constant 0 : i32
    return %c0_i32, %c0_i32_0, %c0_i32_1 : i32, i32, i32
  }
  func.func @transform_15(%arg0: i32) -> (i32, i32, i32) {
    %c0_i32 = arith.constant 0 : i32
    %c0_i32_0 = arith.constant 0 : i32
    %c0_i32_1 = arith.constant 0 : i32
    %c0_i32_2 = arith.constant 0 : i32
    return %c0_i32, %c0_i32_0, %c0_i32_1 : i32, i32, i32
  }
  func.func @transform_16(%arg0: i32) -> (i32, i32, i32) {
    %c0_i32 = arith.constant 0 : i32
    %c0_i32_0 = arith.constant 0 : i32
    %c0_i32_1 = arith.constant 0 : i32
    %c0_i32_2 = arith.constant 0 : i32
    return %c0_i32, %c0_i32_0, %c0_i32_1 : i32, i32, i32
  }
  func.func @transform_17(%arg0: i32) -> (i32, i32, i32) {
    %c0_i32 = arith.constant 0 : i32
    %c0_i32_0 = arith.constant 0 : i32
    %c0_i32_1 = arith.constant 0 : i32
    %c0_i32_2 = arith.constant 0 : i32
    return %c0_i32, %c0_i32_0, %c0_i32_1 : i32, i32, i32
  }
  func.func @transform_18(%arg0: i32) -> (i32, i32, i32) {
    %c0_i32 = arith.constant 0 : i32
    %c0_i32_0 = arith.constant 0 : i32
    %c0_i32_1 = arith.constant 0 : i32
    %c0_i32_2 = arith.constant 0 : i32
    return %c0_i32, %c0_i32_0, %c0_i32_1 : i32, i32, i32
  }
  func.func @transform_19(%arg0: i32) -> (i32, i32, i32) {
    %c0_i32 = arith.constant 0 : i32
    %c0_i32_0 = arith.constant 0 : i32
    %c0_i32_1 = arith.constant 0 : i32
    %c0_i32_2 = arith.constant 0 : i32
    return %c0_i32, %c0_i32_0, %c0_i32_1 : i32, i32, i32
  }
  func.func @transform_20(%arg0: i32) -> (i32, i32, i32) {
    %c0_i32 = arith.constant 0 : i32
    %c0_i32_0 = arith.constant 0 : i32
    %c0_i32_1 = arith.constant 0 : i32
    %c0_i32_2 = arith.constant 0 : i32
    return %c0_i32, %c0_i32_0, %c0_i32_1 : i32, i32, i32
  }
  func.func @transform_21(%arg0: i32) -> (i32, i32) {
    %c0_i32 = arith.constant 0 : i32
    %c0_i32_0 = arith.constant 0 : i32
    %c0_i32_1 = arith.constant 0 : i32
    return %c0_i32, %c0_i32_0 : i32, i32
  }
  func.func @transform_22(%arg0: i32) -> (i32, i32) {
    %c0_i32 = arith.constant 0 : i32
    %c0_i32_0 = arith.constant 0 : i32
    %c0_i32_1 = arith.constant 0 : i32
    return %c0_i32, %c0_i32_0 : i32, i32
  }
  func.func @transform_23(%arg0: i32) -> (i32, i32) {
    %c0_i32 = arith.constant 0 : i32
    %c0_i32_0 = arith.constant 0 : i32
    %c0_i32_1 = arith.constant 0 : i32
    return %c0_i32, %c0_i32_0 : i32, i32
  }
  func.func @transform_24(%arg0: i32) -> (i32, i32) {
    %c0_i32 = arith.constant 0 : i32
    %c0_i32_0 = arith.constant 0 : i32
    %c0_i32_1 = arith.constant 0 : i32
    return %c0_i32, %c0_i32_0 : i32, i32
  }
  func.func @transform_25(%arg0: i32) -> (i32, i32) {
    %c0_i32 = arith.constant 0 : i32
    %c0_i32_0 = arith.constant 0 : i32
    %c0_i32_1 = arith.constant 0 : i32
    return %c0_i32, %c0_i32_0 : i32, i32
  }
  func.func @transform_26(%arg0: i32) -> (i32, i32) {
    %c0_i32 = arith.constant 0 : i32
    %c0_i32_0 = arith.constant 0 : i32
    %c0_i32_1 = arith.constant 0 : i32
    return %c0_i32, %c0_i32_0 : i32, i32
  }
  func.func @transform_27(%arg0: i32) -> (i32, i32, i32, i32) {
    %c0_i32 = arith.constant 0 : i32
    %c0_i32_0 = arith.constant 0 : i32
    %c0_i32_1 = arith.constant 0 : i32
    %c0_i32_2 = arith.constant 0 : i32
    return %arg0, %c0_i32, %c0_i32_0, %c0_i32_1 : i32, i32, i32, i32
  }
  func.func @transform_28(%arg0: i32) -> (i32, i32, i32, i32) {
    %c0_i32 = arith.constant 0 : i32
    %c0_i32_0 = arith.constant 0 : i32
    %c0_i32_1 = arith.constant 0 : i32
    %c0_i32_2 = arith.constant 0 : i32
    return %arg0, %c0_i32, %c0_i32_0, %c0_i32_1 : i32, i32, i32, i32
  }
}

</mosaic_0001>

<llo_original>
// kernel: tpu_custom_call.1
$region0: #{tpu_custom_call.1}
  #allocation0 [shape = 'u32[]', space=smem, size = 0x4, offset = 0x4, fixed_abs, tag = 'smem constant byte address 0x4 - core index']
  #allocation1 [shape = 'u32[144,128]{1,0:T(1,128)}', space=vmem, size = 0x12000, scoped, tag = 'internal scratch']
  %s0 = inlined_call_operand.vmem [shape: f32[2,256,32], index: 0, kind: input, shape index: {}]
  %s1 = inlined_call_operand.vmem [shape: f32[2,1,32], index: 1, kind: input, shape index: {}]
  %s2 = inlined_call_operand.vmem [shape: f32[64,256], index: 2, kind: input, shape index: {}]
  %s3 = inlined_call_operand.vmem [shape: f32[16,64], index: 3, kind: input, shape index: {}]
  %s4 = inlined_call_operand.vmem [shape: f32[3,32,32], index: 4, kind: input, shape index: {}]
  %s5 = inlined_call_operand.vmem [shape: f32[3,1,32], index: 5, kind: input, shape index: {}]
  %s6 = inlined_call_operand.vmem [shape: f32[32,32], index: 6, kind: input, shape index: {}]
  %s7 = inlined_call_operand.vmem [shape: f32[1,32], index: 7, kind: input, shape index: {}]
  %s8 = inlined_call_operand.vmem [shape: f32[8,32], index: 8, kind: input, shape index: {}]
  %s9 = inlined_call_operand.vmem [shape: f32[3,32,32], index: 9, kind: input, shape index: {}]
  %s10 = inlined_call_operand.vmem [shape: f32[3,1,32], index: 10, kind: input, shape index: {}]
  %s11 = inlined_call_operand.vmem [shape: f32[3,32,32], index: 11, kind: input, shape index: {}]
  %s12 = inlined_call_operand.vmem [shape: f32[3,1,32], index: 12, kind: input, shape index: {}]
  %s13 = inlined_call_operand.vmem [shape: f32[3,32,32], index: 13, kind: input, shape index: {}]
  %s14 = inlined_call_operand.vmem [shape: f32[3,1,32], index: 14, kind: input, shape index: {}]
  %s15 = inlined_call_operand.vmem [shape: f32[3,32,32], index: 15, kind: input, shape index: {}]
  %s16 = inlined_call_operand.vmem [shape: f32[3,1,32], index: 16, kind: input, shape index: {}]
  %s17 = inlined_call_operand.vmem [shape: f32[3,32,128], index: 17, kind: input, shape index: {}]
  %s18 = inlined_call_operand.vmem [shape: f32[3,1,128], index: 18, kind: input, shape index: {}]
  %s19 = inlined_call_operand.vmem [shape: f32[3,128,32], index: 19, kind: input, shape index: {}]
  %s20 = inlined_call_operand.vmem [shape: f32[3,1,32], index: 20, kind: input, shape index: {}]
  %s21 = inlined_call_operand.vmem [shape: f32[32,32], index: 21, kind: input, shape index: {}]
  %s22 = inlined_call_operand.vmem [shape: f32[1,32], index: 22, kind: input, shape index: {}]
  %s23 = inlined_call_operand.vmem [shape: f32[32,32], index: 23, kind: input, shape index: {}]
  %s24 = inlined_call_operand.vmem [shape: f32[1,32], index: 24, kind: input, shape index: {}]
  %s25 = inlined_call_operand.vmem [shape: f32[32,128], index: 25, kind: input, shape index: {}]
  %s26 = inlined_call_operand.vmem [shape: f32[1,128], index: 26, kind: input, shape index: {}]
  %s27 = inlined_call_operand.hbm [shape: f32[2,3,8,256], index: 27, kind: output, shape index: {0}]
  %s28 = inlined_call_operand.hbm [shape: f32[2,3,8,128], index: 28, kind: output, shape index: {1}]
  %29 = xla_tuple %s27, %s28
  %s30 = sld [smem:[#allocation0]]
  $region149: #{tpu_custom_call.1} parent=0
    _
  %s32 = ssub.s32 1, %s30
  %s33 = scalar_select 0, %s32, %s30
  $region1: #{tpu_custom_call.1} parent=0
    #allocation2 [shape = 'u8[49152]{0}', space=vmem, size = 0xc000, scoped, tag = 'output window, operand 0']
    #allocation3 [shape = 's32[2]{0}', space=sflag, size = 0x8, scoped, tag = 'scoped memory for tpu_custom_call.1']
    #allocation4 [shape = 'u8[24576]{0}', space=vmem, size = 0x6000, scoped, tag = 'output window, operand 1']
    #allocation5 [shape = 's32[2]{0}', space=sflag, size = 0x8, scoped, tag = 'scoped memory for tpu_custom_call.1']
    %34 = vsyncpa [#allocation3], 0
    %s35 = scalar_lea.sflag [#allocation3], 1
    %36 = vsyncpa %s35, 0
    %37 = vsyncpa [#allocation5], 0
    %s38 = scalar_lea.sflag [#allocation5], 1
    %39 = vsyncpa %s38, 0
    loop: start=0, step=1, limit=4
    $region2: #{tpu_custom_call.1} parent=1 // loop_pre_header
      _
    $region3: #{tpu_custom_call.1} parent=1 // loop_header
      %s41 = sphi 0, %s45
      %p42 = scmp.ge.s32.totalorder %s41, 4
      %s51 = sphi 0, %s53
      %s54 = sphi 0, %s51
      %s55 = sphi 0, %s54
      %s71 = sphi 0, %s55
      %s77 = sphi 0, %s79
      %s80 = sphi 0, %s77
      %s81 = sphi 0, %s80
      %s97 = sphi 0, %s81
      %s101 = sphi 0, %s101
      %s103 = sphi 0, %s101
      %s104 = sphi 0, %s103
      %s118 = sphi 0, %s104
      %s122 = sphi 0, %s122
      %s124 = sphi 0, %s122
      %s125 = sphi 0, %s124
      %s139 = sphi 0, %s125
      %s143 = sphi 0, %s143
      %s145 = sphi 0, %s143
      %s146 = sphi 0, %s145
      %s160 = sphi 0, %s146
      %s164 = sphi 0, %s164
      %s166 = sphi 0, %s164
      %s167 = sphi 0, %s166
      %s181 = sphi 0, %s167
      %s185 = sphi 0, %s185
      %s187 = sphi 0, %s185
      %s188 = sphi 0, %s187
      %s202 = sphi 0, %s188
      %s206 = sphi 0, %s206
      %s208 = sphi 0, %s206
      %s209 = sphi 0, %s208
      %s223 = sphi 0, %s209
      %s227 = sphi 0, %s227
      %s229 = sphi 0, %s227
      %s230 = sphi 0, %s229
      %s244 = sphi 0, %s230
      %s248 = sphi 0, %s248
      %s250 = sphi 0, %s248
      %s251 = sphi 0, %s250
      %s265 = sphi 0, %s251
      %s269 = sphi 0, %s269
      %s271 = sphi 0, %s269
      %s272 = sphi 0, %s271
      %s286 = sphi 0, %s272
      %s290 = sphi 0, %s290
      %s292 = sphi 0, %s290
      %s293 = sphi 0, %s292
      %s307 = sphi 0, %s293
      %s311 = sphi 0, %s311
      %s313 = sphi 0, %s311
      %s314 = sphi 0, %s313
      %s328 = sphi 0, %s314
      %s332 = sphi 0, %s332
      %s334 = sphi 0, %s332
      %s335 = sphi 0, %s334
      %s349 = sphi 0, %s335
      %s353 = sphi 0, %s353
      %s355 = sphi 0, %s353
      %s356 = sphi 0, %s355
      %s370 = sphi 0, %s356
      %s374 = sphi 0, %s374
      %s376 = sphi 0, %s374
      %s377 = sphi 0, %s376
      %s391 = sphi 0, %s377
      %s395 = sphi 0, %s395
      %s397 = sphi 0, %s395
      %s398 = sphi 0, %s397
      %s412 = sphi 0, %s398
      %s416 = sphi 0, %s416
      %s418 = sphi 0, %s416
      %s419 = sphi 0, %s418
      %s433 = sphi 0, %s419
      %s437 = sphi 0, %s437
      %s439 = sphi 0, %s437
      %s440 = sphi 0, %s439
      %s454 = sphi 0, %s440
      %s458 = sphi 0, %s458
      %s460 = sphi 0, %s458
      %s461 = sphi 0, %s460
      %s475 = sphi 0, %s461
      %s479 = sphi 0, %s479
      %s481 = sphi 0, %s479
      %s482 = sphi 0, %s481
      %s496 = sphi 0, %s482
      %s500 = sphi 0, %s500
      %s502 = sphi 0, %s500
      %s503 = sphi 0, %s502
      %s517 = sphi 0, %s503
      %s521 = sphi 0, %s521
      %s523 = sphi 0, %s521
      %s524 = sphi 0, %s523
      %s538 = sphi 0, %s524
      %s542 = sphi 0, %s542
      %s544 = sphi 0, %s542
      %s545 = sphi 0, %s544
      %s559 = sphi 0, %s545
      %s563 = sphi 0, %s563
      %s565 = sphi 0, %s563
      %s566 = sphi 0, %s565
      %s580 = sphi 0, %s566
      %s584 = sphi 0, %s584
      %s586 = sphi 0, %s584
      %s587 = sphi 0, %s586
      %s601 = sphi 0, %s587
      %s605 = sphi 0, %s605
      %s607 = sphi 0, %s605
      %s608 = sphi 0, %s607
      %s622 = sphi 0, %s608
      %s628 = sphi 0, %s630
      %s631 = sphi 0, %s628
      %s632 = sphi 0, %s631
      %s648 = sphi 0, %s632
      %s654 = sphi 0, %s656
      %s657 = sphi 0, %s654
      %s658 = sphi 0, %s657
      %s674 = sphi 0, %s658
    $region4: #{tpu_custom_call.1} parent=1 // loop_header_branch
      %44 = sbr.rel (%p42) target = $region8
    $region5: #{tpu_custom_call.1} parent=1 // loop_body
      %s46 = ssub.s32 %s41, 1
      %s47 = ssub.s32 %s41, 2
      %s48 = sadd.s32 %s41, 1
      %s49 = ssub.s32 %s41, %s48
      %p50 = scmp.eq.s32.totalorder %s49, 0
      %s52 = sadd.s32 %s51, 1
      %s53 = scalar_select %p50, %s51, %s52
      %p56 = pneg %p50
      %p57 = scmp.eq.s32.totalorder %s41, 1
      %p58 = por %p56, %p57
      %p59 = scmp.ne.s32.totalorder %s51, %s54
      %p60 = scmp.eq.s32.totalorder %s41, 0
      %p61 = por %p59, %p60
      %p62 = scmp.ne.s32.totalorder %s51, %s54
      %p63 = scmp.eq.s32.totalorder %s46, 1
      %p64 = por %p62, %p63
      %p65 = scmp.ne.s32.totalorder %s54, %s55
      %p66 = scmp.eq.s32.totalorder %s46, 0
      %p67 = por %p65, %p66
      %p68 = scmp.ne.s32.totalorder %s54, %s55
      %p69 = scmp.eq.s32.totalorder %s47, 1
      %p70 = por %p68, %p69
      %p72 = scmp.ne.s32.totalorder %s55, %s71
      %p73 = scmp.eq.s32.totalorder %s47, 0
      %p74 = por %p72, %p73
      %s75 = ssub.s32 %s41, %s48
      %p76 = scmp.eq.s32.totalorder %s75, 0
      %s78 = sadd.s32 %s77, 1
      %s79 = scalar_select %p76, %s77, %s78
      %p82 = pneg %p76
      %p83 = scmp.eq.s32.totalorder %s41, 1
      %p84 = por %p82, %p83
      %p85 = scmp.ne.s32.totalorder %s77, %s80
      %p86 = scmp.eq.s32.totalorder %s41, 0
      %p87 = por %p85, %p86
      %p88 = scmp.ne.s32.totalorder %s77, %s80
      %p89 = scmp.eq.s32.totalorder %s46, 1
      %p90 = por %p88, %p89
      %p91 = scmp.ne.s32.totalorder %s80, %s81
      %p92 = scmp.eq.s32.totalorder %s46, 0
      %p93 = por %p91, %p92
      %p94 = scmp.ne.s32.totalorder %s80, %s81
      %p95 = scmp.eq.s32.totalorder %s47, 1
      %p96 = por %p94, %p95
      %p98 = scmp.ne.s32.totalorder %s81, %s97
      %p99 = scmp.eq.s32.totalorder %s47, 0
      %p100 = por %p98, %p99
      %s102 = sadd.s32 %s101, 1
      %p105 = scmp.eq.s32.totalorder %s41, 1
      %p106 = scmp.ne.s32.totalorder %s101, %s103
      %p107 = scmp.eq.s32.totalorder %s41, 0
      %p108 = por %p106, %p107
      %p109 = scmp.ne.s32.totalorder %s101, %s103
      %p110 = scmp.eq.s32.totalorder %s46, 1
      %p111 = por %p109, %p110
      %p112 = scmp.ne.s32.totalorder %s103, %s104
      %p113 = scmp.eq.s32.totalorder %s46, 0
      %p114 = por %p112, %p113
      %p115 = scmp.ne.s32.totalorder %s103, %s104
      %p116 = scmp.eq.s32.totalorder %s47, 1
      %p117 = por %p115, %p116
      %p119 = scmp.ne.s32.totalorder %s104, %s118
      %p120 = scmp.eq.s32.totalorder %s47, 0
      %p121 = por %p119, %p120
      %s123 = sadd.s32 %s122, 1
      %p126 = scmp.eq.s32.totalorder %s41, 1
      %p127 = scmp.ne.s32.totalorder %s122, %s124
      %p128 = scmp.eq.s32.totalorder %s41, 0
      %p129 = por %p127, %p128
      %p130 = scmp.ne.s32.totalorder %s122, %s124
      %p131 = scmp.eq.s32.totalorder %s46, 1
      %p132 = por %p130, %p131
      %p133 = scmp.ne.s32.totalorder %s124, %s125
      %p134 = scmp.eq.s32.totalorder %s46, 0
      %p135 = por %p133, %p134
      %p136 = scmp.ne.s32.totalorder %s124, %s125
      %p137 = scmp.eq.s32.totalorder %s47, 1
      %p138 = por %p136, %p137
      %p140 = scmp.ne.s32.totalorder %s125, %s139
      %p141 = scmp.eq.s32.totalorder %s47, 0
      %p142 = por %p140, %p141
      %s144 = sadd.s32 %s143, 1
      %p147 = scmp.eq.s32.totalorder %s41, 1
      %p148 = scmp.ne.s32.totalorder %s143, %s145
      %p149 = scmp.eq.s32.totalorder %s41, 0
      %p150 = por %p148, %p149
      %p151 = scmp.ne.s32.totalorder %s143, %s145
      %p152 = scmp.eq.s32.totalorder %s46, 1
      %p153 = por %p151, %p152
      %p154 = scmp.ne.s32.totalorder %s145, %s146
      %p155 = scmp.eq.s32.totalorder %s46, 0
      %p156 = por %p154, %p155
      %p157 = scmp.ne.s32.totalorder %s145, %s146
      %p158 = scmp.eq.s32.totalorder %s47, 1
      %p159 = por %p157, %p158
      %p161 = scmp.ne.s32.totalorder %s146, %s160
      %p162 = scmp.eq.s32.totalorder %s47, 0
      %p163 = por %p161, %p162
      %s165 = sadd.s32 %s164, 1
      %p168 = scmp.eq.s32.totalorder %s41, 1
      %p169 = scmp.ne.s32.totalorder %s164, %s166
      %p170 = scmp.eq.s32.totalorder %s41, 0
      %p171 = por %p169, %p170
      %p172 = scmp.ne.s32.totalorder %s164, %s166
      %p173 = scmp.eq.s32.totalorder %s46, 1
      %p174 = por %p172, %p173
      %p175 = scmp.ne.s32.totalorder %s166, %s167
      %p176 = scmp.eq.s32.totalorder %s46, 0
      %p177 = por %p175, %p176
      %p178 = scmp.ne.s32.totalorder %s166, %s167
      %p179 = scmp.eq.s32.totalorder %s47, 1
      %p180 = por %p178, %p179
      %p182 = scmp.ne.s32.totalorder %s167, %s181
      %p183 = scmp.eq.s32.totalorder %s47, 0
      %p184 = por %p182, %p183
      %s186 = sadd.s32 %s185, 1
      %p189 = scmp.eq.s32.totalorder %s41, 1
      %p190 = scmp.ne.s32.totalorder %s185, %s187
      %p191 = scmp.eq.s32.totalorder %s41, 0
      %p192 = por %p190, %p191
      %p193 = scmp.ne.s32.totalorder %s185, %s187
      %p194 = scmp.eq.s32.totalorder %s46, 1
      %p195 = por %p193, %p194
      %p196 = scmp.ne.s32.totalorder %s187, %s188
      %p197 = scmp.eq.s32.totalorder %s46, 0
      %p198 = por %p196, %p197
      %p199 = scmp.ne.s32.totalorder %s187, %s188
      %p200 = scmp.eq.s32.totalorder %s47, 1
      %p201 = por %p199, %p200
      %p203 = scmp.ne.s32.totalorder %s188, %s202
      %p204 = scmp.eq.s32.totalorder %s47, 0
      %p205 = por %p203, %p204
      %s207 = sadd.s32 %s206, 1
      %p210 = scmp.eq.s32.totalorder %s41, 1
      %p211 = scmp.ne.s32.totalorder %s206, %s208
      %p212 = scmp.eq.s32.totalorder %s41, 0
      %p213 = por %p211, %p212
      %p214 = scmp.ne.s32.totalorder %s206, %s208
      %p215 = scmp.eq.s32.totalorder %s46, 1
      %p216 = por %p214, %p215
      %p217 = scmp.ne.s32.totalorder %s208, %s209
      %p218 = scmp.eq.s32.totalorder %s46, 0
      %p219 = por %p217, %p218
      %p220 = scmp.ne.s32.totalorder %s208, %s209
      %p221 = scmp.eq.s32.totalorder %s47, 1
      %p222 = por %p220, %p221
      %p224 = scmp.ne.s32.totalorder %s209, %s223
      %p225 = scmp.eq.s32.totalorder %s47, 0
      %p226 = por %p224, %p225
      %s228 = sadd.s32 %s227, 1
      %p231 = scmp.eq.s32.totalorder %s41, 1
      %p232 = scmp.ne.s32.totalorder %s227, %s229
      %p233 = scmp.eq.s32.totalorder %s41, 0
      %p234 = por %p232, %p233
      %p235 = scmp.ne.s32.totalorder %s227, %s229
      %p236 = scmp.eq.s32.totalorder %s46, 1
      %p237 = por %p235, %p236
      %p238 = scmp.ne.s32.totalorder %s229, %s230
      %p239 = scmp.eq.s32.totalorder %s46, 0
      %p240 = por %p238, %p239
      %p241 = scmp.ne.s32.totalorder %s229, %s230
      %p242 = scmp.eq.s32.totalorder %s47, 1
      %p243 = por %p241, %p242
      %p245 = scmp.ne.s32.totalorder %s230, %s244
      %p246 = scmp.eq.s32.totalorder %s47, 0
      %p247 = por %p245, %p246
      %s249 = sadd.s32 %s248, 1
      %p252 = scmp.eq.s32.totalorder %s41, 1
      %p253 = scmp.ne.s32.totalorder %s248, %s250
      %p254 = scmp.eq.s32.totalorder %s41, 0
      %p255 = por %p253, %p254
      %p256 = scmp.ne.s32.totalorder %s248, %s250
      %p257 = scmp.eq.s32.totalorder %s46, 1
      %p258 = por %p256, %p257
      %p259 = scmp.ne.s32.totalorder %s250, %s251
      %p260 = scmp.eq.s32.totalorder %s46, 0
      %p261 = por %p259, %p260
      %p262 = scmp.ne.s32.totalorder %s250, %s251
      %p263 = scmp.eq.s32.totalorder %s47, 1
      %p264 = por %p262, %p263
      %p266 = scmp.ne.s32.totalorder %s251, %s265
      %p267 = scmp.eq.s32.totalorder %s47, 0
      %p268 = por %p266, %p267
      %s270 = sadd.s32 %s269, 1
      %p273 = scmp.eq.s32.totalorder %s41, 1
      %p274 = scmp.ne.s32.totalorder %s269, %s271
      %p275 = scmp.eq.s32.totalorder %s41, 0
      %p276 = por %p274, %p275
      %p277 = scmp.ne.s32.totalorder %s269, %s271
      %p278 = scmp.eq.s32.totalorder %s46, 1
      %p279 = por %p277, %p278
      %p280 = scmp.ne.s32.totalorder %s271, %s272
      %p281 = scmp.eq.s32.totalorder %s46, 0
      %p282 = por %p280, %p281
      %p283 = scmp.ne.s32.totalorder %s271, %s272
      %p284 = scmp.eq.s32.totalorder %s47, 1
      %p285 = por %p283, %p284
      %p287 = scmp.ne.s32.totalorder %s272, %s286
      %p288 = scmp.eq.s32.totalorder %s47, 0
      %p289 = por %p287, %p288
      %s291 = sadd.s32 %s290, 1
      %p294 = scmp.eq.s32.totalorder %s41, 1
      %p295 = scmp.ne.s32.totalorder %s290, %s292
      %p296 = scmp.eq.s32.totalorder %s41, 0
      %p297 = por %p295, %p296
      %p298 = scmp.ne.s32.totalorder %s290, %s292
      %p299 = scmp.eq.s32.totalorder %s46, 1
      %p300 = por %p298, %p299
      %p301 = scmp.ne.s32.totalorder %s292, %s293
      %p302 = scmp.eq.s32.totalorder %s46, 0
      %p303 = por %p301, %p302
      %p304 = scmp.ne.s32.totalorder %s292, %s293
      %p305 = scmp.eq.s32.totalorder %s47, 1
      %p306 = por %p304, %p305
      %p308 = scmp.ne.s32.totalorder %s293, %s307
      %p309 = scmp.eq.s32.totalorder %s47, 0
      %p310 = por %p308, %p309
      %s312 = sadd.s32 %s311, 1
      %p315 = scmp.eq.s32.totalorder %s41, 1
      %p316 = scmp.ne.s32.totalorder %s311, %s313
      %p317 = scmp.eq.s32.totalorder %s41, 0
      %p318 = por %p316, %p317
      %p319 = scmp.ne.s32.totalorder %s311, %s313
      %p320 = scmp.eq.s32.totalorder %s46, 1
      %p321 = por %p319, %p320
      %p322 = scmp.ne.s32.totalorder %s313, %s314
      %p323 = scmp.eq.s32.totalorder %s46, 0
      %p324 = por %p322, %p323
      %p325 = scmp.ne.s32.totalorder %s313, %s314
      %p326 = scmp.eq.s32.totalorder %s47, 1
      %p327 = por %p325, %p326
      %p329 = scmp.ne.s32.totalorder %s314, %s328
      %p330 = scmp.eq.s32.totalorder %s47, 0
      %p331 = por %p329, %p330
      %s333 = sadd.s32 %s332, 1
      %p336 = scmp.eq.s32.totalorder %s41, 1
      %p337 = scmp.ne.s32.totalorder %s332, %s334
      %p338 = scmp.eq.s32.totalorder %s41, 0
      %p339 = por %p337, %p338
      %p340 = scmp.ne.s32.totalorder %s332, %s334
      %p341 = scmp.eq.s32.totalorder %s46, 1
      %p342 = por %p340, %p341
      %p343 = scmp.ne.s32.totalorder %s334, %s335
      %p344 = scmp.eq.s32.totalorder %s46, 0
      %p345 = por %p343, %p344
      %p346 = scmp.ne.s32.totalorder %s334, %s335
      %p347 = scmp.eq.s32.totalorder %s47, 1
      %p348 = por %p346, %p347
      %p350 = scmp.ne.s32.totalorder %s335, %s349
      %p351 = scmp.eq.s32.totalorder %s47, 0
      %p352 = por %p350, %p351
      %s354 = sadd.s32 %s353, 1
      %p357 = scmp.eq.s32.totalorder %s41, 1
      %p358 = scmp.ne.s32.totalorder %s353, %s355
      %p359 = scmp.eq.s32.totalorder %s41, 0
      %p360 = por %p358, %p359
      %p361 = scmp.ne.s32.totalorder %s353, %s355
      %p362 = scmp.eq.s32.totalorder %s46, 1
      %p363 = por %p361, %p362
      %p364 = scmp.ne.s32.totalorder %s355, %s356
      %p365 = scmp.eq.s32.totalorder %s46, 0
      %p366 = por %p364, %p365
      %p367 = scmp.ne.s32.totalorder %s355, %s356
      %p368 = scmp.eq.s32.totalorder %s47, 1
      %p369 = por %p367, %p368
      %p371 = scmp.ne.s32.totalorder %s356, %s370
      %p372 = scmp.eq.s32.totalorder %s47, 0
      %p373 = por %p371, %p372
      %s375 = sadd.s32 %s374, 1
      %p378 = scmp.eq.s32.totalorder %s41, 1
      %p379 = scmp.ne.s32.totalorder %s374, %s376
      %p380 = scmp.eq.s32.totalorder %s41, 0
      %p381 = por %p379, %p380
      %p382 = scmp.ne.s32.totalorder %s374, %s376
      %p383 = scmp.eq.s32.totalorder %s46, 1
      %p384 = por %p382, %p383
      %p385 = scmp.ne.s32.totalorder %s376, %s377
      %p386 = scmp.eq.s32.totalorder %s46, 0
      %p387 = por %p385, %p386
      %p388 = scmp.ne.s32.totalorder %s376, %s377
      %p389 = scmp.eq.s32.totalorder %s47, 1
      %p390 = por %p388, %p389
      %p392 = scmp.ne.s32.totalorder %s377, %s391
      %p393 = scmp.eq.s32.totalorder %s47, 0
      %p394 = por %p392, %p393
      %s396 = sadd.s32 %s395, 1
      %p399 = scmp.eq.s32.totalorder %s41, 1
      %p400 = scmp.ne.s32.totalorder %s395, %s397
      %p401 = scmp.eq.s32.totalorder %s41, 0
      %p402 = por %p400, %p401
      %p403 = scmp.ne.s32.totalorder %s395, %s397
      %p404 = scmp.eq.s32.totalorder %s46, 1
      %p405 = por %p403, %p404
      %p406 = scmp.ne.s32.totalorder %s397, %s398
      %p407 = scmp.eq.s32.totalorder %s46, 0
      %p408 = por %p406, %p407
      %p409 = scmp.ne.s32.totalorder %s397, %s398
      %p410 = scmp.eq.s32.totalorder %s47, 1
      %p411 = por %p409, %p410
      %p413 = scmp.ne.s32.totalorder %s398, %s412
      %p414 = scmp.eq.s32.totalorder %s47, 0
      %p415 = por %p413, %p414
      %s417 = sadd.s32 %s416, 1
      %p420 = scmp.eq.s32.totalorder %s41, 1
      %p421 = scmp.ne.s32.totalorder %s416, %s418
      %p422 = scmp.eq.s32.totalorder %s41, 0
      %p423 = por %p421, %p422
      %p424 = scmp.ne.s32.totalorder %s416, %s418
      %p425 = scmp.eq.s32.totalorder %s46, 1
      %p426 = por %p424, %p425
      %p427 = scmp.ne.s32.totalorder %s418, %s419
      %p428 = scmp.eq.s32.totalorder %s46, 0
      %p429 = por %p427, %p428
      %p430 = scmp.ne.s32.totalorder %s418, %s419
      %p431 = scmp.eq.s32.totalorder %s47, 1
      %p432 = por %p430, %p431
      %p434 = scmp.ne.s32.totalorder %s419, %s433
      %p435 = scmp.eq.s32.totalorder %s47, 0
      %p436 = por %p434, %p435
      %s438 = sadd.s32 %s437, 1
      %p441 = scmp.eq.s32.totalorder %s41, 1
      %p442 = scmp.ne.s32.totalorder %s437, %s439
      %p443 = scmp.eq.s32.totalorder %s41, 0
      %p444 = por %p442, %p443
      %p445 = scmp.ne.s32.totalorder %s437, %s439
      %p446 = scmp.eq.s32.totalorder %s46, 1
      %p447 = por %p445, %p446
      %p448 = scmp.ne.s32.totalorder %s439, %s440
      %p449 = scmp.eq.s32.totalorder %s46, 0
      %p450 = por %p448, %p449
      %p451 = scmp.ne.s32.totalorder %s439, %s440
      %p452 = scmp.eq.s32.totalorder %s47, 1
      %p453 = por %p451, %p452
      %p455 = scmp.ne.s32.totalorder %s440, %s454
      %p456 = scmp.eq.s32.totalorder %s47, 0
      %p457 = por %p455, %p456
      %s459 = sadd.s32 %s458, 1
      %p462 = scmp.eq.s32.totalorder %s41, 1
      %p463 = scmp.ne.s32.totalorder %s458, %s460
      %p464 = scmp.eq.s32.totalorder %s41, 0
      %p465 = por %p463, %p464
      %p466 = scmp.ne.s32.totalorder %s458, %s460
      %p467 = scmp.eq.s32.totalorder %s46, 1
      %p468 = por %p466, %p467
      %p469 = scmp.ne.s32.totalorder %s460, %s461
      %p470 = scmp.eq.s32.totalorder %s46, 0
      %p471 = por %p469, %p470
      %p472 = scmp.ne.s32.totalorder %s460, %s461
      %p473 = scmp.eq.s32.totalorder %s47, 1
      %p474 = por %p472, %p473
      %p476 = scmp.ne.s32.totalorder %s461, %s475
      %p477 = scmp.eq.s32.totalorder %s47, 0
      %p478 = por %p476, %p477
      %s480 = sadd.s32 %s479, 1
      %p483 = scmp.eq.s32.totalorder %s41, 1
      %p484 = scmp.ne.s32.totalorder %s479, %s481
      %p485 = scmp.eq.s32.totalorder %s41, 0
      %p486 = por %p484, %p485
      %p487 = scmp.ne.s32.totalorder %s479, %s481
      %p488 = scmp.eq.s32.totalorder %s46, 1
      %p489 = por %p487, %p488
      %p490 = scmp.ne.s32.totalorder %s481, %s482
      %p491 = scmp.eq.s32.totalorder %s46, 0
      %p492 = por %p490, %p491
      %p493 = scmp.ne.s32.totalorder %s481, %s482
      %p494 = scmp.eq.s32.totalorder %s47, 1
      %p495 = por %p493, %p494
      %p497 = scmp.ne.s32.totalorder %s482, %s496
      %p498 = scmp.eq.s32.totalorder %s47, 0
      %p499 = por %p497, %p498
      %s501 = sadd.s32 %s500, 1
      %p504 = scmp.eq.s32.totalorder %s41, 1
      %p505 = scmp.ne.s32.totalorder %s500, %s502
      %p506 = scmp.eq.s32.totalorder %s41, 0
      %p507 = por %p505, %p506
      %p508 = scmp.ne.s32.totalorder %s500, %s502
      %p509 = scmp.eq.s32.totalorder %s46, 1
      %p510 = por %p508, %p509
      %p511 = scmp.ne.s32.totalorder %s502, %s503
      %p512 = scmp.eq.s32.totalorder %s46, 0
      %p513 = por %p511, %p512
      %p514 = scmp.ne.s32.totalorder %s502, %s503
      %p515 = scmp.eq.s32.totalorder %s47, 1
      %p516 = por %p514, %p515
      %p518 = scmp.ne.s32.totalorder %s503, %s517
      %p519 = scmp.eq.s32.totalorder %s47, 0
      %p520 = por %p518, %p519
      %s522 = sadd.s32 %s521, 1
      %p525 = scmp.eq.s32.totalorder %s41, 1
      %p526 = scmp.ne.s32.totalorder %s521, %s523
      %p527 = scmp.eq.s32.totalorder %s41, 0
      %p528 = por %p526, %p527
      %p529 = scmp.ne.s32.totalorder %s521, %s523
      %p530 = scmp.eq.s32.totalorder %s46, 1
      %p531 = por %p529, %p530
      %p532 = scmp.ne.s32.totalorder %s523, %s524
      %p533 = scmp.eq.s32.totalorder %s46, 0
      %p534 = por %p532, %p533
      %p535 = scmp.ne.s32.totalorder %s523, %s524
      %p536 = scmp.eq.s32.totalorder %s47, 1
      %p537 = por %p535, %p536
      %p539 = scmp.ne.s32.totalorder %s524, %s538
      %p540 = scmp.eq.s32.totalorder %s47, 0
      %p541 = por %p539, %p540
      %s543 = sadd.s32 %s542, 1
      %p546 = scmp.eq.s32.totalorder %s41, 1
      %p547 = scmp.ne.s32.totalorder %s542, %s544
      %p548 = scmp.eq.s32.totalorder %s41, 0
      %p549 = por %p547, %p548
      %p550 = scmp.ne.s32.totalorder %s542, %s544
      %p551 = scmp.eq.s32.totalorder %s46, 1
      %p552 = por %p550, %p551
      %p553 = scmp.ne.s32.totalorder %s544, %s545
      %p554 = scmp.eq.s32.totalorder %s46, 0
      %p555 = por %p553, %p554
      %p556 = scmp.ne.s32.totalorder %s544, %s545
      %p557 = scmp.eq.s32.totalorder %s47, 1
      %p558 = por %p556, %p557
      %p560 = scmp.ne.s32.totalorder %s545, %s559
      %p561 = scmp.eq.s32.totalorder %s47, 0
      %p562 = por %p560, %p561
      %s564 = sadd.s32 %s563, 1
      %p567 = scmp.eq.s32.totalorder %s41, 1
      %p568 = scmp.ne.s32.totalorder %s563, %s565
      %p569 = scmp.eq.s32.totalorder %s41, 0
      %p570 = por %p568, %p569
      %p571 = scmp.ne.s32.totalorder %s563, %s565
      %p572 = scmp.eq.s32.totalorder %s46, 1
      %p573 = por %p571, %p572
      %p574 = scmp.ne.s32.totalorder %s565, %s566
      %p575 = scmp.eq.s32.totalorder %s46, 0
      %p576 = por %p574, %p575
      %p577 = scmp.ne.s32.totalorder %s565, %s566
      %p578 = scmp.eq.s32.totalorder %s47, 1
      %p579 = por %p577, %p578
      %p581 = scmp.ne.s32.totalorder %s566, %s580
      %p582 = scmp.eq.s32.totalorder %s47, 0
      %p583 = por %p581, %p582
      %s585 = sadd.s32 %s584, 1
      %p588 = scmp.eq.s32.totalorder %s41, 1
      %p589 = scmp.ne.s32.totalorder %s584, %s586
      %p590 = scmp.eq.s32.totalorder %s41, 0
      %p591 = por %p589, %p590
      %p592 = scmp.ne.s32.totalorder %s584, %s586
      %p593 = scmp.eq.s32.totalorder %s46, 1
      %p594 = por %p592, %p593
      %p595 = scmp.ne.s32.totalorder %s586, %s587
      %p596 = scmp.eq.s32.totalorder %s46, 0
      %p597 = por %p595, %p596
      %p598 = scmp.ne.s32.totalorder %s586, %s587
      %p599 = scmp.eq.s32.totalorder %s47, 1
      %p600 = por %p598, %p599
      %p602 = scmp.ne.s32.totalorder %s587, %s601
      %p603 = scmp.eq.s32.totalorder %s47, 0
      %p604 = por %p602, %p603
      %s606 = sadd.s32 %s605, 1
      %p609 = scmp.eq.s32.totalorder %s41, 1
      %p610 = scmp.ne.s32.totalorder %s605, %s607
      %p611 = scmp.eq.s32.totalorder %s41, 0
      %p612 = por %p610, %p611
      %p613 = scmp.ne.s32.totalorder %s605, %s607
      %p614 = scmp.eq.s32.totalorder %s46, 1
      %p615 = por %p613, %p614
      %p616 = scmp.ne.s32.totalorder %s607, %s608
      %p617 = scmp.eq.s32.totalorder %s46, 0
      %p618 = por %p616, %p617
      %p619 = scmp.ne.s32.totalorder %s607, %s608
      %p620 = scmp.eq.s32.totalorder %s47, 1
      %p621 = por %p619, %p620
      %p623 = scmp.ne.s32.totalorder %s608, %s622
      %p624 = scmp.eq.s32.totalorder %s47, 0
      %p625 = por %p623, %p624
      %s626 = ssub.s32 %s41, %s48
      %p627 = scmp.eq.s32.totalorder %s626, 0
      %s629 = sadd.s32 %s628, 1
      %s630 = scalar_select %p627, %s628, %s629
      %p633 = pneg %p627
      %p634 = scmp.eq.s32.totalorder %s41, 1
      %p635 = por %p633, %p634
      %p636 = scmp.ne.s32.totalorder %s628, %s631
      %p637 = scmp.eq.s32.totalorder %s41, 0
      %p638 = por %p636, %p637
      %p639 = scmp.ne.s32.totalorder %s628, %s631
      %p640 = scmp.eq.s32.totalorder %s46, 1
      %p641 = por %p639, %p640
      %p642 = scmp.ne.s32.totalorder %s631, %s632
      %p643 = scmp.eq.s32.totalorder %s46, 0
      %p644 = por %p642, %p643
      %p645 = scmp.ne.s32.totalorder %s631, %s632
      %p646 = scmp.eq.s32.totalorder %s47, 1
      %p647 = por %p645, %p646
      %p649 = scmp.ne.s32.totalorder %s632, %s648
      %p650 = scmp.eq.s32.totalorder %s47, 0
      %p651 = por %p649, %p650
      %s652 = ssub.s32 %s41, %s48
      %p653 = scmp.eq.s32.totalorder %s652, 0
      %s655 = sadd.s32 %s654, 1
      %s656 = scalar_select %p653, %s654, %s655
      %p659 = pneg %p653
      %p660 = scmp.eq.s32.totalorder %s41, 1
      %p661 = por %p659, %p660
      %p662 = scmp.ne.s32.totalorder %s654, %s657
      %p663 = scmp.eq.s32.totalorder %s41, 0
      %p664 = por %p662, %p663
      %p665 = scmp.ne.s32.totalorder %s654, %s657
      %p666 = scmp.eq.s32.totalorder %s46, 1
      %p667 = por %p665, %p666
      %p668 = scmp.ne.s32.totalorder %s657, %s658
      %p669 = scmp.eq.s32.totalorder %s46, 0
      %p670 = por %p668, %p669
      %p671 = scmp.ne.s32.totalorder %s657, %s658
      %p672 = scmp.eq.s32.totalorder %s47, 1
      %p673 = por %p671, %p672
      %p675 = scmp.ne.s32.totalorder %s658, %s674
      %p676 = scmp.eq.s32.totalorder %s47, 0
      %p677 = por %p675, %p676
      %p678 = scmp.le.s32.totalorder 1, %s41
      %p679 = scmp.lt.s32.totalorder %s41, 3
      %p680 = pnand %p678, %p679
      %p681 = pneg %p680
      // Predicated region
      $region9: #{tpu_custom_call.1} parent=5 // pred_check
        _
      $region10: #{tpu_custom_call.1} parent=5 // pred_check_branch
        %683 = sbr.rel (%p680) target = $region12
      $region11: #{tpu_custom_call.1} parent=5 // pred_region
        %s684 = ssub.s32 %s41, 1
        // Predicated region
        $region13: #{tpu_custom_call.1} parent=11 // pred_check
          %p685 = pneg %p114
        $region14: #{tpu_custom_call.1} parent=11 // pred_check_branch
          %687 = sbr.rel (%p685) target = $region16
        $region15: #{tpu_custom_call.1} parent=11 // pred_region
          _
        $region16: #{tpu_custom_call.1} parent=11 // pred_fallthru
          _
        // Predicated region
        $region17: #{tpu_custom_call.1} parent=11 // pred_check
          %p688 = pneg %p135
        $region18: #{tpu_custom_call.1} parent=11 // pred_check_branch
          %690 = sbr.rel (%p688) target = $region20
        $region19: #{tpu_custom_call.1} parent=11 // pred_region
          _
        $region20: #{tpu_custom_call.1} parent=11 // pred_fallthru
          _
        // Predicated region
        $region21: #{tpu_custom_call.1} parent=11 // pred_check
          %p691 = pneg %p156
        $region22: #{tpu_custom_call.1} parent=11 // pred_check_branch
          %693 = sbr.rel (%p691) target = $region24
        $region23: #{tpu_custom_call.1} parent=11 // pred_region
          _
        $region24: #{tpu_custom_call.1} parent=11 // pred_fallthru
          _
        // Predicated region
        $region25: #{tpu_custom_call.1} parent=11 // pred_check
          %p694 = pneg %p177
        $region26: #{tpu_custom_call.1} parent=11 // pred_check_branch
          %696 = sbr.rel (%p694) target = $region28
        $region27: #{tpu_custom_call.1} parent=11 // pred_region
          _
        $region28: #{tpu_custom_call.1} parent=11 // pred_fallthru
          _
        // Predicated region
        $region29: #{tpu_custom_call.1} parent=11 // pred_check
          %p697 = pneg %p198
        $region30: #{tpu_custom_call.1} parent=11 // pred_check_branch
          %699 = sbr.rel (%p697) target = $region32
        $region31: #{tpu_custom_call.1} parent=11 // pred_region
          _
        $region32: #{tpu_custom_call.1} parent=11 // pred_fallthru
          _
        // Predicated region
        $region33: #{tpu_custom_call.1} parent=11 // pred_check
          %p700 = pneg %p219
        $region34: #{tpu_custom_call.1} parent=11 // pred_check_branch
          %702 = sbr.rel (%p700) target = $region36
        $region35: #{tpu_custom_call.1} parent=11 // pred_region
          _
        $region36: #{tpu_custom_call.1} parent=11 // pred_fallthru
          _
        // Predicated region
        $region37: #{tpu_custom_call.1} parent=11 // pred_check
          %p703 = pneg %p240
        $region38: #{tpu_custom_call.1} parent=11 // pred_check_branch
          %705 = sbr.rel (%p703) target = $region40
        $region39: #{tpu_custom_call.1} parent=11 // pred_region
          _
        $region40: #{tpu_custom_call.1} parent=11 // pred_fallthru
          _
        // Predicated region
        $region41: #{tpu_custom_call.1} parent=11 // pred_check
          %p706 = pneg %p261
        $region42: #{tpu_custom_call.1} parent=11 // pred_check_branch
          %708 = sbr.rel (%p706) target = $region44
        $region43: #{tpu_custom_call.1} parent=11 // pred_region
          _
        $region44: #{tpu_custom_call.1} parent=11 // pred_fallthru
          _
        // Predicated region
        $region45: #{tpu_custom_call.1} parent=11 // pred_check
          %p709 = pneg %p282
        $region46: #{tpu_custom_call.1} parent=11 // pred_check_branch
          %711 = sbr.rel (%p709) target = $region48
        $region47: #{tpu_custom_call.1} parent=11 // pred_region
          _
        $region48: #{tpu_custom_call.1} parent=11 // pred_fallthru
          _
        // Predicated region
        $region49: #{tpu_custom_call.1} parent=11 // pred_check
          %p712 = pneg %p303
        $region50: #{tpu_custom_call.1} parent=11 // pred_check_branch
          %714 = sbr.rel (%p712) target = $region52
        $region51: #{tpu_custom_call.1} parent=11 // pred_region
          _
        $region52: #{tpu_custom_call.1} parent=11 // pred_fallthru
          _
        // Predicated region
        $region53: #{tpu_custom_call.1} parent=11 // pred_check
          %p715 = pneg %p324
        $region54: #{tpu_custom_call.1} parent=11 // pred_check_branch
          %717 = sbr.rel (%p715) target = $region56
        $region55: #{tpu_custom_call.1} parent=11 // pred_region
          _
        $region56: #{tpu_custom_call.1} parent=11 // pred_fallthru
          _
        // Predicated region
        $region57: #{tpu_custom_call.1} parent=11 // pred_check
          %p718 = pneg %p345
        $region58: #{tpu_custom_call.1} parent=11 // pred_check_branch
          %720 = sbr.rel (%p718) target = $region60
        $region59: #{tpu_custom_call.1} parent=11 // pred_region
          _
        $region60: #{tpu_custom_call.1} parent=11 // pred_fallthru
          _
        // Predicated region
        $region61: #{tpu_custom_call.1} parent=11 // pred_check
          %p721 = pneg %p366
        $region62: #{tpu_custom_call.1} parent=11 // pred_check_branch
          %723 = sbr.rel (%p721) target = $region64
        $region63: #{tpu_custom_call.1} parent=11 // pred_region
          _
        $region64: #{tpu_custom_call.1} parent=11 // pred_fallthru
          _
        // Predicated region
        $region65: #{tpu_custom_call.1} parent=11 // pred_check
          %p724 = pneg %p387
        $region66: #{tpu_custom_call.1} parent=11 // pred_check_branch
          %726 = sbr.rel (%p724) target = $region68
        $region67: #{tpu_custom_call.1} parent=11 // pred_region
          _
        $region68: #{tpu_custom_call.1} parent=11 // pred_fallthru
          _
        // Predicated region
        $region69: #{tpu_custom_call.1} parent=11 // pred_check
          %p727 = pneg %p408
        $region70: #{tpu_custom_call.1} parent=11 // pred_check_branch
          %729 = sbr.rel (%p727) target = $region72
        $region71: #{tpu_custom_call.1} parent=11 // pred_region
          _
        $region72: #{tpu_custom_call.1} parent=11 // pred_fallthru
          _
        // Predicated region
        $region73: #{tpu_custom_call.1} parent=11 // pred_check
          %p730 = pneg %p429
        $region74: #{tpu_custom_call.1} parent=11 // pred_check_branch
          %732 = sbr.rel (%p730) target = $region76
        $region75: #{tpu_custom_call.1} parent=11 // pred_region
          _
        $region76: #{tpu_custom_call.1} parent=11 // pred_fallthru
          _
        // Predicated region
        $region77: #{tpu_custom_call.1} parent=11 // pred_check
          %p733 = pneg %p450
        $region78: #{tpu_custom_call.1} parent=11 // pred_check_branch
          %735 = sbr.rel (%p733) target = $region80
        $region79: #{tpu_custom_call.1} parent=11 // pred_region
          _
        $region80: #{tpu_custom_call.1} parent=11 // pred_fallthru
          _
        // Predicated region
        $region81: #{tpu_custom_call.1} parent=11 // pred_check
          %p736 = pneg %p471
        $region82: #{tpu_custom_call.1} parent=11 // pred_check_branch
          %738 = sbr.rel (%p736) target = $region84
        $region83: #{tpu_custom_call.1} parent=11 // pred_region
          _
        $region84: #{tpu_custom_call.1} parent=11 // pred_fallthru
          _
        // Predicated region
        $region85: #{tpu_custom_call.1} parent=11 // pred_check
          %p739 = pneg %p492
        $region86: #{tpu_custom_call.1} parent=11 // pred_check_branch
          %741 = sbr.rel (%p739) target = $region88
        $region87: #{tpu_custom_call.1} parent=11 // pred_region
          _
        $region88: #{tpu_custom_call.1} parent=11 // pred_fallthru
          _
        // Predicated region
        $region89: #{tpu_custom_call.1} parent=11 // pred_check
          %p742 = pneg %p513
        $region90: #{tpu_custom_call.1} parent=11 // pred_check_branch
          %744 = sbr.rel (%p742) target = $region92
        $region91: #{tpu_custom_call.1} parent=11 // pred_region
          _
        $region92: #{tpu_custom_call.1} parent=11 // pred_fallthru
          _
        // Predicated region
        $region93: #{tpu_custom_call.1} parent=11 // pred_check
          %p745 = pneg %p534
        $region94: #{tpu_custom_call.1} parent=11 // pred_check_branch
          %747 = sbr.rel (%p745) target = $region96
        $region95: #{tpu_custom_call.1} parent=11 // pred_region
          _
        $region96: #{tpu_custom_call.1} parent=11 // pred_fallthru
          _
        // Predicated region
        $region97: #{tpu_custom_call.1} parent=11 // pred_check
          %p748 = pneg %p555
        $region98: #{tpu_custom_call.1} parent=11 // pred_check_branch
          %750 = sbr.rel (%p748) target = $region100
        $region99: #{tpu_custom_call.1} parent=11 // pred_region
          _
        $region100: #{tpu_custom_call.1} parent=11 // pred_fallthru
          _
        // Predicated region
        $region101: #{tpu_custom_call.1} parent=11 // pred_check
          %p751 = pneg %p576
        $region102: #{tpu_custom_call.1} parent=11 // pred_check_branch
          %753 = sbr.rel (%p751) target = $region104
        $region103: #{tpu_custom_call.1} parent=11 // pred_region
          _
        $region104: #{tpu_custom_call.1} parent=11 // pred_fallthru
          _
        // Predicated region
        $region105: #{tpu_custom_call.1} parent=11 // pred_check
          %p754 = pneg %p597
        $region106: #{tpu_custom_call.1} parent=11 // pred_check_branch
          %756 = sbr.rel (%p754) target = $region108
        $region107: #{tpu_custom_call.1} parent=11 // pred_region
          _
        $region108: #{tpu_custom_call.1} parent=11 // pred_fallthru
          _
        // Predicated region
        $region109: #{tpu_custom_call.1} parent=11 // pred_check
          %p757 = pneg %p618
        $region110: #{tpu_custom_call.1} parent=11 // pred_check_branch
          %759 = sbr.rel (%p757) target = $region112
        $region111: #{tpu_custom_call.1} parent=11 // pred_region
          _
        $region112: #{tpu_custom_call.1} parent=11 // pred_fallthru
          _
      $region12: #{tpu_custom_call.1} parent=5 // pred_fallthru
        _
      %p760 = scmp.lt.s32.totalorder %s41, 2
      // Predicated region
      $region113: #{tpu_custom_call.1} parent=5 // pred_check
        %p761 = pneg %p760
      $region114: #{tpu_custom_call.1} parent=5 // pred_check_branch
        %763 = sbr.rel (%p761) target = $region116
      $region115: #{tpu_custom_call.1} parent=5 // pred_region
        // Predicated region
        $region117: #{tpu_custom_call.1} parent=115 // pred_check
          %p764 = pneg %p61
        $region118: #{tpu_custom_call.1} parent=115 // pred_check_branch
          %766 = sbr.rel (%p764) target = $region120
        $region119: #{tpu_custom_call.1} parent=115 // pred_region
          %p767 = scmp.lt.s32.totalorder %s41, 1
          %s768 = scalar_select %p767, %s41, 1
          %s769 = smul.addr %s768, 32
          %s770 = smul.addr %s769, 8
          %s771 = scalar_lea.vmem %s0, %s770
        $region120: #{tpu_custom_call.1} parent=115 // pred_fallthru
          _
        // Predicated region
        $region121: #{tpu_custom_call.1} parent=115 // pred_check
          %p772 = pneg %p87
        $region122: #{tpu_custom_call.1} parent=115 // pred_check_branch
          %774 = sbr.rel (%p772) target = $region124
        $region123: #{tpu_custom_call.1} parent=115 // pred_region
          %p775 = scmp.lt.s32.totalorder %s41, 1
          %s776 = scalar_select %p775, %s41, 1
          %s777 = scalar_lea.vmem %s1, %s776
        $region124: #{tpu_custom_call.1} parent=115 // pred_fallthru
          _
      $region116: #{tpu_custom_call.1} parent=5 // pred_fallthru
        _
      %p778 = scmp.le.s32.totalorder 1, %s41
      %p779 = scmp.lt.s32.totalorder %s41, 3
      %p780 = pnand %p778, %p779
      %p781 = pneg %p780
      // Predicated region
      $region125: #{tpu_custom_call.1} parent=5 // pred_check
        _
      $region126: #{tpu_custom_call.1} parent=5 // pred_check_branch
        %783 = sbr.rel (%p780) target = $region128
      $region127: #{tpu_custom_call.1} parent=5 // pred_region
        %s784 = ssub.s32 %s41, 1
        %p785 = scmp.lt.s32.totalorder %s46, 1
        %s786 = scalar_select %p785, %s46, 1
        %s787 = smul.addr %s786, 32
        %s788 = smul.addr %s787, 8
        %s789 = scalar_lea.vmem %s0, %s788
        %p790 = pneg %p67
        %p791 = pneg %p64
        %p792 = scmp.lt.s32.totalorder %s46, 1
        %s793 = scalar_select %p792, %s46, 1
        %s794 = scalar_lea.vmem %s1, %s793
        %p795 = pneg %p93
        %p796 = pneg %p90
        %p797 = pneg %p114
        %p798 = pneg %p111
        %p799 = pneg %p135
        %p800 = pneg %p132
        %p801 = pneg %p156
        %p802 = pneg %p153
        %p803 = pneg %p177
        %p804 = pneg %p174
        %p805 = pneg %p198
        %p806 = pneg %p195
        %p807 = pneg %p219
        %p808 = pneg %p216
        %p809 = pneg %p240
        %p810 = pneg %p237
        %p811 = pneg %p261
        %p812 = pneg %p258
        %p813 = pneg %p282
        %p814 = pneg %p279
        %p815 = pneg %p303
        %p816 = pneg %p300
        %p817 = pneg %p324
        %p818 = pneg %p321
        %p819 = pneg %p345
        %p820 = pneg %p342
        %p821 = pneg %p366
        %p822 = pneg %p363
        %p823 = pneg %p387
        %p824 = pneg %p384
        %p825 = pneg %p408
        %p826 = pneg %p405
        %p827 = pneg %p429
        %p828 = pneg %p426
        %p829 = pneg %p450
        %p830 = pneg %p447
        %p831 = pneg %p471
        %p832 = pneg %p468
        %p833 = pneg %p492
        %p834 = pneg %p489
        %p835 = pneg %p513
        %p836 = pneg %p510
        %p837 = pneg %p534
        %p838 = pneg %p531
        %p839 = pneg %p555
        %p840 = pneg %p552
        %p841 = pneg %p576
        %p842 = pneg %p573
        %p843 = pneg %p597
        %p844 = pneg %p594
        %p845 = pneg %p618
        %p846 = pneg %p615
        %p847 = pneg %p644
        %p848 = pneg %p641
        %s849 = sand.u32 %s631, 1
        %s850 = scalar_lea.sflag [#allocation3], %s849
        %s851 = sand.u32 %s631, 1
        %s852 = smul.addr %s851, 48
        %s853 = scalar_lea.vmem [#allocation2], %s852
        %p854 = pneg %p670
        %p855 = pneg %p667
        %s856 = sand.u32 %s657, 1
        %s857 = scalar_lea.sflag [#allocation5], %s856
        %s858 = sand.u32 %s657, 1
        %s859 = smul.addr %s858, 24
        %s860 = scalar_lea.vmem [#allocation4], %s859
        %p861 = scmp.lt.s32.totalorder %s46, 1
        %s862 = scalar_select %p861, %s46, 1
        %s863 = smul.addr %s862, 32
        %s864 = smul.addr %s863, 8
        %s865 = scalar_lea.vmem %s0, %s864
        %p866 = scmp.lt.s32.totalorder %s46, 1
        %s867 = scalar_select %p866, %s46, 1
        %s868 = scalar_lea.vmem %s1, %s867
        %v869 = vld [vmem:[%s865] sm:$0xff]
        %v870 = vld [vmem:[%s865 + $0x8] sm:$0xff]
        %v871 = vld [vmem:[%s865 + $0x10] sm:$0xff]
        %v872 = vld [vmem:[%s865 + $0x18] sm:$0xff]
        %v873 = vld [vmem:[%s865 + $0x20] sm:$0xff]
        %v874 = vld [vmem:[%s865 + $0x28] sm:$0xff]
        %v875 = vld [vmem:[%s865 + $0x30] sm:$0xff]
        %v876 = vld [vmem:[%s865 + $0x38] sm:$0xff]
        %v877 = vld [vmem:[%s865 + $0x40] sm:$0xff]
        %v878 = vld [vmem:[%s865 + $0x48] sm:$0xff]
        %v879 = vld [vmem:[%s865 + $0x50] sm:$0xff]
        %v880 = vld [vmem:[%s865 + $0x58] sm:$0xff]
        %v881 = vld [vmem:[%s865 + $0x60] sm:$0xff]
        %v882 = vld [vmem:[%s865 + $0x68] sm:$0xff]
        %v883 = vld [vmem:[%s865 + $0x70] sm:$0xff]
        %v884 = vld [vmem:[%s865 + $0x78] sm:$0xff]
        %v885 = vld [vmem:[%s865 + $0x80] sm:$0xff]
        %v886 = vld [vmem:[%s865 + $0x88] sm:$0xff]
        %v887 = vld [vmem:[%s865 + $0x90] sm:$0xff]
        %v888 = vld [vmem:[%s865 + $0x98] sm:$0xff]
        %v889 = vld [vmem:[%s865 + $0xa0] sm:$0xff]
        %v890 = vld [vmem:[%s865 + $0xa8] sm:$0xff]
        %v891 = vld [vmem:[%s865 + $0xb0] sm:$0xff]
        %v892 = vld [vmem:[%s865 + $0xb8] sm:$0xff]
        %v893 = vld [vmem:[%s865 + $0xc0] sm:$0xff]
        %v894 = vld [vmem:[%s865 + $0xc8] sm:$0xff]
        %v895 = vld [vmem:[%s865 + $0xd0] sm:$0xff]
        %v896 = vld [vmem:[%s865 + $0xd8] sm:$0xff]
        %v897 = vld [vmem:[%s865 + $0xe0] sm:$0xff]
        %v898 = vld [vmem:[%s865 + $0xe8] sm:$0xff]
        %v899 = vld [vmem:[%s865 + $0xf0] sm:$0xff]
        %v900 = vld [vmem:[%s865 + $0xf8] sm:$0xff]
        %v901 = vld [vmem:[%s868] sm:$0x1]
        %v902 = vld [vmem:[%s2] sm:$0xff]
        %v903 = vld [vmem:[%s2 + $0x8] sm:$0xff]
        %v904 = vld [vmem:[%s2 + $0x10] sm:$0xff]
        %v905 = vld [vmem:[%s2 + $0x18] sm:$0xff]
        %v906 = vld [vmem:[%s2 + $0x20] sm:$0xff]
        %v907 = vld [vmem:[%s2 + $0x28] sm:$0xff]
        %v908 = vld [vmem:[%s2 + $0x30] sm:$0xff]
        %v909 = vld [vmem:[%s2 + $0x38] sm:$0xff]
        %v910 = vld [vmem:[%s2 + $0x40] sm:$0xff]
        %v911 = vld [vmem:[%s2 + $0x48] sm:$0xff]
        %v912 = vld [vmem:[%s2 + $0x50] sm:$0xff]
        %v913 = vld [vmem:[%s2 + $0x58] sm:$0xff]
        %v914 = vld [vmem:[%s2 + $0x60] sm:$0xff]
        %v915 = vld [vmem:[%s2 + $0x68] sm:$0xff]
        %v916 = vld [vmem:[%s2 + $0x70] sm:$0xff]
        %v917 = vld [vmem:[%s2 + $0x78] sm:$0xff]
        %918 = vmatprep.subr.mxu0 0.0
        %919 = vmatpush1.msra.mxu0 %v869
        %920 = vmatprep.subr.mxu0 0.0
        %921 = vmatpush1.msra.mxu0 %v870
        %922 = vmatprep.subr.mxu0 0.0
        %923 = vmatpush1.msra.mxu0 %v871
        %924 = vmatprep.subr.mxu0 0.0
        %925 = vmatpush1.msra.mxu0 %v872
        %926 = vmatprep.subr.mxu0 0.0
        %927 = vmatpush1.msra.mxu0 %v873
        %928 = vmatprep.subr.mxu0 0.0
        %929 = vmatpush1.msra.mxu0 %v874
        %930 = vmatprep.subr.mxu0 0.0
        %931 = vmatpush1.msra.mxu0 %v875
        %932 = vmatprep.subr.mxu0 0.0
        %933 = vmatpush1.msra.mxu0 %v876
        %934 = vmatprep.subr.mxu0 0.0
        %935 = vmatpush1.msra.mxu0 %v877
        %936 = vmatprep.subr.mxu0 0.0
        %937 = vmatpush1.msra.mxu0 %v878
        %938 = vmatprep.subr.mxu0 0.0
        %939 = vmatpush1.msra.mxu0 %v879
        %940 = vmatprep.subr.mxu0 0.0
        %941 = vmatpush1.msra.mxu0 %v880
        %942 = vmatprep.subr.mxu0 0.0
        %943 = vmatpush1.msra.mxu0 %v881
        %944 = vmatprep.subr.mxu0 0.0
        %945 = vmatpush1.msra.mxu0 %v882
        %946 = vmatprep.subr.mxu0 0.0
        %947 = vmatpush1.msra.mxu0 %v883
        %948 = vmatprep.subr.mxu0 0.0
        %949 = vmatpush1.msra.mxu0 %v884
        %950 = vmatprep.subr.mxu0 0.0
        %951 = vmatpush1.msra.mxu0 %v885
        %952 = vmatprep.subr.mxu0 0.0
        %953 = vmatpush1.msra.mxu0 %v886
        %954 = vmatprep.subr.mxu0 0.0
        %955 = vmatpush1.msra.mxu0 %v887
        %956 = vmatprep.subr.mxu0 0.0
        %957 = vmatpush1.msra.mxu0 %v888
        %958 = vmatprep.subr.mxu0 0.0
        %959 = vmatpush1.msra.mxu0 %v889
        %960 = vmatprep.subr.mxu0 0.0
        %961 = vmatpush1.msra.mxu0 %v890
        %962 = vmatprep.subr.mxu0 0.0
        %963 = vmatpush1.msra.mxu0 %v891
        %964 = vmatprep.subr.mxu0 0.0
        %965 = vmatpush1.msra.mxu0 %v892
        %966 = vmatprep.subr.mxu0 0.0
        %967 = vmatpush1.msra.mxu0 %v893
        %968 = vmatprep.subr.mxu0 0.0
        %969 = vmatpush1.msra.mxu0 %v894
        %970 = vmatprep.subr.mxu0 0.0
        %971 = vmatpush1.msra.mxu0 %v895
        %972 = vmatprep.subr.mxu0 0.0
        %973 = vmatpush1.msra.mxu0 %v896
        %974 = vmatprep.subr.mxu0 0.0
        %975 = vmatpush1.msra.mxu0 %v897
        %976 = vmatprep.subr.mxu0 0.0
        %977 = vmatpush1.msra.mxu0 %v898
        %978 = vmatprep.subr.mxu0 0.0
        %979 = vmatpush1.msra.mxu0 %v899
        %980 = vmatprep.subr.mxu0 0.0
        %981 = vmatpush1.msra.mxu0 %v900
        %982 = vmatprep.mubr.f32.mxu0 %v903
        %983 = vmatmul.mubr.f32.gmra.mrb[0].mxu0 %v902
        %v984 = vpop.f32.mrb[0].mxu0
        %v985 = vadd.f32 0.0, %v984
        %v986 = vpop.f32.mrb[0].mxu0
        %987 = vmatprep.mubr.f32.mxu0 %v905
        %988 = vmatmul.mubr.f32.gmra.mrb[0].mxu0 %v904
        %v989 = vpop.f32.mrb[0].mxu0
        %v990 = vadd.f32 0.0, %v989
        %v991 = vpop.f32.mrb[0].mxu0
        %992 = vmatprep.mubr.f32.mxu0 %v907
        %993 = vmatmul.mubr.f32.gmra.mrb[0].mxu0 %v906
        %v994 = vpop.f32.mrb[0].mxu0
        %v995 = vadd.f32 0.0, %v994
        %v996 = vpop.f32.mrb[0].mxu0
        %997 = vmatprep.mubr.f32.mxu0 %v909
        %998 = vmatmul.mubr.f32.gmra.mrb[0].mxu0 %v908
        %v999 = vpop.f32.mrb[0].mxu0
        %v1000 = vadd.f32 0.0, %v999
        %v1001 = vpop.f32.mrb[0].mxu0
        %1002 = vmatprep.mubr.f32.mxu0 %v911
        %1003 = vmatmul.mubr.f32.gmra.mrb[0].mxu0 %v910
        %v1004 = vpop.f32.mrb[0].mxu0
        %v1005 = vadd.f32 0.0, %v1004
        %v1006 = vpop.f32.mrb[0].mxu0
        %1007 = vmatprep.mubr.f32.mxu0 %v913
        %1008 = vmatmul.mubr.f32.gmra.mrb[0].mxu0 %v912
        %v1009 = vpop.f32.mrb[0].mxu0
        %v1010 = vadd.f32 0.0, %v1009
        %v1011 = vpop.f32.mrb[0].mxu0
        %1012 = vmatprep.mubr.f32.mxu0 %v915
        %1013 = vmatmul.mubr.f32.gmra.mrb[0].mxu0 %v914
        %v1014 = vpop.f32.mrb[0].mxu0
        %v1015 = vadd.f32 0.0, %v1014
        %v1016 = vpop.f32.mrb[0].mxu0
        %1017 = vmatprep.mubr.f32.mxu0 %v917
        %1018 = vmatmul.mubr.f32.gmra.mrb[0].mxu0 %v916
        %v1019 = vpop.f32.mrb[0].mxu0
        %v1020 = vadd.f32 0.0, %v1019
        %v1021 = vpop.f32.mrb[0].mxu0
        %1022 = vdwg.mxu0
        %v1023 = vld [vmem:[%s3] sm:$0xff]
        %v1024 = vld [vmem:[%s3 + $0x8] sm:$0xff]
        %vm1025 = vcmask 523264
        %v1027 = vsel %vm1025, %v1023, 0
        %v1030 = vsel %vm1025, %v1024, 0
        %1032 = vmatprep.subr.mxu0 0.0
        %1033 = vmatpush1.msra.mxu0 %v985
        %1034 = vmatprep.subr.mxu0 0.0
        %1035 = vmatpush1.msra.mxu0 %v990
        %1036 = vmatprep.subr.mxu0 0.0
        %1037 = vmatpush1.msra.mxu0 %v995
        %1038 = vmatprep.subr.mxu0 0.0
        %1039 = vmatpush1.msra.mxu0 %v1000
        %1040 = vmatprep.subr.mxu0 0.0
        %1041 = vmatpush1.msra.mxu0 %v1005
        %1042 = vmatprep.subr.mxu0 0.0
        %1043 = vmatpush1.msra.mxu0 %v1010
        %1044 = vmatprep.subr.mxu0 0.0
        %1045 = vmatpush1.msra.mxu0 %v1015
        %1046 = vmatprep.subr.mxu0 0.0
        %1047 = vmatpush1.msra.mxu0 %v1020
        %1048 = vmatprep.subr.mxu0 0.0
        %1049 = vmatpush1.msra.mxu0 0.0
        %1050 = vmatprep.subr.mxu0 0.0
        %1051 = vmatpush1.msra.mxu0 0.0
        %1052 = vmatprep.subr.mxu0 0.0
        %1053 = vmatpush1.msra.mxu0 0.0
        %1054 = vmatprep.subr.mxu0 0.0
        %1055 = vmatpush1.msra.mxu0 0.0
        %1056 = vmatprep.subr.mxu0 0.0
        %1057 = vmatpush1.msra.mxu0 0.0
        %1058 = vmatprep.subr.mxu0 0.0
        %1059 = vmatpush1.msra.mxu0 0.0
        %1060 = vmatprep.subr.mxu0 0.0
        %1061 = vmatpush1.msra.mxu0 0.0
        %1062 = vmatprep.subr.mxu0 0.0
        %1063 = vmatpush1.msra.mxu0 0.0
        %1064 = vmatprep.subr.mxu0 0.0
        %1065 = vmatpush1.msra.mxu0 0.0
        %1066 = vmatprep.subr.mxu0 0.0
        %1067 = vmatpush1.msra.mxu0 0.0
        %1068 = vmatprep.subr.mxu0 0.0
        %1069 = vmatpush1.msra.mxu0 0.0
        %1070 = vmatprep.subr.mxu0 0.0
        %1071 = vmatpush1.msra.mxu0 0.0
        %1072 = vmatprep.subr.mxu0 0.0
        %1073 = vmatpush1.msra.mxu0 0.0
        %1074 = vmatprep.subr.mxu0 0.0
        %1075 = vmatpush1.msra.mxu0 0.0
        %1076 = vmatprep.subr.mxu0 0.0
        %1077 = vmatpush1.msra.mxu0 0.0
        %1078 = vmatprep.subr.mxu0 0.0
        %1079 = vmatpush1.msra.mxu0 0.0
        %1080 = vmatprep.subr.mxu0 0.0
        %1081 = vmatpush1.msra.mxu0 0.0
        %1082 = vmatprep.subr.mxu0 0.0
        %1083 = vmatpush1.msra.mxu0 0.0
        %1084 = vmatprep.subr.mxu0 0.0
        %1085 = vmatpush1.msra.mxu0 0.0
        %1086 = vmatprep.subr.mxu0 0.0
        %1087 = vmatpush1.msra.mxu0 0.0
        %1088 = vmatprep.subr.mxu0 0.0
        %1089 = vmatpush1.msra.mxu0 0.0
        %1090 = vmatprep.subr.mxu0 0.0
        %1091 = vmatpush1.msra.mxu0 0.0
        %1092 = vmatprep.subr.mxu0 0.0
        %1093 = vmatpush1.msra.mxu0 0.0
        %1094 = vmatprep.subr.mxu0 0.0
        %1095 = vmatpush1.msra.mxu0 0.0
        %1096 = vmatprep.mubr.f32.mxu0 0.0
        %1097 = vmatmul.mubr.f32.gmra.mrb[0].mxu0 %v1027
        %v1098 = vpop.f32.mrb[0].mxu0
        %v1099 = vadd.f32 0.0, %v1098
        %v1100 = vpop.f32.mrb[0].mxu0
        %1101 = vmatprep.mubr.f32.mxu0 0.0
        %1102 = vmatmul.mubr.f32.gmra.mrb[0].mxu0 %v1030
        %v1103 = vpop.f32.mrb[0].mxu0
        %v1104 = vadd.f32 0.0, %v1103
        %v1105 = vpop.f32.mrb[0].mxu0
        %1106 = vdwg.mxu0
        %v1107 = vld [vmem:[%s4] sm:$0xff]
        %v1108 = vld [vmem:[%s4 + $0x8] sm:$0xff]
        %v1109 = vld [vmem:[%s4 + $0x10] sm:$0xff]
        %v1110 = vld [vmem:[%s4 + $0x18] sm:$0xff]
        %v1111 = vld [vmem:[%s5] sm:$0x1]
        %v1113 = vlaneseq
        %v1114 = vshrl.u32 %v1113, 7
        %v1115 = vsub.s32 0, %v1114
        %v1116 = vrot.slane %v1111, %v1115
        %vm1118 = vcmask 261120
        %v1120 = vsel %vm1118, %v869, 0
        %v1123 = vsel %vm1118, %v870, 0
        %v1126 = vsel %vm1118, %v871, 0
        %v1129 = vsel %vm1118, %v872, 0
        %v1132 = vsel %vm1118, %v873, 0
        %v1135 = vsel %vm1118, %v874, 0
        %v1138 = vsel %vm1118, %v875, 0
        %v1141 = vsel %vm1118, %v876, 0
        %v1144 = vsel %vm1118, %v877, 0
        %v1147 = vsel %vm1118, %v878, 0
        %v1150 = vsel %vm1118, %v879, 0
        %v1153 = vsel %vm1118, %v880, 0
        %v1156 = vsel %vm1118, %v881, 0
        %v1159 = vsel %vm1118, %v882, 0
        %v1162 = vsel %vm1118, %v883, 0
        %v1165 = vsel %vm1118, %v884, 0
        %v1168 = vsel %vm1118, %v885, 0
        %v1171 = vsel %vm1118, %v886, 0
        %v1174 = vsel %vm1118, %v887, 0
        %v1177 = vsel %vm1118, %v888, 0
        %v1180 = vsel %vm1118, %v889, 0
        %v1183 = vsel %vm1118, %v890, 0
        %v1186 = vsel %vm1118, %v891, 0
        %v1189 = vsel %vm1118, %v892, 0
        %v1192 = vsel %vm1118, %v893, 0
        %v1195 = vsel %vm1118, %v894, 0
        %v1198 = vsel %vm1118, %v895, 0
        %v1201 = vsel %vm1118, %v896, 0
        %v1204 = vsel %vm1118, %v897, 0
        %v1207 = vsel %vm1118, %v898, 0
        %v1210 = vsel %vm1118, %v899, 0
        %v1213 = vsel %vm1118, %v900, 0
        %1215 = vmatprep.subr.mxu0 0.0
        %1216 = vmatpush1.msra.mxu0 %v1107
        %1217 = vmatprep.subr.mxu0 0.0
        %1218 = vmatpush1.msra.mxu0 %v1108
        %1219 = vmatprep.subr.mxu0 0.0
        %1220 = vmatpush1.msra.mxu0 %v1109
        %1221 = vmatprep.subr.mxu0 0.0
        %1222 = vmatpush1.msra.mxu0 %v1110
        %1223 = vmatprep.subr.mxu0 0.0
        %1224 = vmatpush1.msra.mxu0 0.0
        %1225 = vmatprep.subr.mxu0 0.0
        %1226 = vmatpush1.msra.mxu0 0.0
        %1227 = vmatprep.subr.mxu0 0.0
        %1228 = vmatpush1.msra.mxu0 0.0
        %1229 = vmatprep.subr.mxu0 0.0
        %1230 = vmatpush1.msra.mxu0 0.0
        %1231 = vmatprep.subr.mxu0 0.0
        %1232 = vmatpush1.msra.mxu0 0.0
        %1233 = vmatprep.subr.mxu0 0.0
        %1234 = vmatpush1.msra.mxu0 0.0
        %1235 = vmatprep.subr.mxu0 0.0
        %1236 = vmatpush1.msra.mxu0 0.0
        %1237 = vmatprep.subr.mxu0 0.0
        %1238 = vmatpush1.msra.mxu0 0.0
        %1239 = vmatprep.subr.mxu0 0.0
        %1240 = vmatpush1.msra.mxu0 0.0
        %1241 = vmatprep.subr.mxu0 0.0
        %1242 = vmatpush1.msra.mxu0 0.0
        %1243 = vmatprep.subr.mxu0 0.0
        %1244 = vmatpush1.msra.mxu0 0.0
        %1245 = vmatprep.subr.mxu0 0.0
        %1246 = vmatpush1.msra.mxu0 0.0
        %1247 = vmatprep.subr.mxu0 0.0
        %1248 = vmatpush1.msra.mxu0 0.0
        %1249 = vmatprep.subr.mxu0 0.0
        %1250 = vmatpush1.msra.mxu0 0.0
        %1251 = vmatprep.subr.mxu0 0.0
        %1252 = vmatpush1.msra.mxu0 0.0
        %1253 = vmatprep.subr.mxu0 0.0
        %1254 = vmatpush1.msra.mxu0 0.0
        %1255 = vmatprep.subr.mxu0 0.0
        %1256 = vmatpush1.msra.mxu0 0.0
        %1257 = vmatprep.subr.mxu0 0.0
        %1258 = vmatpush1.msra.mxu0 0.0
        %1259 = vmatprep.subr.mxu0 0.0
        %1260 = vmatpush1.msra.mxu0 0.0
        %1261 = vmatprep.subr.mxu0 0.0
        %1262 = vmatpush1.msra.mxu0 0.0
        %1263 = vmatprep.subr.mxu0 0.0
        %1264 = vmatpush1.msra.mxu0 0.0
        %1265 = vmatprep.subr.mxu0 0.0
        %1266 = vmatpush1.msra.mxu0 0.0
        %1267 = vmatprep.subr.mxu0 0.0
        %1268 = vmatpush1.msra.mxu0 0.0
        %1269 = vmatprep.subr.mxu0 0.0
        %1270 = vmatpush1.msra.mxu0 0.0
        %1271 = vmatprep.subr.mxu0 0.0
        %1272 = vmatpush1.msra.mxu0 0.0
        %1273 = vmatprep.subr.mxu0 0.0
        %1274 = vmatpush1.msra.mxu0 0.0
        %1275 = vmatprep.subr.mxu0 0.0
        %1276 = vmatpush1.msra.mxu0 0.0
        %1277 = vmatprep.subr.mxu0 0.0
        %1278 = vmatpush1.msra.mxu0 0.0
        %1279 = vmatprep.mubr.f32.mxu0 0.0
        %1280 = vmatmul.mubr.f32.gmra.mrb[0].mxu0 %v1120
        %v1281 = vpop.f32.mrb[0].mxu0
        %v1282 = vadd.f32 %v1116, %v1281
        %v1283 = vpop.f32.mrb[0].mxu0
        %1284 = vmatprep.mubr.f32.mxu0 0.0
        %1285 = vmatmul.mubr.f32.gmra.mrb[0].mxu0 %v1123
        %v1286 = vpop.f32.mrb[0].mxu0
        %v1287 = vadd.f32 %v1116, %v1286
        %v1288 = vpop.f32.mrb[0].mxu0
        %1289 = vmatprep.mubr.f32.mxu0 0.0
        %1290 = vmatmul.mubr.f32.gmra.mrb[0].mxu0 %v1126
        %v1291 = vpop.f32.mrb[0].mxu0
        %v1292 = vadd.f32 %v1116, %v1291
        %v1293 = vpop.f32.mrb[0].mxu0
        %1294 = vmatprep.mubr.f32.mxu0 0.0
        %1295 = vmatmul.mubr.f32.gmra.mrb[0].mxu0 %v1129
        %v1296 = vpop.f32.mrb[0].mxu0
        %v1297 = vadd.f32 %v1116, %v1296
        %v1298 = vpop.f32.mrb[0].mxu0
        %1299 = vmatprep.mubr.f32.mxu0 0.0
        %1300 = vmatmul.mubr.f32.gmra.mrb[0].mxu0 %v1132
        %v1301 = vpop.f32.mrb[0].mxu0
        %v1302 = vadd.f32 %v1116, %v1301
        %v1303 = vpop.f32.mrb[0].mxu0
        %1304 = vmatprep.mubr.f32.mxu0 0.0
        %1305 = vmatmul.mubr.f32.gmra.mrb[0].mxu0 %v1135
        %v1306 = vpop.f32.mrb[0].mxu0
        %v1307 = vadd.f32 %v1116, %v1306
        %v1308 = vpop.f32.mrb[0].mxu0
        %1309 = vmatprep.mubr.f32.mxu0 0.0
        %1310 = vmatmul.mubr.f32.gmra.mrb[0].mxu0 %v1138
        %v1311 = vpop.f32.mrb[0].mxu0
        %v1312 = vadd.f32 %v1116, %v1311
        %v1313 = vpop.f32.mrb[0].mxu0
        %1314 = vmatprep.mubr.f32.mxu0 0.0
        %1315 = vmatmul.mubr.f32.gmra.mrb[0].mxu0 %v1141
        %v1316 = vpop.f32.mrb[0].mxu0
        %v1317 = vadd.f32 %v1116, %v1316
        %v1318 = vpop.f32.mrb[0].mxu0
        %1319 = vmatprep.mubr.f32.mxu0 0.0
        %1320 = vmatmul.mubr.f32.gmra.mrb[0].mxu0 %v1144
        %v1321 = vpop.f32.mrb[0].mxu0
        %v1322 = vadd.f32 %v1116, %v1321
        %v1323 = vpop.f32.mrb[0].mxu0
        %1324 = vmatprep.mubr.f32.mxu0 0.0
        %1325 = vmatmul.mubr.f32.gmra.mrb[0].mxu0 %v1147
        %v1326 = vpop.f32.mrb[0].mxu0
        %v1327 = vadd.f32 %v1116, %v1326
        %v1328 = vpop.f32.mrb[0].mxu0
        %1329 = vmatprep.mubr.f32.mxu0 0.0
        %1330 = vmatmul.mubr.f32.gmra.mrb[0].mxu0 %v1150
        %v1331 = vpop.f32.mrb[0].mxu0
        %v1332 = vadd.f32 %v1116, %v1331
        %v1333 = vpop.f32.mrb[0].mxu0
        %1334 = vmatprep.mubr.f32.mxu0 0.0
        %1335 = vmatmul.mubr.f32.gmra.mrb[0].mxu0 %v1153
        %v1336 = vpop.f32.mrb[0].mxu0
        %v1337 = vadd.f32 %v1116, %v1336
        %v1338 = vpop.f32.mrb[0].mxu0
        %1339 = vmatprep.mubr.f32.mxu0 0.0
        %1340 = vmatmul.mubr.f32.gmra.mrb[0].mxu0 %v1156
        %v1341 = vpop.f32.mrb[0].mxu0
        %v1342 = vadd.f32 %v1116, %v1341
        %v1343 = vpop.f32.mrb[0].mxu0
        %1344 = vmatprep.mubr.f32.mxu0 0.0
        %1345 = vmatmul.mubr.f32.gmra.mrb[0].mxu0 %v1159
        %v1346 = vpop.f32.mrb[0].mxu0
        %v1347 = vadd.f32 %v1116, %v1346
        %v1348 = vpop.f32.mrb[0].mxu0
        %1349 = vmatprep.mubr.f32.mxu0 0.0
        %1350 = vmatmul.mubr.f32.gmra.mrb[0].mxu0 %v1162
        %v1351 = vpop.f32.mrb[0].mxu0
        %v1352 = vadd.f32 %v1116, %v1351
        %v1353 = vpop.f32.mrb[0].mxu0
        %1354 = vmatprep.mubr.f32.mxu0 0.0
        %1355 = vmatmul.mubr.f32.gmra.mrb[0].mxu0 %v1165
        %v1356 = vpop.f32.mrb[0].mxu0
        %v1357 = vadd.f32 %v1116, %v1356
        %v1358 = vpop.f32.mrb[0].mxu0
        %1359 = vmatprep.mubr.f32.mxu0 0.0
        %1360 = vmatmul.mubr.f32.gmra.mrb[0].mxu0 %v1168
        %v1361 = vpop.f32.mrb[0].mxu0
        %v1362 = vadd.f32 %v1116, %v1361
        %v1363 = vpop.f32.mrb[0].mxu0
        %1364 = vmatprep.mubr.f32.mxu0 0.0
        %1365 = vmatmul.mubr.f32.gmra.mrb[0].mxu0 %v1171
        %v1366 = vpop.f32.mrb[0].mxu0
        %v1367 = vadd.f32 %v1116, %v1366
        %v1368 = vpop.f32.mrb[0].mxu0
        %1369 = vmatprep.mubr.f32.mxu0 0.0
        %1370 = vmatmul.mubr.f32.gmra.mrb[0].mxu0 %v1174
        %v1371 = vpop.f32.mrb[0].mxu0
        %v1372 = vadd.f32 %v1116, %v1371
        %v1373 = vpop.f32.mrb[0].mxu0
        %1374 = vmatprep.mubr.f32.mxu0 0.0
        %1375 = vmatmul.mubr.f32.gmra.mrb[0].mxu0 %v1177
        %v1376 = vpop.f32.mrb[0].mxu0
        %v1377 = vadd.f32 %v1116, %v1376
        %v1378 = vpop.f32.mrb[0].mxu0
        %1379 = vmatprep.mubr.f32.mxu0 0.0
        %1380 = vmatmul.mubr.f32.gmra.mrb[0].mxu0 %v1180
        %v1381 = vpop.f32.mrb[0].mxu0
        %v1382 = vadd.f32 %v1116, %v1381
        %v1383 = vpop.f32.mrb[0].mxu0
        %1384 = vmatprep.mubr.f32.mxu0 0.0
        %1385 = vmatmul.mubr.f32.gmra.mrb[0].mxu0 %v1183
        %v1386 = vpop.f32.mrb[0].mxu0
        %v1387 = vadd.f32 %v1116, %v1386
        %v1388 = vpop.f32.mrb[0].mxu0
        %1389 = vmatprep.mubr.f32.mxu0 0.0
        %1390 = vmatmul.mubr.f32.gmra.mrb[0].mxu0 %v1186
        %v1391 = vpop.f32.mrb[0].mxu0
        %v1392 = vadd.f32 %v1116, %v1391
        %v1393 = vpop.f32.mrb[0].mxu0
        %1394 = vmatprep.mubr.f32.mxu0 0.0
        %1395 = vmatmul.mubr.f32.gmra.mrb[0].mxu0 %v1189
        %v1396 = vpop.f32.mrb[0].mxu0
        %v1397 = vadd.f32 %v1116, %v1396
        %v1398 = vpop.f32.mrb[0].mxu0
        %1399 = vmatprep.mubr.f32.mxu0 0.0
        %1400 = vmatmul.mubr.f32.gmra.mrb[0].mxu0 %v1192
        %v1401 = vpop.f32.mrb[0].mxu0
        %v1402 = vadd.f32 %v1116, %v1401
        %v1403 = vpop.f32.mrb[0].mxu0
        %1404 = vmatprep.mubr.f32.mxu0 0.0
        %1405 = vmatmul.mubr.f32.gmra.mrb[0].mxu0 %v1195
        %v1406 = vpop.f32.mrb[0].mxu0
        %v1407 = vadd.f32 %v1116, %v1406
        %v1408 = vpop.f32.mrb[0].mxu0
        %1409 = vmatprep.mubr.f32.mxu0 0.0
        %1410 = vmatmul.mubr.f32.gmra.mrb[0].mxu0 %v1198
        %v1411 = vpop.f32.mrb[0].mxu0
        %v1412 = vadd.f32 %v1116, %v1411
        %v1413 = vpop.f32.mrb[0].mxu0
        %1414 = vmatprep.mubr.f32.mxu0 0.0
        %1415 = vmatmul.mubr.f32.gmra.mrb[0].mxu0 %v1201
        %v1416 = vpop.f32.mrb[0].mxu0
        %v1417 = vadd.f32 %v1116, %v1416
        %v1418 = vpop.f32.mrb[0].mxu0
        %1419 = vmatprep.mubr.f32.mxu0 0.0
        %1420 = vmatmul.mubr.f32.gmra.mrb[0].mxu0 %v1204
        %v1421 = vpop.f32.mrb[0].mxu0
        %v1422 = vadd.f32 %v1116, %v1421
        %v1423 = vpop.f32.mrb[0].mxu0
        %1424 = vmatprep.mubr.f32.mxu0 0.0
        %1425 = vmatmul.mubr.f32.gmra.mrb[0].mxu0 %v1207
        %v1426 = vpop.f32.mrb[0].mxu0
        %v1427 = vadd.f32 %v1116, %v1426
        %v1428 = vpop.f32.mrb[0].mxu0
        %1429 = vmatprep.mubr.f32.mxu0 0.0
        %1430 = vmatmul.mubr.f32.gmra.mrb[0].mxu0 %v1210
        %v1431 = vpop.f32.mrb[0].mxu0
        %v1432 = vadd.f32 %v1116, %v1431
        %v1433 = vpop.f32.mrb[0].mxu0
        %1434 = vmatprep.mubr.f32.mxu0 0.0
        %1435 = vmatmul.mubr.f32.gmra.mrb[0].mxu0 %v1213
        %v1436 = vpop.f32.mrb[0].mxu0
        %v1437 = vadd.f32 %v1116, %v1436
        %v1438 = vpop.f32.mrb[0].mxu0
        %1439 = vdwg.mxu0
        %v1440 = vmax.f32 %v1282, 0.0
        %v1441 = vmax.f32 %v1287, 0.0
        %v1442 = vmax.f32 %v1292, 0.0
        %v1443 = vmax.f32 %v1297, 0.0
        %v1444 = vmax.f32 %v1302, 0.0
        %v1445 = vmax.f32 %v1307, 0.0
        %v1446 = vmax.f32 %v1312, 0.0
        %v1447 = vmax.f32 %v1317, 0.0
        %v1448 = vmax.f32 %v1322, 0.0
        %v1449 = vmax.f32 %v1327, 0.0
        %v1450 = vmax.f32 %v1332, 0.0
        %v1451 = vmax.f32 %v1337, 0.0
        %v1452 = vmax.f32 %v1342, 0.0
        %v1453 = vmax.f32 %v1347, 0.0
        %v1454 = vmax.f32 %v1352, 0.0
        %v1455 = vmax.f32 %v1357, 0.0
        %v1456 = vmax.f32 %v1362, 0.0
        %v1457 = vmax.f32 %v1367, 0.0
        %v1458 = vmax.f32 %v1372, 0.0
        %v1459 = vmax.f32 %v1377, 0.0
        %v1460 = vmax.f32 %v1382, 0.0
        %v1461 = vmax.f32 %v1387, 0.0
        %v1462 = vmax.f32 %v1392, 0.0
        %v1463 = vmax.f32 %v1397, 0.0
        %v1464 = vmax.f32 %v1402, 0.0
        %v1465 = vmax.f32 %v1407, 0.0
        %v1466 = vmax.f32 %v1412, 0.0
        %v1467 = vmax.f32 %v1417, 0.0
        %v1468 = vmax.f32 %v1422, 0.0
        %v1469 = vmax.f32 %v1427, 0.0
        %v1470 = vmax.f32 %v1432, 0.0
        %v1471 = vmax.f32 %v1437, 0.0
        %s1472 = scalar_lea.vmem %s4, 32
        %v1473 = vld [vmem:[%s1472] sm:$0xff]
        %v1474 = vld [vmem:[%s1472 + $0x8] sm:$0xff]
        %v1475 = vld [vmem:[%s1472 + $0x10] sm:$0xff]
        %v1476 = vld [vmem:[%s1472 + $0x18] sm:$0xff]
        %s1477 = scalar_lea.vmem %s5, 1
        %v1478 = vld [vmem:[%s1477] sm:$0x1]
        %v1480 = vlaneseq
        %v1481 = vshrl.u32 %v1480, 7
        %v1482 = vsub.s32 0, %v1481
        %v1483 = vrot.slane %v1478, %v1482
        %v1486 = vsel %vm1118, %v985, 0
        %v1489 = vsel %vm1118, %v990, 0
        %v1492 = vsel %vm1118, %v995, 0
        %v1495 = vsel %vm1118, %v1000, 0
        %v1498 = vsel %vm1118, %v1005, 0
        %v1501 = vsel %vm1118, %v1010, 0
        %v1504 = vsel %vm1118, %v1015, 0
        %v1507 = vsel %vm1118, %v1020, 0
        %1509 = vmatprep.subr.mxu0 0.0
        %1510 = vmatpush1.msra.mxu0 %v1473
        %1511 = vmatprep.subr.mxu0 0.0
        %1512 = vmatpush1.msra.mxu0 %v1474
        %1513 = vmatprep.subr.mxu0 0.0
        %1514 = vmatpush1.msra.mxu0 %v1475
        %1515 = vmatprep.subr.mxu0 0.0
        %1516 = vmatpush1.msra.mxu0 %v1476
        %1517 = vmatprep.subr.mxu0 0.0
        %1518 = vmatpush1.msra.mxu0 0.0
        %1519 = vmatprep.subr.mxu0 0.0
        %1520 = vmatpush1.msra.mxu0 0.0
        %1521 = vmatprep.subr.mxu0 0.0
        %1522 = vmatpush1.msra.mxu0 0.0
        %1523 = vmatprep.subr.mxu0 0.0
        %1524 = vmatpush1.msra.mxu0 0.0
        %1525 = vmatprep.subr.mxu0 0.0
        %1526 = vmatpush1.msra.mxu0 0.0
        %1527 = vmatprep.subr.mxu0 0.0
        %1528 = vmatpush1.msra.mxu0 0.0
        %1529 = vmatprep.subr.mxu0 0.0
        %1530 = vmatpush1.msra.mxu0 0.0
        %1531 = vmatprep.subr.mxu0 0.0
        %1532 = vmatpush1.msra.mxu0 0.0
        %1533 = vmatprep.subr.mxu0 0.0
        %1534 = vmatpush1.msra.mxu0 0.0
        %1535 = vmatprep.subr.mxu0 0.0
        %1536 = vmatpush1.msra.mxu0 0.0
        %1537 = vmatprep.subr.mxu0 0.0
        %1538 = vmatpush1.msra.mxu0 0.0
        %1539 = vmatprep.subr.mxu0 0.0
        %1540 = vmatpush1.msra.mxu0 0.0
        %1541 = vmatprep.subr.mxu0 0.0
        %1542 = vmatpush1.msra.mxu0 0.0
        %1543 = vmatprep.subr.mxu0 0.0
        %1544 = vmatpush1.msra.mxu0 0.0
        %1545 = vmatprep.subr.mxu0 0.0
        %1546 = vmatpush1.msra.mxu0 0.0
        %1547 = vmatprep.subr.mxu0 0.0
        %1548 = vmatpush1.msra.mxu0 0.0
        %1549 = vmatprep.subr.mxu0 0.0
        %1550 = vmatpush1.msra.mxu0 0.0
        %1551 = vmatprep.subr.mxu0 0.0
        %1552 = vmatpush1.msra.mxu0 0.0
        %1553 = vmatprep.subr.mxu0 0.0
        %1554 = vmatpush1.msra.mxu0 0.0
        %1555 = vmatprep.subr.mxu0 0.0
        %1556 = vmatpush1.msra.mxu0 0.0
        %1557 = vmatprep.subr.mxu0 0.0
        %1558 = vmatpush1.msra.mxu0 0.0
        %1559 = vmatprep.subr.mxu0 0.0
        %1560 = vmatpush1.msra.mxu0 0.0
        %1561 = vmatprep.subr.mxu0 0.0
        %1562 = vmatpush1.msra.mxu0 0.0
        %1563 = vmatprep.subr.mxu0 0.0
        %1564 = vmatpush1.msra.mxu0 0.0
        %1565 = vmatprep.subr.mxu0 0.0
        %1566 = vmatpush1.msra.mxu0 0.0
        %1567 = vmatprep.subr.mxu0 0.0
        %1568 = vmatpush1.msra.mxu0 0.0
        %1569 = vmatprep.subr.mxu0 0.0
        %1570 = vmatpush1.msra.mxu0 0.0
        %1571 = vmatprep.subr.mxu0 0.0
        %1572 = vmatpush1.msra.mxu0 0.0
        %1573 = vmatprep.mubr.f32.mxu0 0.0
        %1574 = vmatmul.mubr.f32.gmra.mrb[0].mxu0 %v1486
        %v1575 = vpop.f32.mrb[0].mxu0
        %v1576 = vadd.f32 %v1483, %v1575
        %v1577 = vpop.f32.mrb[0].mxu0
        %1578 = vmatprep.mubr.f32.mxu0 0.0
        %1579 = vmatmul.mubr.f32.gmra.mrb[0].mxu0 %v1489
        %v1580 = vpop.f32.mrb[0].mxu0
        %v1581 = vadd.f32 %v1483, %v1580
        %v1582 = vpop.f32.mrb[0].mxu0
        %1583 = vmatprep.mubr.f32.mxu0 0.0
        %1584 = vmatmul.mubr.f32.gmra.mrb[0].mxu0 %v1492
        %v1585 = vpop.f32.mrb[0].mxu0
        %v1586 = vadd.f32 %v1483, %v1585
        %v1587 = vpop.f32.mrb[0].mxu0
        %1588 = vmatprep.mubr.f32.mxu0 0.0
        %1589 = vmatmul.mubr.f32.gmra.mrb[0].mxu0 %v1495
        %v1590 = vpop.f32.mrb[0].mxu0
        %v1591 = vadd.f32 %v1483, %v1590
        %v1592 = vpop.f32.mrb[0].mxu0
        %1593 = vmatprep.mubr.f32.mxu0 0.0
        %1594 = vmatmul.mubr.f32.gmra.mrb[0].mxu0 %v1498
        %v1595 = vpop.f32.mrb[0].mxu0
        %v1596 = vadd.f32 %v1483, %v1595
        %v1597 = vpop.f32.mrb[0].mxu0
        %1598 = vmatprep.mubr.f32.mxu0 0.0
        %1599 = vmatmul.mubr.f32.gmra.mrb[0].mxu0 %v1501
        %v1600 = vpop.f32.mrb[0].mxu0
        %v1601 = vadd.f32 %v1483, %v1600
        %v1602 = vpop.f32.mrb[0].mxu0
        %1603 = vmatprep.mubr.f32.mxu0 0.0
        %1604 = vmatmul.mubr.f32.gmra.mrb[0].mxu0 %v1504
        %v1605 = vpop.f32.mrb[0].mxu0
        %v1606 = vadd.f32 %v1483, %v1605
        %v1607 = vpop.f32.mrb[0].mxu0
        %1608 = vmatprep.mubr.f32.mxu0 0.0
        %1609 = vmatmul.mubr.f32.gmra.mrb[0].mxu0 %v1507
        %v1610 = vpop.f32.mrb[0].mxu0
        %v1611 = vadd.f32 %v1483, %v1610
        %v1612 = vpop.f32.mrb[0].mxu0
        %1613 = vdwg.mxu0
        %v1614 = vmax.f32 %v1576, 0.0
        %v1615 = vmax.f32 %v1581, 0.0
        %v1616 = vmax.f32 %v1586, 0.0
        %v1617 = vmax.f32 %v1591, 0.0
        %v1618 = vmax.f32 %v1596, 0.0
        %v1619 = vmax.f32 %v1601, 0.0
        %v1620 = vmax.f32 %v1606, 0.0
        %v1621 = vmax.f32 %v1611, 0.0
        %s1622 = scalar_lea.vmem %s4, 64
        %v1623 = vld [vmem:[%s1622] sm:$0xff]
        %v1624 = vld [vmem:[%s1622 + $0x8] sm:$0xff]
        %v1625 = vld [vmem:[%s1622 + $0x10] sm:$0xff]
        %v1626 = vld [vmem:[%s1622 + $0x18] sm:$0xff]
        %s1627 = scalar_lea.vmem %s5, 2
        %v1628 = vld [vmem:[%s1627] sm:$0x1]
        %v1630 = vlaneseq
        %v1631 = vshrl.u32 %v1630, 7
        %v1632 = vsub.s32 0, %v1631
        %v1633 = vrot.slane %v1628, %v1632
        %v1636 = vsel %vm1118, %v1099, 0
        %v1639 = vsel %vm1118, %v1104, 0
        %1641 = vmatprep.subr.mxu0 0.0
        %1642 = vmatpush1.msra.mxu0 %v1623
        %1643 = vmatprep.subr.mxu0 0.0
        %1644 = vmatpush1.msra.mxu0 %v1624
        %1645 = vmatprep.subr.mxu0 0.0
        %1646 = vmatpush1.msra.mxu0 %v1625
        %1647 = vmatprep.subr.mxu0 0.0
        %1648 = vmatpush1.msra.mxu0 %v1626
        %1649 = vmatprep.subr.mxu0 0.0
        %1650 = vmatpush1.msra.mxu0 0.0
        %1651 = vmatprep.subr.mxu0 0.0
        %1652 = vmatpush1.msra.mxu0 0.0
        %1653 = vmatprep.subr.mxu0 0.0
        %1654 = vmatpush1.msra.mxu0 0.0
        %1655 = vmatprep.subr.mxu0 0.0
        %1656 = vmatpush1.msra.mxu0 0.0
        %1657 = vmatprep.subr.mxu0 0.0
        %1658 = vmatpush1.msra.mxu0 0.0
        %1659 = vmatprep.subr.mxu0 0.0
        %1660 = vmatpush1.msra.mxu0 0.0
        %1661 = vmatprep.subr.mxu0 0.0
        %1662 = vmatpush1.msra.mxu0 0.0
        %1663 = vmatprep.subr.mxu0 0.0
        %1664 = vmatpush1.msra.mxu0 0.0
        %1665 = vmatprep.subr.mxu0 0.0
        %1666 = vmatpush1.msra.mxu0 0.0
        %1667 = vmatprep.subr.mxu0 0.0
        %1668 = vmatpush1.msra.mxu0 0.0
        %1669 = vmatprep.subr.mxu0 0.0
        %1670 = vmatpush1.msra.mxu0 0.0
        %1671 = vmatprep.subr.mxu0 0.0
        %1672 = vmatpush1.msra.mxu0 0.0
        %1673 = vmatprep.subr.mxu0 0.0
        %1674 = vmatpush1.msra.mxu0 0.0
        %1675 = vmatprep.subr.mxu0 0.0
        %1676 = vmatpush1.msra.mxu0 0.0
        %1677 = vmatprep.subr.mxu0 0.0
        %1678 = vmatpush1.msra.mxu0 0.0
        %1679 = vmatprep.subr.mxu0 0.0
        %1680 = vmatpush1.msra.mxu0 0.0
        %1681 = vmatprep.subr.mxu0 0.0
        %1682 = vmatpush1.msra.mxu0 0.0
        %1683 = vmatprep.subr.mxu0 0.0
        %1684 = vmatpush1.msra.mxu0 0.0
        %1685 = vmatprep.subr.mxu0 0.0
        %1686 = vmatpush1.msra.mxu0 0.0
        %1687 = vmatprep.subr.mxu0 0.0
        %1688 = vmatpush1.msra.mxu0 0.0
        %1689 = vmatprep.subr.mxu0 0.0
        %1690 = vmatpush1.msra.mxu0 0.0
        %1691 = vmatprep.subr.mxu0 0.0
        %1692 = vmatpush1.msra.mxu0 0.0
        %1693 = vmatprep.subr.mxu0 0.0
        %1694 = vmatpush1.msra.mxu0 0.0
        %1695 = vmatprep.subr.mxu0 0.0
        %1696 = vmatpush1.msra.mxu0 0.0
        %1697 = vmatprep.subr.mxu0 0.0
        %1698 = vmatpush1.msra.mxu0 0.0
        %1699 = vmatprep.subr.mxu0 0.0
        %1700 = vmatpush1.msra.mxu0 0.0
        %1701 = vmatprep.subr.mxu0 0.0
        %1702 = vmatpush1.msra.mxu0 0.0
        %1703 = vmatprep.subr.mxu0 0.0
        %1704 = vmatpush1.msra.mxu0 0.0
        %1705 = vmatprep.mubr.f32.mxu0 0.0
        %1706 = vmatmul.mubr.f32.gmra.mrb[0].mxu0 %v1636
        %v1707 = vpop.f32.mrb[0].mxu0
        %v1708 = vadd.f32 %v1633, %v1707
        %v1709 = vpop.f32.mrb[0].mxu0
        %1710 = vmatprep.mubr.f32.mxu0 0.0
        %1711 = vmatmul.mubr.f32.gmra.mrb[0].mxu0 %v1639
        %v1712 = vpop.f32.mrb[0].mxu0
        %v1713 = vadd.f32 %v1633, %v1712
        %v1714 = vpop.f32.mrb[0].mxu0
        %1715 = vdwg.mxu0
        %v1716 = vmax.f32 %v1708, 0.0
        %v1717 = vmax.f32 %v1713, 0.0
        %v1718 = vld [vmem:[%s6] sm:$0xff]
        %v1719 = vld [vmem:[%s6 + $0x8] sm:$0xff]
        %v1720 = vld [vmem:[%s6 + $0x10] sm:$0xff]
        %v1721 = vld [vmem:[%s6 + $0x18] sm:$0xff]
        %v1722 = vld [vmem:[%s7] sm:$0x1]
        %v1724 = vlaneseq
        %v1725 = vshrl.u32 %v1724, 7
        %v1726 = vsub.s32 0, %v1725
        %v1727 = vrot.slane %v1722, %v1726
        %v1730 = vsel %vm1118, %v1440, 0
        %v1733 = vsel %vm1118, %v1441, 0
        %v1736 = vsel %vm1118, %v1442, 0
        %v1739 = vsel %vm1118, %v1443, 0
        %v1742 = vsel %vm1118, %v1444, 0
        %v1745 = vsel %vm1118, %v1445, 0
        %v1748 = vsel %vm1118, %v1446, 0
        %v1751 = vsel %vm1118, %v1447, 0
        %v1754 = vsel %vm1118, %v1448, 0
        %v1757 = vsel %vm1118, %v1449, 0
        %v1760 = vsel %vm1118, %v1450, 0
        %v1763 = vsel %vm1118, %v1451, 0
        %v1766 = vsel %vm1118, %v1452, 0
        %v1769 = vsel %vm1118, %v1453, 0
        %v1772 = vsel %vm1118, %v1454, 0
        %v1775 = vsel %vm1118, %v1455, 0
        %v1778 = vsel %vm1118, %v1456, 0
        %v1781 = vsel %vm1118, %v1457, 0
        %v1784 = vsel %vm1118, %v1458, 0
        %v1787 = vsel %vm1118, %v1459, 0
        %v1790 = vsel %vm1118, %v1460, 0
        %v1793 = vsel %vm1118, %v1461, 0
        %v1796 = vsel %vm1118, %v1462, 0
        %v1799 = vsel %vm1118, %v1463, 0
        %v1802 = vsel %vm1118, %v1464, 0
        %v1805 = vsel %vm1118, %v1465, 0
        %v1808 = vsel %vm1118, %v1466, 0
        %v1811 = vsel %vm1118, %v1467, 0
        %v1814 = vsel %vm1118, %v1468, 0
        %v1817 = vsel %vm1118, %v1469, 0
        %v1820 = vsel %vm1118, %v1470, 0
        %v1823 = vsel %vm1118, %v1471, 0
        %1825 = vmatprep.subr.mxu0 0.0
        %1826 = vmatpush1.msra.mxu0 %v1718
        %1827 = vmatprep.subr.mxu0 0.0
        %1828 = vmatpush1.msra.mxu0 %v1719
        %1829 = vmatprep.subr.mxu0 0.0
        %1830 = vmatpush1.msra.mxu0 %v1720
        %1831 = vmatprep.subr.mxu0 0.0
        %1832 = vmatpush1.msra.mxu0 %v1721
        %1833 = vmatprep.subr.mxu0 0.0
        %1834 = vmatpush1.msra.mxu0 0.0
        %1835 = vmatprep.subr.mxu0 0.0
        %1836 = vmatpush1.msra.mxu0 0.0
        %1837 = vmatprep.subr.mxu0 0.0
        %1838 = vmatpush1.msra.mxu0 0.0
        %1839 = vmatprep.subr.mxu0 0.0
        %1840 = vmatpush1.msra.mxu0 0.0
        %1841 = vmatprep.subr.mxu0 0.0
        %1842 = vmatpush1.msra.mxu0 0.0
        %1843 = vmatprep.subr.mxu0 0.0
        %1844 = vmatpush1.msra.mxu0 0.0
        %1845 = vmatprep.subr.mxu0 0.0
        %1846 = vmatpush1.msra.mxu0 0.0
        %1847 = vmatprep.subr.mxu0 0.0
        %1848 = vmatpush1.msra.mxu0 0.0
        %1849 = vmatprep.subr.mxu0 0.0
        %1850 = vmatpush1.msra.mxu0 0.0
        %1851 = vmatprep.subr.mxu0 0.0
        %1852 = vmatpush1.msra.mxu0 0.0
        %1853 = vmatprep.subr.mxu0 0.0
        %1854 = vmatpush1.msra.mxu0 0.0
        %1855 = vmatprep.subr.mxu0 0.0
        %1856 = vmatpush1.msra.mxu0 0.0
        %1857 = vmatprep.subr.mxu0 0.0
        %1858 = vmatpush1.msra.mxu0 0.0
        %1859 = vmatprep.subr.mxu0 0.0
        %1860 = vmatpush1.msra.mxu0 0.0
        %1861 = vmatprep.subr.mxu0 0.0
        %1862 = vmatpush1.msra.mxu0 0.0
        %1863 = vmatprep.subr.mxu0 0.0
        %1864 = vmatpush1.msra.mxu0 0.0
        %1865 = vmatprep.subr.mxu0 0.0
        %1866 = vmatpush1.msra.mxu0 0.0
        %1867 = vmatprep.subr.mxu0 0.0
        %1868 = vmatpush1.msra.mxu0 0.0
        %1869 = vmatprep.subr.mxu0 0.0
        %1870 = vmatpush1.msra.mxu0 0.0
        %1871 = vmatprep.subr.mxu0 0.0
        %1872 = vmatpush1.msra.mxu0 0.0
        %1873 = vmatprep.subr.mxu0 0.0
        %1874 = vmatpush1.msra.mxu0 0.0
        %1875 = vmatprep.subr.mxu0 0.0
        %1876 = vmatpush1.msra.mxu0 0.0
        %1877 = vmatprep.subr.mxu0 0.0
        %1878 = vmatpush1.msra.mxu0 0.0
        %1879 = vmatprep.subr.mxu0 0.0
        %1880 = vmatpush1.msra.mxu0 0.0
        %1881 = vmatprep.subr.mxu0 0.0
        %1882 = vmatpush1.msra.mxu0 0.0
        %1883 = vmatprep.subr.mxu0 0.0
        %1884 = vmatpush1.msra.mxu0 0.0
        %1885 = vmatprep.subr.mxu0 0.0
        %1886 = vmatpush1.msra.mxu0 0.0
        %1887 = vmatprep.subr.mxu0 0.0
        %1888 = vmatpush1.msra.mxu0 0.0
        %1889 = vmatprep.mubr.f32.mxu0 0.0
        %1890 = vmatmul.mubr.f32.gmra.mrb[0].mxu0 %v1730
        %v1891 = vpop.f32.mrb[0].mxu0
        %v1892 = vadd.f32 %v1727, %v1891
        %v1893 = vpop.f32.mrb[0].mxu0
        %1894 = vmatprep.mubr.f32.mxu0 0.0
        %1895 = vmatmul.mubr.f32.gmra.mrb[0].mxu0 %v1733
        %v1896 = vpop.f32.mrb[0].mxu0
        %v1897 = vadd.f32 %v1727, %v1896
        %v1898 = vpop.f32.mrb[0].mxu0
        %1899 = vmatprep.mubr.f32.mxu0 0.0
        %1900 = vmatmul.mubr.f32.gmra.mrb[0].mxu0 %v1736
        %v1901 = vpop.f32.mrb[0].mxu0
        %v1902 = vadd.f32 %v1727, %v1901
        %v1903 = vpop.f32.mrb[0].mxu0
        %1904 = vmatprep.mubr.f32.mxu0 0.0
        %1905 = vmatmul.mubr.f32.gmra.mrb[0].mxu0 %v1739
        %v1906 = vpop.f32.mrb[0].mxu0
        %v1907 = vadd.f32 %v1727, %v1906
        %v1908 = vpop.f32.mrb[0].mxu0
        %1909 = vmatprep.mubr.f32.mxu0 0.0
        %1910 = vmatmul.mubr.f32.gmra.mrb[0].mxu0 %v1742
        %v1911 = vpop.f32.mrb[0].mxu0
        %v1912 = vadd.f32 %v1727, %v1911
        %v1913 = vpop.f32.mrb[0].mxu0
        %1914 = vmatprep.mubr.f32.mxu0 0.0
        %1915 = vmatmul.mubr.f32.gmra.mrb[0].mxu0 %v1745
        %v1916 = vpop.f32.mrb[0].mxu0
        %v1917 = vadd.f32 %v1727, %v1916
        %v1918 = vpop.f32.mrb[0].mxu0
        %1919 = vmatprep.mubr.f32.mxu0 0.0
        %1920 = vmatmul.mubr.f32.gmra.mrb[0].mxu0 %v1748
        %v1921 = vpop.f32.mrb[0].mxu0
        %v1922 = vadd.f32 %v1727, %v1921
        %v1923 = vpop.f32.mrb[0].mxu0
        %1924 = vmatprep.mubr.f32.mxu0 0.0
        %1925 = vmatmul.mubr.f32.gmra.mrb[0].mxu0 %v1751
        %v1926 = vpop.f32.mrb[0].mxu0
        %v1927 = vadd.f32 %v1727, %v1926
        %v1928 = vpop.f32.mrb[0].mxu0
        %1929 = vmatprep.mubr.f32.mxu0 0.0
        %1930 = vmatmul.mubr.f32.gmra.mrb[0].mxu0 %v1754
        %v1931 = vpop.f32.mrb[0].mxu0
        %v1932 = vadd.f32 %v1727, %v1931
        %v1933 = vpop.f32.mrb[0].mxu0
        %1934 = vmatprep.mubr.f32.mxu0 0.0
        %1935 = vmatmul.mubr.f32.gmra.mrb[0].mxu0 %v1757
        %v1936 = vpop.f32.mrb[0].mxu0
        %v1937 = vadd.f32 %v1727, %v1936
        %v1938 = vpop.f32.mrb[0].mxu0
        %1939 = vmatprep.mubr.f32.mxu0 0.0
        %1940 = vmatmul.mubr.f32.gmra.mrb[0].mxu0 %v1760
        %v1941 = vpop.f32.mrb[0].mxu0
        %v1942 = vadd.f32 %v1727, %v1941
        %v1943 = vpop.f32.mrb[0].mxu0
        %1944 = vmatprep.mubr.f32.mxu0 0.0
        %1945 = vmatmul.mubr.f32.gmra.mrb[0].mxu0 %v1763
        %v1946 = vpop.f32.mrb[0].mxu0
        %v1947 = vadd.f32 %v1727, %v1946
        %v1948 = vpop.f32.mrb[0].mxu0
        %1949 = vmatprep.mubr.f32.mxu0 0.0
        %1950 = vmatmul.mubr.f32.gmra.mrb[0].mxu0 %v1766
        %v1951 = vpop.f32.mrb[0].mxu0
        %v1952 = vadd.f32 %v1727, %v1951
        %v1953 = vpop.f32.mrb[0].mxu0
        %1954 = vmatprep.mubr.f32.mxu0 0.0
        %1955 = vmatmul.mubr.f32.gmra.mrb[0].mxu0 %v1769
        %v1956 = vpop.f32.mrb[0].mxu0
        %v1957 = vadd.f32 %v1727, %v1956
        %v1958 = vpop.f32.mrb[0].mxu0
        %1959 = vmatprep.mubr.f32.mxu0 0.0
        %1960 = vmatmul.mubr.f32.gmra.mrb[0].mxu0 %v1772
        %v1961 = vpop.f32.mrb[0].mxu0
        %v1962 = vadd.f32 %v1727, %v1961
        %v1963 = vpop.f32.mrb[0].mxu0
        %1964 = vmatprep.mubr.f32.mxu0 0.0
        %1965 = vmatmul.mubr.f32.gmra.mrb[0].mxu0 %v1775
        %v1966 = vpop.f32.mrb[0].mxu0
        %v1967 = vadd.f32 %v1727, %v1966
        %v1968 = vpop.f32.mrb[0].mxu0
        %1969 = vmatprep.mubr.f32.mxu0 0.0
        %1970 = vmatmul.mubr.f32.gmra.mrb[0].mxu0 %v1778
        %v1971 = vpop.f32.mrb[0].mxu0
        %v1972 = vadd.f32 %v1727, %v1971
        %v1973 = vpop.f32.mrb[0].mxu0
        %1974 = vmatprep.mubr.f32.mxu0 0.0
        %1975 = vmatmul.mubr.f32.gmra.mrb[0].mxu0 %v1781
        %v1976 = vpop.f32.mrb[0].mxu0
        %v1977 = vadd.f32 %v1727, %v1976
        %v1978 = vpop.f32.mrb[0].mxu0
        %1979 = vmatprep.mubr.f32.mxu0 0.0
        %1980 = vmatmul.mubr.f32.gmra.mrb[0].mxu0 %v1784
        %v1981 = vpop.f32.mrb[0].mxu0
        %v1982 = vadd.f32 %v1727, %v1981
        %v1983 = vpop.f32.mrb[0].mxu0
        %1984 = vmatprep.mubr.f32.mxu0 0.0
        %1985 = vmatmul.mubr.f32.gmra.mrb[0].mxu0 %v1787
        %v1986 = vpop.f32.mrb[0].mxu0
        %v1987 = vadd.f32 %v1727, %v1986
        %v1988 = vpop.f32.mrb[0].mxu0
        %1989 = vmatprep.mubr.f32.mxu0 0.0
        %1990 = vmatmul.mubr.f32.gmra.mrb[0].mxu0 %v1790
        %v1991 = vpop.f32.mrb[0].mxu0
        %v1992 = vadd.f32 %v1727, %v1991
        %v1993 = vpop.f32.mrb[0].mxu0
        %1994 = vmatprep.mubr.f32.mxu0 0.0
        %1995 = vmatmul.mubr.f32.gmra.mrb[0].mxu0 %v1793
        %v1996 = vpop.f32.mrb[0].mxu0
        %v1997 = vadd.f32 %v1727, %v1996
        %v1998 = vpop.f32.mrb[0].mxu0
        %1999 = vmatprep.mubr.f32.mxu0 0.0
        %2000 = vmatmul.mubr.f32.gmra.mrb[0].mxu0 %v1796
        %v2001 = vpop.f32.mrb[0].mxu0
        %v2002 = vadd.f32 %v1727, %v2001
        %v2003 = vpop.f32.mrb[0].mxu0
        %2004 = vmatprep.mubr.f32.mxu0 0.0
        %2005 = vmatmul.mubr.f32.gmra.mrb[0].mxu0 %v1799
        %v2006 = vpop.f32.mrb[0].mxu0
        %v2007 = vadd.f32 %v1727, %v2006
        %v2008 = vpop.f32.mrb[0].mxu0
        %2009 = vmatprep.mubr.f32.mxu0 0.0
        %2010 = vmatmul.mubr.f32.gmra.mrb[0].mxu0 %v1802
        %v2011 = vpop.f32.mrb[0].mxu0
        %v2012 = vadd.f32 %v1727, %v2011
        %v2013 = vpop.f32.mrb[0].mxu0
        %2014 = vmatprep.mubr.f32.mxu0 0.0
        %2015 = vmatmul.mubr.f32.gmra.mrb[0].mxu0 %v1805
        %v2016 = vpop.f32.mrb[0].mxu0
        %v2017 = vadd.f32 %v1727, %v2016
        %v2018 = vpop.f32.mrb[0].mxu0
        %2019 = vmatprep.mubr.f32.mxu0 0.0
        %2020 = vmatmul.mubr.f32.gmra.mrb[0].mxu0 %v1808
        %v2021 = vpop.f32.mrb[0].mxu0
        %v2022 = vadd.f32 %v1727, %v2021
        %v2023 = vpop.f32.mrb[0].mxu0
        %2024 = vmatprep.mubr.f32.mxu0 0.0
        %2025 = vmatmul.mubr.f32.gmra.mrb[0].mxu0 %v1811
        %v2026 = vpop.f32.mrb[0].mxu0
        %v2027 = vadd.f32 %v1727, %v2026
        %v2028 = vpop.f32.mrb[0].mxu0
        %2029 = vmatprep.mubr.f32.mxu0 0.0
        %2030 = vmatmul.mubr.f32.gmra.mrb[0].mxu0 %v1814
        %v2031 = vpop.f32.mrb[0].mxu0
        %v2032 = vadd.f32 %v1727, %v2031
        %v2033 = vpop.f32.mrb[0].mxu0
        %2034 = vmatprep.mubr.f32.mxu0 0.0
        %2035 = vmatmul.mubr.f32.gmra.mrb[0].mxu0 %v1817
        %v2036 = vpop.f32.mrb[0].mxu0
        %v2037 = vadd.f32 %v1727, %v2036
        %v2038 = vpop.f32.mrb[0].mxu0
        %2039 = vmatprep.mubr.f32.mxu0 0.0
        %2040 = vmatmul.mubr.f32.gmra.mrb[0].mxu0 %v1820
        %v2041 = vpop.f32.mrb[0].mxu0
        %v2042 = vadd.f32 %v1727, %v2041
        %v2043 = vpop.f32.mrb[0].mxu0
        %2044 = vmatprep.mubr.f32.mxu0 0.0
        %2045 = vmatmul.mubr.f32.gmra.mrb[0].mxu0 %v1823
        %v2046 = vpop.f32.mrb[0].mxu0
        %v2047 = vadd.f32 %v1727, %v2046
        %v2048 = vpop.f32.mrb[0].mxu0
        %2049 = vdwg.mxu0
        %v2051 = vlaneseq
        %v2052 = vshrl.u32 %v2051, 7
        %v2053 = vsub.s32 0, %v2052
        %v2054 = vrot.slane %v901, %v2053
        %v2056 = vadd.f32 %v1440, %v2054
        %v2057 = vadd.f32 %v1441, %v2054
        %v2058 = vadd.f32 %v1442, %v2054
        %v2059 = vadd.f32 %v1443, %v2054
        %v2060 = vadd.f32 %v1444, %v2054
        %v2061 = vadd.f32 %v1445, %v2054
        %v2062 = vadd.f32 %v1446, %v2054
        %v2063 = vadd.f32 %v1447, %v2054
        %v2064 = vadd.f32 %v1448, %v2054
        %v2065 = vadd.f32 %v1449, %v2054
        %v2066 = vadd.f32 %v1450, %v2054
        %v2067 = vadd.f32 %v1451, %v2054
        %v2068 = vadd.f32 %v1452, %v2054
        %v2069 = vadd.f32 %v1453, %v2054
        %v2070 = vadd.f32 %v1454, %v2054
        %v2071 = vadd.f32 %v1455, %v2054
        %v2072 = vadd.f32 %v1456, %v2054
        %v2073 = vadd.f32 %v1457, %v2054
        %v2074 = vadd.f32 %v1458, %v2054
        %v2075 = vadd.f32 %v1459, %v2054
        %v2076 = vadd.f32 %v1460, %v2054
        %v2077 = vadd.f32 %v1461, %v2054
        %v2078 = vadd.f32 %v1462, %v2054
        %v2079 = vadd.f32 %v1463, %v2054
        %v2080 = vadd.f32 %v1464, %v2054
        %v2081 = vadd.f32 %v1465, %v2054
        %v2082 = vadd.f32 %v1466, %v2054
        %v2083 = vadd.f32 %v1467, %v2054
        %v2084 = vadd.f32 %v1468, %v2054
        %v2085 = vadd.f32 %v1469, %v2054
        %v2086 = vadd.f32 %v1470, %v2054
        %v2087 = vadd.f32 %v1471, %v2054
        %v2088 = vadd.f32 %v1614, %v2054
        %v2089 = vadd.f32 %v1615, %v2054
        %v2090 = vadd.f32 %v1616, %v2054
        %v2091 = vadd.f32 %v1617, %v2054
        %v2092 = vadd.f32 %v1618, %v2054
        %v2093 = vadd.f32 %v1619, %v2054
        %v2094 = vadd.f32 %v1620, %v2054
        %v2095 = vadd.f32 %v1621, %v2054
        %v2096 = vadd.f32 %v1716, %v2054
        %v2097 = vadd.f32 %v1717, %v2054
        %v2098 = vld [vmem:[%s8] sm:$0xff]
        %v2099 = vld [vmem:[%s9] sm:$0xff]
        %v2100 = vld [vmem:[%s9 + $0x8] sm:$0xff]
        %v2101 = vld [vmem:[%s9 + $0x10] sm:$0xff]
        %v2102 = vld [vmem:[%s9 + $0x18] sm:$0xff]
        %v2103 = vld [vmem:[%s10] sm:$0x1]
        %v2105 = vlaneseq
        %v2106 = vshrl.u32 %v2105, 7
        %v2107 = vsub.s32 0, %v2106
        %v2108 = vrot.slane %v2103, %v2107
        %v2111 = vsel %vm1118, %v2098, 0
        %2113 = vmatprep.subr.mxu0 0.0
        %2114 = vmatpush1.msra.mxu0 %v2099
        %2115 = vmatprep.subr.mxu0 0.0
        %2116 = vmatpush1.msra.mxu0 %v2100
        %2117 = vmatprep.subr.mxu0 0.0
        %2118 = vmatpush1.msra.mxu0 %v2101
        %2119 = vmatprep.subr.mxu0 0.0
        %2120 = vmatpush1.msra.mxu0 %v2102
        %2121 = vmatprep.subr.mxu0 0.0
        %2122 = vmatpush1.msra.mxu0 0.0
        %2123 = vmatprep.subr.mxu0 0.0
        %2124 = vmatpush1.msra.mxu0 0.0
        %2125 = vmatprep.subr.mxu0 0.0
        %2126 = vmatpush1.msra.mxu0 0.0
        %2127 = vmatprep.subr.mxu0 0.0
        %2128 = vmatpush1.msra.mxu0 0.0
        %2129 = vmatprep.subr.mxu0 0.0
        %2130 = vmatpush1.msra.mxu0 0.0
        %2131 = vmatprep.subr.mxu0 0.0
        %2132 = vmatpush1.msra.mxu0 0.0
        %2133 = vmatprep.subr.mxu0 0.0
        %2134 = vmatpush1.msra.mxu0 0.0
        %2135 = vmatprep.subr.mxu0 0.0
        %2136 = vmatpush1.msra.mxu0 0.0
        %2137 = vmatprep.subr.mxu0 0.0
        %2138 = vmatpush1.msra.mxu0 0.0
        %2139 = vmatprep.subr.mxu0 0.0
        %2140 = vmatpush1.msra.mxu0 0.0
        %2141 = vmatprep.subr.mxu0 0.0
        %2142 = vmatpush1.msra.mxu0 0.0
        %2143 = vmatprep.subr.mxu0 0.0
        %2144 = vmatpush1.msra.mxu0 0.0
        %2145 = vmatprep.subr.mxu0 0.0
        %2146 = vmatpush1.msra.mxu0 0.0
        %2147 = vmatprep.subr.mxu0 0.0
        %2148 = vmatpush1.msra.mxu0 0.0
        %2149 = vmatprep.subr.mxu0 0.0
        %2150 = vmatpush1.msra.mxu0 0.0
        %2151 = vmatprep.subr.mxu0 0.0
        %2152 = vmatpush1.msra.mxu0 0.0
        %2153 = vmatprep.subr.mxu0 0.0
        %2154 = vmatpush1.msra.mxu0 0.0
        %2155 = vmatprep.subr.mxu0 0.0
        %2156 = vmatpush1.msra.mxu0 0.0
        %2157 = vmatprep.subr.mxu0 0.0
        %2158 = vmatpush1.msra.mxu0 0.0
        %2159 = vmatprep.subr.mxu0 0.0
        %2160 = vmatpush1.msra.mxu0 0.0
        %2161 = vmatprep.subr.mxu0 0.0
        %2162 = vmatpush1.msra.mxu0 0.0
        %2163 = vmatprep.subr.mxu0 0.0
        %2164 = vmatpush1.msra.mxu0 0.0
        %2165 = vmatprep.subr.mxu0 0.0
        %2166 = vmatpush1.msra.mxu0 0.0
        %2167 = vmatprep.subr.mxu0 0.0
        %2168 = vmatpush1.msra.mxu0 0.0
        %2169 = vmatprep.subr.mxu0 0.0
        %2170 = vmatpush1.msra.mxu0 0.0
        %2171 = vmatprep.subr.mxu0 0.0
        %2172 = vmatpush1.msra.mxu0 0.0
        %2173 = vmatprep.subr.mxu0 0.0
        %2174 = vmatpush1.msra.mxu0 0.0
        %2175 = vmatprep.subr.mxu0 0.0
        %2176 = vmatpush1.msra.mxu0 0.0
        %2177 = vmatprep.mubr.f32.mxu0 0.0
        %2178 = vmatmul.mubr.f32.gmra.mrb[0].mxu0 %v2111
        %v2179 = vpop.f32.mrb[0].mxu0
        %v2180 = vadd.f32 %v2108, %v2179
        %v2181 = vpop.f32.mrb[0].mxu0
        %2182 = vdwg.mxu0
        %v2183 = vld [vmem:[%s11] sm:$0xff]
        %v2184 = vld [vmem:[%s11 + $0x8] sm:$0xff]
        %v2185 = vld [vmem:[%s11 + $0x10] sm:$0xff]
        %v2186 = vld [vmem:[%s11 + $0x18] sm:$0xff]
        %v2187 = vld [vmem:[%s12] sm:$0x1]
        %v2189 = vlaneseq
        %v2190 = vshrl.u32 %v2189, 7
        %v2191 = vsub.s32 0, %v2190
        %v2192 = vrot.slane %v2187, %v2191
        %v2195 = vsel %vm1118, %v2056, 0
        %v2198 = vsel %vm1118, %v2057, 0
        %v2201 = vsel %vm1118, %v2058, 0
        %v2204 = vsel %vm1118, %v2059, 0
        %v2207 = vsel %vm1118, %v2060, 0
        %v2210 = vsel %vm1118, %v2061, 0
        %v2213 = vsel %vm1118, %v2062, 0
        %v2216 = vsel %vm1118, %v2063, 0
        %v2219 = vsel %vm1118, %v2064, 0
        %v2222 = vsel %vm1118, %v2065, 0
        %v2225 = vsel %vm1118, %v2066, 0
        %v2228 = vsel %vm1118, %v2067, 0
        %v2231 = vsel %vm1118, %v2068, 0
        %v2234 = vsel %vm1118, %v2069, 0
        %v2237 = vsel %vm1118, %v2070, 0
        %v2240 = vsel %vm1118, %v2071, 0
        %v2243 = vsel %vm1118, %v2072, 0
        %v2246 = vsel %vm1118, %v2073, 0
        %v2249 = vsel %vm1118, %v2074, 0
        %v2252 = vsel %vm1118, %v2075, 0
        %v2255 = vsel %vm1118, %v2076, 0
        %v2258 = vsel %vm1118, %v2077, 0
        %v2261 = vsel %vm1118, %v2078, 0
        %v2264 = vsel %vm1118, %v2079, 0
        %v2267 = vsel %vm1118, %v2080, 0
        %v2270 = vsel %vm1118, %v2081, 0
        %v2273 = vsel %vm1118, %v2082, 0
        %v2276 = vsel %vm1118, %v2083, 0
        %v2279 = vsel %vm1118, %v2084, 0
        %v2282 = vsel %vm1118, %v2085, 0
        %v2285 = vsel %vm1118, %v2086, 0
        %v2288 = vsel %vm1118, %v2087, 0
        %2290 = vmatprep.subr.mxu0 0.0
        %2291 = vmatpush1.msra.mxu0 %v2183
        %2292 = vmatprep.subr.mxu0 0.0
        %2293 = vmatpush1.msra.mxu0 %v2184
        %2294 = vmatprep.subr.mxu0 0.0
        %2295 = vmatpush1.msra.mxu0 %v2185
        %2296 = vmatprep.subr.mxu0 0.0
        %2297 = vmatpush1.msra.mxu0 %v2186
        %2298 = vmatprep.subr.mxu0 0.0
        %2299 = vmatpush1.msra.mxu0 0.0
        %2300 = vmatprep.subr.mxu0 0.0
        %2301 = vmatpush1.msra.mxu0 0.0
        %2302 = vmatprep.subr.mxu0 0.0
        %2303 = vmatpush1.msra.mxu0 0.0
        %2304 = vmatprep.subr.mxu0 0.0
        %2305 = vmatpush1.msra.mxu0 0.0
        %2306 = vmatprep.subr.mxu0 0.0
        %2307 = vmatpush1.msra.mxu0 0.0
        %2308 = vmatprep.subr.mxu0 0.0
        %2309 = vmatpush1.msra.mxu0 0.0
        %2310 = vmatprep.subr.mxu0 0.0
        %2311 = vmatpush1.msra.mxu0 0.0
        %2312 = vmatprep.subr.mxu0 0.0
        %2313 = vmatpush1.msra.mxu0 0.0
        %2314 = vmatprep.subr.mxu0 0.0
        %2315 = vmatpush1.msra.mxu0 0.0
        %2316 = vmatprep.subr.mxu0 0.0
        %2317 = vmatpush1.msra.mxu0 0.0
        %2318 = vmatprep.subr.mxu0 0.0
        %2319 = vmatpush1.msra.mxu0 0.0
        %2320 = vmatprep.subr.mxu0 0.0
        %2321 = vmatpush1.msra.mxu0 0.0
        %2322 = vmatprep.subr.mxu0 0.0
        %2323 = vmatpush1.msra.mxu0 0.0
        %2324 = vmatprep.subr.mxu0 0.0
        %2325 = vmatpush1.msra.mxu0 0.0
        %2326 = vmatprep.subr.mxu0 0.0
        %2327 = vmatpush1.msra.mxu0 0.0
        %2328 = vmatprep.subr.mxu0 0.0
        %2329 = vmatpush1.msra.mxu0 0.0
        %2330 = vmatprep.subr.mxu0 0.0
        %2331 = vmatpush1.msra.mxu0 0.0
        %2332 = vmatprep.subr.mxu0 0.0
        %2333 = vmatpush1.msra.mxu0 0.0
        %2334 = vmatprep.subr.mxu0 0.0
        %2335 = vmatpush1.msra.mxu0 0.0
        %2336 = vmatprep.subr.mxu0 0.0
        %2337 = vmatpush1.msra.mxu0 0.0
        %2338 = vmatprep.subr.mxu0 0.0
        %2339 = vmatpush1.msra.mxu0 0.0
        %2340 = vmatprep.subr.mxu0 0.0
        %2341 = vmatpush1.msra.mxu0 0.0
        %2342 = vmatprep.subr.mxu0 0.0
        %2343 = vmatpush1.msra.mxu0 0.0
        %2344 = vmatprep.subr.mxu0 0.0
        %2345 = vmatpush1.msra.mxu0 0.0
        %2346 = vmatprep.subr.mxu0 0.0
        %2347 = vmatpush1.msra.mxu0 0.0
        %2348 = vmatprep.subr.mxu0 0.0
        %2349 = vmatpush1.msra.mxu0 0.0
        %2350 = vmatprep.subr.mxu0 0.0
        %2351 = vmatpush1.msra.mxu0 0.0
        %2352 = vmatprep.subr.mxu0 0.0
        %2353 = vmatpush1.msra.mxu0 0.0
        %2354 = vmatprep.mubr.f32.mxu0 0.0
        %2355 = vmatmul.mubr.f32.gmra.mrb[0].mxu0 %v2195
        %v2356 = vpop.f32.mrb[0].mxu0
        %v2357 = vadd.f32 %v2192, %v2356
        %v2358 = vpop.f32.mrb[0].mxu0
        %2359 = vmatprep.mubr.f32.mxu0 0.0
        %2360 = vmatmul.mubr.f32.gmra.mrb[0].mxu0 %v2198
        %v2361 = vpop.f32.mrb[0].mxu0
        %v2362 = vadd.f32 %v2192, %v2361
        %v2363 = vpop.f32.mrb[0].mxu0
        %2364 = vmatprep.mubr.f32.mxu0 0.0
        %2365 = vmatmul.mubr.f32.gmra.mrb[0].mxu0 %v2201
        %v2366 = vpop.f32.mrb[0].mxu0
        %v2367 = vadd.f32 %v2192, %v2366
        %v2368 = vpop.f32.mrb[0].mxu0
        %2369 = vmatprep.mubr.f32.mxu0 0.0
        %2370 = vmatmul.mubr.f32.gmra.mrb[0].mxu0 %v2204
        %v2371 = vpop.f32.mrb[0].mxu0
        %v2372 = vadd.f32 %v2192, %v2371
        %v2373 = vpop.f32.mrb[0].mxu0
        %2374 = vmatprep.mubr.f32.mxu0 0.0
        %2375 = vmatmul.mubr.f32.gmra.mrb[0].mxu0 %v2207
        %v2376 = vpop.f32.mrb[0].mxu0
        %v2377 = vadd.f32 %v2192, %v2376
        %v2378 = vpop.f32.mrb[0].mxu0
        %2379 = vmatprep.mubr.f32.mxu0 0.0
        %2380 = vmatmul.mubr.f32.gmra.mrb[0].mxu0 %v2210
        %v2381 = vpop.f32.mrb[0].mxu0
        %v2382 = vadd.f32 %v2192, %v2381
        %v2383 = vpop.f32.mrb[0].mxu0
        %2384 = vmatprep.mubr.f32.mxu0 0.0
        %2385 = vmatmul.mubr.f32.gmra.mrb[0].mxu0 %v2213
        %v2386 = vpop.f32.mrb[0].mxu0
        %v2387 = vadd.f32 %v2192, %v2386
        %v2388 = vpop.f32.mrb[0].mxu0
        %2389 = vmatprep.mubr.f32.mxu0 0.0
        %2390 = vmatmul.mubr.f32.gmra.mrb[0].mxu0 %v2216
        %v2391 = vpop.f32.mrb[0].mxu0
        %v2392 = vadd.f32 %v2192, %v2391
        %v2393 = vpop.f32.mrb[0].mxu0
        %2394 = vmatprep.mubr.f32.mxu0 0.0
        %2395 = vmatmul.mubr.f32.gmra.mrb[0].mxu0 %v2219
        %v2396 = vpop.f32.mrb[0].mxu0
        %v2397 = vadd.f32 %v2192, %v2396
        %v2398 = vpop.f32.mrb[0].mxu0
        %2399 = vmatprep.mubr.f32.mxu0 0.0
        %2400 = vmatmul.mubr.f32.gmra.mrb[0].mxu0 %v2222
        %v2401 = vpop.f32.mrb[0].mxu0
        %v2402 = vadd.f32 %v2192, %v2401
        %v2403 = vpop.f32.mrb[0].mxu0
        %2404 = vmatprep.mubr.f32.mxu0 0.0
        %2405 = vmatmul.mubr.f32.gmra.mrb[0].mxu0 %v2225
        %v2406 = vpop.f32.mrb[0].mxu0
        %v2407 = vadd.f32 %v2192, %v2406
        %v2408 = vpop.f32.mrb[0].mxu0
        %2409 = vmatprep.mubr.f32.mxu0 0.0
        %2410 = vmatmul.mubr.f32.gmra.mrb[0].mxu0 %v2228
        %v2411 = vpop.f32.mrb[0].mxu0
        %v2412 = vadd.f32 %v2192, %v2411
        %v2413 = vpop.f32.mrb[0].mxu0
        %2414 = vmatprep.mubr.f32.mxu0 0.0
        %2415 = vmatmul.mubr.f32.gmra.mrb[0].mxu0 %v2231
        %v2416 = vpop.f32.mrb[0].mxu0
        %v2417 = vadd.f32 %v2192, %v2416
        %v2418 = vpop.f32.mrb[0].mxu0
        %2419 = vmatprep.mubr.f32.mxu0 0.0
        %2420 = vmatmul.mubr.f32.gmra.mrb[0].mxu0 %v2234
        %v2421 = vpop.f32.mrb[0].mxu0
        %v2422 = vadd.f32 %v2192, %v2421
        %v2423 = vpop.f32.mrb[0].mxu0
        %2424 = vmatprep.mubr.f32.mxu0 0.0
        %2425 = vmatmul.mubr.f32.gmra.mrb[0].mxu0 %v2237
        %v2426 = vpop.f32.mrb[0].mxu0
        %v2427 = vadd.f32 %v2192, %v2426
        %v2428 = vpop.f32.mrb[0].mxu0
        %2429 = vmatprep.mubr.f32.mxu0 0.0
        %2430 = vmatmul.mubr.f32.gmra.mrb[0].mxu0 %v2240
        %v2431 = vpop.f32.mrb[0].mxu0
        %v2432 = vadd.f32 %v2192, %v2431
        %v2433 = vpop.f32.mrb[0].mxu0
        %2434 = vmatprep.mubr.f32.mxu0 0.0
        %2435 = vmatmul.mubr.f32.gmra.mrb[0].mxu0 %v2243
        %v2436 = vpop.f32.mrb[0].mxu0
        %v2437 = vadd.f32 %v2192, %v2436
        %v2438 = vpop.f32.mrb[0].mxu0
        %2439 = vmatprep.mubr.f32.mxu0 0.0
        %2440 = vmatmul.mubr.f32.gmra.mrb[0].mxu0 %v2246
        %v2441 = vpop.f32.mrb[0].mxu0
        %v2442 = vadd.f32 %v2192, %v2441
        %v2443 = vpop.f32.mrb[0].mxu0
        %2444 = vmatprep.mubr.f32.mxu0 0.0
        %2445 = vmatmul.mubr.f32.gmra.mrb[0].mxu0 %v2249
        %v2446 = vpop.f32.mrb[0].mxu0
        %v2447 = vadd.f32 %v2192, %v2446
        %v2448 = vpop.f32.mrb[0].mxu0
        %2449 = vmatprep.mubr.f32.mxu0 0.0
        %2450 = vmatmul.mubr.f32.gmra.mrb[0].mxu0 %v2252
        %v2451 = vpop.f32.mrb[0].mxu0
        %v2452 = vadd.f32 %v2192, %v2451
        %v2453 = vpop.f32.mrb[0].mxu0
        %2454 = vmatprep.mubr.f32.mxu0 0.0
        %2455 = vmatmul.mubr.f32.gmra.mrb[0].mxu0 %v2255
        %v2456 = vpop.f32.mrb[0].mxu0
        %v2457 = vadd.f32 %v2192, %v2456
        %v2458 = vpop.f32.mrb[0].mxu0
        %2459 = vmatprep.mubr.f32.mxu0 0.0
        %2460 = vmatmul.mubr.f32.gmra.mrb[0].mxu0 %v2258
        %v2461 = vpop.f32.mrb[0].mxu0
        %v2462 = vadd.f32 %v2192, %v2461
        %v2463 = vpop.f32.mrb[0].mxu0
        %2464 = vmatprep.mubr.f32.mxu0 0.0
        %2465 = vmatmul.mubr.f32.gmra.mrb[0].mxu0 %v2261
        %v2466 = vpop.f32.mrb[0].mxu0
        %v2467 = vadd.f32 %v2192, %v2466
        %v2468 = vpop.f32.mrb[0].mxu0
        %2469 = vmatprep.mubr.f32.mxu0 0.0
        %2470 = vmatmul.mubr.f32.gmra.mrb[0].mxu0 %v2264
        %v2471 = vpop.f32.mrb[0].mxu0
        %v2472 = vadd.f32 %v2192, %v2471
        %v2473 = vpop.f32.mrb[0].mxu0
        %2474 = vmatprep.mubr.f32.mxu0 0.0
        %2475 = vmatmul.mubr.f32.gmra.mrb[0].mxu0 %v2267
        %v2476 = vpop.f32.mrb[0].mxu0
        %v2477 = vadd.f32 %v2192, %v2476
        %v2478 = vpop.f32.mrb[0].mxu0
        %2479 = vmatprep.mubr.f32.mxu0 0.0
        %2480 = vmatmul.mubr.f32.gmra.mrb[0].mxu0 %v2270
        %v2481 = vpop.f32.mrb[0].mxu0
        %v2482 = vadd.f32 %v2192, %v2481
        %v2483 = vpop.f32.mrb[0].mxu0
        %2484 = vmatprep.mubr.f32.mxu0 0.0
        %2485 = vmatmul.mubr.f32.gmra.mrb[0].mxu0 %v2273
        %v2486 = vpop.f32.mrb[0].mxu0
        %v2487 = vadd.f32 %v2192, %v2486
        %v2488 = vpop.f32.mrb[0].mxu0
        %2489 = vmatprep.mubr.f32.mxu0 0.0
        %2490 = vmatmul.mubr.f32.gmra.mrb[0].mxu0 %v2276
        %v2491 = vpop.f32.mrb[0].mxu0
        %v2492 = vadd.f32 %v2192, %v2491
        %v2493 = vpop.f32.mrb[0].mxu0
        %2494 = vmatprep.mubr.f32.mxu0 0.0
        %2495 = vmatmul.mubr.f32.gmra.mrb[0].mxu0 %v2279
        %v2496 = vpop.f32.mrb[0].mxu0
        %v2497 = vadd.f32 %v2192, %v2496
        %v2498 = vpop.f32.mrb[0].mxu0
        %2499 = vmatprep.mubr.f32.mxu0 0.0
        %2500 = vmatmul.mubr.f32.gmra.mrb[0].mxu0 %v2282
        %v2501 = vpop.f32.mrb[0].mxu0
        %v2502 = vadd.f32 %v2192, %v2501
        %v2503 = vpop.f32.mrb[0].mxu0
        %2504 = vmatprep.mubr.f32.mxu0 0.0
        %2505 = vmatmul.mubr.f32.gmra.mrb[0].mxu0 %v2285
        %v2506 = vpop.f32.mrb[0].mxu0
        %v2507 = vadd.f32 %v2192, %v2506
        %v2508 = vpop.f32.mrb[0].mxu0
        %2509 = vmatprep.mubr.f32.mxu0 0.0
        %2510 = vmatmul.mubr.f32.gmra.mrb[0].mxu0 %v2288
        %v2511 = vpop.f32.mrb[0].mxu0
        %v2512 = vadd.f32 %v2192, %v2511
        %v2513 = vpop.f32.mrb[0].mxu0
        %2514 = vdwg.mxu0
        %v2515 = vld [vmem:[%s13] sm:$0xff]
        %v2516 = vld [vmem:[%s13 + $0x8] sm:$0xff]
        %v2517 = vld [vmem:[%s13 + $0x10] sm:$0xff]
        %v2518 = vld [vmem:[%s13 + $0x18] sm:$0xff]
        %v2519 = vld [vmem:[%s14] sm:$0x1]
        %v2521 = vlaneseq
        %v2522 = vshrl.u32 %v2521, 7
        %v2523 = vsub.s32 0, %v2522
        %v2524 = vrot.slane %v2519, %v2523
        %2526 = vmatprep.subr.mxu0 0.0
        %2527 = vmatpush1.msra.mxu0 %v2515
        %2528 = vmatprep.subr.mxu0 0.0
        %2529 = vmatpush1.msra.mxu0 %v2516
        %2530 = vmatprep.subr.mxu0 0.0
        %2531 = vmatpush1.msra.mxu0 %v2517
        %2532 = vmatprep.subr.mxu0 0.0
        %2533 = vmatpush1.msra.mxu0 %v2518
        %2534 = vmatprep.subr.mxu0 0.0
        %2535 = vmatpush1.msra.mxu0 0.0
        %2536 = vmatprep.subr.mxu0 0.0
        %2537 = vmatpush1.msra.mxu0 0.0
        %2538 = vmatprep.subr.mxu0 0.0
        %2539 = vmatpush1.msra.mxu0 0.0
        %2540 = vmatprep.subr.mxu0 0.0
        %2541 = vmatpush1.msra.mxu0 0.0
        %2542 = vmatprep.subr.mxu0 0.0
        %2543 = vmatpush1.msra.mxu0 0.0
        %2544 = vmatprep.subr.mxu0 0.0
        %2545 = vmatpush1.msra.mxu0 0.0
        %2546 = vmatprep.subr.mxu0 0.0
        %2547 = vmatpush1.msra.mxu0 0.0
        %2548 = vmatprep.subr.mxu0 0.0
        %2549 = vmatpush1.msra.mxu0 0.0
        %2550 = vmatprep.subr.mxu0 0.0
        %2551 = vmatpush1.msra.mxu0 0.0
        %2552 = vmatprep.subr.mxu0 0.0
        %2553 = vmatpush1.msra.mxu0 0.0
        %2554 = vmatprep.subr.mxu0 0.0
        %2555 = vmatpush1.msra.mxu0 0.0
        %2556 = vmatprep.subr.mxu0 0.0
        %2557 = vmatpush1.msra.mxu0 0.0
        %2558 = vmatprep.subr.mxu0 0.0
        %2559 = vmatpush1.msra.mxu0 0.0
        %2560 = vmatprep.subr.mxu0 0.0
        %2561 = vmatpush1.msra.mxu0 0.0
        %2562 = vmatprep.subr.mxu0 0.0
        %2563 = vmatpush1.msra.mxu0 0.0
        %2564 = vmatprep.subr.mxu0 0.0
        %2565 = vmatpush1.msra.mxu0 0.0
        %2566 = vmatprep.subr.mxu0 0.0
        %2567 = vmatpush1.msra.mxu0 0.0
        %2568 = vmatprep.subr.mxu0 0.0
        %2569 = vmatpush1.msra.mxu0 0.0
        %2570 = vmatprep.subr.mxu0 0.0
        %2571 = vmatpush1.msra.mxu0 0.0
        %2572 = vmatprep.subr.mxu0 0.0
        %2573 = vmatpush1.msra.mxu0 0.0
        %2574 = vmatprep.subr.mxu0 0.0
        %2575 = vmatpush1.msra.mxu0 0.0
        %2576 = vmatprep.subr.mxu0 0.0
        %2577 = vmatpush1.msra.mxu0 0.0
        %2578 = vmatprep.subr.mxu0 0.0
        %2579 = vmatpush1.msra.mxu0 0.0
        %2580 = vmatprep.subr.mxu0 0.0
        %2581 = vmatpush1.msra.mxu0 0.0
        %2582 = vmatprep.subr.mxu0 0.0
        %2583 = vmatpush1.msra.mxu0 0.0
        %2584 = vmatprep.subr.mxu0 0.0
        %2585 = vmatpush1.msra.mxu0 0.0
        %2586 = vmatprep.subr.mxu0 0.0
        %2587 = vmatpush1.msra.mxu0 0.0
        %2588 = vmatprep.subr.mxu0 0.0
        %2589 = vmatpush1.msra.mxu0 0.0
        %2590 = vmatprep.mubr.f32.mxu0 0.0
        %2591 = vmatmul.mubr.f32.gmra.mrb[0].mxu0 %v2195
        %v2592 = vpop.f32.mrb[0].mxu0
        %v2593 = vadd.f32 %v2524, %v2592
        %v2594 = vpop.f32.mrb[0].mxu0
        %2595 = vmatprep.mubr.f32.mxu0 0.0
        %2596 = vmatmul.mubr.f32.gmra.mrb[0].mxu0 %v2198
        %v2597 = vpop.f32.mrb[0].mxu0
        %v2598 = vadd.f32 %v2524, %v2597
        %v2599 = vpop.f32.mrb[0].mxu0
        %2600 = vmatprep.mubr.f32.mxu0 0.0
        %2601 = vmatmul.mubr.f32.gmra.mrb[0].mxu0 %v2201
        %v2602 = vpop.f32.mrb[0].mxu0
        %v2603 = vadd.f32 %v2524, %v2602
        %v2604 = vpop.f32.mrb[0].mxu0
        %2605 = vmatprep.mubr.f32.mxu0 0.0
        %2606 = vmatmul.mubr.f32.gmra.mrb[0].mxu0 %v2204
        %v2607 = vpop.f32.mrb[0].mxu0
        %v2608 = vadd.f32 %v2524, %v2607
        %v2609 = vpop.f32.mrb[0].mxu0
        %2610 = vmatprep.mubr.f32.mxu0 0.0
        %2611 = vmatmul.mubr.f32.gmra.mrb[0].mxu0 %v2207
        %v2612 = vpop.f32.mrb[0].mxu0
        %v2613 = vadd.f32 %v2524, %v2612
        %v2614 = vpop.f32.mrb[0].mxu0
        %2615 = vmatprep.mubr.f32.mxu0 0.0
        %2616 = vmatmul.mubr.f32.gmra.mrb[0].mxu0 %v2210
        %v2617 = vpop.f32.mrb[0].mxu0
        %v2618 = vadd.f32 %v2524, %v2617
        %v2619 = vpop.f32.mrb[0].mxu0
        %2620 = vmatprep.mubr.f32.mxu0 0.0
        %2621 = vmatmul.mubr.f32.gmra.mrb[0].mxu0 %v2213
        %v2622 = vpop.f32.mrb[0].mxu0
        %v2623 = vadd.f32 %v2524, %v2622
        %v2624 = vpop.f32.mrb[0].mxu0
        %2625 = vmatprep.mubr.f32.mxu0 0.0
        %2626 = vmatmul.mubr.f32.gmra.mrb[0].mxu0 %v2216
        %v2627 = vpop.f32.mrb[0].mxu0
        %v2628 = vadd.f32 %v2524, %v2627
        %v2629 = vpop.f32.mrb[0].mxu0
        %2630 = vmatprep.mubr.f32.mxu0 0.0
        %2631 = vmatmul.mubr.f32.gmra.mrb[0].mxu0 %v2219
        %v2632 = vpop.f32.mrb[0].mxu0
        %v2633 = vadd.f32 %v2524, %v2632
        %v2634 = vpop.f32.mrb[0].mxu0
        %2635 = vmatprep.mubr.f32.mxu0 0.0
        %2636 = vmatmul.mubr.f32.gmra.mrb[0].mxu0 %v2222
        %v2637 = vpop.f32.mrb[0].mxu0
        %v2638 = vadd.f32 %v2524, %v2637
        %v2639 = vpop.f32.mrb[0].mxu0
        %2640 = vmatprep.mubr.f32.mxu0 0.0
        %2641 = vmatmul.mubr.f32.gmra.mrb[0].mxu0 %v2225
        %v2642 = vpop.f32.mrb[0].mxu0
        %v2643 = vadd.f32 %v2524, %v2642
        %v2644 = vpop.f32.mrb[0].mxu0
        %2645 = vmatprep.mubr.f32.mxu0 0.0
        %2646 = vmatmul.mubr.f32.gmra.mrb[0].mxu0 %v2228
        %v2647 = vpop.f32.mrb[0].mxu0
        %v2648 = vadd.f32 %v2524, %v2647
        %v2649 = vpop.f32.mrb[0].mxu0
        %2650 = vmatprep.mubr.f32.mxu0 0.0
        %2651 = vmatmul.mubr.f32.gmra.mrb[0].mxu0 %v2231
        %v2652 = vpop.f32.mrb[0].mxu0
        %v2653 = vadd.f32 %v2524, %v2652
        %v2654 = vpop.f32.mrb[0].mxu0
        %2655 = vmatprep.mubr.f32.mxu0 0.0
        %2656 = vmatmul.mubr.f32.gmra.mrb[0].mxu0 %v2234
        %v2657 = vpop.f32.mrb[0].mxu0
        %v2658 = vadd.f32 %v2524, %v2657
        %v2659 = vpop.f32.mrb[0].mxu0
        %2660 = vmatprep.mubr.f32.mxu0 0.0
        %2661 = vmatmul.mubr.f32.gmra.mrb[0].mxu0 %v2237
        %v2662 = vpop.f32.mrb[0].mxu0
        %v2663 = vadd.f32 %v2524, %v2662
        %v2664 = vpop.f32.mrb[0].mxu0
        %2665 = vmatprep.mubr.f32.mxu0 0.0
        %2666 = vmatmul.mubr.f32.gmra.mrb[0].mxu0 %v2240
        %v2667 = vpop.f32.mrb[0].mxu0
        %v2668 = vadd.f32 %v2524, %v2667
        %v2669 = vpop.f32.mrb[0].mxu0
        %2670 = vmatprep.mubr.f32.mxu0 0.0
        %2671 = vmatmul.mubr.f32.gmra.mrb[0].mxu0 %v2243
        %v2672 = vpop.f32.mrb[0].mxu0
        %v2673 = vadd.f32 %v2524, %v2672
        %v2674 = vpop.f32.mrb[0].mxu0
        %2675 = vmatprep.mubr.f32.mxu0 0.0
        %2676 = vmatmul.mubr.f32.gmra.mrb[0].mxu0 %v2246
        %v2677 = vpop.f32.mrb[0].mxu0
        %v2678 = vadd.f32 %v2524, %v2677
        %v2679 = vpop.f32.mrb[0].mxu0
        %2680 = vmatprep.mubr.f32.mxu0 0.0
        %2681 = vmatmul.mubr.f32.gmra.mrb[0].mxu0 %v2249
        %v2682 = vpop.f32.mrb[0].mxu0
        %v2683 = vadd.f32 %v2524, %v2682
        %v2684 = vpop.f32.mrb[0].mxu0
        %2685 = vmatprep.mubr.f32.mxu0 0.0
        %2686 = vmatmul.mubr.f32.gmra.mrb[0].mxu0 %v2252
        %v2687 = vpop.f32.mrb[0].mxu0
        %v2688 = vadd.f32 %v2524, %v2687
        %v2689 = vpop.f32.mrb[0].mxu0
        %2690 = vmatprep.mubr.f32.mxu0 0.0
        %2691 = vmatmul.mubr.f32.gmra.mrb[0].mxu0 %v2255
        %v2692 = vpop.f32.mrb[0].mxu0
        %v2693 = vadd.f32 %v2524, %v2692
        %v2694 = vpop.f32.mrb[0].mxu0
        %2695 = vmatprep.mubr.f32.mxu0 0.0
        %2696 = vmatmul.mubr.f32.gmra.mrb[0].mxu0 %v2258
        %v2697 = vpop.f32.mrb[0].mxu0
        %v2698 = vadd.f32 %v2524, %v2697
        %v2699 = vpop.f32.mrb[0].mxu0
        %2700 = vmatprep.mubr.f32.mxu0 0.0
        %2701 = vmatmul.mubr.f32.gmra.mrb[0].mxu0 %v2261
        %v2702 = vpop.f32.mrb[0].mxu0
        %v2703 = vadd.f32 %v2524, %v2702
        %v2704 = vpop.f32.mrb[0].mxu0
        %2705 = vmatprep.mubr.f32.mxu0 0.0
        %2706 = vmatmul.mubr.f32.gmra.mrb[0].mxu0 %v2264
        %v2707 = vpop.f32.mrb[0].mxu0
        %v2708 = vadd.f32 %v2524, %v2707
        %v2709 = vpop.f32.mrb[0].mxu0
        %2710 = vmatprep.mubr.f32.mxu0 0.0
        %2711 = vmatmul.mubr.f32.gmra.mrb[0].mxu0 %v2267
        %v2712 = vpop.f32.mrb[0].mxu0
        %v2713 = vadd.f32 %v2524, %v2712
        %v2714 = vpop.f32.mrb[0].mxu0
        %2715 = vmatprep.mubr.f32.mxu0 0.0
        %2716 = vmatmul.mubr.f32.gmra.mrb[0].mxu0 %v2270
        %v2717 = vpop.f32.mrb[0].mxu0
        %v2718 = vadd.f32 %v2524, %v2717
        %v2719 = vpop.f32.mrb[0].mxu0
        %2720 = vmatprep.mubr.f32.mxu0 0.0
        %2721 = vmatmul.mubr.f32.gmra.mrb[0].mxu0 %v2273
        %v2722 = vpop.f32.mrb[0].mxu0
        %v2723 = vadd.f32 %v2524, %v2722
        %v2724 = vpop.f32.mrb[0].mxu0
        %2725 = vmatprep.mubr.f32.mxu0 0.0
        %2726 = vmatmul.mubr.f32.gmra.mrb[0].mxu0 %v2276
        %v2727 = vpop.f32.mrb[0].mxu0
        %v2728 = vadd.f32 %v2524, %v2727
        %v2729 = vpop.f32.mrb[0].mxu0
        %2730 = vmatprep.mubr.f32.mxu0 0.0
        %2731 = vmatmul.mubr.f32.gmra.mrb[0].mxu0 %v2279
        %v2732 = vpop.f32.mrb[0].mxu0
        %v2733 = vadd.f32 %v2524, %v2732
        %v2734 = vpop.f32.mrb[0].mxu0
        %2735 = vmatprep.mubr.f32.mxu0 0.0
        %2736 = vmatmul.mubr.f32.gmra.mrb[0].mxu0 %v2282
        %v2737 = vpop.f32.mrb[0].mxu0
        %v2738 = vadd.f32 %v2524, %v2737
        %v2739 = vpop.f32.mrb[0].mxu0
        %2740 = vmatprep.mubr.f32.mxu0 0.0
        %2741 = vmatmul.mubr.f32.gmra.mrb[0].mxu0 %v2285
        %v2742 = vpop.f32.mrb[0].mxu0
        %v2743 = vadd.f32 %v2524, %v2742
        %v2744 = vpop.f32.mrb[0].mxu0
        %2745 = vmatprep.mubr.f32.mxu0 0.0
        %2746 = vmatmul.mubr.f32.gmra.mrb[0].mxu0 %v2288
        %v2747 = vpop.f32.mrb[0].mxu0
        %v2748 = vadd.f32 %v2524, %v2747
        %v2749 = vpop.f32.mrb[0].mxu0
        %2750 = vdwg.mxu0
        %v2752 = vsel %vm1118, %v2180, 0
        %v2755 = vsel %vm1118, %v2357, 0
        %v2758 = vsel %vm1118, %v2362, 0
        %v2761 = vsel %vm1118, %v2367, 0
        %v2764 = vsel %vm1118, %v2372, 0
        %v2767 = vsel %vm1118, %v2377, 0
        %v2770 = vsel %vm1118, %v2382, 0
        %v2773 = vsel %vm1118, %v2387, 0
        %v2776 = vsel %vm1118, %v2392, 0
        %v2779 = vsel %vm1118, %v2397, 0
        %v2782 = vsel %vm1118, %v2402, 0
        %v2785 = vsel %vm1118, %v2407, 0
        %v2788 = vsel %vm1118, %v2412, 0
        %v2791 = vsel %vm1118, %v2417, 0
        %v2794 = vsel %vm1118, %v2422, 0
        %v2797 = vsel %vm1118, %v2427, 0
        %v2800 = vsel %vm1118, %v2432, 0
        %v2803 = vsel %vm1118, %v2437, 0
        %v2806 = vsel %vm1118, %v2442, 0
        %v2809 = vsel %vm1118, %v2447, 0
        %v2812 = vsel %vm1118, %v2452, 0
        %v2815 = vsel %vm1118, %v2457, 0
        %v2818 = vsel %vm1118, %v2462, 0
        %v2821 = vsel %vm1118, %v2467, 0
        %v2824 = vsel %vm1118, %v2472, 0
        %v2827 = vsel %vm1118, %v2477, 0
        %v2830 = vsel %vm1118, %v2482, 0
        %v2833 = vsel %vm1118, %v2487, 0
        %v2836 = vsel %vm1118, %v2492, 0
        %v2839 = vsel %vm1118, %v2497, 0
        %v2842 = vsel %vm1118, %v2502, 0
        %v2845 = vsel %vm1118, %v2507, 0
        %v2848 = vsel %vm1118, %v2512, 0
        %2850 = vmatprep.subr.mxu0 0.0
        %2851 = vmatpush1.xpose.msra.mxu0 %v2755
        %2852 = vmatprep.subr.mxu0 0.0
        %2853 = vmatpush1.xpose.msra.mxu0 %v2758
        %2854 = vmatprep.subr.mxu0 0.0
        %2855 = vmatpush1.xpose.msra.mxu0 %v2761
        %2856 = vmatprep.subr.mxu0 0.0
        %2857 = vmatpush1.xpose.msra.mxu0 %v2764
        %2858 = vmatprep.subr.mxu0 0.0
        %2859 = vmatpush1.xpose.msra.mxu0 %v2767
        %2860 = vmatprep.subr.mxu0 0.0
        %2861 = vmatpush1.xpose.msra.mxu0 %v2770
        %2862 = vmatprep.subr.mxu0 0.0
        %2863 = vmatpush1.xpose.msra.mxu0 %v2773
        %2864 = vmatprep.subr.mxu0 0.0
        %2865 = vmatpush1.xpose.msra.mxu0 %v2776
        %2866 = vmatprep.subr.mxu0 0.0
        %2867 = vmatpush1.xpose.msra.mxu0 %v2779
        %2868 = vmatprep.subr.mxu0 0.0
        %2869 = vmatpush1.xpose.msra.mxu0 %v2782
        %2870 = vmatprep.subr.mxu0 0.0
        %2871 = vmatpush1.xpose.msra.mxu0 %v2785
        %2872 = vmatprep.subr.mxu0 0.0
        %2873 = vmatpush1.xpose.msra.mxu0 %v2788
        %2874 = vmatprep.subr.mxu0 0.0
        %2875 = vmatpush1.xpose.msra.mxu0 %v2791
        %2876 = vmatprep.subr.mxu0 0.0
        %2877 = vmatpush1.xpose.msra.mxu0 %v2794
        %2878 = vmatprep.subr.mxu0 0.0
        %2879 = vmatpush1.xpose.msra.mxu0 %v2797
        %2880 = vmatprep.subr.mxu0 0.0
        %2881 = vmatpush1.xpose.msra.mxu0 %v2800
        %2882 = vmatprep.subr.mxu0 0.0
        %2883 = vmatpush1.xpose.msra.mxu0 %v2803
        %2884 = vmatprep.subr.mxu0 0.0
        %2885 = vmatpush1.xpose.msra.mxu0 %v2806
        %2886 = vmatprep.subr.mxu0 0.0
        %2887 = vmatpush1.xpose.msra.mxu0 %v2809
        %2888 = vmatprep.subr.mxu0 0.0
        %2889 = vmatpush1.xpose.msra.mxu0 %v2812
        %2890 = vmatprep.subr.mxu0 0.0
        %2891 = vmatpush1.xpose.msra.mxu0 %v2815
        %2892 = vmatprep.subr.mxu0 0.0
        %2893 = vmatpush1.xpose.msra.mxu0 %v2818
        %2894 = vmatprep.subr.mxu0 0.0
        %2895 = vmatpush1.xpose.msra.mxu0 %v2821
        %2896 = vmatprep.subr.mxu0 0.0
        %2897 = vmatpush1.xpose.msra.mxu0 %v2824
        %2898 = vmatprep.subr.mxu0 0.0
        %2899 = vmatpush1.xpose.msra.mxu0 %v2827
        %2900 = vmatprep.subr.mxu0 0.0
        %2901 = vmatpush1.xpose.msra.mxu0 %v2830
        %2902 = vmatprep.subr.mxu0 0.0
        %2903 = vmatpush1.xpose.msra.mxu0 %v2833
        %2904 = vmatprep.subr.mxu0 0.0
        %2905 = vmatpush1.xpose.msra.mxu0 %v2836
        %2906 = vmatprep.subr.mxu0 0.0
        %2907 = vmatpush1.xpose.msra.mxu0 %v2839
        %2908 = vmatprep.subr.mxu0 0.0
        %2909 = vmatpush1.xpose.msra.mxu0 %v2842
        %2910 = vmatprep.subr.mxu0 0.0
        %2911 = vmatpush1.xpose.msra.mxu0 %v2845
        %2912 = vmatprep.subr.mxu0 0.0
        %2913 = vmatpush1.xpose.msra.mxu0 %v2848
        %2914 = vmatprep.mubr.f32.mxu0 0.0
        %2915 = vmatmul.mubr.f32.gmra.mrb[0].mxu0 %v2752
        %v2916 = vpop.f32.mrb[0].mxu0
        %v2917 = vadd.f32 0.0, %v2916
        %v2918 = vpop.f32.mrb[0].mxu0
        %v2919 = vadd.f32 0.0, %v2918
        %2920 = vdwg.mxu0
        %v2921 = vmax.f32 %v2917, %v2919
        %2922 = vmax.xlane.f32.xlu0 %v2921
        %v2923 = vpop.xlane.xlu0 %2922
        %v2924 = vsub.f32 %v2917, %v2923
        %v2925 = vsub.f32 %v2919, %v2923
        %v2926 = vmul.f32 %v2924, 1.442695
        %v2927 = vpow.pop %v2926
        %v2928 = vmul.f32 %v2925, 1.442695
        %v2929 = vpow.pop %v2928
        %v2930 = vadd.f32 %v2927, %v2929
        %2931 = vadd.xlane.f32.xlu0 %v2930
        %v2932 = vpop.xlane.xlu0 %2931
        %v2933 = vrcp.pop %v2932
        %v2934 = vmul.f32 %v2927, %v2933
        %v2935 = vmul.f32 %v2929, %v2933
        %2936 = vmatprep.subr.mxu0 0.0
        %2937 = vmatpush1.msra.mxu0 %v2593
        %2938 = vmatprep.subr.mxu0 0.0
        %2939 = vmatpush1.msra.mxu0 %v2598
        %2940 = vmatprep.subr.mxu0 0.0
        %2941 = vmatpush1.msra.mxu0 %v2603
        %2942 = vmatprep.subr.mxu0 0.0
        %2943 = vmatpush1.msra.mxu0 %v2608
        %2944 = vmatprep.subr.mxu0 0.0
        %2945 = vmatpush1.msra.mxu0 %v2613
        %2946 = vmatprep.subr.mxu0 0.0
        %2947 = vmatpush1.msra.mxu0 %v2618
        %2948 = vmatprep.subr.mxu0 0.0
        %2949 = vmatpush1.msra.mxu0 %v2623
        %2950 = vmatprep.subr.mxu0 0.0
        %2951 = vmatpush1.msra.mxu0 %v2628
        %2952 = vmatprep.subr.mxu0 0.0
        %2953 = vmatpush1.msra.mxu0 %v2633
        %2954 = vmatprep.subr.mxu0 0.0
        %2955 = vmatpush1.msra.mxu0 %v2638
        %2956 = vmatprep.subr.mxu0 0.0
        %2957 = vmatpush1.msra.mxu0 %v2643
        %2958 = vmatprep.subr.mxu0 0.0
        %2959 = vmatpush1.msra.mxu0 %v2648
        %2960 = vmatprep.subr.mxu0 0.0
        %2961 = vmatpush1.msra.mxu0 %v2653
        %2962 = vmatprep.subr.mxu0 0.0
        %2963 = vmatpush1.msra.mxu0 %v2658
        %2964 = vmatprep.subr.mxu0 0.0
        %2965 = vmatpush1.msra.mxu0 %v2663
        %2966 = vmatprep.subr.mxu0 0.0
        %2967 = vmatpush1.msra.mxu0 %v2668
        %2968 = vmatprep.subr.mxu0 0.0
        %2969 = vmatpush1.msra.mxu0 %v2673
        %2970 = vmatprep.subr.mxu0 0.0
        %2971 = vmatpush1.msra.mxu0 %v2678
        %2972 = vmatprep.subr.mxu0 0.0
        %2973 = vmatpush1.msra.mxu0 %v2683
        %2974 = vmatprep.subr.mxu0 0.0
        %2975 = vmatpush1.msra.mxu0 %v2688
        %2976 = vmatprep.subr.mxu0 0.0
        %2977 = vmatpush1.msra.mxu0 %v2693
        %2978 = vmatprep.subr.mxu0 0.0
        %2979 = vmatpush1.msra.mxu0 %v2698
        %2980 = vmatprep.subr.mxu0 0.0
        %2981 = vmatpush1.msra.mxu0 %v2703
        %2982 = vmatprep.subr.mxu0 0.0
        %2983 = vmatpush1.msra.mxu0 %v2708
        %2984 = vmatprep.subr.mxu0 0.0
        %2985 = vmatpush1.msra.mxu0 %v2713
        %2986 = vmatprep.subr.mxu0 0.0
        %2987 = vmatpush1.msra.mxu0 %v2718
        %2988 = vmatprep.subr.mxu0 0.0
        %2989 = vmatpush1.msra.mxu0 %v2723
        %2990 = vmatprep.subr.mxu0 0.0
        %2991 = vmatpush1.msra.mxu0 %v2728
        %2992 = vmatprep.subr.mxu0 0.0
        %2993 = vmatpush1.msra.mxu0 %v2733
        %2994 = vmatprep.subr.mxu0 0.0
        %2995 = vmatpush1.msra.mxu0 %v2738
        %2996 = vmatprep.subr.mxu0 0.0
        %2997 = vmatpush1.msra.mxu0 %v2743
        %2998 = vmatprep.subr.mxu0 0.0
        %2999 = vmatpush1.msra.mxu0 %v2748
        %3000 = vmatprep.mubr.f32.mxu0 %v2935
        %3001 = vmatmul.mubr.f32.gmra.mrb[0].mxu0 %v2934
        %v3002 = vpop.f32.mrb[0].mxu0
        %v3003 = vadd.f32 0.0, %v3002
        %v3004 = vpop.f32.mrb[0].mxu0
        %3005 = vdwg.mxu0
        %v3006 = vld [vmem:[%s15] sm:$0xff]
        %v3007 = vld [vmem:[%s15 + $0x8] sm:$0xff]
        %v3008 = vld [vmem:[%s15 + $0x10] sm:$0xff]
        %v3009 = vld [vmem:[%s15 + $0x18] sm:$0xff]
        %v3010 = vld [vmem:[%s16] sm:$0x1]
        %v3012 = vlaneseq
        %v3013 = vshrl.u32 %v3012, 7
        %v3014 = vsub.s32 0, %v3013
        %v3015 = vrot.slane %v3010, %v3014
        %v3018 = vsel %vm1118, %v3003, 0
        %3020 = vmatprep.subr.mxu0 0.0
        %3021 = vmatpush1.msra.mxu0 %v3006
        %3022 = vmatprep.subr.mxu0 0.0
        %3023 = vmatpush1.msra.mxu0 %v3007
        %3024 = vmatprep.subr.mxu0 0.0
        %3025 = vmatpush1.msra.mxu0 %v3008
        %3026 = vmatprep.subr.mxu0 0.0
        %3027 = vmatpush1.msra.mxu0 %v3009
        %3028 = vmatprep.subr.mxu0 0.0
        %3029 = vmatpush1.msra.mxu0 0.0
        %3030 = vmatprep.subr.mxu0 0.0
        %3031 = vmatpush1.msra.mxu0 0.0
        %3032 = vmatprep.subr.mxu0 0.0
        %3033 = vmatpush1.msra.mxu0 0.0
        %3034 = vmatprep.subr.mxu0 0.0
        %3035 = vmatpush1.msra.mxu0 0.0
        %3036 = vmatprep.subr.mxu0 0.0
        %3037 = vmatpush1.msra.mxu0 0.0
        %3038 = vmatprep.subr.mxu0 0.0
        %3039 = vmatpush1.msra.mxu0 0.0
        %3040 = vmatprep.subr.mxu0 0.0
        %3041 = vmatpush1.msra.mxu0 0.0
        %3042 = vmatprep.subr.mxu0 0.0
        %3043 = vmatpush1.msra.mxu0 0.0
        %3044 = vmatprep.subr.mxu0 0.0
        %3045 = vmatpush1.msra.mxu0 0.0
        %3046 = vmatprep.subr.mxu0 0.0
        %3047 = vmatpush1.msra.mxu0 0.0
        %3048 = vmatprep.subr.mxu0 0.0
        %3049 = vmatpush1.msra.mxu0 0.0
        %3050 = vmatprep.subr.mxu0 0.0
        %3051 = vmatpush1.msra.mxu0 0.0
        %3052 = vmatprep.subr.mxu0 0.0
        %3053 = vmatpush1.msra.mxu0 0.0
        %3054 = vmatprep.subr.mxu0 0.0
        %3055 = vmatpush1.msra.mxu0 0.0
        %3056 = vmatprep.subr.mxu0 0.0
        %3057 = vmatpush1.msra.mxu0 0.0
        %3058 = vmatprep.subr.mxu0 0.0
        %3059 = vmatpush1.msra.mxu0 0.0
        %3060 = vmatprep.subr.mxu0 0.0
        %3061 = vmatpush1.msra.mxu0 0.0
        %3062 = vmatprep.subr.mxu0 0.0
        %3063 = vmatpush1.msra.mxu0 0.0
        %3064 = vmatprep.subr.mxu0 0.0
        %3065 = vmatpush1.msra.mxu0 0.0
        %3066 = vmatprep.subr.mxu0 0.0
        %3067 = vmatpush1.msra.mxu0 0.0
        %3068 = vmatprep.subr.mxu0 0.0
        %3069 = vmatpush1.msra.mxu0 0.0
        %3070 = vmatprep.subr.mxu0 0.0
        %3071 = vmatpush1.msra.mxu0 0.0
        %3072 = vmatprep.subr.mxu0 0.0
        %3073 = vmatpush1.msra.mxu0 0.0
        %3074 = vmatprep.subr.mxu0 0.0
        %3075 = vmatpush1.msra.mxu0 0.0
        %3076 = vmatprep.subr.mxu0 0.0
        %3077 = vmatpush1.msra.mxu0 0.0
        %3078 = vmatprep.subr.mxu0 0.0
        %3079 = vmatpush1.msra.mxu0 0.0
        %3080 = vmatprep.subr.mxu0 0.0
        %3081 = vmatpush1.msra.mxu0 0.0
        %3082 = vmatprep.subr.mxu0 0.0
        %3083 = vmatpush1.msra.mxu0 0.0
        %3084 = vmatprep.mubr.f32.mxu0 0.0
        %3085 = vmatmul.mubr.f32.gmra.mrb[0].mxu0 %v3018
        %v3086 = vpop.f32.mrb[0].mxu0
        %v3087 = vadd.f32 %v3015, %v3086
        %v3088 = vpop.f32.mrb[0].mxu0
        %3089 = vdwg.mxu0
        %v3090 = vadd.f32 %v2098, %v3087
        %v3091 = vsel %vm1118, %v3090, 0.0
        %3092 = vadd.xlane.f32.xlu0 %v3091
        %v3093 = vpop.xlane.xlu0 %3092
        %v3094 = vrcp.pop 32.0
        %v3095 = vmul.f32 %v3093, %v3094
        %v3096 = vmul.f32 %v3090, %v3090
        %v3097 = vsel %vm1118, %v3096, 0.0
        %3098 = vadd.xlane.f32.xlu0 %v3097
        %v3099 = vpop.xlane.xlu0 %3098
        %v3100 = vmul.f32 %v3099, %v3094
        %v3101 = vmul.f32 %v3095, %v3095
        %v3102 = vsub.f32 %v3100, %v3101
        %v3103 = vmax.f32 %v3102, 0.0
        %v3104 = vsub.f32 %v3090, %v3095
        %v3105 = vadd.f32 %v3103, 1e-05
        %v3106 = vrsqrt.pop %v3105
        %v3107 = vmul.f32 %v3104, %v3106
        %v3108 = vld [vmem:[%s17] sm:$0xff]
        %v3109 = vld [vmem:[%s17 + $0x8] sm:$0xff]
        %v3110 = vld [vmem:[%s17 + $0x10] sm:$0xff]
        %v3111 = vld [vmem:[%s17 + $0x18] sm:$0xff]
        %v3112 = vld [vmem:[%s18] sm:$0x1]
        %v3114 = vlaneseq
        %v3115 = vshrl.u32 %v3114, 7
        %v3116 = vsub.s32 0, %v3115
        %v3117 = vrot.slane %v3112, %v3116
        %v3120 = vsel %vm1118, %v3107, 0
        %3122 = vmatprep.subr.mxu0 0.0
        %3123 = vmatpush1.msra.mxu0 %v3108
        %3124 = vmatprep.subr.mxu0 0.0
        %3125 = vmatpush1.msra.mxu0 %v3109
        %3126 = vmatprep.subr.mxu0 0.0
        %3127 = vmatpush1.msra.mxu0 %v3110
        %3128 = vmatprep.subr.mxu0 0.0
        %3129 = vmatpush1.msra.mxu0 %v3111
        %3130 = vmatprep.subr.mxu0 0.0
        %3131 = vmatpush1.msra.mxu0 0.0
        %3132 = vmatprep.subr.mxu0 0.0
        %3133 = vmatpush1.msra.mxu0 0.0
        %3134 = vmatprep.subr.mxu0 0.0
        %3135 = vmatpush1.msra.mxu0 0.0
        %3136 = vmatprep.subr.mxu0 0.0
        %3137 = vmatpush1.msra.mxu0 0.0
        %3138 = vmatprep.subr.mxu0 0.0
        %3139 = vmatpush1.msra.mxu0 0.0
        %3140 = vmatprep.subr.mxu0 0.0
        %3141 = vmatpush1.msra.mxu0 0.0
        %3142 = vmatprep.subr.mxu0 0.0
        %3143 = vmatpush1.msra.mxu0 0.0
        %3144 = vmatprep.subr.mxu0 0.0
        %3145 = vmatpush1.msra.mxu0 0.0
        %3146 = vmatprep.subr.mxu0 0.0
        %3147 = vmatpush1.msra.mxu0 0.0
        %3148 = vmatprep.subr.mxu0 0.0
        %3149 = vmatpush1.msra.mxu0 0.0
        %3150 = vmatprep.subr.mxu0 0.0
        %3151 = vmatpush1.msra.mxu0 0.0
        %3152 = vmatprep.subr.mxu0 0.0
        %3153 = vmatpush1.msra.mxu0 0.0
        %3154 = vmatprep.subr.mxu0 0.0
        %3155 = vmatpush1.msra.mxu0 0.0
        %3156 = vmatprep.subr.mxu0 0.0
        %3157 = vmatpush1.msra.mxu0 0.0
        %3158 = vmatprep.subr.mxu0 0.0
        %3159 = vmatpush1.msra.mxu0 0.0
        %3160 = vmatprep.subr.mxu0 0.0
        %3161 = vmatpush1.msra.mxu0 0.0
        %3162 = vmatprep.subr.mxu0 0.0
        %3163 = vmatpush1.msra.mxu0 0.0
        %3164 = vmatprep.subr.mxu0 0.0
        %3165 = vmatpush1.msra.mxu0 0.0
        %3166 = vmatprep.subr.mxu0 0.0
        %3167 = vmatpush1.msra.mxu0 0.0
        %3168 = vmatprep.subr.mxu0 0.0
        %3169 = vmatpush1.msra.mxu0 0.0
        %3170 = vmatprep.subr.mxu0 0.0
        %3171 = vmatpush1.msra.mxu0 0.0
        %3172 = vmatprep.subr.mxu0 0.0
        %3173 = vmatpush1.msra.mxu0 0.0
        %3174 = vmatprep.subr.mxu0 0.0
        %3175 = vmatpush1.msra.mxu0 0.0
        %3176 = vmatprep.subr.mxu0 0.0
        %3177 = vmatpush1.msra.mxu0 0.0
        %3178 = vmatprep.subr.mxu0 0.0
        %3179 = vmatpush1.msra.mxu0 0.0
        %3180 = vmatprep.subr.mxu0 0.0
        %3181 = vmatpush1.msra.mxu0 0.0
        %3182 = vmatprep.subr.mxu0 0.0
        %3183 = vmatpush1.msra.mxu0 0.0
        %3184 = vmatprep.subr.mxu0 0.0
        %3185 = vmatpush1.msra.mxu0 0.0
        %3186 = vmatprep.mubr.f32.mxu0 0.0
        %3187 = vmatmul.mubr.f32.gmra.mrb[0].mxu0 %v3120
        %v3188 = vpop.f32.mrb[0].mxu0
        %v3189 = vadd.f32 %v3117, %v3188
        %v3190 = vpop.f32.mrb[0].mxu0
        %3191 = vdwg.mxu0
        %v3192 = vmax.f32 %v3189, 0.0
        %v3193 = vld [vmem:[%s19] sm:$0xff]
        %v3194 = vld [vmem:[%s19 + $0x8] sm:$0xff]
        %v3195 = vld [vmem:[%s19 + $0x10] sm:$0xff]
        %v3196 = vld [vmem:[%s19 + $0x18] sm:$0xff]
        %v3197 = vld [vmem:[%s19 + $0x20] sm:$0xff]
        %v3198 = vld [vmem:[%s19 + $0x28] sm:$0xff]
        %v3199 = vld [vmem:[%s19 + $0x30] sm:$0xff]
        %v3200 = vld [vmem:[%s19 + $0x38] sm:$0xff]
        %v3201 = vld [vmem:[%s19 + $0x40] sm:$0xff]
        %v3202 = vld [vmem:[%s19 + $0x48] sm:$0xff]
        %v3203 = vld [vmem:[%s19 + $0x50] sm:$0xff]
        %v3204 = vld [vmem:[%s19 + $0x58] sm:$0xff]
        %v3205 = vld [vmem:[%s19 + $0x60] sm:$0xff]
        %v3206 = vld [vmem:[%s19 + $0x68] sm:$0xff]
        %v3207 = vld [vmem:[%s19 + $0x70] sm:$0xff]
        %v3208 = vld [vmem:[%s19 + $0x78] sm:$0xff]
        %v3209 = vld [vmem:[%s20] sm:$0x1]
        %v3211 = vlaneseq
        %v3212 = vshrl.u32 %v3211, 7
        %v3213 = vsub.s32 0, %v3212
        %v3214 = vrot.slane %v3209, %v3213
        %3216 = vmatprep.subr.mxu0 0.0
        %3217 = vmatpush1.msra.mxu0 %v3193
        %3218 = vmatprep.subr.mxu0 0.0
        %3219 = vmatpush1.msra.mxu0 %v3194
        %3220 = vmatprep.subr.mxu0 0.0
        %3221 = vmatpush1.msra.mxu0 %v3195
        %3222 = vmatprep.subr.mxu0 0.0
        %3223 = vmatpush1.msra.mxu0 %v3196
        %3224 = vmatprep.subr.mxu0 0.0
        %3225 = vmatpush1.msra.mxu0 %v3197
        %3226 = vmatprep.subr.mxu0 0.0
        %3227 = vmatpush1.msra.mxu0 %v3198
        %3228 = vmatprep.subr.mxu0 0.0
        %3229 = vmatpush1.msra.mxu0 %v3199
        %3230 = vmatprep.subr.mxu0 0.0
        %3231 = vmatpush1.msra.mxu0 %v3200
        %3232 = vmatprep.subr.mxu0 0.0
        %3233 = vmatpush1.msra.mxu0 %v3201
        %3234 = vmatprep.subr.mxu0 0.0
        %3235 = vmatpush1.msra.mxu0 %v3202
        %3236 = vmatprep.subr.mxu0 0.0
        %3237 = vmatpush1.msra.mxu0 %v3203
        %3238 = vmatprep.subr.mxu0 0.0
        %3239 = vmatpush1.msra.mxu0 %v3204
        %3240 = vmatprep.subr.mxu0 0.0
        %3241 = vmatpush1.msra.mxu0 %v3205
        %3242 = vmatprep.subr.mxu0 0.0
        %3243 = vmatpush1.msra.mxu0 %v3206
        %3244 = vmatprep.subr.mxu0 0.0
        %3245 = vmatpush1.msra.mxu0 %v3207
        %3246 = vmatprep.subr.mxu0 0.0
        %3247 = vmatpush1.msra.mxu0 %v3208
        %3248 = vmatprep.subr.mxu0 0.0
        %3249 = vmatpush1.msra.mxu0 0.0
        %3250 = vmatprep.subr.mxu0 0.0
        %3251 = vmatpush1.msra.mxu0 0.0
        %3252 = vmatprep.subr.mxu0 0.0
        %3253 = vmatpush1.msra.mxu0 0.0
        %3254 = vmatprep.subr.mxu0 0.0
        %3255 = vmatpush1.msra.mxu0 0.0
        %3256 = vmatprep.subr.mxu0 0.0
        %3257 = vmatpush1.msra.mxu0 0.0
        %3258 = vmatprep.subr.mxu0 0.0
        %3259 = vmatpush1.msra.mxu0 0.0
        %3260 = vmatprep.subr.mxu0 0.0
        %3261 = vmatpush1.msra.mxu0 0.0
        %3262 = vmatprep.subr.mxu0 0.0
        %3263 = vmatpush1.msra.mxu0 0.0
        %3264 = vmatprep.subr.mxu0 0.0
        %3265 = vmatpush1.msra.mxu0 0.0
        %3266 = vmatprep.subr.mxu0 0.0
        %3267 = vmatpush1.msra.mxu0 0.0
        %3268 = vmatprep.subr.mxu0 0.0
        %3269 = vmatpush1.msra.mxu0 0.0
        %3270 = vmatprep.subr.mxu0 0.0
        %3271 = vmatpush1.msra.mxu0 0.0
        %3272 = vmatprep.subr.mxu0 0.0
        %3273 = vmatpush1.msra.mxu0 0.0
        %3274 = vmatprep.subr.mxu0 0.0
        %3275 = vmatpush1.msra.mxu0 0.0
        %3276 = vmatprep.subr.mxu0 0.0
        %3277 = vmatpush1.msra.mxu0 0.0
        %3278 = vmatprep.subr.mxu0 0.0
        %3279 = vmatpush1.msra.mxu0 0.0
        %3280 = vmatprep.mubr.f32.mxu0 0.0
        %3281 = vmatmul.mubr.f32.gmra.mrb[0].mxu0 %v3192
        %v3282 = vpop.f32.mrb[0].mxu0
        %v3283 = vadd.f32 %v3214, %v3282
        %v3284 = vpop.f32.mrb[0].mxu0
        %3285 = vdwg.mxu0
        %v3286 = vadd.f32 %v3107, %v3283
        %v3287 = vsel %vm1118, %v3286, 0.0
        %3288 = vadd.xlane.f32.xlu0 %v3287
        %v3289 = vpop.xlane.xlu0 %3288
        %v3290 = vmul.f32 %v3289, %v3094
        %v3291 = vmul.f32 %v3286, %v3286
        %v3292 = vsel %vm1118, %v3291, 0.0
        %3293 = vadd.xlane.f32.xlu0 %v3292
        %v3294 = vpop.xlane.xlu0 %3293
        %v3295 = vmul.f32 %v3294, %v3094
        %v3296 = vmul.f32 %v3290, %v3290
        %v3297 = vsub.f32 %v3295, %v3296
        %v3298 = vmax.f32 %v3297, 0.0
        %v3299 = vsub.f32 %v3286, %v3290
        %v3300 = vadd.f32 %v3298, 1e-05
        %v3301 = vrsqrt.pop %v3300
        %v3302 = vmul.f32 %v3299, %v3301
        %v3303 = vld [vmem:[%s21] sm:$0xff]
        %v3304 = vld [vmem:[%s21 + $0x8] sm:$0xff]
        %v3305 = vld [vmem:[%s21 + $0x10] sm:$0xff]
        %v3306 = vld [vmem:[%s21 + $0x18] sm:$0xff]
        %v3307 = vld [vmem:[%s22] sm:$0x1]
        %v3309 = vlaneseq
        %v3310 = vshrl.u32 %v3309, 7
        %v3311 = vsub.s32 0, %v3310
        %v3312 = vrot.slane %v3307, %v3311
        %v3315 = vsel %vm1118, %v3302, 0
        %3317 = vmatprep.subr.mxu0 0.0
        %3318 = vmatpush1.msra.mxu0 %v3303
        %3319 = vmatprep.subr.mxu0 0.0
        %3320 = vmatpush1.msra.mxu0 %v3304
        %3321 = vmatprep.subr.mxu0 0.0
        %3322 = vmatpush1.msra.mxu0 %v3305
        %3323 = vmatprep.subr.mxu0 0.0
        %3324 = vmatpush1.msra.mxu0 %v3306
        %3325 = vmatprep.subr.mxu0 0.0
        %3326 = vmatpush1.msra.mxu0 0.0
        %3327 = vmatprep.subr.mxu0 0.0
        %3328 = vmatpush1.msra.mxu0 0.0
        %3329 = vmatprep.subr.mxu0 0.0
        %3330 = vmatpush1.msra.mxu0 0.0
        %3331 = vmatprep.subr.mxu0 0.0
        %3332 = vmatpush1.msra.mxu0 0.0
        %3333 = vmatprep.subr.mxu0 0.0
        %3334 = vmatpush1.msra.mxu0 0.0
        %3335 = vmatprep.subr.mxu0 0.0
        %3336 = vmatpush1.msra.mxu0 0.0
        %3337 = vmatprep.subr.mxu0 0.0
        %3338 = vmatpush1.msra.mxu0 0.0
        %3339 = vmatprep.subr.mxu0 0.0
        %3340 = vmatpush1.msra.mxu0 0.0
        %3341 = vmatprep.subr.mxu0 0.0
        %3342 = vmatpush1.msra.mxu0 0.0
        %3343 = vmatprep.subr.mxu0 0.0
        %3344 = vmatpush1.msra.mxu0 0.0
        %3345 = vmatprep.subr.mxu0 0.0
        %3346 = vmatpush1.msra.mxu0 0.0
        %3347 = vmatprep.subr.mxu0 0.0
        %3348 = vmatpush1.msra.mxu0 0.0
        %3349 = vmatprep.subr.mxu0 0.0
        %3350 = vmatpush1.msra.mxu0 0.0
        %3351 = vmatprep.subr.mxu0 0.0
        %3352 = vmatpush1.msra.mxu0 0.0
        %3353 = vmatprep.subr.mxu0 0.0
        %3354 = vmatpush1.msra.mxu0 0.0
        %3355 = vmatprep.subr.mxu0 0.0
        %3356 = vmatpush1.msra.mxu0 0.0
        %3357 = vmatprep.subr.mxu0 0.0
        %3358 = vmatpush1.msra.mxu0 0.0
        %3359 = vmatprep.subr.mxu0 0.0
        %3360 = vmatpush1.msra.mxu0 0.0
        %3361 = vmatprep.subr.mxu0 0.0
        %3362 = vmatpush1.msra.mxu0 0.0
        %3363 = vmatprep.subr.mxu0 0.0
        %3364 = vmatpush1.msra.mxu0 0.0
        %3365 = vmatprep.subr.mxu0 0.0
        %3366 = vmatpush1.msra.mxu0 0.0
        %3367 = vmatprep.subr.mxu0 0.0
        %3368 = vmatpush1.msra.mxu0 0.0
        %3369 = vmatprep.subr.mxu0 0.0
        %3370 = vmatpush1.msra.mxu0 0.0
        %3371 = vmatprep.subr.mxu0 0.0
        %3372 = vmatpush1.msra.mxu0 0.0
        %3373 = vmatprep.subr.mxu0 0.0
        %3374 = vmatpush1.msra.mxu0 0.0
        %3375 = vmatprep.subr.mxu0 0.0
        %3376 = vmatpush1.msra.mxu0 0.0
        %3377 = vmatprep.subr.mxu0 0.0
        %3378 = vmatpush1.msra.mxu0 0.0
        %3379 = vmatprep.subr.mxu0 0.0
        %3380 = vmatpush1.msra.mxu0 0.0
        %3381 = vmatprep.mubr.f32.mxu0 0.0
        %3382 = vmatmul.mubr.f32.gmra.mrb[0].mxu0 %v3315
        %v3383 = vpop.f32.mrb[0].mxu0
        %v3384 = vadd.f32 %v3312, %v3383
        %v3385 = vpop.f32.mrb[0].mxu0
        %3386 = vdwg.mxu0
        %v3387 = vmax.f32 %v3384, 0.0
        %v3388 = vld [vmem:[%s23] sm:$0xff]
        %v3389 = vld [vmem:[%s23 + $0x8] sm:$0xff]
        %v3390 = vld [vmem:[%s23 + $0x10] sm:$0xff]
        %v3391 = vld [vmem:[%s23 + $0x18] sm:$0xff]
        %v3392 = vld [vmem:[%s24] sm:$0x1]
        %v3394 = vlaneseq
        %v3395 = vshrl.u32 %v3394, 7
        %v3396 = vsub.s32 0, %v3395
        %v3397 = vrot.slane %v3392, %v3396
        %v3400 = vsel %vm1118, %v3387, 0
        %3402 = vmatprep.subr.mxu0 0.0
        %3403 = vmatpush1.msra.mxu0 %v3388
        %3404 = vmatprep.subr.mxu0 0.0
        %3405 = vmatpush1.msra.mxu0 %v3389
        %3406 = vmatprep.subr.mxu0 0.0
        %3407 = vmatpush1.msra.mxu0 %v3390
        %3408 = vmatprep.subr.mxu0 0.0
        %3409 = vmatpush1.msra.mxu0 %v3391
        %3410 = vmatprep.subr.mxu0 0.0
        %3411 = vmatpush1.msra.mxu0 0.0
        %3412 = vmatprep.subr.mxu0 0.0
        %3413 = vmatpush1.msra.mxu0 0.0
        %3414 = vmatprep.subr.mxu0 0.0
        %3415 = vmatpush1.msra.mxu0 0.0
        %3416 = vmatprep.subr.mxu0 0.0
        %3417 = vmatpush1.msra.mxu0 0.0
        %3418 = vmatprep.subr.mxu0 0.0
        %3419 = vmatpush1.msra.mxu0 0.0
        %3420 = vmatprep.subr.mxu0 0.0
        %3421 = vmatpush1.msra.mxu0 0.0
        %3422 = vmatprep.subr.mxu0 0.0
        %3423 = vmatpush1.msra.mxu0 0.0
        %3424 = vmatprep.subr.mxu0 0.0
        %3425 = vmatpush1.msra.mxu0 0.0
        %3426 = vmatprep.subr.mxu0 0.0
        %3427 = vmatpush1.msra.mxu0 0.0
        %3428 = vmatprep.subr.mxu0 0.0
        %3429 = vmatpush1.msra.mxu0 0.0
        %3430 = vmatprep.subr.mxu0 0.0
        %3431 = vmatpush1.msra.mxu0 0.0
        %3432 = vmatprep.subr.mxu0 0.0
        %3433 = vmatpush1.msra.mxu0 0.0
        %3434 = vmatprep.subr.mxu0 0.0
        %3435 = vmatpush1.msra.mxu0 0.0
        %3436 = vmatprep.subr.mxu0 0.0
        %3437 = vmatpush1.msra.mxu0 0.0
        %3438 = vmatprep.subr.mxu0 0.0
        %3439 = vmatpush1.msra.mxu0 0.0
        %3440 = vmatprep.subr.mxu0 0.0
        %3441 = vmatpush1.msra.mxu0 0.0
        %3442 = vmatprep.subr.mxu0 0.0
        %3443 = vmatpush1.msra.mxu0 0.0
        %3444 = vmatprep.subr.mxu0 0.0
        %3445 = vmatpush1.msra.mxu0 0.0
        %3446 = vmatprep.subr.mxu0 0.0
        %3447 = vmatpush1.msra.mxu0 0.0
        %3448 = vmatprep.subr.mxu0 0.0
        %3449 = vmatpush1.msra.mxu0 0.0
        %3450 = vmatprep.subr.mxu0 0.0
        %3451 = vmatpush1.msra.mxu0 0.0
        %3452 = vmatprep.subr.mxu0 0.0
        %3453 = vmatpush1.msra.mxu0 0.0
        %3454 = vmatprep.subr.mxu0 0.0
        %3455 = vmatpush1.msra.mxu0 0.0
        %3456 = vmatprep.subr.mxu0 0.0
        %3457 = vmatpush1.msra.mxu0 0.0
        %3458 = vmatprep.subr.mxu0 0.0
        %3459 = vmatpush1.msra.mxu0 0.0
        %3460 = vmatprep.subr.mxu0 0.0
        %3461 = vmatpush1.msra.mxu0 0.0
        %3462 = vmatprep.subr.mxu0 0.0
        %3463 = vmatpush1.msra.mxu0 0.0
        %3464 = vmatprep.subr.mxu0 0.0
        %3465 = vmatpush1.msra.mxu0 0.0
        %3466 = vmatprep.mubr.f32.mxu0 0.0
        %3467 = vmatmul.mubr.f32.gmra.mrb[0].mxu0 %v3400
        %v3468 = vpop.f32.mrb[0].mxu0
        %v3469 = vadd.f32 %v3397, %v3468
        %v3470 = vpop.f32.mrb[0].mxu0
        %3471 = vdwg.mxu0
        %v3473 = vsel %vm1118, %v3469, 0
        %v3476 = vsel %vm1118, %v1892, 0
        %v3479 = vsel %vm1118, %v1897, 0
        %v3482 = vsel %vm1118, %v1902, 0
        %v3485 = vsel %vm1118, %v1907, 0
        %v3488 = vsel %vm1118, %v1912, 0
        %v3491 = vsel %vm1118, %v1917, 0
        %v3494 = vsel %vm1118, %v1922, 0
        %v3497 = vsel %vm1118, %v1927, 0
        %v3500 = vsel %vm1118, %v1932, 0
        %v3503 = vsel %vm1118, %v1937, 0
        %v3506 = vsel %vm1118, %v1942, 0
        %v3509 = vsel %vm1118, %v1947, 0
        %v3512 = vsel %vm1118, %v1952, 0
        %v3515 = vsel %vm1118, %v1957, 0
        %v3518 = vsel %vm1118, %v1962, 0
        %v3521 = vsel %vm1118, %v1967, 0
        %v3524 = vsel %vm1118, %v1972, 0
        %v3527 = vsel %vm1118, %v1977, 0
        %v3530 = vsel %vm1118, %v1982, 0
        %v3533 = vsel %vm1118, %v1987, 0
        %v3536 = vsel %vm1118, %v1992, 0
        %v3539 = vsel %vm1118, %v1997, 0
        %v3542 = vsel %vm1118, %v2002, 0
        %v3545 = vsel %vm1118, %v2007, 0
        %v3548 = vsel %vm1118, %v2012, 0
        %v3551 = vsel %vm1118, %v2017, 0
        %v3554 = vsel %vm1118, %v2022, 0
        %v3557 = vsel %vm1118, %v2027, 0
        %v3560 = vsel %vm1118, %v2032, 0
        %v3563 = vsel %vm1118, %v2037, 0
        %v3566 = vsel %vm1118, %v2042, 0
        %v3569 = vsel %vm1118, %v2047, 0
        %3571 = vmatprep.subr.mxu0 0.0
        %3572 = vmatpush1.xpose.msra.mxu0 %v3476
        %3573 = vmatprep.subr.mxu0 0.0
        %3574 = vmatpush1.xpose.msra.mxu0 %v3479
        %3575 = vmatprep.subr.mxu0 0.0
        %3576 = vmatpush1.xpose.msra.mxu0 %v3482
        %3577 = vmatprep.subr.mxu0 0.0
        %3578 = vmatpush1.xpose.msra.mxu0 %v3485
        %3579 = vmatprep.subr.mxu0 0.0
        %3580 = vmatpush1.xpose.msra.mxu0 %v3488
        %3581 = vmatprep.subr.mxu0 0.0
        %3582 = vmatpush1.xpose.msra.mxu0 %v3491
        %3583 = vmatprep.subr.mxu0 0.0
        %3584 = vmatpush1.xpose.msra.mxu0 %v3494
        %3585 = vmatprep.subr.mxu0 0.0
        %3586 = vmatpush1.xpose.msra.mxu0 %v3497
        %3587 = vmatprep.subr.mxu0 0.0
        %3588 = vmatpush1.xpose.msra.mxu0 %v3500
        %3589 = vmatprep.subr.mxu0 0.0
        %3590 = vmatpush1.xpose.msra.mxu0 %v3503
        %3591 = vmatprep.subr.mxu0 0.0
        %3592 = vmatpush1.xpose.msra.mxu0 %v3506
        %3593 = vmatprep.subr.mxu0 0.0
        %3594 = vmatpush1.xpose.msra.mxu0 %v3509
        %3595 = vmatprep.subr.mxu0 0.0
        %3596 = vmatpush1.xpose.msra.mxu0 %v3512
        %3597 = vmatprep.subr.mxu0 0.0
        %3598 = vmatpush1.xpose.msra.mxu0 %v3515
        %3599 = vmatprep.subr.mxu0 0.0
        %3600 = vmatpush1.xpose.msra.mxu0 %v3518
        %3601 = vmatprep.subr.mxu0 0.0
        %3602 = vmatpush1.xpose.msra.mxu0 %v3521
        %3603 = vmatprep.subr.mxu0 0.0
        %3604 = vmatpush1.xpose.msra.mxu0 %v3524
        %3605 = vmatprep.subr.mxu0 0.0
        %3606 = vmatpush1.xpose.msra.mxu0 %v3527
        %3607 = vmatprep.subr.mxu0 0.0
        %3608 = vmatpush1.xpose.msra.mxu0 %v3530
        %3609 = vmatprep.subr.mxu0 0.0
        %3610 = vmatpush1.xpose.msra.mxu0 %v3533
        %3611 = vmatprep.subr.mxu0 0.0
        %3612 = vmatpush1.xpose.msra.mxu0 %v3536
        %3613 = vmatprep.subr.mxu0 0.0
        %3614 = vmatpush1.xpose.msra.mxu0 %v3539
        %3615 = vmatprep.subr.mxu0 0.0
        %3616 = vmatpush1.xpose.msra.mxu0 %v3542
        %3617 = vmatprep.subr.mxu0 0.0
        %3618 = vmatpush1.xpose.msra.mxu0 %v3545
        %3619 = vmatprep.subr.mxu0 0.0
        %3620 = vmatpush1.xpose.msra.mxu0 %v3548
        %3621 = vmatprep.subr.mxu0 0.0
        %3622 = vmatpush1.xpose.msra.mxu0 %v3551
        %3623 = vmatprep.subr.mxu0 0.0
        %3624 = vmatpush1.xpose.msra.mxu0 %v3554
        %3625 = vmatprep.subr.mxu0 0.0
        %3626 = vmatpush1.xpose.msra.mxu0 %v3557
        %3627 = vmatprep.subr.mxu0 0.0
        %3628 = vmatpush1.xpose.msra.mxu0 %v3560
        %3629 = vmatprep.subr.mxu0 0.0
        %3630 = vmatpush1.xpose.msra.mxu0 %v3563
        %3631 = vmatprep.subr.mxu0 0.0
        %3632 = vmatpush1.xpose.msra.mxu0 %v3566
        %3633 = vmatprep.subr.mxu0 0.0
        %3634 = vmatpush1.xpose.msra.mxu0 %v3569
        %3635 = vmatprep.mubr.f32.mxu0 0.0
        %3636 = vmatmul.mubr.f32.gmra.mrb[0].mxu0 %v3473
        %v3637 = vpop.f32.mrb[0].mxu0
        %v3638 = vadd.f32 0.0, %v3637
        %v3639 = vpop.f32.mrb[0].mxu0
        %v3640 = vadd.f32 0.0, %v3639
        %3641 = vdwg.mxu0
        %3642 = vst [vmem:[%s853] sm:$0xff] %v3638
        %3643 = vst [vmem:[%s853 + $0x8] sm:$0xff] %v3640
        %v3644 = vld [vmem:[%s25] sm:$0xff]
        %v3645 = vld [vmem:[%s25 + $0x8] sm:$0xff]
        %v3646 = vld [vmem:[%s25 + $0x10] sm:$0xff]
        %v3647 = vld [vmem:[%s25 + $0x18] sm:$0xff]
        %v3648 = vld [vmem:[%s26] sm:$0x1]
        %v3650 = vlaneseq
        %v3651 = vshrl.u32 %v3650, 7
        %v3652 = vsub.s32 0, %v3651
        %v3653 = vrot.slane %v3648, %v3652
        %3655 = vmatprep.subr.mxu0 0.0
        %3656 = vmatpush1.msra.mxu0 %v3644
        %3657 = vmatprep.subr.mxu0 0.0
        %3658 = vmatpush1.msra.mxu0 %v3645
        %3659 = vmatprep.subr.mxu0 0.0
        %3660 = vmatpush1.msra.mxu0 %v3646
        %3661 = vmatprep.subr.mxu0 0.0
        %3662 = vmatpush1.msra.mxu0 %v3647
        %3663 = vmatprep.subr.mxu0 0.0
        %3664 = vmatpush1.msra.mxu0 0.0
        %3665 = vmatprep.subr.mxu0 0.0
        %3666 = vmatpush1.msra.mxu0 0.0
        %3667 = vmatprep.subr.mxu0 0.0
        %3668 = vmatpush1.msra.mxu0 0.0
        %3669 = vmatprep.subr.mxu0 0.0
        %3670 = vmatpush1.msra.mxu0 0.0
        %3671 = vmatprep.subr.mxu0 0.0
        %3672 = vmatpush1.msra.mxu0 0.0
        %3673 = vmatprep.subr.mxu0 0.0
        %3674 = vmatpush1.msra.mxu0 0.0
        %3675 = vmatprep.subr.mxu0 0.0
        %3676 = vmatpush1.msra.mxu0 0.0
        %3677 = vmatprep.subr.mxu0 0.0
        %3678 = vmatpush1.msra.mxu0 0.0
        %3679 = vmatprep.subr.mxu0 0.0
        %3680 = vmatpush1.msra.mxu0 0.0
        %3681 = vmatprep.subr.mxu0 0.0
        %3682 = vmatpush1.msra.mxu0 0.0
        %3683 = vmatprep.subr.mxu0 0.0
        %3684 = vmatpush1.msra.mxu0 0.0
        %3685 = vmatprep.subr.mxu0 0.0
        %3686 = vmatpush1.msra.mxu0 0.0
        %3687 = vmatprep.subr.mxu0 0.0
        %3688 = vmatpush1.msra.mxu0 0.0
        %3689 = vmatprep.subr.mxu0 0.0
        %3690 = vmatpush1.msra.mxu0 0.0
        %3691 = vmatprep.subr.mxu0 0.0
        %3692 = vmatpush1.msra.mxu0 0.0
        %3693 = vmatprep.subr.mxu0 0.0
        %3694 = vmatpush1.msra.mxu0 0.0
        %3695 = vmatprep.subr.mxu0 0.0
        %3696 = vmatpush1.msra.mxu0 0.0
        %3697 = vmatprep.subr.mxu0 0.0
        %3698 = vmatpush1.msra.mxu0 0.0
        %3699 = vmatprep.subr.mxu0 0.0
        %3700 = vmatpush1.msra.mxu0 0.0
        %3701 = vmatprep.subr.mxu0 0.0
        %3702 = vmatpush1.msra.mxu0 0.0
        %3703 = vmatprep.subr.mxu0 0.0
        %3704 = vmatpush1.msra.mxu0 0.0
        %3705 = vmatprep.subr.mxu0 0.0
        %3706 = vmatpush1.msra.mxu0 0.0
        %3707 = vmatprep.subr.mxu0 0.0
        %3708 = vmatpush1.msra.mxu0 0.0
        %3709 = vmatprep.subr.mxu0 0.0
        %3710 = vmatpush1.msra.mxu0 0.0
        %3711 = vmatprep.subr.mxu0 0.0
        %3712 = vmatpush1.msra.mxu0 0.0
        %3713 = vmatprep.subr.mxu0 0.0
        %3714 = vmatpush1.msra.mxu0 0.0
        %3715 = vmatprep.subr.mxu0 0.0
        %3716 = vmatpush1.msra.mxu0 0.0
        %3717 = vmatprep.subr.mxu0 0.0
        %3718 = vmatpush1.msra.mxu0 0.0
        %3719 = vmatprep.mubr.f32.mxu0 0.0
        %3720 = vmatmul.mubr.f32.gmra.mrb[0].mxu0 %v3315
        %v3721 = vpop.f32.mrb[0].mxu0
        %v3722 = vadd.f32 %v3653, %v3721
        %v3723 = vpop.f32.mrb[0].mxu0
        %3724 = vdwg.mxu0
        %3725 = vst [vmem:[%s860] sm:$0xff] %v3722
        %s3726 = scalar_lea.vmem %s9, 32
        %v3727 = vld [vmem:[%s3726] sm:$0xff]
        %v3728 = vld [vmem:[%s3726 + $0x8] sm:$0xff]
        %v3729 = vld [vmem:[%s3726 + $0x10] sm:$0xff]
        %v3730 = vld [vmem:[%s3726 + $0x18] sm:$0xff]
        %s3731 = scalar_lea.vmem %s10, 1
        %v3732 = vld [vmem:[%s3731] sm:$0x1]
        %v3734 = vlaneseq
        %v3735 = vshrl.u32 %v3734, 7
        %v3736 = vsub.s32 0, %v3735
        %v3737 = vrot.slane %v3732, %v3736
        %3739 = vmatprep.subr.mxu0 0.0
        %3740 = vmatpush1.msra.mxu0 %v3727
        %3741 = vmatprep.subr.mxu0 0.0
        %3742 = vmatpush1.msra.mxu0 %v3728
        %3743 = vmatprep.subr.mxu0 0.0
        %3744 = vmatpush1.msra.mxu0 %v3729
        %3745 = vmatprep.subr.mxu0 0.0
        %3746 = vmatpush1.msra.mxu0 %v3730
        %3747 = vmatprep.subr.mxu0 0.0
        %3748 = vmatpush1.msra.mxu0 0.0
        %3749 = vmatprep.subr.mxu0 0.0
        %3750 = vmatpush1.msra.mxu0 0.0
        %3751 = vmatprep.subr.mxu0 0.0
        %3752 = vmatpush1.msra.mxu0 0.0
        %3753 = vmatprep.subr.mxu0 0.0
        %3754 = vmatpush1.msra.mxu0 0.0
        %3755 = vmatprep.subr.mxu0 0.0
        %3756 = vmatpush1.msra.mxu0 0.0
        %3757 = vmatprep.subr.mxu0 0.0
        %3758 = vmatpush1.msra.mxu0 0.0
        %3759 = vmatprep.subr.mxu0 0.0
        %3760 = vmatpush1.msra.mxu0 0.0
        %3761 = vmatprep.subr.mxu0 0.0
        %3762 = vmatpush1.msra.mxu0 0.0
        %3763 = vmatprep.subr.mxu0 0.0
        %3764 = vmatpush1.msra.mxu0 0.0
        %3765 = vmatprep.subr.mxu0 0.0
        %3766 = vmatpush1.msra.mxu0 0.0
        %3767 = vmatprep.subr.mxu0 0.0
        %3768 = vmatpush1.msra.mxu0 0.0
        %3769 = vmatprep.subr.mxu0 0.0
        %3770 = vmatpush1.msra.mxu0 0.0
        %3771 = vmatprep.subr.mxu0 0.0
        %3772 = vmatpush1.msra.mxu0 0.0
        %3773 = vmatprep.subr.mxu0 0.0
        %3774 = vmatpush1.msra.mxu0 0.0
        %3775 = vmatprep.subr.mxu0 0.0
        %3776 = vmatpush1.msra.mxu0 0.0
        %3777 = vmatprep.subr.mxu0 0.0
        %3778 = vmatpush1.msra.mxu0 0.0
        %3779 = vmatprep.subr.mxu0 0.0
        %3780 = vmatpush1.msra.mxu0 0.0
        %3781 = vmatprep.subr.mxu0 0.0
        %3782 = vmatpush1.msra.mxu0 0.0
        %3783 = vmatprep.subr.mxu0 0.0
        %3784 = vmatpush1.msra.mxu0 0.0
        %3785 = vmatprep.subr.mxu0 0.0
        %3786 = vmatpush1.msra.mxu0 0.0
        %3787 = vmatprep.subr.mxu0 0.0
        %3788 = vmatpush1.msra.mxu0 0.0
        %3789 = vmatprep.subr.mxu0 0.0
        %3790 = vmatpush1.msra.mxu0 0.0
        %3791 = vmatprep.subr.mxu0 0.0
        %3792 = vmatpush1.msra.mxu0 0.0
        %3793 = vmatprep.subr.mxu0 0.0
        %3794 = vmatpush1.msra.mxu0 0.0
        %3795 = vmatprep.subr.mxu0 0.0
        %3796 = vmatpush1.msra.mxu0 0.0
        %3797 = vmatprep.subr.mxu0 0.0
        %3798 = vmatpush1.msra.mxu0 0.0
        %3799 = vmatprep.subr.mxu0 0.0
        %3800 = vmatpush1.msra.mxu0 0.0
        %3801 = vmatprep.subr.mxu0 0.0
        %3802 = vmatpush1.msra.mxu0 0.0
        %3803 = vmatprep.mubr.f32.mxu0 0.0
        %3804 = vmatmul.mubr.f32.gmra.mrb[0].mxu0 %v3315
        %v3805 = vpop.f32.mrb[0].mxu0
        %v3806 = vadd.f32 %v3737, %v3805
        %v3807 = vpop.f32.mrb[0].mxu0
        %3808 = vdwg.mxu0
        %s3809 = scalar_lea.vmem %s11, 32
        %v3810 = vld [vmem:[%s3809] sm:$0xff]
        %v3811 = vld [vmem:[%s3809 + $0x8] sm:$0xff]
        %v3812 = vld [vmem:[%s3809 + $0x10] sm:$0xff]
        %v3813 = vld [vmem:[%s3809 + $0x18] sm:$0xff]
        %s3814 = scalar_lea.vmem %s12, 1
        %v3815 = vld [vmem:[%s3814] sm:$0x1]
        %v3817 = vlaneseq
        %v3818 = vshrl.u32 %v3817, 7
        %v3819 = vsub.s32 0, %v3818
        %v3820 = vrot.slane %v3815, %v3819
        %v3823 = vsel %vm1118, %v2088, 0
        %v3826 = vsel %vm1118, %v2089, 0
        %v3829 = vsel %vm1118, %v2090, 0
        %v3832 = vsel %vm1118, %v2091, 0
        %v3835 = vsel %vm1118, %v2092, 0
        %v3838 = vsel %vm1118, %v2093, 0
        %v3841 = vsel %vm1118, %v2094, 0
        %v3844 = vsel %vm1118, %v2095, 0
        %3846 = vmatprep.subr.mxu0 0.0
        %3847 = vmatpush1.msra.mxu0 %v3810
        %3848 = vmatprep.subr.mxu0 0.0
        %3849 = vmatpush1.msra.mxu0 %v3811
        %3850 = vmatprep.subr.mxu0 0.0
        %3851 = vmatpush1.msra.mxu0 %v3812
        %3852 = vmatprep.subr.mxu0 0.0
        %3853 = vmatpush1.msra.mxu0 %v3813
        %3854 = vmatprep.subr.mxu0 0.0
        %3855 = vmatpush1.msra.mxu0 0.0
        %3856 = vmatprep.subr.mxu0 0.0
        %3857 = vmatpush1.msra.mxu0 0.0
        %3858 = vmatprep.subr.mxu0 0.0
        %3859 = vmatpush1.msra.mxu0 0.0
        %3860 = vmatprep.subr.mxu0 0.0
        %3861 = vmatpush1.msra.mxu0 0.0
        %3862 = vmatprep.subr.mxu0 0.0
        %3863 = vmatpush1.msra.mxu0 0.0
        %3864 = vmatprep.subr.mxu0 0.0
        %3865 = vmatpush1.msra.mxu0 0.0
        %3866 = vmatprep.subr.mxu0 0.0
        %3867 = vmatpush1.msra.mxu0 0.0
        %3868 = vmatprep.subr.mxu0 0.0
        %3869 = vmatpush1.msra.mxu0 0.0
        %3870 = vmatprep.subr.mxu0 0.0
        %3871 = vmatpush1.msra.mxu0 0.0
        %3872 = vmatprep.subr.mxu0 0.0
        %3873 = vmatpush1.msra.mxu0 0.0
        %3874 = vmatprep.subr.mxu0 0.0
        %3875 = vmatpush1.msra.mxu0 0.0
        %3876 = vmatprep.subr.mxu0 0.0
        %3877 = vmatpush1.msra.mxu0 0.0
        %3878 = vmatprep.subr.mxu0 0.0
        %3879 = vmatpush1.msra.mxu0 0.0
        %3880 = vmatprep.subr.mxu0 0.0
        %3881 = vmatpush1.msra.mxu0 0.0
        %3882 = vmatprep.subr.mxu0 0.0
        %3883 = vmatpush1.msra.mxu0 0.0
        %3884 = vmatprep.subr.mxu0 0.0
        %3885 = vmatpush1.msra.mxu0 0.0
        %3886 = vmatprep.subr.mxu0 0.0
        %3887 = vmatpush1.msra.mxu0 0.0
        %3888 = vmatprep.subr.mxu0 0.0
        %3889 = vmatpush1.msra.mxu0 0.0
        %3890 = vmatprep.subr.mxu0 0.0
        %3891 = vmatpush1.msra.mxu0 0.0
        %3892 = vmatprep.subr.mxu0 0.0
        %3893 = vmatpush1.msra.mxu0 0.0
        %3894 = vmatprep.subr.mxu0 0.0
        %3895 = vmatpush1.msra.mxu0 0.0
        %3896 = vmatprep.subr.mxu0 0.0
        %3897 = vmatpush1.msra.mxu0 0.0
        %3898 = vmatprep.subr.mxu0 0.0
        %3899 = vmatpush1.msra.mxu0 0.0
        %3900 = vmatprep.subr.mxu0 0.0
        %3901 = vmatpush1.msra.mxu0 0.0
        %3902 = vmatprep.subr.mxu0 0.0
        %3903 = vmatpush1.msra.mxu0 0.0
        %3904 = vmatprep.subr.mxu0 0.0
        %3905 = vmatpush1.msra.mxu0 0.0
        %3906 = vmatprep.subr.mxu0 0.0
        %3907 = vmatpush1.msra.mxu0 0.0
        %3908 = vmatprep.subr.mxu0 0.0
        %3909 = vmatpush1.msra.mxu0 0.0
        %3910 = vmatprep.mubr.f32.mxu0 0.0
        %3911 = vmatmul.mubr.f32.gmra.mrb[0].mxu0 %v3823
        %v3912 = vpop.f32.mrb[0].mxu0
        %v3913 = vadd.f32 %v3820, %v3912
        %v3914 = vpop.f32.mrb[0].mxu0
        %3915 = vmatprep.mubr.f32.mxu0 0.0
        %3916 = vmatmul.mubr.f32.gmra.mrb[0].mxu0 %v3826
        %v3917 = vpop.f32.mrb[0].mxu0
        %v3918 = vadd.f32 %v3820, %v3917
        %v3919 = vpop.f32.mrb[0].mxu0
        %3920 = vmatprep.mubr.f32.mxu0 0.0
        %3921 = vmatmul.mubr.f32.gmra.mrb[0].mxu0 %v3829
        %v3922 = vpop.f32.mrb[0].mxu0
        %v3923 = vadd.f32 %v3820, %v3922
        %v3924 = vpop.f32.mrb[0].mxu0
        %3925 = vmatprep.mubr.f32.mxu0 0.0
        %3926 = vmatmul.mubr.f32.gmra.mrb[0].mxu0 %v3832
        %v3927 = vpop.f32.mrb[0].mxu0
        %v3928 = vadd.f32 %v3820, %v3927
        %v3929 = vpop.f32.mrb[0].mxu0
        %3930 = vmatprep.mubr.f32.mxu0 0.0
        %3931 = vmatmul.mubr.f32.gmra.mrb[0].mxu0 %v3835
        %v3932 = vpop.f32.mrb[0].mxu0
        %v3933 = vadd.f32 %v3820, %v3932
        %v3934 = vpop.f32.mrb[0].mxu0
        %3935 = vmatprep.mubr.f32.mxu0 0.0
        %3936 = vmatmul.mubr.f32.gmra.mrb[0].mxu0 %v3838
        %v3937 = vpop.f32.mrb[0].mxu0
        %v3938 = vadd.f32 %v3820, %v3937
        %v3939 = vpop.f32.mrb[0].mxu0
        %3940 = vmatprep.mubr.f32.mxu0 0.0
        %3941 = vmatmul.mubr.f32.gmra.mrb[0].mxu0 %v3841
        %v3942 = vpop.f32.mrb[0].mxu0
        %v3943 = vadd.f32 %v3820, %v3942
        %v3944 = vpop.f32.mrb[0].mxu0
        %3945 = vmatprep.mubr.f32.mxu0 0.0
        %3946 = vmatmul.mubr.f32.gmra.mrb[0].mxu0 %v3844
        %v3947 = vpop.f32.mrb[0].mxu0
        %v3948 = vadd.f32 %v3820, %v3947
        %v3949 = vpop.f32.mrb[0].mxu0
        %3950 = vdwg.mxu0
        %s3951 = scalar_lea.vmem %s13, 32
        %v3952 = vld [vmem:[%s3951] sm:$0xff]
        %v3953 = vld [vmem:[%s3951 + $0x8] sm:$0xff]
        %v3954 = vld [vmem:[%s3951 + $0x10] sm:$0xff]
        %v3955 = vld [vmem:[%s3951 + $0x18] sm:$0xff]
        %s3956 = scalar_lea.vmem %s14, 1
        %v3957 = vld [vmem:[%s3956] sm:$0x1]
        %v3959 = vlaneseq
        %v3960 = vshrl.u32 %v3959, 7
        %v3961 = vsub.s32 0, %v3960
        %v3962 = vrot.slane %v3957, %v3961
        %3964 = vmatprep.subr.mxu0 0.0
        %3965 = vmatpush1.msra.mxu0 %v3952
        %3966 = vmatprep.subr.mxu0 0.0
        %3967 = vmatpush1.msra.mxu0 %v3953
        %3968 = vmatprep.subr.mxu0 0.0
        %3969 = vmatpush1.msra.mxu0 %v3954
        %3970 = vmatprep.subr.mxu0 0.0
        %3971 = vmatpush1.msra.mxu0 %v3955
        %3972 = vmatprep.subr.mxu0 0.0
        %3973 = vmatpush1.msra.mxu0 0.0
        %3974 = vmatprep.subr.mxu0 0.0
        %3975 = vmatpush1.msra.mxu0 0.0
        %3976 = vmatprep.subr.mxu0 0.0
        %3977 = vmatpush1.msra.mxu0 0.0
        %3978 = vmatprep.subr.mxu0 0.0
        %3979 = vmatpush1.msra.mxu0 0.0
        %3980 = vmatprep.subr.mxu0 0.0
        %3981 = vmatpush1.msra.mxu0 0.0
        %3982 = vmatprep.subr.mxu0 0.0
        %3983 = vmatpush1.msra.mxu0 0.0
        %3984 = vmatprep.subr.mxu0 0.0
        %3985 = vmatpush1.msra.mxu0 0.0
        %3986 = vmatprep.subr.mxu0 0.0
        %3987 = vmatpush1.msra.mxu0 0.0
        %3988 = vmatprep.subr.mxu0 0.0
        %3989 = vmatpush1.msra.mxu0 0.0
        %3990 = vmatprep.subr.mxu0 0.0
        %3991 = vmatpush1.msra.mxu0 0.0
        %3992 = vmatprep.subr.mxu0 0.0
        %3993 = vmatpush1.msra.mxu0 0.0
        %3994 = vmatprep.subr.mxu0 0.0
        %3995 = vmatpush1.msra.mxu0 0.0
        %3996 = vmatprep.subr.mxu0 0.0
        %3997 = vmatpush1.msra.mxu0 0.0
        %3998 = vmatprep.subr.mxu0 0.0
        %3999 = vmatpush1.msra.mxu0 0.0
        %4000 = vmatprep.subr.mxu0 0.0
        %4001 = vmatpush1.msra.mxu0 0.0
        %4002 = vmatprep.subr.mxu0 0.0
        %4003 = vmatpush1.msra.mxu0 0.0
        %4004 = vmatprep.subr.mxu0 0.0
        %4005 = vmatpush1.msra.mxu0 0.0
        %4006 = vmatprep.subr.mxu0 0.0
        %4007 = vmatpush1.msra.mxu0 0.0
        %4008 = vmatprep.subr.mxu0 0.0
        %4009 = vmatpush1.msra.mxu0 0.0
        %4010 = vmatprep.subr.mxu0 0.0
        %4011 = vmatpush1.msra.mxu0 0.0
        %4012 = vmatprep.subr.mxu0 0.0
        %4013 = vmatpush1.msra.mxu0 0.0
        %4014 = vmatprep.subr.mxu0 0.0
        %4015 = vmatpush1.msra.mxu0 0.0
        %4016 = vmatprep.subr.mxu0 0.0
        %4017 = vmatpush1.msra.mxu0 0.0
        %4018 = vmatprep.subr.mxu0 0.0
        %4019 = vmatpush1.msra.mxu0 0.0
        %4020 = vmatprep.subr.mxu0 0.0
        %4021 = vmatpush1.msra.mxu0 0.0
        %4022 = vmatprep.subr.mxu0 0.0
        %4023 = vmatpush1.msra.mxu0 0.0
        %4024 = vmatprep.subr.mxu0 0.0
        %4025 = vmatpush1.msra.mxu0 0.0
        %4026 = vmatprep.subr.mxu0 0.0
        %4027 = vmatpush1.msra.mxu0 0.0
        %4028 = vmatprep.mubr.f32.mxu0 0.0
        %4029 = vmatmul.mubr.f32.gmra.mrb[0].mxu0 %v3823
        %v4030 = vpop.f32.mrb[0].mxu0
        %v4031 = vadd.f32 %v3962, %v4030
        %v4032 = vpop.f32.mrb[0].mxu0
        %4033 = vmatprep.mubr.f32.mxu0 0.0
        %4034 = vmatmul.mubr.f32.gmra.mrb[0].mxu0 %v3826
        %v4035 = vpop.f32.mrb[0].mxu0
        %v4036 = vadd.f32 %v3962, %v4035
        %v4037 = vpop.f32.mrb[0].mxu0
        %4038 = vmatprep.mubr.f32.mxu0 0.0
        %4039 = vmatmul.mubr.f32.gmra.mrb[0].mxu0 %v3829
        %v4040 = vpop.f32.mrb[0].mxu0
        %v4041 = vadd.f32 %v3962, %v4040
        %v4042 = vpop.f32.mrb[0].mxu0
        %4043 = vmatprep.mubr.f32.mxu0 0.0
        %4044 = vmatmul.mubr.f32.gmra.mrb[0].mxu0 %v3832
        %v4045 = vpop.f32.mrb[0].mxu0
        %v4046 = vadd.f32 %v3962, %v4045
        %v4047 = vpop.f32.mrb[0].mxu0
        %4048 = vmatprep.mubr.f32.mxu0 0.0
        %4049 = vmatmul.mubr.f32.gmra.mrb[0].mxu0 %v3835
        %v4050 = vpop.f32.mrb[0].mxu0
        %v4051 = vadd.f32 %v3962, %v4050
        %v4052 = vpop.f32.mrb[0].mxu0
        %4053 = vmatprep.mubr.f32.mxu0 0.0
        %4054 = vmatmul.mubr.f32.gmra.mrb[0].mxu0 %v3838
        %v4055 = vpop.f32.mrb[0].mxu0
        %v4056 = vadd.f32 %v3962, %v4055
        %v4057 = vpop.f32.mrb[0].mxu0
        %4058 = vmatprep.mubr.f32.mxu0 0.0
        %4059 = vmatmul.mubr.f32.gmra.mrb[0].mxu0 %v3841
        %v4060 = vpop.f32.mrb[0].mxu0
        %v4061 = vadd.f32 %v3962, %v4060
        %v4062 = vpop.f32.mrb[0].mxu0
        %4063 = vmatprep.mubr.f32.mxu0 0.0
        %4064 = vmatmul.mubr.f32.gmra.mrb[0].mxu0 %v3844
        %v4065 = vpop.f32.mrb[0].mxu0
        %v4066 = vadd.f32 %v3962, %v4065
        %v4067 = vpop.f32.mrb[0].mxu0
        %4068 = vdwg.mxu0
        %v4070 = vsel %vm1118, %v3806, 0
        %v4073 = vsel %vm1118, %v3913, 0
        %v4076 = vsel %vm1118, %v3918, 0
        %v4079 = vsel %vm1118, %v3923, 0
        %v4082 = vsel %vm1118, %v3928, 0
        %v4085 = vsel %vm1118, %v3933, 0
        %v4088 = vsel %vm1118, %v3938, 0
        %v4091 = vsel %vm1118, %v3943, 0
        %v4094 = vsel %vm1118, %v3948, 0
        %4096 = vmatprep.subr.mxu0 0.0
        %4097 = vmatpush1.xpose.msra.mxu0 %v4073
        %4098 = vmatprep.subr.mxu0 0.0
        %4099 = vmatpush1.xpose.msra.mxu0 %v4076
        %4100 = vmatprep.subr.mxu0 0.0
        %4101 = vmatpush1.xpose.msra.mxu0 %v4079
        %4102 = vmatprep.subr.mxu0 0.0
        %4103 = vmatpush1.xpose.msra.mxu0 %v4082
        %4104 = vmatprep.subr.mxu0 0.0
        %4105 = vmatpush1.xpose.msra.mxu0 %v4085
        %4106 = vmatprep.subr.mxu0 0.0
        %4107 = vmatpush1.xpose.msra.mxu0 %v4088
        %4108 = vmatprep.subr.mxu0 0.0
        %4109 = vmatpush1.xpose.msra.mxu0 %v4091
        %4110 = vmatprep.subr.mxu0 0.0
        %4111 = vmatpush1.xpose.msra.mxu0 %v4094
        %4112 = vmatprep.subr.mxu0 0.0
        %4113 = vmatpush1.xpose.msra.mxu0 0.0
        %4114 = vmatprep.subr.mxu0 0.0
        %4115 = vmatpush1.xpose.msra.mxu0 0.0
        %4116 = vmatprep.subr.mxu0 0.0
        %4117 = vmatpush1.xpose.msra.mxu0 0.0
        %4118 = vmatprep.subr.mxu0 0.0
        %4119 = vmatpush1.xpose.msra.mxu0 0.0
        %4120 = vmatprep.subr.mxu0 0.0
        %4121 = vmatpush1.xpose.msra.mxu0 0.0
        %4122 = vmatprep.subr.mxu0 0.0
        %4123 = vmatpush1.xpose.msra.mxu0 0.0
        %4124 = vmatprep.subr.mxu0 0.0
        %4125 = vmatpush1.xpose.msra.mxu0 0.0
        %4126 = vmatprep.subr.mxu0 0.0
        %4127 = vmatpush1.xpose.msra.mxu0 0.0
        %4128 = vmatprep.subr.mxu0 0.0
        %4129 = vmatpush1.xpose.msra.mxu0 0.0
        %4130 = vmatprep.subr.mxu0 0.0
        %4131 = vmatpush1.xpose.msra.mxu0 0.0
        %4132 = vmatprep.subr.mxu0 0.0
        %4133 = vmatpush1.xpose.msra.mxu0 0.0
        %4134 = vmatprep.subr.mxu0 0.0
        %4135 = vmatpush1.xpose.msra.mxu0 0.0
        %4136 = vmatprep.subr.mxu0 0.0
        %4137 = vmatpush1.xpose.msra.mxu0 0.0
        %4138 = vmatprep.subr.mxu0 0.0
        %4139 = vmatpush1.xpose.msra.mxu0 0.0
        %4140 = vmatprep.subr.mxu0 0.0
        %4141 = vmatpush1.xpose.msra.mxu0 0.0
        %4142 = vmatprep.subr.mxu0 0.0
        %4143 = vmatpush1.xpose.msra.mxu0 0.0
        %4144 = vmatprep.subr.mxu0 0.0
        %4145 = vmatpush1.xpose.msra.mxu0 0.0
        %4146 = vmatprep.subr.mxu0 0.0
        %4147 = vmatpush1.xpose.msra.mxu0 0.0
        %4148 = vmatprep.subr.mxu0 0.0
        %4149 = vmatpush1.xpose.msra.mxu0 0.0
        %4150 = vmatprep.subr.mxu0 0.0
        %4151 = vmatpush1.xpose.msra.mxu0 0.0
        %4152 = vmatprep.subr.mxu0 0.0
        %4153 = vmatpush1.xpose.msra.mxu0 0.0
        %4154 = vmatprep.subr.mxu0 0.0
        %4155 = vmatpush1.xpose.msra.mxu0 0.0
        %4156 = vmatprep.subr.mxu0 0.0
        %4157 = vmatpush1.xpose.msra.mxu0 0.0
        %4158 = vmatprep.subr.mxu0 0.0
        %4159 = vmatpush1.xpose.msra.mxu0 0.0
        %4160 = vmatprep.mubr.f32.mxu0 0.0
        %4161 = vmatmul.mubr.f32.gmra.mrb[0].mxu0 %v4070
        %v4162 = vpop.f32.mrb[0].mxu0
        %v4163 = vadd.f32 0.0, %v4162
        %v4164 = vpop.f32.mrb[0].mxu0
        %4165 = vdwg.mxu0
        %v4166 = vsel %vm1025, %v4163, -inf
        %4167 = vmax.xlane.f32.xlu0 %v4166
        %v4168 = vpop.xlane.xlu0 %4167
        %v4169 = vsub.f32 %v4163, %v4168
        %v4170 = vmul.f32 %v4169, 1.442695
        %v4171 = vpow.pop %v4170
        %v4172 = vsel %vm1025, %v4171, 0.0
        %4173 = vadd.xlane.f32.xlu0 %v4172
        %v4174 = vpop.xlane.xlu0 %4173
        %v4175 = vrcp.pop %v4174
        %v4176 = vmul.f32 %v4171, %v4175
        %v4178 = vsel %vm1025, %v4176, 0
        %4180 = vmatprep.subr.mxu0 0.0
        %4181 = vmatpush1.msra.mxu0 %v4031
        %4182 = vmatprep.subr.mxu0 0.0
        %4183 = vmatpush1.msra.mxu0 %v4036
        %4184 = vmatprep.subr.mxu0 0.0
        %4185 = vmatpush1.msra.mxu0 %v4041
        %4186 = vmatprep.subr.mxu0 0.0
        %4187 = vmatpush1.msra.mxu0 %v4046
        %4188 = vmatprep.subr.mxu0 0.0
        %4189 = vmatpush1.msra.mxu0 %v4051
        %4190 = vmatprep.subr.mxu0 0.0
        %4191 = vmatpush1.msra.mxu0 %v4056
        %4192 = vmatprep.subr.mxu0 0.0
        %4193 = vmatpush1.msra.mxu0 %v4061
        %4194 = vmatprep.subr.mxu0 0.0
        %4195 = vmatpush1.msra.mxu0 %v4066
        %4196 = vmatprep.subr.mxu0 0.0
        %4197 = vmatpush1.msra.mxu0 0.0
        %4198 = vmatprep.subr.mxu0 0.0
        %4199 = vmatpush1.msra.mxu0 0.0
        %4200 = vmatprep.subr.mxu0 0.0
        %4201 = vmatpush1.msra.mxu0 0.0
        %4202 = vmatprep.subr.mxu0 0.0
        %4203 = vmatpush1.msra.mxu0 0.0
        %4204 = vmatprep.subr.mxu0 0.0
        %4205 = vmatpush1.msra.mxu0 0.0
        %4206 = vmatprep.subr.mxu0 0.0
        %4207 = vmatpush1.msra.mxu0 0.0
        %4208 = vmatprep.subr.mxu0 0.0
        %4209 = vmatpush1.msra.mxu0 0.0
        %4210 = vmatprep.subr.mxu0 0.0
        %4211 = vmatpush1.msra.mxu0 0.0
        %4212 = vmatprep.subr.mxu0 0.0
        %4213 = vmatpush1.msra.mxu0 0.0
        %4214 = vmatprep.subr.mxu0 0.0
        %4215 = vmatpush1.msra.mxu0 0.0
        %4216 = vmatprep.subr.mxu0 0.0
        %4217 = vmatpush1.msra.mxu0 0.0
        %4218 = vmatprep.subr.mxu0 0.0
        %4219 = vmatpush1.msra.mxu0 0.0
        %4220 = vmatprep.subr.mxu0 0.0
        %4221 = vmatpush1.msra.mxu0 0.0
        %4222 = vmatprep.subr.mxu0 0.0
        %4223 = vmatpush1.msra.mxu0 0.0
        %4224 = vmatprep.subr.mxu0 0.0
        %4225 = vmatpush1.msra.mxu0 0.0
        %4226 = vmatprep.subr.mxu0 0.0
        %4227 = vmatpush1.msra.mxu0 0.0
        %4228 = vmatprep.subr.mxu0 0.0
        %4229 = vmatpush1.msra.mxu0 0.0
        %4230 = vmatprep.subr.mxu0 0.0
        %4231 = vmatpush1.msra.mxu0 0.0
        %4232 = vmatprep.subr.mxu0 0.0
        %4233 = vmatpush1.msra.mxu0 0.0
        %4234 = vmatprep.subr.mxu0 0.0
        %4235 = vmatpush1.msra.mxu0 0.0
        %4236 = vmatprep.subr.mxu0 0.0
        %4237 = vmatpush1.msra.mxu0 0.0
        %4238 = vmatprep.subr.mxu0 0.0
        %4239 = vmatpush1.msra.mxu0 0.0
        %4240 = vmatprep.subr.mxu0 0.0
        %4241 = vmatpush1.msra.mxu0 0.0
        %4242 = vmatprep.subr.mxu0 0.0
        %4243 = vmatpush1.msra.mxu0 0.0
        %4244 = vmatprep.mubr.f32.mxu0 0.0
        %4245 = vmatmul.mubr.f32.gmra.mrb[0].mxu0 %v4178
        %v4246 = vpop.f32.mrb[0].mxu0
        %v4247 = vadd.f32 0.0, %v4246
        %v4248 = vpop.f32.mrb[0].mxu0
        %4249 = vdwg.mxu0
        %s4250 = scalar_lea.vmem %s15, 32
        %v4251 = vld [vmem:[%s4250] sm:$0xff]
        %v4252 = vld [vmem:[%s4250 + $0x8] sm:$0xff]
        %v4253 = vld [vmem:[%s4250 + $0x10] sm:$0xff]
        %v4254 = vld [vmem:[%s4250 + $0x18] sm:$0xff]
        %s4255 = scalar_lea.vmem %s16, 1
        %v4256 = vld [vmem:[%s4255] sm:$0x1]
        %v4258 = vlaneseq
        %v4259 = vshrl.u32 %v4258, 7
        %v4260 = vsub.s32 0, %v4259
        %v4261 = vrot.slane %v4256, %v4260
        %v4264 = vsel %vm1118, %v4247, 0
        %4266 = vmatprep.subr.mxu0 0.0
        %4267 = vmatpush1.msra.mxu0 %v4251
        %4268 = vmatprep.subr.mxu0 0.0
        %4269 = vmatpush1.msra.mxu0 %v4252
        %4270 = vmatprep.subr.mxu0 0.0
        %4271 = vmatpush1.msra.mxu0 %v4253
        %4272 = vmatprep.subr.mxu0 0.0
        %4273 = vmatpush1.msra.mxu0 %v4254
        %4274 = vmatprep.subr.mxu0 0.0
        %4275 = vmatpush1.msra.mxu0 0.0
        %4276 = vmatprep.subr.mxu0 0.0
        %4277 = vmatpush1.msra.mxu0 0.0
        %4278 = vmatprep.subr.mxu0 0.0
        %4279 = vmatpush1.msra.mxu0 0.0
        %4280 = vmatprep.subr.mxu0 0.0
        %4281 = vmatpush1.msra.mxu0 0.0
        %4282 = vmatprep.subr.mxu0 0.0
        %4283 = vmatpush1.msra.mxu0 0.0
        %4284 = vmatprep.subr.mxu0 0.0
        %4285 = vmatpush1.msra.mxu0 0.0
        %4286 = vmatprep.subr.mxu0 0.0
        %4287 = vmatpush1.msra.mxu0 0.0
        %4288 = vmatprep.subr.mxu0 0.0
        %4289 = vmatpush1.msra.mxu0 0.0
        %4290 = vmatprep.subr.mxu0 0.0
        %4291 = vmatpush1.msra.mxu0 0.0
        %4292 = vmatprep.subr.mxu0 0.0
        %4293 = vmatpush1.msra.mxu0 0.0
        %4294 = vmatprep.subr.mxu0 0.0
        %4295 = vmatpush1.msra.mxu0 0.0
        %4296 = vmatprep.subr.mxu0 0.0
        %4297 = vmatpush1.msra.mxu0 0.0
        %4298 = vmatprep.subr.mxu0 0.0
        %4299 = vmatpush1.msra.mxu0 0.0
        %4300 = vmatprep.subr.mxu0 0.0
        %4301 = vmatpush1.msra.mxu0 0.0
        %4302 = vmatprep.subr.mxu0 0.0
        %4303 = vmatpush1.msra.mxu0 0.0
        %4304 = vmatprep.subr.mxu0 0.0
        %4305 = vmatpush1.msra.mxu0 0.0
        %4306 = vmatprep.subr.mxu0 0.0
        %4307 = vmatpush1.msra.mxu0 0.0
        %4308 = vmatprep.subr.mxu0 0.0
        %4309 = vmatpush1.msra.mxu0 0.0
        %4310 = vmatprep.subr.mxu0 0.0
        %4311 = vmatpush1.msra.mxu0 0.0
        %4312 = vmatprep.subr.mxu0 0.0
        %4313 = vmatpush1.msra.mxu0 0.0
        %4314 = vmatprep.subr.mxu0 0.0
        %4315 = vmatpush1.msra.mxu0 0.0
        %4316 = vmatprep.subr.mxu0 0.0
        %4317 = vmatpush1.msra.mxu0 0.0
        %4318 = vmatprep.subr.mxu0 0.0
        %4319 = vmatpush1.msra.mxu0 0.0
        %4320 = vmatprep.subr.mxu0 0.0
        %4321 = vmatpush1.msra.mxu0 0.0
        %4322 = vmatprep.subr.mxu0 0.0
        %4323 = vmatpush1.msra.mxu0 0.0
        %4324 = vmatprep.subr.mxu0 0.0
        %4325 = vmatpush1.msra.mxu0 0.0
        %4326 = vmatprep.subr.mxu0 0.0
        %4327 = vmatpush1.msra.mxu0 0.0
        %4328 = vmatprep.subr.mxu0 0.0
        %4329 = vmatpush1.msra.mxu0 0.0
        %4330 = vmatprep.mubr.f32.mxu0 0.0
        %4331 = vmatmul.mubr.f32.gmra.mrb[0].mxu0 %v4264
        %v4332 = vpop.f32.mrb[0].mxu0
        %v4333 = vadd.f32 %v4261, %v4332
        %v4334 = vpop.f32.mrb[0].mxu0
        %4335 = vdwg.mxu0
        %v4336 = vadd.f32 %v3302, %v4333
        %v4337 = vsel %vm1118, %v4336, 0.0
        %4338 = vadd.xlane.f32.xlu0 %v4337
        %v4339 = vpop.xlane.xlu0 %4338
        %v4340 = vmul.f32 %v4339, %v3094
        %v4341 = vmul.f32 %v4336, %v4336
        %v4342 = vsel %vm1118, %v4341, 0.0
        %4343 = vadd.xlane.f32.xlu0 %v4342
        %v4344 = vpop.xlane.xlu0 %4343
        %v4345 = vmul.f32 %v4344, %v3094
        %v4346 = vmul.f32 %v4340, %v4340
        %v4347 = vsub.f32 %v4345, %v4346
        %v4348 = vmax.f32 %v4347, 0.0
        %v4349 = vsub.f32 %v4336, %v4340
        %v4350 = vadd.f32 %v4348, 1e-05
        %v4351 = vrsqrt.pop %v4350
        %v4352 = vmul.f32 %v4349, %v4351
        %s4353 = scalar_lea.vmem %s17, 32
        %v4354 = vld [vmem:[%s4353] sm:$0xff]
        %v4355 = vld [vmem:[%s4353 + $0x8] sm:$0xff]
        %v4356 = vld [vmem:[%s4353 + $0x10] sm:$0xff]
        %v4357 = vld [vmem:[%s4353 + $0x18] sm:$0xff]
        %s4358 = scalar_lea.vmem %s18, 1
        %v4359 = vld [vmem:[%s4358] sm:$0x1]
        %v4361 = vlaneseq
        %v4362 = vshrl.u32 %v4361, 7
        %v4363 = vsub.s32 0, %v4362
        %v4364 = vrot.slane %v4359, %v4363
        %v4367 = vsel %vm1118, %v4352, 0
        %4369 = vmatprep.subr.mxu0 0.0
        %4370 = vmatpush1.msra.mxu0 %v4354
        %4371 = vmatprep.subr.mxu0 0.0
        %4372 = vmatpush1.msra.mxu0 %v4355
        %4373 = vmatprep.subr.mxu0 0.0
        %4374 = vmatpush1.msra.mxu0 %v4356
        %4375 = vmatprep.subr.mxu0 0.0
        %4376 = vmatpush1.msra.mxu0 %v4357
        %4377 = vmatprep.subr.mxu0 0.0
        %4378 = vmatpush1.msra.mxu0 0.0
        %4379 = vmatprep.subr.mxu0 0.0
        %4380 = vmatpush1.msra.mxu0 0.0
        %4381 = vmatprep.subr.mxu0 0.0
        %4382 = vmatpush1.msra.mxu0 0.0
        %4383 = vmatprep.subr.mxu0 0.0
        %4384 = vmatpush1.msra.mxu0 0.0
        %4385 = vmatprep.subr.mxu0 0.0
        %4386 = vmatpush1.msra.mxu0 0.0
        %4387 = vmatprep.subr.mxu0 0.0
        %4388 = vmatpush1.msra.mxu0 0.0
        %4389 = vmatprep.subr.mxu0 0.0
        %4390 = vmatpush1.msra.mxu0 0.0
        %4391 = vmatprep.subr.mxu0 0.0
        %4392 = vmatpush1.msra.mxu0 0.0
        %4393 = vmatprep.subr.mxu0 0.0
        %4394 = vmatpush1.msra.mxu0 0.0
        %4395 = vmatprep.subr.mxu0 0.0
        %4396 = vmatpush1.msra.mxu0 0.0
        %4397 = vmatprep.subr.mxu0 0.0
        %4398 = vmatpush1.msra.mxu0 0.0
        %4399 = vmatprep.subr.mxu0 0.0
        %4400 = vmatpush1.msra.mxu0 0.0
        %4401 = vmatprep.subr.mxu0 0.0
        %4402 = vmatpush1.msra.mxu0 0.0
        %4403 = vmatprep.subr.mxu0 0.0
        %4404 = vmatpush1.msra.mxu0 0.0
        %4405 = vmatprep.subr.mxu0 0.0
        %4406 = vmatpush1.msra.mxu0 0.0
        %4407 = vmatprep.subr.mxu0 0.0
        %4408 = vmatpush1.msra.mxu0 0.0
        %4409 = vmatprep.subr.mxu0 0.0
        %4410 = vmatpush1.msra.mxu0 0.0
        %4411 = vmatprep.subr.mxu0 0.0
        %4412 = vmatpush1.msra.mxu0 0.0
        %4413 = vmatprep.subr.mxu0 0.0
        %4414 = vmatpush1.msra.mxu0 0.0
        %4415 = vmatprep.subr.mxu0 0.0
        %4416 = vmatpush1.msra.mxu0 0.0
        %4417 = vmatprep.subr.mxu0 0.0
        %4418 = vmatpush1.msra.mxu0 0.0
        %4419 = vmatprep.subr.mxu0 0.0
        %4420 = vmatpush1.msra.mxu0 0.0
        %4421 = vmatprep.subr.mxu0 0.0
        %4422 = vmatpush1.msra.mxu0 0.0
        %4423 = vmatprep.subr.mxu0 0.0
        %4424 = vmatpush1.msra.mxu0 0.0
        %4425 = vmatprep.subr.mxu0 0.0
        %4426 = vmatpush1.msra.mxu0 0.0
        %4427 = vmatprep.subr.mxu0 0.0
        %4428 = vmatpush1.msra.mxu0 0.0
        %4429 = vmatprep.subr.mxu0 0.0
        %4430 = vmatpush1.msra.mxu0 0.0
        %4431 = vmatprep.subr.mxu0 0.0
        %4432 = vmatpush1.msra.mxu0 0.0
        %4433 = vmatprep.mubr.f32.mxu0 0.0
        %4434 = vmatmul.mubr.f32.gmra.mrb[0].mxu0 %v4367
        %v4435 = vpop.f32.mrb[0].mxu0
        %v4436 = vadd.f32 %v4364, %v4435
        %v4437 = vpop.f32.mrb[0].mxu0
        %4438 = vdwg.mxu0
        %v4439 = vmax.f32 %v4436, 0.0
        %s4440 = scalar_lea.vmem %s19, 128
        %v4441 = vld [vmem:[%s4440] sm:$0xff]
        %v4442 = vld [vmem:[%s4440 + $0x8] sm:$0xff]
        %v4443 = vld [vmem:[%s4440 + $0x10] sm:$0xff]
        %v4444 = vld [vmem:[%s4440 + $0x18] sm:$0xff]
        %v4445 = vld [vmem:[%s4440 + $0x20] sm:$0xff]
        %v4446 = vld [vmem:[%s4440 + $0x28] sm:$0xff]
        %v4447 = vld [vmem:[%s4440 + $0x30] sm:$0xff]
        %v4448 = vld [vmem:[%s4440 + $0x38] sm:$0xff]
        %v4449 = vld [vmem:[%s4440 + $0x40] sm:$0xff]
        %v4450 = vld [vmem:[%s4440 + $0x48] sm:$0xff]
        %v4451 = vld [vmem:[%s4440 + $0x50] sm:$0xff]
        %v4452 = vld [vmem:[%s4440 + $0x58] sm:$0xff]
        %v4453 = vld [vmem:[%s4440 + $0x60] sm:$0xff]
        %v4454 = vld [vmem:[%s4440 + $0x68] sm:$0xff]
        %v4455 = vld [vmem:[%s4440 + $0x70] sm:$0xff]
        %v4456 = vld [vmem:[%s4440 + $0x78] sm:$0xff]
        %s4457 = scalar_lea.vmem %s20, 1
        %v4458 = vld [vmem:[%s4457] sm:$0x1]
        %v4460 = vlaneseq
        %v4461 = vshrl.u32 %v4460, 7
        %v4462 = vsub.s32 0, %v4461
        %v4463 = vrot.slane %v4458, %v4462
        %4465 = vmatprep.subr.mxu0 0.0
        %4466 = vmatpush1.msra.mxu0 %v4441
        %4467 = vmatprep.subr.mxu0 0.0
        %4468 = vmatpush1.msra.mxu0 %v4442
        %4469 = vmatprep.subr.mxu0 0.0
        %4470 = vmatpush1.msra.mxu0 %v4443
        %4471 = vmatprep.subr.mxu0 0.0
        %4472 = vmatpush1.msra.mxu0 %v4444
        %4473 = vmatprep.subr.mxu0 0.0
        %4474 = vmatpush1.msra.mxu0 %v4445
        %4475 = vmatprep.subr.mxu0 0.0
        %4476 = vmatpush1.msra.mxu0 %v4446
        %4477 = vmatprep.subr.mxu0 0.0
        %4478 = vmatpush1.msra.mxu0 %v4447
        %4479 = vmatprep.subr.mxu0 0.0
        %4480 = vmatpush1.msra.mxu0 %v4448
        %4481 = vmatprep.subr.mxu0 0.0
        %4482 = vmatpush1.msra.mxu0 %v4449
        %4483 = vmatprep.subr.mxu0 0.0
        %4484 = vmatpush1.msra.mxu0 %v4450
        %4485 = vmatprep.subr.mxu0 0.0
        %4486 = vmatpush1.msra.mxu0 %v4451
        %4487 = vmatprep.subr.mxu0 0.0
        %4488 = vmatpush1.msra.mxu0 %v4452
        %4489 = vmatprep.subr.mxu0 0.0
        %4490 = vmatpush1.msra.mxu0 %v4453
        %4491 = vmatprep.subr.mxu0 0.0
        %4492 = vmatpush1.msra.mxu0 %v4454
        %4493 = vmatprep.subr.mxu0 0.0
        %4494 = vmatpush1.msra.mxu0 %v4455
        %4495 = vmatprep.subr.mxu0 0.0
        %4496 = vmatpush1.msra.mxu0 %v4456
        %4497 = vmatprep.subr.mxu0 0.0
        %4498 = vmatpush1.msra.mxu0 0.0
        %4499 = vmatprep.subr.mxu0 0.0
        %4500 = vmatpush1.msra.mxu0 0.0
        %4501 = vmatprep.subr.mxu0 0.0
        %4502 = vmatpush1.msra.mxu0 0.0
        %4503 = vmatprep.subr.mxu0 0.0
        %4504 = vmatpush1.msra.mxu0 0.0
        %4505 = vmatprep.subr.mxu0 0.0
        %4506 = vmatpush1.msra.mxu0 0.0
        %4507 = vmatprep.subr.mxu0 0.0
        %4508 = vmatpush1.msra.mxu0 0.0
        %4509 = vmatprep.subr.mxu0 0.0
        %4510 = vmatpush1.msra.mxu0 0.0
        %4511 = vmatprep.subr.mxu0 0.0
        %4512 = vmatpush1.msra.mxu0 0.0
        %4513 = vmatprep.subr.mxu0 0.0
        %4514 = vmatpush1.msra.mxu0 0.0
        %4515 = vmatprep.subr.mxu0 0.0
        %4516 = vmatpush1.msra.mxu0 0.0
        %4517 = vmatprep.subr.mxu0 0.0
        %4518 = vmatpush1.msra.mxu0 0.0
        %4519 = vmatprep.subr.mxu0 0.0
        %4520 = vmatpush1.msra.mxu0 0.0
        %4521 = vmatprep.subr.mxu0 0.0
        %4522 = vmatpush1.msra.mxu0 0.0
        %4523 = vmatprep.subr.mxu0 0.0
        %4524 = vmatpush1.msra.mxu0 0.0
        %4525 = vmatprep.subr.mxu0 0.0
        %4526 = vmatpush1.msra.mxu0 0.0
        %4527 = vmatprep.subr.mxu0 0.0
        %4528 = vmatpush1.msra.mxu0 0.0
        %4529 = vmatprep.mubr.f32.mxu0 0.0
        %4530 = vmatmul.mubr.f32.gmra.mrb[0].mxu0 %v4439
        %v4531 = vpop.f32.mrb[0].mxu0
        %v4532 = vadd.f32 %v4463, %v4531
        %v4533 = vpop.f32.mrb[0].mxu0
        %4534 = vdwg.mxu0
        %v4535 = vadd.f32 %v4352, %v4532
        %v4536 = vsel %vm1118, %v4535, 0.0
        %4537 = vadd.xlane.f32.xlu0 %v4536
        %v4538 = vpop.xlane.xlu0 %4537
        %v4539 = vmul.f32 %v4538, %v3094
        %v4540 = vmul.f32 %v4535, %v4535
        %v4541 = vsel %vm1118, %v4540, 0.0
        %4542 = vadd.xlane.f32.xlu0 %v4541
        %v4543 = vpop.xlane.xlu0 %4542
        %v4544 = vmul.f32 %v4543, %v3094
        %v4545 = vmul.f32 %v4539, %v4539
        %v4546 = vsub.f32 %v4544, %v4545
        %v4547 = vmax.f32 %v4546, 0.0
        %v4548 = vsub.f32 %v4535, %v4539
        %v4549 = vadd.f32 %v4547, 1e-05
        %v4550 = vrsqrt.pop %v4549
        %v4551 = vmul.f32 %v4548, %v4550
        %v4552 = vld [vmem:[%s21] sm:$0xff]
        %v4553 = vld [vmem:[%s21 + $0x8] sm:$0xff]
        %v4554 = vld [vmem:[%s21 + $0x10] sm:$0xff]
        %v4555 = vld [vmem:[%s21 + $0x18] sm:$0xff]
        %v4556 = vld [vmem:[%s22] sm:$0x1]
        %v4558 = vlaneseq
        %v4559 = vshrl.u32 %v4558, 7
        %v4560 = vsub.s32 0, %v4559
        %v4561 = vrot.slane %v4556, %v4560
        %v4564 = vsel %vm1118, %v4551, 0
        %4566 = vmatprep.subr.mxu0 0.0
        %4567 = vmatpush1.msra.mxu0 %v4552
        %4568 = vmatprep.subr.mxu0 0.0
        %4569 = vmatpush1.msra.mxu0 %v4553
        %4570 = vmatprep.subr.mxu0 0.0
        %4571 = vmatpush1.msra.mxu0 %v4554
        %4572 = vmatprep.subr.mxu0 0.0
        %4573 = vmatpush1.msra.mxu0 %v4555
        %4574 = vmatprep.subr.mxu0 0.0
        %4575 = vmatpush1.msra.mxu0 0.0
        %4576 = vmatprep.subr.mxu0 0.0
        %4577 = vmatpush1.msra.mxu0 0.0
        %4578 = vmatprep.subr.mxu0 0.0
        %4579 = vmatpush1.msra.mxu0 0.0
        %4580 = vmatprep.subr.mxu0 0.0
        %4581 = vmatpush1.msra.mxu0 0.0
        %4582 = vmatprep.subr.mxu0 0.0
        %4583 = vmatpush1.msra.mxu0 0.0
        %4584 = vmatprep.subr.mxu0 0.0
        %4585 = vmatpush1.msra.mxu0 0.0
        %4586 = vmatprep.subr.mxu0 0.0
        %4587 = vmatpush1.msra.mxu0 0.0
        %4588 = vmatprep.subr.mxu0 0.0
        %4589 = vmatpush1.msra.mxu0 0.0
        %4590 = vmatprep.subr.mxu0 0.0
        %4591 = vmatpush1.msra.mxu0 0.0
        %4592 = vmatprep.subr.mxu0 0.0
        %4593 = vmatpush1.msra.mxu0 0.0
        %4594 = vmatprep.subr.mxu0 0.0
        %4595 = vmatpush1.msra.mxu0 0.0
        %4596 = vmatprep.subr.mxu0 0.0
        %4597 = vmatpush1.msra.mxu0 0.0
        %4598 = vmatprep.subr.mxu0 0.0
        %4599 = vmatpush1.msra.mxu0 0.0
        %4600 = vmatprep.subr.mxu0 0.0
        %4601 = vmatpush1.msra.mxu0 0.0
        %4602 = vmatprep.subr.mxu0 0.0
        %4603 = vmatpush1.msra.mxu0 0.0
        %4604 = vmatprep.subr.mxu0 0.0
        %4605 = vmatpush1.msra.mxu0 0.0
        %4606 = vmatprep.subr.mxu0 0.0
        %4607 = vmatpush1.msra.mxu0 0.0
        %4608 = vmatprep.subr.mxu0 0.0
        %4609 = vmatpush1.msra.mxu0 0.0
        %4610 = vmatprep.subr.mxu0 0.0
        %4611 = vmatpush1.msra.mxu0 0.0
        %4612 = vmatprep.subr.mxu0 0.0
        %4613 = vmatpush1.msra.mxu0 0.0
        %4614 = vmatprep.subr.mxu0 0.0
        %4615 = vmatpush1.msra.mxu0 0.0
        %4616 = vmatprep.subr.mxu0 0.0
        %4617 = vmatpush1.msra.mxu0 0.0
        %4618 = vmatprep.subr.mxu0 0.0
        %4619 = vmatpush1.msra.mxu0 0.0
        %4620 = vmatprep.subr.mxu0 0.0
        %4621 = vmatpush1.msra.mxu0 0.0
        %4622 = vmatprep.subr.mxu0 0.0
        %4623 = vmatpush1.msra.mxu0 0.0
        %4624 = vmatprep.subr.mxu0 0.0
        %4625 = vmatpush1.msra.mxu0 0.0
        %4626 = vmatprep.subr.mxu0 0.0
        %4627 = vmatpush1.msra.mxu0 0.0
        %4628 = vmatprep.subr.mxu0 0.0
        %4629 = vmatpush1.msra.mxu0 0.0
        %4630 = vmatprep.mubr.f32.mxu0 0.0
        %4631 = vmatmul.mubr.f32.gmra.mrb[0].mxu0 %v4564
        %v4632 = vpop.f32.mrb[0].mxu0
        %v4633 = vadd.f32 %v4561, %v4632
        %v4634 = vpop.f32.mrb[0].mxu0
        %4635 = vdwg.mxu0
        %v4636 = vmax.f32 %v4633, 0.0
        %v4637 = vld [vmem:[%s23] sm:$0xff]
        %v4638 = vld [vmem:[%s23 + $0x8] sm:$0xff]
        %v4639 = vld [vmem:[%s23 + $0x10] sm:$0xff]
        %v4640 = vld [vmem:[%s23 + $0x18] sm:$0xff]
        %v4641 = vld [vmem:[%s24] sm:$0x1]
        %v4643 = vlaneseq
        %v4644 = vshrl.u32 %v4643, 7
        %v4645 = vsub.s32 0, %v4644
        %v4646 = vrot.slane %v4641, %v4645
        %v4649 = vsel %vm1118, %v4636, 0
        %4651 = vmatprep.subr.mxu0 0.0
        %4652 = vmatpush1.msra.mxu0 %v4637
        %4653 = vmatprep.subr.mxu0 0.0
        %4654 = vmatpush1.msra.mxu0 %v4638
        %4655 = vmatprep.subr.mxu0 0.0
        %4656 = vmatpush1.msra.mxu0 %v4639
        %4657 = vmatprep.subr.mxu0 0.0
        %4658 = vmatpush1.msra.mxu0 %v4640
        %4659 = vmatprep.subr.mxu0 0.0
        %4660 = vmatpush1.msra.mxu0 0.0
        %4661 = vmatprep.subr.mxu0 0.0
        %4662 = vmatpush1.msra.mxu0 0.0
        %4663 = vmatprep.subr.mxu0 0.0
        %4664 = vmatpush1.msra.mxu0 0.0
        %4665 = vmatprep.subr.mxu0 0.0
        %4666 = vmatpush1.msra.mxu0 0.0
        %4667 = vmatprep.subr.mxu0 0.0
        %4668 = vmatpush1.msra.mxu0 0.0
        %4669 = vmatprep.subr.mxu0 0.0
        %4670 = vmatpush1.msra.mxu0 0.0
        %4671 = vmatprep.subr.mxu0 0.0
        %4672 = vmatpush1.msra.mxu0 0.0
        %4673 = vmatprep.subr.mxu0 0.0
        %4674 = vmatpush1.msra.mxu0 0.0
        %4675 = vmatprep.subr.mxu0 0.0
        %4676 = vmatpush1.msra.mxu0 0.0
        %4677 = vmatprep.subr.mxu0 0.0
        %4678 = vmatpush1.msra.mxu0 0.0
        %4679 = vmatprep.subr.mxu0 0.0
        %4680 = vmatpush1.msra.mxu0 0.0
        %4681 = vmatprep.subr.mxu0 0.0
        %4682 = vmatpush1.msra.mxu0 0.0
        %4683 = vmatprep.subr.mxu0 0.0
        %4684 = vmatpush1.msra.mxu0 0.0
        %4685 = vmatprep.subr.mxu0 0.0
        %4686 = vmatpush1.msra.mxu0 0.0
        %4687 = vmatprep.subr.mxu0 0.0
        %4688 = vmatpush1.msra.mxu0 0.0
        %4689 = vmatprep.subr.mxu0 0.0
        %4690 = vmatpush1.msra.mxu0 0.0
        %4691 = vmatprep.subr.mxu0 0.0
        %4692 = vmatpush1.msra.mxu0 0.0
        %4693 = vmatprep.subr.mxu0 0.0
        %4694 = vmatpush1.msra.mxu0 0.0
        %4695 = vmatprep.subr.mxu0 0.0
        %4696 = vmatpush1.msra.mxu0 0.0
        %4697 = vmatprep.subr.mxu0 0.0
        %4698 = vmatpush1.msra.mxu0 0.0
        %4699 = vmatprep.subr.mxu0 0.0
        %4700 = vmatpush1.msra.mxu0 0.0
        %4701 = vmatprep.subr.mxu0 0.0
        %4702 = vmatpush1.msra.mxu0 0.0
        %4703 = vmatprep.subr.mxu0 0.0
        %4704 = vmatpush1.msra.mxu0 0.0
        %4705 = vmatprep.subr.mxu0 0.0
        %4706 = vmatpush1.msra.mxu0 0.0
        %4707 = vmatprep.subr.mxu0 0.0
        %4708 = vmatpush1.msra.mxu0 0.0
        %4709 = vmatprep.subr.mxu0 0.0
        %4710 = vmatpush1.msra.mxu0 0.0
        %4711 = vmatprep.subr.mxu0 0.0
        %4712 = vmatpush1.msra.mxu0 0.0
        %4713 = vmatprep.subr.mxu0 0.0
        %4714 = vmatpush1.msra.mxu0 0.0
        %4715 = vmatprep.mubr.f32.mxu0 0.0
        %4716 = vmatmul.mubr.f32.gmra.mrb[0].mxu0 %v4649
        %v4717 = vpop.f32.mrb[0].mxu0
        %v4718 = vadd.f32 %v4646, %v4717
        %v4719 = vpop.f32.mrb[0].mxu0
        %4720 = vdwg.mxu0
        %v4722 = vsel %vm1118, %v4718, 0
        %4724 = vmatprep.subr.mxu0 0.0
        %4725 = vmatpush1.xpose.msra.mxu0 %v3476
        %4726 = vmatprep.subr.mxu0 0.0
        %4727 = vmatpush1.xpose.msra.mxu0 %v3479
        %4728 = vmatprep.subr.mxu0 0.0
        %4729 = vmatpush1.xpose.msra.mxu0 %v3482
        %4730 = vmatprep.subr.mxu0 0.0
        %4731 = vmatpush1.xpose.msra.mxu0 %v3485
        %4732 = vmatprep.subr.mxu0 0.0
        %4733 = vmatpush1.xpose.msra.mxu0 %v3488
        %4734 = vmatprep.subr.mxu0 0.0
        %4735 = vmatpush1.xpose.msra.mxu0 %v3491
        %4736 = vmatprep.subr.mxu0 0.0
        %4737 = vmatpush1.xpose.msra.mxu0 %v3494
        %4738 = vmatprep.subr.mxu0 0.0
        %4739 = vmatpush1.xpose.msra.mxu0 %v3497
        %4740 = vmatprep.subr.mxu0 0.0
        %4741 = vmatpush1.xpose.msra.mxu0 %v3500
        %4742 = vmatprep.subr.mxu0 0.0
        %4743 = vmatpush1.xpose.msra.mxu0 %v3503
        %4744 = vmatprep.subr.mxu0 0.0
        %4745 = vmatpush1.xpose.msra.mxu0 %v3506
        %4746 = vmatprep.subr.mxu0 0.0
        %4747 = vmatpush1.xpose.msra.mxu0 %v3509
        %4748 = vmatprep.subr.mxu0 0.0
        %4749 = vmatpush1.xpose.msra.mxu0 %v3512
        %4750 = vmatprep.subr.mxu0 0.0
        %4751 = vmatpush1.xpose.msra.mxu0 %v3515
        %4752 = vmatprep.subr.mxu0 0.0
        %4753 = vmatpush1.xpose.msra.mxu0 %v3518
        %4754 = vmatprep.subr.mxu0 0.0
        %4755 = vmatpush1.xpose.msra.mxu0 %v3521
        %4756 = vmatprep.subr.mxu0 0.0
        %4757 = vmatpush1.xpose.msra.mxu0 %v3524
        %4758 = vmatprep.subr.mxu0 0.0
        %4759 = vmatpush1.xpose.msra.mxu0 %v3527
        %4760 = vmatprep.subr.mxu0 0.0
        %4761 = vmatpush1.xpose.msra.mxu0 %v3530
        %4762 = vmatprep.subr.mxu0 0.0
        %4763 = vmatpush1.xpose.msra.mxu0 %v3533
        %4764 = vmatprep.subr.mxu0 0.0
        %4765 = vmatpush1.xpose.msra.mxu0 %v3536
        %4766 = vmatprep.subr.mxu0 0.0
        %4767 = vmatpush1.xpose.msra.mxu0 %v3539
        %4768 = vmatprep.subr.mxu0 0.0
        %4769 = vmatpush1.xpose.msra.mxu0 %v3542
        %4770 = vmatprep.subr.mxu0 0.0
        %4771 = vmatpush1.xpose.msra.mxu0 %v3545
        %4772 = vmatprep.subr.mxu0 0.0
        %4773 = vmatpush1.xpose.msra.mxu0 %v3548
        %4774 = vmatprep.subr.mxu0 0.0
        %4775 = vmatpush1.xpose.msra.mxu0 %v3551
        %4776 = vmatprep.subr.mxu0 0.0
        %4777 = vmatpush1.xpose.msra.mxu0 %v3554
        %4778 = vmatprep.subr.mxu0 0.0
        %4779 = vmatpush1.xpose.msra.mxu0 %v3557
        %4780 = vmatprep.subr.mxu0 0.0
        %4781 = vmatpush1.xpose.msra.mxu0 %v3560
        %4782 = vmatprep.subr.mxu0 0.0
        %4783 = vmatpush1.xpose.msra.mxu0 %v3563
        %4784 = vmatprep.subr.mxu0 0.0
        %4785 = vmatpush1.xpose.msra.mxu0 %v3566
        %4786 = vmatprep.subr.mxu0 0.0
        %4787 = vmatpush1.xpose.msra.mxu0 %v3569
        %4788 = vmatprep.mubr.f32.mxu0 0.0
        %4789 = vmatmul.mubr.f32.gmra.mrb[0].mxu0 %v4722
        %v4790 = vpop.f32.mrb[0].mxu0
        %v4791 = vadd.f32 0.0, %v4790
        %v4792 = vpop.f32.mrb[0].mxu0
        %v4793 = vadd.f32 0.0, %v4792
        %4794 = vdwg.mxu0
        %s4795 = scalar_lea.vmem %s853, 16 [#allocation2]
        %4796 = vst [vmem:[%s4795] sm:$0xff] %v4791
        %4797 = vst [vmem:[%s4795 + $0x8] sm:$0xff] %v4793
        %v4798 = vld [vmem:[%s25] sm:$0xff]
        %v4799 = vld [vmem:[%s25 + $0x8] sm:$0xff]
        %v4800 = vld [vmem:[%s25 + $0x10] sm:$0xff]
        %v4801 = vld [vmem:[%s25 + $0x18] sm:$0xff]
        %v4802 = vld [vmem:[%s26] sm:$0x1]
        %v4804 = vlaneseq
        %v4805 = vshrl.u32 %v4804, 7
        %v4806 = vsub.s32 0, %v4805
        %v4807 = vrot.slane %v4802, %v4806
        %4809 = vmatprep.subr.mxu0 0.0
        %4810 = vmatpush1.msra.mxu0 %v4798
        %4811 = vmatprep.subr.mxu0 0.0
        %4812 = vmatpush1.msra.mxu0 %v4799
        %4813 = vmatprep.subr.mxu0 0.0
        %4814 = vmatpush1.msra.mxu0 %v4800
        %4815 = vmatprep.subr.mxu0 0.0
        %4816 = vmatpush1.msra.mxu0 %v4801
        %4817 = vmatprep.subr.mxu0 0.0
        %4818 = vmatpush1.msra.mxu0 0.0
        %4819 = vmatprep.subr.mxu0 0.0
        %4820 = vmatpush1.msra.mxu0 0.0
        %4821 = vmatprep.subr.mxu0 0.0
        %4822 = vmatpush1.msra.mxu0 0.0
        %4823 = vmatprep.subr.mxu0 0.0
        %4824 = vmatpush1.msra.mxu0 0.0
        %4825 = vmatprep.subr.mxu0 0.0
        %4826 = vmatpush1.msra.mxu0 0.0
        %4827 = vmatprep.subr.mxu0 0.0
        %4828 = vmatpush1.msra.mxu0 0.0
        %4829 = vmatprep.subr.mxu0 0.0
        %4830 = vmatpush1.msra.mxu0 0.0
        %4831 = vmatprep.subr.mxu0 0.0
        %4832 = vmatpush1.msra.mxu0 0.0
        %4833 = vmatprep.subr.mxu0 0.0
        %4834 = vmatpush1.msra.mxu0 0.0
        %4835 = vmatprep.subr.mxu0 0.0
        %4836 = vmatpush1.msra.mxu0 0.0
        %4837 = vmatprep.subr.mxu0 0.0
        %4838 = vmatpush1.msra.mxu0 0.0
        %4839 = vmatprep.subr.mxu0 0.0
        %4840 = vmatpush1.msra.mxu0 0.0
        %4841 = vmatprep.subr.mxu0 0.0
        %4842 = vmatpush1.msra.mxu0 0.0
        %4843 = vmatprep.subr.mxu0 0.0
        %4844 = vmatpush1.msra.mxu0 0.0
        %4845 = vmatprep.subr.mxu0 0.0
        %4846 = vmatpush1.msra.mxu0 0.0
        %4847 = vmatprep.subr.mxu0 0.0
        %4848 = vmatpush1.msra.mxu0 0.0
        %4849 = vmatprep.subr.mxu0 0.0
        %4850 = vmatpush1.msra.mxu0 0.0
        %4851 = vmatprep.subr.mxu0 0.0
        %4852 = vmatpush1.msra.mxu0 0.0
        %4853 = vmatprep.subr.mxu0 0.0
        %4854 = vmatpush1.msra.mxu0 0.0
        %4855 = vmatprep.subr.mxu0 0.0
        %4856 = vmatpush1.msra.mxu0 0.0
        %4857 = vmatprep.subr.mxu0 0.0
        %4858 = vmatpush1.msra.mxu0 0.0
        %4859 = vmatprep.subr.mxu0 0.0
        %4860 = vmatpush1.msra.mxu0 0.0
        %4861 = vmatprep.subr.mxu0 0.0
        %4862 = vmatpush1.msra.mxu0 0.0
        %4863 = vmatprep.subr.mxu0 0.0
        %4864 = vmatpush1.msra.mxu0 0.0
        %4865 = vmatprep.subr.mxu0 0.0
        %4866 = vmatpush1.msra.mxu0 0.0
        %4867 = vmatprep.subr.mxu0 0.0
        %4868 = vmatpush1.msra.mxu0 0.0
        %4869 = vmatprep.subr.mxu0 0.0
        %4870 = vmatpush1.msra.mxu0 0.0
        %4871 = vmatprep.subr.mxu0 0.0
        %4872 = vmatpush1.msra.mxu0 0.0
        %4873 = vmatprep.mubr.f32.mxu0 0.0
        %4874 = vmatmul.mubr.f32.gmra.mrb[0].mxu0 %v4564
        %v4875 = vpop.f32.mrb[0].mxu0
        %v4876 = vadd.f32 %v4807, %v4875
        %v4877 = vpop.f32.mrb[0].mxu0
        %4878 = vdwg.mxu0
        %s4879 = scalar_lea.vmem %s860, 8 [#allocation4]
        %4880 = vst [vmem:[%s4879] sm:$0xff] %v4876
        %s4881 = scalar_lea.vmem %s9, 64
        %v4882 = vld [vmem:[%s4881] sm:$0xff]
        %v4883 = vld [vmem:[%s4881 + $0x8] sm:$0xff]
        %v4884 = vld [vmem:[%s4881 + $0x10] sm:$0xff]
        %v4885 = vld [vmem:[%s4881 + $0x18] sm:$0xff]
        %s4886 = scalar_lea.vmem %s10, 2
        %v4887 = vld [vmem:[%s4886] sm:$0x1]
        %v4889 = vlaneseq
        %v4890 = vshrl.u32 %v4889, 7
        %v4891 = vsub.s32 0, %v4890
        %v4892 = vrot.slane %v4887, %v4891
        %4894 = vmatprep.subr.mxu0 0.0
        %4895 = vmatpush1.msra.mxu0 %v4882
        %4896 = vmatprep.subr.mxu0 0.0
        %4897 = vmatpush1.msra.mxu0 %v4883
        %4898 = vmatprep.subr.mxu0 0.0
        %4899 = vmatpush1.msra.mxu0 %v4884
        %4900 = vmatprep.subr.mxu0 0.0
        %4901 = vmatpush1.msra.mxu0 %v4885
        %4902 = vmatprep.subr.mxu0 0.0
        %4903 = vmatpush1.msra.mxu0 0.0
        %4904 = vmatprep.subr.mxu0 0.0
        %4905 = vmatpush1.msra.mxu0 0.0
        %4906 = vmatprep.subr.mxu0 0.0
        %4907 = vmatpush1.msra.mxu0 0.0
        %4908 = vmatprep.subr.mxu0 0.0
        %4909 = vmatpush1.msra.mxu0 0.0
        %4910 = vmatprep.subr.mxu0 0.0
        %4911 = vmatpush1.msra.mxu0 0.0
        %4912 = vmatprep.subr.mxu0 0.0
        %4913 = vmatpush1.msra.mxu0 0.0
        %4914 = vmatprep.subr.mxu0 0.0
        %4915 = vmatpush1.msra.mxu0 0.0
        %4916 = vmatprep.subr.mxu0 0.0
        %4917 = vmatpush1.msra.mxu0 0.0
        %4918 = vmatprep.subr.mxu0 0.0
        %4919 = vmatpush1.msra.mxu0 0.0
        %4920 = vmatprep.subr.mxu0 0.0
        %4921 = vmatpush1.msra.mxu0 0.0
        %4922 = vmatprep.subr.mxu0 0.0
        %4923 = vmatpush1.msra.mxu0 0.0
        %4924 = vmatprep.subr.mxu0 0.0
        %4925 = vmatpush1.msra.mxu0 0.0
        %4926 = vmatprep.subr.mxu0 0.0
        %4927 = vmatpush1.msra.mxu0 0.0
        %4928 = vmatprep.subr.mxu0 0.0
        %4929 = vmatpush1.msra.mxu0 0.0
        %4930 = vmatprep.subr.mxu0 0.0
        %4931 = vmatpush1.msra.mxu0 0.0
        %4932 = vmatprep.subr.mxu0 0.0
        %4933 = vmatpush1.msra.mxu0 0.0
        %4934 = vmatprep.subr.mxu0 0.0
        %4935 = vmatpush1.msra.mxu0 0.0
        %4936 = vmatprep.subr.mxu0 0.0
        %4937 = vmatpush1.msra.mxu0 0.0
        %4938 = vmatprep.subr.mxu0 0.0
        %4939 = vmatpush1.msra.mxu0 0.0
        %4940 = vmatprep.subr.mxu0 0.0
        %4941 = vmatpush1.msra.mxu0 0.0
        %4942 = vmatprep.subr.mxu0 0.0
        %4943 = vmatpush1.msra.mxu0 0.0
        %4944 = vmatprep.subr.mxu0 0.0
        %4945 = vmatpush1.msra.mxu0 0.0
        %4946 = vmatprep.subr.mxu0 0.0
        %4947 = vmatpush1.msra.mxu0 0.0
        %4948 = vmatprep.subr.mxu0 0.0
        %4949 = vmatpush1.msra.mxu0 0.0
        %4950 = vmatprep.subr.mxu0 0.0
        %4951 = vmatpush1.msra.mxu0 0.0
        %4952 = vmatprep.subr.mxu0 0.0
        %4953 = vmatpush1.msra.mxu0 0.0
        %4954 = vmatprep.subr.mxu0 0.0
        %4955 = vmatpush1.msra.mxu0 0.0
        %4956 = vmatprep.subr.mxu0 0.0
        %4957 = vmatpush1.msra.mxu0 0.0
        %4958 = vmatprep.mubr.f32.mxu0 0.0
        %4959 = vmatmul.mubr.f32.gmra.mrb[0].mxu0 %v4564
        %v4960 = vpop.f32.mrb[0].mxu0
        %v4961 = vadd.f32 %v4892, %v4960
        %v4962 = vpop.f32.mrb[0].mxu0
        %4963 = vdwg.mxu0
        %s4964 = scalar_lea.vmem %s11, 64
        %v4965 = vld [vmem:[%s4964] sm:$0xff]
        %v4966 = vld [vmem:[%s4964 + $0x8] sm:$0xff]
        %v4967 = vld [vmem:[%s4964 + $0x10] sm:$0xff]
        %v4968 = vld [vmem:[%s4964 + $0x18] sm:$0xff]
        %s4969 = scalar_lea.vmem %s12, 2
        %v4970 = vld [vmem:[%s4969] sm:$0x1]
        %v4972 = vlaneseq
        %v4973 = vshrl.u32 %v4972, 7
        %v4974 = vsub.s32 0, %v4973
        %v4975 = vrot.slane %v4970, %v4974
        %v4978 = vsel %vm1118, %v2096, 0
        %v4981 = vsel %vm1118, %v2097, 0
        %4983 = vmatprep.subr.mxu0 0.0
        %4984 = vmatpush1.msra.mxu0 %v4965
        %4985 = vmatprep.subr.mxu0 0.0
        %4986 = vmatpush1.msra.mxu0 %v4966
        %4987 = vmatprep.subr.mxu0 0.0
        %4988 = vmatpush1.msra.mxu0 %v4967
        %4989 = vmatprep.subr.mxu0 0.0
        %4990 = vmatpush1.msra.mxu0 %v4968
        %4991 = vmatprep.subr.mxu0 0.0
        %4992 = vmatpush1.msra.mxu0 0.0
        %4993 = vmatprep.subr.mxu0 0.0
        %4994 = vmatpush1.msra.mxu0 0.0
        %4995 = vmatprep.subr.mxu0 0.0
        %4996 = vmatpush1.msra.mxu0 0.0
        %4997 = vmatprep.subr.mxu0 0.0
        %4998 = vmatpush1.msra.mxu0 0.0
        %4999 = vmatprep.subr.mxu0 0.0
        %5000 = vmatpush1.msra.mxu0 0.0
        %5001 = vmatprep.subr.mxu0 0.0
        %5002 = vmatpush1.msra.mxu0 0.0
        %5003 = vmatprep.subr.mxu0 0.0
        %5004 = vmatpush1.msra.mxu0 0.0
        %5005 = vmatprep.subr.mxu0 0.0
        %5006 = vmatpush1.msra.mxu0 0.0
        %5007 = vmatprep.subr.mxu0 0.0
        %5008 = vmatpush1.msra.mxu0 0.0
        %5009 = vmatprep.subr.mxu0 0.0
        %5010 = vmatpush1.msra.mxu0 0.0
        %5011 = vmatprep.subr.mxu0 0.0
        %5012 = vmatpush1.msra.mxu0 0.0
        %5013 = vmatprep.subr.mxu0 0.0
        %5014 = vmatpush1.msra.mxu0 0.0
        %5015 = vmatprep.subr.mxu0 0.0
        %5016 = vmatpush1.msra.mxu0 0.0
        %5017 = vmatprep.subr.mxu0 0.0
        %5018 = vmatpush1.msra.mxu0 0.0
        %5019 = vmatprep.subr.mxu0 0.0
        %5020 = vmatpush1.msra.mxu0 0.0
        %5021 = vmatprep.subr.mxu0 0.0
        %5022 = vmatpush1.msra.mxu0 0.0
        %5023 = vmatprep.subr.mxu0 0.0
        %5024 = vmatpush1.msra.mxu0 0.0
        %5025 = vmatprep.subr.mxu0 0.0
        %5026 = vmatpush1.msra.mxu0 0.0
        %5027 = vmatprep.subr.mxu0 0.0
        %5028 = vmatpush1.msra.mxu0 0.0
        %5029 = vmatprep.subr.mxu0 0.0
        %5030 = vmatpush1.msra.mxu0 0.0
        %5031 = vmatprep.subr.mxu0 0.0
        %5032 = vmatpush1.msra.mxu0 0.0
        %5033 = vmatprep.subr.mxu0 0.0
        %5034 = vmatpush1.msra.mxu0 0.0
        %5035 = vmatprep.subr.mxu0 0.0
        %5036 = vmatpush1.msra.mxu0 0.0
        %5037 = vmatprep.subr.mxu0 0.0
        %5038 = vmatpush1.msra.mxu0 0.0
        %5039 = vmatprep.subr.mxu0 0.0
        %5040 = vmatpush1.msra.mxu0 0.0
        %5041 = vmatprep.subr.mxu0 0.0
        %5042 = vmatpush1.msra.mxu0 0.0
        %5043 = vmatprep.subr.mxu0 0.0
        %5044 = vmatpush1.msra.mxu0 0.0
        %5045 = vmatprep.subr.mxu0 0.0
        %5046 = vmatpush1.msra.mxu0 0.0
        %5047 = vmatprep.mubr.f32.mxu0 0.0
        %5048 = vmatmul.mubr.f32.gmra.mrb[0].mxu0 %v4978
        %v5049 = vpop.f32.mrb[0].mxu0
        %v5050 = vadd.f32 %v4975, %v5049
        %v5051 = vpop.f32.mrb[0].mxu0
        %5052 = vmatprep.mubr.f32.mxu0 0.0
        %5053 = vmatmul.mubr.f32.gmra.mrb[0].mxu0 %v4981
        %v5054 = vpop.f32.mrb[0].mxu0
        %v5055 = vadd.f32 %v4975, %v5054
        %v5056 = vpop.f32.mrb[0].mxu0
        %5057 = vdwg.mxu0
        %s5058 = scalar_lea.vmem %s13, 64
        %v5059 = vld [vmem:[%s5058] sm:$0xff]
        %v5060 = vld [vmem:[%s5058 + $0x8] sm:$0xff]
        %v5061 = vld [vmem:[%s5058 + $0x10] sm:$0xff]
        %v5062 = vld [vmem:[%s5058 + $0x18] sm:$0xff]
        %s5063 = scalar_lea.vmem %s14, 2
        %v5064 = vld [vmem:[%s5063] sm:$0x1]
        %v5066 = vlaneseq
        %v5067 = vshrl.u32 %v5066, 7
        %v5068 = vsub.s32 0, %v5067
        %v5069 = vrot.slane %v5064, %v5068
        %5071 = vmatprep.subr.mxu0 0.0
        %5072 = vmatpush1.msra.mxu0 %v5059
        %5073 = vmatprep.subr.mxu0 0.0
        %5074 = vmatpush1.msra.mxu0 %v5060
        %5075 = vmatprep.subr.mxu0 0.0
        %5076 = vmatpush1.msra.mxu0 %v5061
        %5077 = vmatprep.subr.mxu0 0.0
        %5078 = vmatpush1.msra.mxu0 %v5062
        %5079 = vmatprep.subr.mxu0 0.0
        %5080 = vmatpush1.msra.mxu0 0.0
        %5081 = vmatprep.subr.mxu0 0.0
        %5082 = vmatpush1.msra.mxu0 0.0
        %5083 = vmatprep.subr.mxu0 0.0
        %5084 = vmatpush1.msra.mxu0 0.0
        %5085 = vmatprep.subr.mxu0 0.0
        %5086 = vmatpush1.msra.mxu0 0.0
        %5087 = vmatprep.subr.mxu0 0.0
        %5088 = vmatpush1.msra.mxu0 0.0
        %5089 = vmatprep.subr.mxu0 0.0
        %5090 = vmatpush1.msra.mxu0 0.0
        %5091 = vmatprep.subr.mxu0 0.0
        %5092 = vmatpush1.msra.mxu0 0.0
        %5093 = vmatprep.subr.mxu0 0.0
        %5094 = vmatpush1.msra.mxu0 0.0
        %5095 = vmatprep.subr.mxu0 0.0
        %5096 = vmatpush1.msra.mxu0 0.0
        %5097 = vmatprep.subr.mxu0 0.0
        %5098 = vmatpush1.msra.mxu0 0.0
        %5099 = vmatprep.subr.mxu0 0.0
        %5100 = vmatpush1.msra.mxu0 0.0
        %5101 = vmatprep.subr.mxu0 0.0
        %5102 = vmatpush1.msra.mxu0 0.0
        %5103 = vmatprep.subr.mxu0 0.0
        %5104 = vmatpush1.msra.mxu0 0.0
        %5105 = vmatprep.subr.mxu0 0.0
        %5106 = vmatpush1.msra.mxu0 0.0
        %5107 = vmatprep.subr.mxu0 0.0
        %5108 = vmatpush1.msra.mxu0 0.0
        %5109 = vmatprep.subr.mxu0 0.0
        %5110 = vmatpush1.msra.mxu0 0.0
        %5111 = vmatprep.subr.mxu0 0.0
        %5112 = vmatpush1.msra.mxu0 0.0
        %5113 = vmatprep.subr.mxu0 0.0
        %5114 = vmatpush1.msra.mxu0 0.0
        %5115 = vmatprep.subr.mxu0 0.0
        %5116 = vmatpush1.msra.mxu0 0.0
        %5117 = vmatprep.subr.mxu0 0.0
        %5118 = vmatpush1.msra.mxu0 0.0
        %5119 = vmatprep.subr.mxu0 0.0
        %5120 = vmatpush1.msra.mxu0 0.0
        %5121 = vmatprep.subr.mxu0 0.0
        %5122 = vmatpush1.msra.mxu0 0.0
        %5123 = vmatprep.subr.mxu0 0.0
        %5124 = vmatpush1.msra.mxu0 0.0
        %5125 = vmatprep.subr.mxu0 0.0
        %5126 = vmatpush1.msra.mxu0 0.0
        %5127 = vmatprep.subr.mxu0 0.0
        %5128 = vmatpush1.msra.mxu0 0.0
        %5129 = vmatprep.subr.mxu0 0.0
        %5130 = vmatpush1.msra.mxu0 0.0
        %5131 = vmatprep.subr.mxu0 0.0
        %5132 = vmatpush1.msra.mxu0 0.0
        %5133 = vmatprep.subr.mxu0 0.0
        %5134 = vmatpush1.msra.mxu0 0.0
        %5135 = vmatprep.mubr.f32.mxu0 0.0
        %5136 = vmatmul.mubr.f32.gmra.mrb[0].mxu0 %v4978
        %v5137 = vpop.f32.mrb[0].mxu0
        %v5138 = vadd.f32 %v5069, %v5137
        %v5139 = vpop.f32.mrb[0].mxu0
        %5140 = vmatprep.mubr.f32.mxu0 0.0
        %5141 = vmatmul.mubr.f32.gmra.mrb[0].mxu0 %v4981
        %v5142 = vpop.f32.mrb[0].mxu0
        %v5143 = vadd.f32 %v5069, %v5142
        %v5144 = vpop.f32.mrb[0].mxu0
        %5145 = vdwg.mxu0
        %v5147 = vsel %vm1118, %v4961, 0
        %v5150 = vsel %vm1118, %v5050, 0
        %v5153 = vsel %vm1118, %v5055, 0
        %5155 = vmatprep.subr.mxu0 0.0
        %5156 = vmatpush1.xpose.msra.mxu0 %v5150
        %5157 = vmatprep.subr.mxu0 0.0
        %5158 = vmatpush1.xpose.msra.mxu0 %v5153
        %5159 = vmatprep.subr.mxu0 0.0
        %5160 = vmatpush1.xpose.msra.mxu0 0.0
        %5161 = vmatprep.subr.mxu0 0.0
        %5162 = vmatpush1.xpose.msra.mxu0 0.0
        %5163 = vmatprep.subr.mxu0 0.0
        %5164 = vmatpush1.xpose.msra.mxu0 0.0
        %5165 = vmatprep.subr.mxu0 0.0
        %5166 = vmatpush1.xpose.msra.mxu0 0.0
        %5167 = vmatprep.subr.mxu0 0.0
        %5168 = vmatpush1.xpose.msra.mxu0 0.0
        %5169 = vmatprep.subr.mxu0 0.0
        %5170 = vmatpush1.xpose.msra.mxu0 0.0
        %5171 = vmatprep.subr.mxu0 0.0
        %5172 = vmatpush1.xpose.msra.mxu0 0.0
        %5173 = vmatprep.subr.mxu0 0.0
        %5174 = vmatpush1.xpose.msra.mxu0 0.0
        %5175 = vmatprep.subr.mxu0 0.0
        %5176 = vmatpush1.xpose.msra.mxu0 0.0
        %5177 = vmatprep.subr.mxu0 0.0
        %5178 = vmatpush1.xpose.msra.mxu0 0.0
        %5179 = vmatprep.subr.mxu0 0.0
        %5180 = vmatpush1.xpose.msra.mxu0 0.0
        %5181 = vmatprep.subr.mxu0 0.0
        %5182 = vmatpush1.xpose.msra.mxu0 0.0
        %5183 = vmatprep.subr.mxu0 0.0
        %5184 = vmatpush1.xpose.msra.mxu0 0.0
        %5185 = vmatprep.subr.mxu0 0.0
        %5186 = vmatpush1.xpose.msra.mxu0 0.0
        %5187 = vmatprep.subr.mxu0 0.0
        %5188 = vmatpush1.xpose.msra.mxu0 0.0
        %5189 = vmatprep.subr.mxu0 0.0
        %5190 = vmatpush1.xpose.msra.mxu0 0.0
        %5191 = vmatprep.subr.mxu0 0.0
        %5192 = vmatpush1.xpose.msra.mxu0 0.0
        %5193 = vmatprep.subr.mxu0 0.0
        %5194 = vmatpush1.xpose.msra.mxu0 0.0
        %5195 = vmatprep.subr.mxu0 0.0
        %5196 = vmatpush1.xpose.msra.mxu0 0.0
        %5197 = vmatprep.subr.mxu0 0.0
        %5198 = vmatpush1.xpose.msra.mxu0 0.0
        %5199 = vmatprep.subr.mxu0 0.0
        %5200 = vmatpush1.xpose.msra.mxu0 0.0
        %5201 = vmatprep.subr.mxu0 0.0
        %5202 = vmatpush1.xpose.msra.mxu0 0.0
        %5203 = vmatprep.subr.mxu0 0.0
        %5204 = vmatpush1.xpose.msra.mxu0 0.0
        %5205 = vmatprep.subr.mxu0 0.0
        %5206 = vmatpush1.xpose.msra.mxu0 0.0
        %5207 = vmatprep.subr.mxu0 0.0
        %5208 = vmatpush1.xpose.msra.mxu0 0.0
        %5209 = vmatprep.subr.mxu0 0.0
        %5210 = vmatpush1.xpose.msra.mxu0 0.0
        %5211 = vmatprep.subr.mxu0 0.0
        %5212 = vmatpush1.xpose.msra.mxu0 0.0
        %5213 = vmatprep.subr.mxu0 0.0
        %5214 = vmatpush1.xpose.msra.mxu0 0.0
        %5215 = vmatprep.subr.mxu0 0.0
        %5216 = vmatpush1.xpose.msra.mxu0 0.0
        %5217 = vmatprep.subr.mxu0 0.0
        %5218 = vmatpush1.xpose.msra.mxu0 0.0
        %5219 = vmatprep.mubr.f32.mxu0 0.0
        %5220 = vmatmul.mubr.f32.gmra.mrb[0].mxu0 %v5147
        %v5221 = vpop.f32.mrb[0].mxu0
        %v5222 = vadd.f32 0.0, %v5221
        %v5223 = vpop.f32.mrb[0].mxu0
        %5224 = vdwg.mxu0
        %vm5225 = vcmask 130048
        %v5226 = vsel %vm5225, %v5222, -inf
        %5227 = vmax.xlane.f32.xlu0 %v5226
        %v5228 = vpop.xlane.xlu0 %5227
        %v5229 = vsub.f32 %v5222, %v5228
        %v5230 = vmul.f32 %v5229, 1.442695
        %v5231 = vpow.pop %v5230
        %v5232 = vsel %vm5225, %v5231, 0.0
        %5233 = vadd.xlane.f32.xlu0 %v5232
        %v5234 = vpop.xlane.xlu0 %5233
        %v5235 = vrcp.pop %v5234
        %v5236 = vmul.f32 %v5231, %v5235
        %v5238 = vsel %vm5225, %v5236, 0
        %5240 = vmatprep.subr.mxu0 0.0
        %5241 = vmatpush1.msra.mxu0 %v5138
        %5242 = vmatprep.subr.mxu0 0.0
        %5243 = vmatpush1.msra.mxu0 %v5143
        %5244 = vmatprep.subr.mxu0 0.0
        %5245 = vmatpush1.msra.mxu0 0.0
        %5246 = vmatprep.subr.mxu0 0.0
        %5247 = vmatpush1.msra.mxu0 0.0
        %5248 = vmatprep.subr.mxu0 0.0
        %5249 = vmatpush1.msra.mxu0 0.0
        %5250 = vmatprep.subr.mxu0 0.0
        %5251 = vmatpush1.msra.mxu0 0.0
        %5252 = vmatprep.subr.mxu0 0.0
        %5253 = vmatpush1.msra.mxu0 0.0
        %5254 = vmatprep.subr.mxu0 0.0
        %5255 = vmatpush1.msra.mxu0 0.0
        %5256 = vmatprep.subr.mxu0 0.0
        %5257 = vmatpush1.msra.mxu0 0.0
        %5258 = vmatprep.subr.mxu0 0.0
        %5259 = vmatpush1.msra.mxu0 0.0
        %5260 = vmatprep.subr.mxu0 0.0
        %5261 = vmatpush1.msra.mxu0 0.0
        %5262 = vmatprep.subr.mxu0 0.0
        %5263 = vmatpush1.msra.mxu0 0.0
        %5264 = vmatprep.subr.mxu0 0.0
        %5265 = vmatpush1.msra.mxu0 0.0
        %5266 = vmatprep.subr.mxu0 0.0
        %5267 = vmatpush1.msra.mxu0 0.0
        %5268 = vmatprep.subr.mxu0 0.0
        %5269 = vmatpush1.msra.mxu0 0.0
        %5270 = vmatprep.subr.mxu0 0.0
        %5271 = vmatpush1.msra.mxu0 0.0
        %5272 = vmatprep.subr.mxu0 0.0
        %5273 = vmatpush1.msra.mxu0 0.0
        %5274 = vmatprep.subr.mxu0 0.0
        %5275 = vmatpush1.msra.mxu0 0.0
        %5276 = vmatprep.subr.mxu0 0.0
        %5277 = vmatpush1.msra.mxu0 0.0
        %5278 = vmatprep.subr.mxu0 0.0
        %5279 = vmatpush1.msra.mxu0 0.0
        %5280 = vmatprep.subr.mxu0 0.0
        %5281 = vmatpush1.msra.mxu0 0.0
        %5282 = vmatprep.subr.mxu0 0.0
        %5283 = vmatpush1.msra.mxu0 0.0
        %5284 = vmatprep.subr.mxu0 0.0
        %5285 = vmatpush1.msra.mxu0 0.0
        %5286 = vmatprep.subr.mxu0 0.0
        %5287 = vmatpush1.msra.mxu0 0.0
        %5288 = vmatprep.subr.mxu0 0.0
        %5289 = vmatpush1.msra.mxu0 0.0
        %5290 = vmatprep.subr.mxu0 0.0
        %5291 = vmatpush1.msra.mxu0 0.0
        %5292 = vmatprep.subr.mxu0 0.0
        %5293 = vmatpush1.msra.mxu0 0.0
        %5294 = vmatprep.subr.mxu0 0.0
        %5295 = vmatpush1.msra.mxu0 0.0
        %5296 = vmatprep.subr.mxu0 0.0
        %5297 = vmatpush1.msra.mxu0 0.0
        %5298 = vmatprep.subr.mxu0 0.0
        %5299 = vmatpush1.msra.mxu0 0.0
        %5300 = vmatprep.subr.mxu0 0.0
        %5301 = vmatpush1.msra.mxu0 0.0
        %5302 = vmatprep.subr.mxu0 0.0
        %5303 = vmatpush1.msra.mxu0 0.0
        %5304 = vmatprep.mubr.f32.mxu0 0.0
        %5305 = vmatmul.mubr.f32.gmra.mrb[0].mxu0 %v5238
        %v5306 = vpop.f32.mrb[0].mxu0
        %v5307 = vadd.f32 0.0, %v5306
        %v5308 = vpop.f32.mrb[0].mxu0
        %5309 = vdwg.mxu0
        %s5310 = scalar_lea.vmem %s15, 64
        %v5311 = vld [vmem:[%s5310] sm:$0xff]
        %v5312 = vld [vmem:[%s5310 + $0x8] sm:$0xff]
        %v5313 = vld [vmem:[%s5310 + $0x10] sm:$0xff]
        %v5314 = vld [vmem:[%s5310 + $0x18] sm:$0xff]
        %s5315 = scalar_lea.vmem %s16, 2
        %v5316 = vld [vmem:[%s5315] sm:$0x1]
        %v5318 = vlaneseq
        %v5319 = vshrl.u32 %v5318, 7
        %v5320 = vsub.s32 0, %v5319
        %v5321 = vrot.slane %v5316, %v5320
        %v5324 = vsel %vm1118, %v5307, 0
        %5326 = vmatprep.subr.mxu0 0.0
        %5327 = vmatpush1.msra.mxu0 %v5311
        %5328 = vmatprep.subr.mxu0 0.0
        %5329 = vmatpush1.msra.mxu0 %v5312
        %5330 = vmatprep.subr.mxu0 0.0
        %5331 = vmatpush1.msra.mxu0 %v5313
        %5332 = vmatprep.subr.mxu0 0.0
        %5333 = vmatpush1.msra.mxu0 %v5314
        %5334 = vmatprep.subr.mxu0 0.0
        %5335 = vmatpush1.msra.mxu0 0.0
        %5336 = vmatprep.subr.mxu0 0.0
        %5337 = vmatpush1.msra.mxu0 0.0
        %5338 = vmatprep.subr.mxu0 0.0
        %5339 = vmatpush1.msra.mxu0 0.0
        %5340 = vmatprep.subr.mxu0 0.0
        %5341 = vmatpush1.msra.mxu0 0.0
        %5342 = vmatprep.subr.mxu0 0.0
        %5343 = vmatpush1.msra.mxu0 0.0
        %5344 = vmatprep.subr.mxu0 0.0
        %5345 = vmatpush1.msra.mxu0 0.0
        %5346 = vmatprep.subr.mxu0 0.0
        %5347 = vmatpush1.msra.mxu0 0.0
        %5348 = vmatprep.subr.mxu0 0.0
        %5349 = vmatpush1.msra.mxu0 0.0
        %5350 = vmatprep.subr.mxu0 0.0
        %5351 = vmatpush1.msra.mxu0 0.0
        %5352 = vmatprep.subr.mxu0 0.0
        %5353 = vmatpush1.msra.mxu0 0.0
        %5354 = vmatprep.subr.mxu0 0.0
        %5355 = vmatpush1.msra.mxu0 0.0
        %5356 = vmatprep.subr.mxu0 0.0
        %5357 = vmatpush1.msra.mxu0 0.0
        %5358 = vmatprep.subr.mxu0 0.0
        %5359 = vmatpush1.msra.mxu0 0.0
        %5360 = vmatprep.subr.mxu0 0.0
        %5361 = vmatpush1.msra.mxu0 0.0
        %5362 = vmatprep.subr.mxu0 0.0
        %5363 = vmatpush1.msra.mxu0 0.0
        %5364 = vmatprep.subr.mxu0 0.0
        %5365 = vmatpush1.msra.mxu0 0.0
        %5366 = vmatprep.subr.mxu0 0.0
        %5367 = vmatpush1.msra.mxu0 0.0
        %5368 = vmatprep.subr.mxu0 0.0
        %5369 = vmatpush1.msra.mxu0 0.0
        %5370 = vmatprep.subr.mxu0 0.0
        %5371 = vmatpush1.msra.mxu0 0.0
        %5372 = vmatprep.subr.mxu0 0.0
        %5373 = vmatpush1.msra.mxu0 0.0
        %5374 = vmatprep.subr.mxu0 0.0
        %5375 = vmatpush1.msra.mxu0 0.0
        %5376 = vmatprep.subr.mxu0 0.0
        %5377 = vmatpush1.msra.mxu0 0.0
        %5378 = vmatprep.subr.mxu0 0.0
        %5379 = vmatpush1.msra.mxu0 0.0
        %5380 = vmatprep.subr.mxu0 0.0
        %5381 = vmatpush1.msra.mxu0 0.0
        %5382 = vmatprep.subr.mxu0 0.0
        %5383 = vmatpush1.msra.mxu0 0.0
        %5384 = vmatprep.subr.mxu0 0.0
        %5385 = vmatpush1.msra.mxu0 0.0
        %5386 = vmatprep.subr.mxu0 0.0
        %5387 = vmatpush1.msra.mxu0 0.0
        %5388 = vmatprep.subr.mxu0 0.0
        %5389 = vmatpush1.msra.mxu0 0.0
        %5390 = vmatprep.mubr.f32.mxu0 0.0
        %5391 = vmatmul.mubr.f32.gmra.mrb[0].mxu0 %v5324
        %v5392 = vpop.f32.mrb[0].mxu0
        %v5393 = vadd.f32 %v5321, %v5392
        %v5394 = vpop.f32.mrb[0].mxu0
        %5395 = vdwg.mxu0
        %v5396 = vadd.f32 %v4551, %v5393
        %v5397 = vsel %vm1118, %v5396, 0.0
        %5398 = vadd.xlane.f32.xlu0 %v5397
        %v5399 = vpop.xlane.xlu0 %5398
        %v5400 = vmul.f32 %v5399, %v3094
        %v5401 = vmul.f32 %v5396, %v5396
        %v5402 = vsel %vm1118, %v5401, 0.0
        %5403 = vadd.xlane.f32.xlu0 %v5402
        %v5404 = vpop.xlane.xlu0 %5403
        %v5405 = vmul.f32 %v5404, %v3094
        %v5406 = vmul.f32 %v5400, %v5400
        %v5407 = vsub.f32 %v5405, %v5406
        %v5408 = vmax.f32 %v5407, 0.0
        %v5409 = vsub.f32 %v5396, %v5400
        %v5410 = vadd.f32 %v5408, 1e-05
        %v5411 = vrsqrt.pop %v5410
        %v5412 = vmul.f32 %v5409, %v5411
        %s5413 = scalar_lea.vmem %s17, 64
        %v5414 = vld [vmem:[%s5413] sm:$0xff]
        %v5415 = vld [vmem:[%s5413 + $0x8] sm:$0xff]
        %v5416 = vld [vmem:[%s5413 + $0x10] sm:$0xff]
        %v5417 = vld [vmem:[%s5413 + $0x18] sm:$0xff]
        %s5418 = scalar_lea.vmem %s18, 2
        %v5419 = vld [vmem:[%s5418] sm:$0x1]
        %v5421 = vlaneseq
        %v5422 = vshrl.u32 %v5421, 7
        %v5423 = vsub.s32 0, %v5422
        %v5424 = vrot.slane %v5419, %v5423
        %v5427 = vsel %vm1118, %v5412, 0
        %5429 = vmatprep.subr.mxu0 0.0
        %5430 = vmatpush1.msra.mxu0 %v5414
        %5431 = vmatprep.subr.mxu0 0.0
        %5432 = vmatpush1.msra.mxu0 %v5415
        %5433 = vmatprep.subr.mxu0 0.0
        %5434 = vmatpush1.msra.mxu0 %v5416
        %5435 = vmatprep.subr.mxu0 0.0
        %5436 = vmatpush1.msra.mxu0 %v5417
        %5437 = vmatprep.subr.mxu0 0.0
        %5438 = vmatpush1.msra.mxu0 0.0
        %5439 = vmatprep.subr.mxu0 0.0
        %5440 = vmatpush1.msra.mxu0 0.0
        %5441 = vmatprep.subr.mxu0 0.0
        %5442 = vmatpush1.msra.mxu0 0.0
        %5443 = vmatprep.subr.mxu0 0.0
        %5444 = vmatpush1.msra.mxu0 0.0
        %5445 = vmatprep.subr.mxu0 0.0
        %5446 = vmatpush1.msra.mxu0 0.0
        %5447 = vmatprep.subr.mxu0 0.0
        %5448 = vmatpush1.msra.mxu0 0.0
        %5449 = vmatprep.subr.mxu0 0.0
        %5450 = vmatpush1.msra.mxu0 0.0
        %5451 = vmatprep.subr.mxu0 0.0
        %5452 = vmatpush1.msra.mxu0 0.0
        %5453 = vmatprep.subr.mxu0 0.0
        %5454 = vmatpush1.msra.mxu0 0.0
        %5455 = vmatprep.subr.mxu0 0.0
        %5456 = vmatpush1.msra.mxu0 0.0
        %5457 = vmatprep.subr.mxu0 0.0
        %5458 = vmatpush1.msra.mxu0 0.0
        %5459 = vmatprep.subr.mxu0 0.0
        %5460 = vmatpush1.msra.mxu0 0.0
        %5461 = vmatprep.subr.mxu0 0.0
        %5462 = vmatpush1.msra.mxu0 0.0
        %5463 = vmatprep.subr.mxu0 0.0
        %5464 = vmatpush1.msra.mxu0 0.0
        %5465 = vmatprep.subr.mxu0 0.0
        %5466 = vmatpush1.msra.mxu0 0.0
        %5467 = vmatprep.subr.mxu0 0.0
        %5468 = vmatpush1.msra.mxu0 0.0
        %5469 = vmatprep.subr.mxu0 0.0
        %5470 = vmatpush1.msra.mxu0 0.0
        %5471 = vmatprep.subr.mxu0 0.0
        %5472 = vmatpush1.msra.mxu0 0.0
        %5473 = vmatprep.subr.mxu0 0.0
        %5474 = vmatpush1.msra.mxu0 0.0
        %5475 = vmatprep.subr.mxu0 0.0
        %5476 = vmatpush1.msra.mxu0 0.0
        %5477 = vmatprep.subr.mxu0 0.0
        %5478 = vmatpush1.msra.mxu0 0.0
        %5479 = vmatprep.subr.mxu0 0.0
        %5480 = vmatpush1.msra.mxu0 0.0
        %5481 = vmatprep.subr.mxu0 0.0
        %5482 = vmatpush1.msra.mxu0 0.0
        %5483 = vmatprep.subr.mxu0 0.0
        %5484 = vmatpush1.msra.mxu0 0.0
        %5485 = vmatprep.subr.mxu0 0.0
        %5486 = vmatpush1.msra.mxu0 0.0
        %5487 = vmatprep.subr.mxu0 0.0
        %5488 = vmatpush1.msra.mxu0 0.0
        %5489 = vmatprep.subr.mxu0 0.0
        %5490 = vmatpush1.msra.mxu0 0.0
        %5491 = vmatprep.subr.mxu0 0.0
        %5492 = vmatpush1.msra.mxu0 0.0
        %5493 = vmatprep.mubr.f32.mxu0 0.0
        %5494 = vmatmul.mubr.f32.gmra.mrb[0].mxu0 %v5427
        %v5495 = vpop.f32.mrb[0].mxu0
        %v5496 = vadd.f32 %v5424, %v5495
        %v5497 = vpop.f32.mrb[0].mxu0
        %5498 = vdwg.mxu0
        %v5499 = vmax.f32 %v5496, 0.0
        %s5500 = scalar_lea.vmem %s19, 256
        %v5501 = vld [vmem:[%s5500] sm:$0xff]
        %v5502 = vld [vmem:[%s5500 + $0x8] sm:$0xff]
        %v5503 = vld [vmem:[%s5500 + $0x10] sm:$0xff]
        %v5504 = vld [vmem:[%s5500 + $0x18] sm:$0xff]
        %v5505 = vld [vmem:[%s5500 + $0x20] sm:$0xff]
        %v5506 = vld [vmem:[%s5500 + $0x28] sm:$0xff]
        %v5507 = vld [vmem:[%s5500 + $0x30] sm:$0xff]
        %v5508 = vld [vmem:[%s5500 + $0x38] sm:$0xff]
        %v5509 = vld [vmem:[%s5500 + $0x40] sm:$0xff]
        %v5510 = vld [vmem:[%s5500 + $0x48] sm:$0xff]
        %v5511 = vld [vmem:[%s5500 + $0x50] sm:$0xff]
        %v5512 = vld [vmem:[%s5500 + $0x58] sm:$0xff]
        %v5513 = vld [vmem:[%s5500 + $0x60] sm:$0xff]
        %v5514 = vld [vmem:[%s5500 + $0x68] sm:$0xff]
        %v5515 = vld [vmem:[%s5500 + $0x70] sm:$0xff]
        %v5516 = vld [vmem:[%s5500 + $0x78] sm:$0xff]
        %s5517 = scalar_lea.vmem %s20, 2
        %v5518 = vld [vmem:[%s5517] sm:$0x1]
        %v5520 = vlaneseq
        %v5521 = vshrl.u32 %v5520, 7
        %v5522 = vsub.s32 0, %v5521
        %v5523 = vrot.slane %v5518, %v5522
        %5525 = vmatprep.subr.mxu0 0.0
        %5526 = vmatpush1.msra.mxu0 %v5501
        %5527 = vmatprep.subr.mxu0 0.0
        %5528 = vmatpush1.msra.mxu0 %v5502
        %5529 = vmatprep.subr.mxu0 0.0
        %5530 = vmatpush1.msra.mxu0 %v5503
        %5531 = vmatprep.subr.mxu0 0.0
        %5532 = vmatpush1.msra.mxu0 %v5504
        %5533 = vmatprep.subr.mxu0 0.0
        %5534 = vmatpush1.msra.mxu0 %v5505
        %5535 = vmatprep.subr.mxu0 0.0
        %5536 = vmatpush1.msra.mxu0 %v5506
        %5537 = vmatprep.subr.mxu0 0.0
        %5538 = vmatpush1.msra.mxu0 %v5507
        %5539 = vmatprep.subr.mxu0 0.0
        %5540 = vmatpush1.msra.mxu0 %v5508
        %5541 = vmatprep.subr.mxu0 0.0
        %5542 = vmatpush1.msra.mxu0 %v5509
        %5543 = vmatprep.subr.mxu0 0.0
        %5544 = vmatpush1.msra.mxu0 %v5510
        %5545 = vmatprep.subr.mxu0 0.0
        %5546 = vmatpush1.msra.mxu0 %v5511
        %5547 = vmatprep.subr.mxu0 0.0
        %5548 = vmatpush1.msra.mxu0 %v5512
        %5549 = vmatprep.subr.mxu0 0.0
        %5550 = vmatpush1.msra.mxu0 %v5513
        %5551 = vmatprep.subr.mxu0 0.0
        %5552 = vmatpush1.msra.mxu0 %v5514
        %5553 = vmatprep.subr.mxu0 0.0
        %5554 = vmatpush1.msra.mxu0 %v5515
        %5555 = vmatprep.subr.mxu0 0.0
        %5556 = vmatpush1.msra.mxu0 %v5516
        %5557 = vmatprep.subr.mxu0 0.0
        %5558 = vmatpush1.msra.mxu0 0.0
        %5559 = vmatprep.subr.mxu0 0.0
        %5560 = vmatpush1.msra.mxu0 0.0
        %5561 = vmatprep.subr.mxu0 0.0
        %5562 = vmatpush1.msra.mxu0 0.0
        %5563 = vmatprep.subr.mxu0 0.0
        %5564 = vmatpush1.msra.mxu0 0.0
        %5565 = vmatprep.subr.mxu0 0.0
        %5566 = vmatpush1.msra.mxu0 0.0
        %5567 = vmatprep.subr.mxu0 0.0
        %5568 = vmatpush1.msra.mxu0 0.0
        %5569 = vmatprep.subr.mxu0 0.0
        %5570 = vmatpush1.msra.mxu0 0.0
        %5571 = vmatprep.subr.mxu0 0.0
        %5572 = vmatpush1.msra.mxu0 0.0
        %5573 = vmatprep.subr.mxu0 0.0
        %5574 = vmatpush1.msra.mxu0 0.0
        %5575 = vmatprep.subr.mxu0 0.0
        %5576 = vmatpush1.msra.mxu0 0.0
        %5577 = vmatprep.subr.mxu0 0.0
        %5578 = vmatpush1.msra.mxu0 0.0
        %5579 = vmatprep.subr.mxu0 0.0
        %5580 = vmatpush1.msra.mxu0 0.0
        %5581 = vmatprep.subr.mxu0 0.0
        %5582 = vmatpush1.msra.mxu0 0.0
        %5583 = vmatprep.subr.mxu0 0.0
        %5584 = vmatpush1.msra.mxu0 0.0
        %5585 = vmatprep.subr.mxu0 0.0
        %5586 = vmatpush1.msra.mxu0 0.0
        %5587 = vmatprep.subr.mxu0 0.0
        %5588 = vmatpush1.msra.mxu0 0.0
        %5589 = vmatprep.mubr.f32.mxu0 0.0
        %5590 = vmatmul.mubr.f32.gmra.mrb[0].mxu0 %v5499
        %v5591 = vpop.f32.mrb[0].mxu0
        %v5592 = vadd.f32 %v5523, %v5591
        %v5593 = vpop.f32.mrb[0].mxu0
        %5594 = vdwg.mxu0
        %v5595 = vadd.f32 %v5412, %v5592
        %v5596 = vsel %vm1118, %v5595, 0.0
        %5597 = vadd.xlane.f32.xlu0 %v5596
        %v5598 = vpop.xlane.xlu0 %5597
        %v5599 = vmul.f32 %v5598, %v3094
        %v5600 = vmul.f32 %v5595, %v5595
        %v5601 = vsel %vm1118, %v5600, 0.0
        %5602 = vadd.xlane.f32.xlu0 %v5601
        %v5603 = vpop.xlane.xlu0 %5602
        %v5604 = vmul.f32 %v5603, %v3094
        %v5605 = vmul.f32 %v5599, %v5599
        %v5606 = vsub.f32 %v5604, %v5605
        %v5607 = vmax.f32 %v5606, 0.0
        %v5608 = vsub.f32 %v5595, %v5599
        %v5609 = vadd.f32 %v5607, 1e-05
        %v5610 = vrsqrt.pop %v5609
        %v5611 = vmul.f32 %v5608, %v5610
        %v5612 = vld [vmem:[%s21] sm:$0xff]
        %v5613 = vld [vmem:[%s21 + $0x8] sm:$0xff]
        %v5614 = vld [vmem:[%s21 + $0x10] sm:$0xff]
        %v5615 = vld [vmem:[%s21 + $0x18] sm:$0xff]
        %v5616 = vld [vmem:[%s22] sm:$0x1]
        %v5618 = vlaneseq
        %v5619 = vshrl.u32 %v5618, 7
        %v5620 = vsub.s32 0, %v5619
        %v5621 = vrot.slane %v5616, %v5620
        %v5624 = vsel %vm1118, %v5611, 0
        %5626 = vmatprep.subr.mxu0 0.0
        %5627 = vmatpush1.msra.mxu0 %v5612
        %5628 = vmatprep.subr.mxu0 0.0
        %5629 = vmatpush1.msra.mxu0 %v5613
        %5630 = vmatprep.subr.mxu0 0.0
        %5631 = vmatpush1.msra.mxu0 %v5614
        %5632 = vmatprep.subr.mxu0 0.0
        %5633 = vmatpush1.msra.mxu0 %v5615
        %5634 = vmatprep.subr.mxu0 0.0
        %5635 = vmatpush1.msra.mxu0 0.0
        %5636 = vmatprep.subr.mxu0 0.0
        %5637 = vmatpush1.msra.mxu0 0.0
        %5638 = vmatprep.subr.mxu0 0.0
        %5639 = vmatpush1.msra.mxu0 0.0
        %5640 = vmatprep.subr.mxu0 0.0
        %5641 = vmatpush1.msra.mxu0 0.0
        %5642 = vmatprep.subr.mxu0 0.0
        %5643 = vmatpush1.msra.mxu0 0.0
        %5644 = vmatprep.subr.mxu0 0.0
        %5645 = vmatpush1.msra.mxu0 0.0
        %5646 = vmatprep.subr.mxu0 0.0
        %5647 = vmatpush1.msra.mxu0 0.0
        %5648 = vmatprep.subr.mxu0 0.0
        %5649 = vmatpush1.msra.mxu0 0.0
        %5650 = vmatprep.subr.mxu0 0.0
        %5651 = vmatpush1.msra.mxu0 0.0
        %5652 = vmatprep.subr.mxu0 0.0
        %5653 = vmatpush1.msra.mxu0 0.0
        %5654 = vmatprep.subr.mxu0 0.0
        %5655 = vmatpush1.msra.mxu0 0.0
        %5656 = vmatprep.subr.mxu0 0.0
        %5657 = vmatpush1.msra.mxu0 0.0
        %5658 = vmatprep.subr.mxu0 0.0
        %5659 = vmatpush1.msra.mxu0 0.0
        %5660 = vmatprep.subr.mxu0 0.0
        %5661 = vmatpush1.msra.mxu0 0.0
        %5662 = vmatprep.subr.mxu0 0.0
        %5663 = vmatpush1.msra.mxu0 0.0
        %5664 = vmatprep.subr.mxu0 0.0
        %5665 = vmatpush1.msra.mxu0 0.0
        %5666 = vmatprep.subr.mxu0 0.0
        %5667 = vmatpush1.msra.mxu0 0.0
        %5668 = vmatprep.subr.mxu0 0.0
        %5669 = vmatpush1.msra.mxu0 0.0
        %5670 = vmatprep.subr.mxu0 0.0
        %5671 = vmatpush1.msra.mxu0 0.0
        %5672 = vmatprep.subr.mxu0 0.0
        %5673 = vmatpush1.msra.mxu0 0.0
        %5674 = vmatprep.subr.mxu0 0.0
        %5675 = vmatpush1.msra.mxu0 0.0
        %5676 = vmatprep.subr.mxu0 0.0
        %5677 = vmatpush1.msra.mxu0 0.0
        %5678 = vmatprep.subr.mxu0 0.0
        %5679 = vmatpush1.msra.mxu0 0.0
        %5680 = vmatprep.subr.mxu0 0.0
        %5681 = vmatpush1.msra.mxu0 0.0
        %5682 = vmatprep.subr.mxu0 0.0
        %5683 = vmatpush1.msra.mxu0 0.0
        %5684 = vmatprep.subr.mxu0 0.0
        %5685 = vmatpush1.msra.mxu0 0.0
        %5686 = vmatprep.subr.mxu0 0.0
        %5687 = vmatpush1.msra.mxu0 0.0
        %5688 = vmatprep.subr.mxu0 0.0
        %5689 = vmatpush1.msra.mxu0 0.0
        %5690 = vmatprep.mubr.f32.mxu0 0.0
        %5691 = vmatmul.mubr.f32.gmra.mrb[0].mxu0 %v5624
        %v5692 = vpop.f32.mrb[0].mxu0
        %v5693 = vadd.f32 %v5621, %v5692
        %v5694 = vpop.f32.mrb[0].mxu0
        %5695 = vdwg.mxu0
        %v5696 = vmax.f32 %v5693, 0.0
        %v5697 = vld [vmem:[%s23] sm:$0xff]
        %v5698 = vld [vmem:[%s23 + $0x8] sm:$0xff]
        %v5699 = vld [vmem:[%s23 + $0x10] sm:$0xff]
        %v5700 = vld [vmem:[%s23 + $0x18] sm:$0xff]
        %v5701 = vld [vmem:[%s24] sm:$0x1]
        %v5703 = vlaneseq
        %v5704 = vshrl.u32 %v5703, 7
        %v5705 = vsub.s32 0, %v5704
        %v5706 = vrot.slane %v5701, %v5705
        %v5709 = vsel %vm1118, %v5696, 0
        %5711 = vmatprep.subr.mxu0 0.0
        %5712 = vmatpush1.msra.mxu0 %v5697
        %5713 = vmatprep.subr.mxu0 0.0
        %5714 = vmatpush1.msra.mxu0 %v5698
        %5715 = vmatprep.subr.mxu0 0.0
        %5716 = vmatpush1.msra.mxu0 %v5699
        %5717 = vmatprep.subr.mxu0 0.0
        %5718 = vmatpush1.msra.mxu0 %v5700
        %5719 = vmatprep.subr.mxu0 0.0
        %5720 = vmatpush1.msra.mxu0 0.0
        %5721 = vmatprep.subr.mxu0 0.0
        %5722 = vmatpush1.msra.mxu0 0.0
        %5723 = vmatprep.subr.mxu0 0.0
        %5724 = vmatpush1.msra.mxu0 0.0
        %5725 = vmatprep.subr.mxu0 0.0
        %5726 = vmatpush1.msra.mxu0 0.0
        %5727 = vmatprep.subr.mxu0 0.0
        %5728 = vmatpush1.msra.mxu0 0.0
        %5729 = vmatprep.subr.mxu0 0.0
        %5730 = vmatpush1.msra.mxu0 0.0
        %5731 = vmatprep.subr.mxu0 0.0
        %5732 = vmatpush1.msra.mxu0 0.0
        %5733 = vmatprep.subr.mxu0 0.0
        %5734 = vmatpush1.msra.mxu0 0.0
        %5735 = vmatprep.subr.mxu0 0.0
        %5736 = vmatpush1.msra.mxu0 0.0
        %5737 = vmatprep.subr.mxu0 0.0
        %5738 = vmatpush1.msra.mxu0 0.0
        %5739 = vmatprep.subr.mxu0 0.0
        %5740 = vmatpush1.msra.mxu0 0.0
        %5741 = vmatprep.subr.mxu0 0.0
        %5742 = vmatpush1.msra.mxu0 0.0
        %5743 = vmatprep.subr.mxu0 0.0
        %5744 = vmatpush1.msra.mxu0 0.0
        %5745 = vmatprep.subr.mxu0 0.0
        %5746 = vmatpush1.msra.mxu0 0.0
        %5747 = vmatprep.subr.mxu0 0.0
        %5748 = vmatpush1.msra.mxu0 0.0
        %5749 = vmatprep.subr.mxu0 0.0
        %5750 = vmatpush1.msra.mxu0 0.0
        %5751 = vmatprep.subr.mxu0 0.0
        %5752 = vmatpush1.msra.mxu0 0.0
        %5753 = vmatprep.subr.mxu0 0.0
        %5754 = vmatpush1.msra.mxu0 0.0
        %5755 = vmatprep.subr.mxu0 0.0
        %5756 = vmatpush1.msra.mxu0 0.0
        %5757 = vmatprep.subr.mxu0 0.0
        %5758 = vmatpush1.msra.mxu0 0.0
        %5759 = vmatprep.subr.mxu0 0.0
        %5760 = vmatpush1.msra.mxu0 0.0
        %5761 = vmatprep.subr.mxu0 0.0
        %5762 = vmatpush1.msra.mxu0 0.0
        %5763 = vmatprep.subr.mxu0 0.0
        %5764 = vmatpush1.msra.mxu0 0.0
        %5765 = vmatprep.subr.mxu0 0.0
        %5766 = vmatpush1.msra.mxu0 0.0
        %5767 = vmatprep.subr.mxu0 0.0
        %5768 = vmatpush1.msra.mxu0 0.0
        %5769 = vmatprep.subr.mxu0 0.0
        %5770 = vmatpush1.msra.mxu0 0.0
        %5771 = vmatprep.subr.mxu0 0.0
        %5772 = vmatpush1.msra.mxu0 0.0
        %5773 = vmatprep.subr.mxu0 0.0
        %5774 = vmatpush1.msra.mxu0 0.0
        %5775 = vmatprep.mubr.f32.mxu0 0.0
        %5776 = vmatmul.mubr.f32.gmra.mrb[0].mxu0 %v5709
        %v5777 = vpop.f32.mrb[0].mxu0
        %v5778 = vadd.f32 %v5706, %v5777
        %v5779 = vpop.f32.mrb[0].mxu0
        %5780 = vdwg.mxu0
        %v5782 = vsel %vm1118, %v5778, 0
        %5784 = vmatprep.subr.mxu0 0.0
        %5785 = vmatpush1.xpose.msra.mxu0 %v3476
        %5786 = vmatprep.subr.mxu0 0.0
        %5787 = vmatpush1.xpose.msra.mxu0 %v3479
        %5788 = vmatprep.subr.mxu0 0.0
        %5789 = vmatpush1.xpose.msra.mxu0 %v3482
        %5790 = vmatprep.subr.mxu0 0.0
        %5791 = vmatpush1.xpose.msra.mxu0 %v3485
        %5792 = vmatprep.subr.mxu0 0.0
        %5793 = vmatpush1.xpose.msra.mxu0 %v3488
        %5794 = vmatprep.subr.mxu0 0.0
        %5795 = vmatpush1.xpose.msra.mxu0 %v3491
        %5796 = vmatprep.subr.mxu0 0.0
        %5797 = vmatpush1.xpose.msra.mxu0 %v3494
        %5798 = vmatprep.subr.mxu0 0.0
        %5799 = vmatpush1.xpose.msra.mxu0 %v3497
        %5800 = vmatprep.subr.mxu0 0.0
        %5801 = vmatpush1.xpose.msra.mxu0 %v3500
        %5802 = vmatprep.subr.mxu0 0.0
        %5803 = vmatpush1.xpose.msra.mxu0 %v3503
        %5804 = vmatprep.subr.mxu0 0.0
        %5805 = vmatpush1.xpose.msra.mxu0 %v3506
        %5806 = vmatprep.subr.mxu0 0.0
        %5807 = vmatpush1.xpose.msra.mxu0 %v3509
        %5808 = vmatprep.subr.mxu0 0.0
        %5809 = vmatpush1.xpose.msra.mxu0 %v3512
        %5810 = vmatprep.subr.mxu0 0.0
        %5811 = vmatpush1.xpose.msra.mxu0 %v3515
        %5812 = vmatprep.subr.mxu0 0.0
        %5813 = vmatpush1.xpose.msra.mxu0 %v3518
        %5814 = vmatprep.subr.mxu0 0.0
        %5815 = vmatpush1.xpose.msra.mxu0 %v3521
        %5816 = vmatprep.subr.mxu0 0.0
        %5817 = vmatpush1.xpose.msra.mxu0 %v3524
        %5818 = vmatprep.subr.mxu0 0.0
        %5819 = vmatpush1.xpose.msra.mxu0 %v3527
        %5820 = vmatprep.subr.mxu0 0.0
        %5821 = vmatpush1.xpose.msra.mxu0 %v3530
        %5822 = vmatprep.subr.mxu0 0.0
        %5823 = vmatpush1.xpose.msra.mxu0 %v3533
        %5824 = vmatprep.subr.mxu0 0.0
        %5825 = vmatpush1.xpose.msra.mxu0 %v3536
        %5826 = vmatprep.subr.mxu0 0.0
        %5827 = vmatpush1.xpose.msra.mxu0 %v3539
        %5828 = vmatprep.subr.mxu0 0.0
        %5829 = vmatpush1.xpose.msra.mxu0 %v3542
        %5830 = vmatprep.subr.mxu0 0.0
        %5831 = vmatpush1.xpose.msra.mxu0 %v3545
        %5832 = vmatprep.subr.mxu0 0.0
        %5833 = vmatpush1.xpose.msra.mxu0 %v3548
        %5834 = vmatprep.subr.mxu0 0.0
        %5835 = vmatpush1.xpose.msra.mxu0 %v3551
        %5836 = vmatprep.subr.mxu0 0.0
        %5837 = vmatpush1.xpose.msra.mxu0 %v3554
        %5838 = vmatprep.subr.mxu0 0.0
        %5839 = vmatpush1.xpose.msra.mxu0 %v3557
        %5840 = vmatprep.subr.mxu0 0.0
        %5841 = vmatpush1.xpose.msra.mxu0 %v3560
        %5842 = vmatprep.subr.mxu0 0.0
        %5843 = vmatpush1.xpose.msra.mxu0 %v3563
        %5844 = vmatprep.subr.mxu0 0.0
        %5845 = vmatpush1.xpose.msra.mxu0 %v3566
        %5846 = vmatprep.subr.mxu0 0.0
        %5847 = vmatpush1.xpose.msra.mxu0 %v3569
        %5848 = vmatprep.mubr.f32.mxu0 0.0
        %5849 = vmatmul.mubr.f32.gmra.mrb[0].mxu0 %v5782
        %v5850 = vpop.f32.mrb[0].mxu0
        %v5851 = vadd.f32 0.0, %v5850
        %v5852 = vpop.f32.mrb[0].mxu0
        %v5853 = vadd.f32 0.0, %v5852
        %5854 = vdwg.mxu0
        %s5855 = scalar_lea.vmem %s853, 32 [#allocation2]
        %5856 = vst [vmem:[%s5855] sm:$0xff] %v5851
        %5857 = vst [vmem:[%s5855 + $0x8] sm:$0xff] %v5853
        %v5858 = vld [vmem:[%s25] sm:$0xff]
        %v5859 = vld [vmem:[%s25 + $0x8] sm:$0xff]
        %v5860 = vld [vmem:[%s25 + $0x10] sm:$0xff]
        %v5861 = vld [vmem:[%s25 + $0x18] sm:$0xff]
        %v5862 = vld [vmem:[%s26] sm:$0x1]
        %v5864 = vlaneseq
        %v5865 = vshrl.u32 %v5864, 7
        %v5866 = vsub.s32 0, %v5865
        %v5867 = vrot.slane %v5862, %v5866
        %5869 = vmatprep.subr.mxu0 0.0
        %5870 = vmatpush1.msra.mxu0 %v5858
        %5871 = vmatprep.subr.mxu0 0.0
        %5872 = vmatpush1.msra.mxu0 %v5859
        %5873 = vmatprep.subr.mxu0 0.0
        %5874 = vmatpush1.msra.mxu0 %v5860
        %5875 = vmatprep.subr.mxu0 0.0
        %5876 = vmatpush1.msra.mxu0 %v5861
        %5877 = vmatprep.subr.mxu0 0.0
        %5878 = vmatpush1.msra.mxu0 0.0
        %5879 = vmatprep.subr.mxu0 0.0
        %5880 = vmatpush1.msra.mxu0 0.0
        %5881 = vmatprep.subr.mxu0 0.0
        %5882 = vmatpush1.msra.mxu0 0.0
        %5883 = vmatprep.subr.mxu0 0.0
        %5884 = vmatpush1.msra.mxu0 0.0
        %5885 = vmatprep.subr.mxu0 0.0
        %5886 = vmatpush1.msra.mxu0 0.0
        %5887 = vmatprep.subr.mxu0 0.0
        %5888 = vmatpush1.msra.mxu0 0.0
        %5889 = vmatprep.subr.mxu0 0.0
        %5890 = vmatpush1.msra.mxu0 0.0
        %5891 = vmatprep.subr.mxu0 0.0
        %5892 = vmatpush1.msra.mxu0 0.0
        %5893 = vmatprep.subr.mxu0 0.0
        %5894 = vmatpush1.msra.mxu0 0.0
        %5895 = vmatprep.subr.mxu0 0.0
        %5896 = vmatpush1.msra.mxu0 0.0
        %5897 = vmatprep.subr.mxu0 0.0
        %5898 = vmatpush1.msra.mxu0 0.0
        %5899 = vmatprep.subr.mxu0 0.0
        %5900 = vmatpush1.msra.mxu0 0.0
        %5901 = vmatprep.subr.mxu0 0.0
        %5902 = vmatpush1.msra.mxu0 0.0
        %5903 = vmatprep.subr.mxu0 0.0
        %5904 = vmatpush1.msra.mxu0 0.0
        %5905 = vmatprep.subr.mxu0 0.0
        %5906 = vmatpush1.msra.mxu0 0.0
        %5907 = vmatprep.subr.mxu0 0.0
        %5908 = vmatpush1.msra.mxu0 0.0
        %5909 = vmatprep.subr.mxu0 0.0
        %5910 = vmatpush1.msra.mxu0 0.0
        %5911 = vmatprep.subr.mxu0 0.0
        %5912 = vmatpush1.msra.mxu0 0.0
        %5913 = vmatprep.subr.mxu0 0.0
        %5914 = vmatpush1.msra.mxu0 0.0
        %5915 = vmatprep.subr.mxu0 0.0
        %5916 = vmatpush1.msra.mxu0 0.0
        %5917 = vmatprep.subr.mxu0 0.0
        %5918 = vmatpush1.msra.mxu0 0.0
        %5919 = vmatprep.subr.mxu0 0.0
        %5920 = vmatpush1.msra.mxu0 0.0
        %5921 = vmatprep.subr.mxu0 0.0
        %5922 = vmatpush1.msra.mxu0 0.0
        %5923 = vmatprep.subr.mxu0 0.0
        %5924 = vmatpush1.msra.mxu0 0.0
        %5925 = vmatprep.subr.mxu0 0.0
        %5926 = vmatpush1.msra.mxu0 0.0
        %5927 = vmatprep.subr.mxu0 0.0
        %5928 = vmatpush1.msra.mxu0 0.0
        %5929 = vmatprep.subr.mxu0 0.0
        %5930 = vmatpush1.msra.mxu0 0.0
        %5931 = vmatprep.subr.mxu0 0.0
        %5932 = vmatpush1.msra.mxu0 0.0
        %5933 = vmatprep.mubr.f32.mxu0 0.0
        %5934 = vmatmul.mubr.f32.gmra.mrb[0].mxu0 %v5624
        %v5935 = vpop.f32.mrb[0].mxu0
        %v5936 = vadd.f32 %v5867, %v5935
        %v5937 = vpop.f32.mrb[0].mxu0
        %5938 = vdwg.mxu0
        %s5939 = scalar_lea.vmem %s860, 16 [#allocation4]
        %5940 = vst [vmem:[%s5939] sm:$0xff] %v5936
        %s5941 = sand.u32 %s631, 1
        %s5942 = scalar_lea.sflag [#allocation3], %s5941
        %s5943 = sand.u32 %s631, 1
        %s5944 = smul.addr %s5943, 48
        %s5945 = scalar_lea.vmem [#allocation2], %s5944
        %s5946 = sand.u32 %s657, 1
        %s5947 = scalar_lea.sflag [#allocation5], %s5946
        %s5948 = sand.u32 %s657, 1
        %s5949 = smul.addr %s5948, 24
        %s5950 = scalar_lea.vmem [#allocation4], %s5949
        // Predicated region
        $region129: #{tpu_custom_call.1} parent=127 // pred_check
          %p5951 = pneg %p641
        $region130: #{tpu_custom_call.1} parent=127 // pred_check_branch
          %5953 = sbr.rel (%p5951) target = $region132
        $region131: #{tpu_custom_call.1} parent=127 // pred_region
          %s5955 = ssub.s32 768, 768
          %5956 = vsyncadd %s5942, %s5955
          %s5957 = smul.addr %s46, 6
          %s5958 = smul.addr %s5957, 128
          %s5959 = scalar_lea.hbm %s27, %s5958
          %s5960 = sshll.u32 %s5945, 4
          %s5961 = int_to_ptr.vmem [resolvable:$true] %s5960
          %5966 = dma.vmem_to_hbm [thread:$0]  %s5961, 768, %s5959, %s5942, 256, 256, 16
        $region132: #{tpu_custom_call.1} parent=127 // pred_fallthru
          _
        // Predicated region
        $region133: #{tpu_custom_call.1} parent=127 // pred_check
          %p5967 = pneg %p667
        $region134: #{tpu_custom_call.1} parent=127 // pred_check_branch
          %5969 = sbr.rel (%p5967) target = $region136
        $region135: #{tpu_custom_call.1} parent=127 // pred_region
          %s5971 = ssub.s32 384, 384
          %5972 = vsyncadd %s5947, %s5971
          %s5973 = smul.addr %s46, 3
          %s5974 = smul.addr %s5973, 128
          %s5975 = scalar_lea.hbm %s28, %s5974
          %s5976 = sshll.u32 %s5950, 4
          %s5977 = int_to_ptr.vmem [resolvable:$true] %s5976
          %5982 = dma.vmem_to_hbm [thread:$0]  %s5977, 384, %s5975, %s5947, 128, 128, 8
        $region136: #{tpu_custom_call.1} parent=127 // pred_fallthru
          _
      $region128: #{tpu_custom_call.1} parent=5 // pred_fallthru
        _
      %p5983 = scmp.le.s32.totalorder 2, %s41
      // Predicated region
      $region137: #{tpu_custom_call.1} parent=5 // pred_check
        %p5984 = pneg %p5983
      $region138: #{tpu_custom_call.1} parent=5 // pred_check_branch
        %5986 = sbr.rel (%p5984) target = $region140
      $region139: #{tpu_custom_call.1} parent=5 // pred_region
        %s5987 = ssub.s32 %s41, 2
        // Predicated region
        $region141: #{tpu_custom_call.1} parent=139 // pred_check
          %p5988 = pneg %p647
        $region142: #{tpu_custom_call.1} parent=139 // pred_check_branch
          %5990 = sbr.rel (%p5988) target = $region144
        $region143: #{tpu_custom_call.1} parent=139 // pred_region
          %s5991 = sand.u32 %s632, 1
          %s5992 = scalar_lea.sflag [#allocation3], %s5991
          %s5993 = sand.u32 %s632, 1
          %s5994 = smul.addr %s5993, 48
          %s5995 = scalar_lea.vmem [#allocation2], %s5994
          %5996 = dma.done %s5992, 768
        $region144: #{tpu_custom_call.1} parent=139 // pred_fallthru
          _
        // Predicated region
        $region145: #{tpu_custom_call.1} parent=139 // pred_check
          %p5997 = pneg %p673
        $region146: #{tpu_custom_call.1} parent=139 // pred_check_branch
          %5999 = sbr.rel (%p5997) target = $region148
        $region147: #{tpu_custom_call.1} parent=139 // pred_region
          %s6000 = sand.u32 %s658, 1
          %s6001 = scalar_lea.sflag [#allocation5], %s6000
          %s6002 = sand.u32 %s658, 1
          %s6003 = smul.addr %s6002, 24
          %s6004 = scalar_lea.vmem [#allocation4], %s6003
          %6005 = dma.done %s6001, 384
        $region148: #{tpu_custom_call.1} parent=139 // pred_fallthru
          _
      $region140: #{tpu_custom_call.1} parent=5 // pred_fallthru
        _
    $region6: #{tpu_custom_call.1} parent=1 // loop_footer
      %s45 = sadd.s32 1, %s41
    $region7: #{tpu_custom_call.1} parent=1 // loop_footer_branch
      %40 = sbr.rel target = $region3
    $region8: #{tpu_custom_call.1} parent=1 // loop_exit
      _
    %6006 = vsyncpa [#allocation3], 1
    %s6007 = scalar_lea.sflag [#allocation3], 1
    %6008 = vsyncpa %s6007, 1
    %6009 = vsyncpa [#allocation5], 1
    %s6010 = scalar_lea.sflag [#allocation5], 1
    %6011 = vsyncpa %s6010, 1

</llo_original>
